<compile_context>
chip_gen: v6e
topology: v6e:2x2x1
jax: 0.10.0
libtpu: 0.0.40
codegen_flags: <defaults>
</compile_context>

<pallas_src>
import functools

import jax
import jax.numpy as jnp
from jax.experimental import pallas as pl
from jax.experimental.pallas import tpu as pltpu


def _relu(v):
    return jnp.maximum(v, 0.0)


def _dot(a, b):
    return jnp.dot(a, b, preferred_element_type=jnp.float32)


def pose_refine_kernel(xe_ref,
                       w12a, b12a, w12b, b12b,
                       w5a, w5b, b5, w6, b6,
                       wh1, bh1, wh2, bh2, wh3, bh3,
                       out_ref, *, inv_n):
    bf16 = jnp.bfloat16
    f32 = jnp.float32
    xe = xe_ref[...]                                                  # (M, 35) bf16 = [x | emb]

    # ---- PoseRefineNetFeat (trunk), bf16 activations, f32 MXU accumulation ----
    # fused conv1 / e_conv1 (block-diagonal weight)  -> [x1 | e1]
    h1 = _relu(_dot(xe, w12a[...]) + b12a[...])                       # (M, 128) f32
    h1b = h1.astype(bf16)
    # fused conv2 / e_conv2 (block-diagonal weight)  -> [x2 | e2]
    h2 = _relu(_dot(h1b, w12b[...]) + b12b[...])                      # (M, 256) f32
    h2b = h2.astype(bf16)
    # conv5 on concat([x1, e1, x2, e2]) = h1 @ W5T[:128] + h2 @ W5T[128:]
    h5 = _relu(_dot(h1b, w5a[...]) + _dot(h2b, w5b[...]) + b5[...])   # (M, 512)
    h6 = _relu(_dot(h5.astype(bf16), w6[...]) + b6[...])              # (M, 1024) f32

    # AvgPool1d(num_points): in-kernel sublane sum (XLU) scaled by exact f32 1/N.
    ap = jnp.sum(h6, axis=0, keepdims=True) * jnp.float32(inv_n)      # (1, 1024) f32

    # ---- fused r/t head, f32 activations (weights bf16 in HBM, cast in-kernel) ----
    g1 = _relu(_dot(ap, wh1[...].astype(f32)) + bh1[...])             # (1, 1024)  [r1 | t1]
    g2 = _relu(_dot(g1, wh2[...].astype(f32)) + bh2[...])             # (1, 256)   [r2 | t2]
    # lane-dense 128-wide output slab: [rx (4*no) | tx (3*no) | zeros]
    out_ref[...] = _dot(g2, wh3[...].astype(f32)) + bh3[...]          # (1, 128) f32


def init_params(key, num_obj):
    """Deterministic synthetic parameters, PyTorch shapes: W (Cout, Cin), b (Cout,).

    Weights/biases are rounded to the bf16 grid so the bf16 kernel and the
    f32 reference use numerically identical parameter values.
    """
    def lin(k, cout, cin):
        k1, k2 = jax.random.split(k)
        w = jax.random.normal(k1, (cout, cin), jnp.float32) * jnp.sqrt(2.0 / cin)
        b = jax.random.normal(k2, (cout,), jnp.float32) * 0.05
        w = w.astype(jnp.bfloat16).astype(jnp.float32)
        b = b.astype(jnp.bfloat16).astype(jnp.float32)
        return w, b

    keys = jax.random.split(key, 12)
    return {
        "conv1":   lin(keys[0], 64, 3),
        "e_conv1": lin(keys[1], 64, 32),
        "conv2":   lin(keys[2], 128, 64),
        "e_conv2": lin(keys[3], 128, 64),
        "conv5":   lin(keys[4], 512, 384),
        "conv6":   lin(keys[5], 1024, 512),
        "l1r":     lin(keys[6], 512, 1024),
        "l1t":     lin(keys[7], 512, 1024),
        "l2r":     lin(keys[8], 128, 512),
        "l2t":     lin(keys[9], 128, 512),
        "l3r":     lin(keys[10], num_obj * 4, 128),
        "l3t":     lin(keys[11], num_obj * 3, 128),
    }


def pack_params(params, num_obj):
    """ONE-TIME packing (call at init, not per forward).

    Fuses paired layers (block-diagonal) and the r/t head; bf16 weights, f32 biases.
    Returns a tuple of device arrays ready to feed to the jitted forward.
    """
    f32, bf16 = jnp.float32, jnp.bfloat16

    def wT(name):
        return jnp.asarray(params[name][0], f32).T               # (Cin, Cout)

    def bias(*names):
        return jnp.concatenate(
            [jnp.asarray(params[n][1], f32) for n in names]).reshape(1, -1)

    def block_diag(a, b):
        ra, ca = a.shape
        rb, cb = b.shape
        out = jnp.zeros((ra + rb, ca + cb), f32)
        out = out.at[:ra, :ca].set(a)
        out = out.at[ra:, ca:].set(b)
        return out

    w12a = block_diag(wT("conv1"), wT("e_conv1"))                # (35, 128)
    b12a = bias("conv1", "e_conv1")                              # (1, 128)
    w12b = block_diag(wT("conv2"), wT("e_conv2"))                # (128, 256)
    b12b = bias("conv2", "e_conv2")                              # (1, 256)
    w5t = wT("conv5")                                            # (384, 512)
    w5a, w5b = w5t[:128], w5t[128:]                              # [x1|e1] rows, [x2|e2] rows
    b5 = bias("conv5")
    w6 = wT("conv6")                                             # (512, 1024)
    b6 = bias("conv6")
    wh1 = jnp.concatenate([wT("l1r"), wT("l1t")], axis=1)        # (1024, 1024)
    bh1 = bias("l1r", "l1t")                                     # (1, 1024)
    wh2 = block_diag(wT("l2r"), wT("l2t"))                       # (1024, 256)
    bh2 = bias("l2r", "l2t")                                     # (1, 256)
    out_cols = max(128, ((7 * num_obj + 127) // 128) * 128)      # lane-dense output width
    w3 = block_diag(wT("l3r"), wT("l3t"))                        # (256, 7*num_obj)
    wh3 = jnp.zeros((256, out_cols), f32).at[:, :7 * num_obj].set(w3)
    bh3 = jnp.zeros((1, out_cols), f32).at[:, :7 * num_obj].set(bias("l3r", "l3t"))

    packed = (
        w12a.astype(bf16), b12a,
        w12b.astype(bf16), b12b,
        w5a.astype(bf16), w5b.astype(bf16), b5,
        w6.astype(bf16), b6,
        wh1.astype(bf16), bh1,
        wh2.astype(bf16), bh2,
        wh3.astype(bf16), bh3,
    )
    return jax.device_put(packed)


@functools.partial(jax.jit, static_argnames=("num_obj",))
def pose_refine_net(x, emb_cl, obj, packed, *, num_obj):
    """Jitted forward. `packed` comes from pack_params (done once at init).

    Matches the PyTorch forward: only batch 0 is consumed (index_select on b = 0),
    so only batch 0 is computed.
    """
    bs, N, _ = x.shape
    xe = jnp.concatenate([x[:1], emb_cl[:1]], axis=-1) \
            .reshape(N, 3 + 32).astype(jnp.bfloat16)              # (N, 35)

    bh3 = packed[-1]
    out_cols = bh3.shape[1]

    kernel = functools.partial(pose_refine_kernel, inv_n=1.0 / float(N))
    n_inputs = 1 + len(packed)

    out = pl.pallas_call(
        kernel,
        out_shape=jax.ShapeDtypeStruct((1, out_cols), jnp.float32),
        # No grid: single invocation, every operand resident in VMEM exactly once
        # (no double-buffered pipeline copies of the ~4 MB of weights).
        in_specs=[pl.BlockSpec(memory_space=pltpu.MemorySpace.VMEM)] * n_inputs,
        out_specs=pl.BlockSpec(memory_space=pltpu.MemorySpace.VMEM),
        compiler_params=pltpu.CompilerParams(
            vmem_limit_bytes=32 * 1024 * 1024,   # well under v7x's 64 MiB physical VMEM
        ),
    )(xe, *packed)

    rx = out[:, : num_obj * 4].reshape(1, num_obj, 4)
    tx = out[:, num_obj * 4: num_obj * 7].reshape(1, num_obj, 3)
    b = 0
    out_rx = jnp.take(rx[b], obj[b], axis=0)   # torch.index_select(rx[0], 0, obj[0])
    out_tx = jnp.take(tx[b], obj[b], axis=0)
    return out_rx, out_tx


def reference(x, emb_cl, obj, params, num_obj):
    """Pure-JAX f32 reference mirroring the PyTorch forward exactly."""
    def lin(v, p):
        w, bb = p
        return v @ w.T + bb
    relu = jax.nn.relu
    x1 = relu(lin(x, params["conv1"]))
    e1 = relu(lin(emb_cl, params["e_conv1"]))
    x2 = relu(lin(x1, params["conv2"]))
    e2 = relu(lin(e1, params["e_conv2"]))
    pf3 = jnp.concatenate([x1, e1, x2, e2], axis=-1)   # pointfeat_3 (channels-last)
    h5 = relu(lin(pf3, params["conv5"]))
    h6 = relu(lin(h5, params["conv6"]))
    ap = jnp.mean(h6, axis=1)                          # AvgPool1d over points
    rx = relu(lin(ap, params["l1r"]))
    tx = relu(lin(ap, params["l1t"]))
    rx = relu(lin(rx, params["l2r"]))
    tx = relu(lin(tx, params["l2t"]))
    rx = lin(rx, params["l3r"]).reshape(-1, num_obj, 4)
    tx = lin(tx, params["l3t"]).reshape(-1, num_obj, 3)
    b = 0
    return jnp.take(rx[b], obj[b], axis=0), jnp.take(tx[b], obj[b], axis=0)


if __name__ == "__main__":
    num_points = 64
    num_obj = 5
    bs = 2

    key = jax.random.PRNGKey(0)
    kx, ke, kp = jax.random.split(key, 3)
    x = jax.random.normal(kx, (bs, num_points, 3), jnp.float32)        # point cloud
    emb_cl = jax.random.normal(ke, (bs, num_points, 32), jnp.float32)  # emb (channels-last)
    # round inputs to the bf16 grid so kernel-vs-reference diff is activation rounding only
    x = x.astype(jnp.bfloat16).astype(jnp.float32)
    emb_cl = emb_cl.astype(jnp.bfloat16).astype(jnp.float32)
    obj = jnp.array([[1], [3]], dtype=jnp.int32)                       # obj ids per batch
    params = init_params(kp, num_obj)

    # One-time weight packing (hoisted out of the per-call path).
    packed = pack_params(params, num_obj)

    out_rx, out_tx = pose_refine_net(x, emb_cl, obj, packed, num_obj=num_obj)
    jax.block_until_ready((out_rx, out_tx))

    ref_rx, ref_tx = reference(x, emb_cl, obj, params, num_obj)
    assert out_rx.shape == (1, 4) and out_tx.shape == (1, 3)
    # bf16 trunk activations / f32 head vs f32 reference
    assert jnp.allclose(out_rx, ref_rx, rtol=3e-2, atol=3e-3)
    assert jnp.allclose(out_tx, ref_tx, rtol=3e-2, atol=3e-3)
    print("KERNEL_OK")
</pallas_src>

<mosaic_0001>
module attributes {stable_mosaic.version = 11 : i64} {
  func.func @pose_refine_kernel(%arg0: memref<64x35xbf16, #tpu.memory_space<vmem>>, %arg1: memref<35x128xbf16, #tpu.memory_space<vmem>>, %arg2: memref<1x128xf32, #tpu.memory_space<vmem>>, %arg3: memref<128x256xbf16, #tpu.memory_space<vmem>>, %arg4: memref<1x256xf32, #tpu.memory_space<vmem>>, %arg5: memref<128x512xbf16, #tpu.memory_space<vmem>>, %arg6: memref<256x512xbf16, #tpu.memory_space<vmem>>, %arg7: memref<1x512xf32, #tpu.memory_space<vmem>>, %arg8: memref<512x1024xbf16, #tpu.memory_space<vmem>>, %arg9: memref<1x1024xf32, #tpu.memory_space<vmem>>, %arg10: memref<1024x1024xbf16, #tpu.memory_space<vmem>>, %arg11: memref<1x1024xf32, #tpu.memory_space<vmem>>, %arg12: memref<1024x256xbf16, #tpu.memory_space<vmem>>, %arg13: memref<1x256xf32, #tpu.memory_space<vmem>>, %arg14: memref<256x128xbf16, #tpu.memory_space<vmem>>, %arg15: memref<1x128xf32, #tpu.memory_space<vmem>>, %arg16: memref<1x128xf32, #tpu.memory_space<vmem>>) attributes {dimension_semantics = [], scalar_prefetch = 0 : i64, scratch_operands = 0 : i64, tpu.core_type = #tpu.core_type<tc>} {
    %c0 = arith.constant 0 : index
    %c0_0 = arith.constant 0 : index
    %0 = vector.load %arg0[%c0, %c0_0] : memref<64x35xbf16, #tpu.memory_space<vmem>>, vector<64x35xbf16>
    %c0_1 = arith.constant 0 : index
    %c0_2 = arith.constant 0 : index
    %1 = vector.load %arg1[%c0_1, %c0_2] : memref<35x128xbf16, #tpu.memory_space<vmem>>, vector<35x128xbf16>
    %cst = arith.constant dense<0.000000e+00> : vector<64x128xf32>
    %2 = tpu.matmul %0, %1, %cst {dimension_numbers = #tpu.dot_dimension_numbers<[1], [0], [0], [1], [0, 0, 1, 1], [], []>} : vector<64x35xbf16>, vector<35x128xbf16>, vector<64x128xf32> -> vector<64x128xf32>
    %c0_3 = arith.constant 0 : index
    %c0_4 = arith.constant 0 : index
    %3 = vector.load %arg2[%c0_3, %c0_4] : memref<1x128xf32, #tpu.memory_space<vmem>>, vector<1x128xf32>
    %4 = vector.broadcast %3 : vector<1x128xf32> to vector<64x128xf32>
    %5 = arith.addf %2, %4 : vector<64x128xf32>
    %cst_5 = arith.constant 0.000000e+00 : f32
    %6 = vector.broadcast %cst_5 : f32 to vector<64x128xf32>
    %7 = arith.maximumf %5, %6 : vector<64x128xf32>
    %8 = arith.truncf %7 : vector<64x128xf32> to vector<64x128xbf16>
    %c0_6 = arith.constant 0 : index
    %c0_7 = arith.constant 0 : index
    %9 = vector.load %arg3[%c0_6, %c0_7] : memref<128x256xbf16, #tpu.memory_space<vmem>>, vector<128x256xbf16>
    %cst_8 = arith.constant dense<0.000000e+00> : vector<64x256xf32>
    %10 = tpu.matmul %8, %9, %cst_8 {dimension_numbers = #tpu.dot_dimension_numbers<[1], [0], [0], [1], [0, 0, 1, 1], [], []>} : vector<64x128xbf16>, vector<128x256xbf16>, vector<64x256xf32> -> vector<64x256xf32>
    %c0_9 = arith.constant 0 : index
    %c0_10 = arith.constant 0 : index
    %11 = vector.load %arg4[%c0_9, %c0_10] : memref<1x256xf32, #tpu.memory_space<vmem>>, vector<1x256xf32>
    %12 = vector.broadcast %11 : vector<1x256xf32> to vector<64x256xf32>
    %13 = arith.addf %10, %12 : vector<64x256xf32>
    %cst_11 = arith.constant 0.000000e+00 : f32
    %14 = vector.broadcast %cst_11 : f32 to vector<64x256xf32>
    %15 = arith.maximumf %13, %14 : vector<64x256xf32>
    %16 = arith.truncf %15 : vector<64x256xf32> to vector<64x256xbf16>
    %c0_12 = arith.constant 0 : index
    %c0_13 = arith.constant 0 : index
    %17 = vector.load %arg5[%c0_12, %c0_13] : memref<128x512xbf16, #tpu.memory_space<vmem>>, vector<128x512xbf16>
    %cst_14 = arith.constant dense<0.000000e+00> : vector<64x512xf32>
    %18 = tpu.matmul %8, %17, %cst_14 {dimension_numbers = #tpu.dot_dimension_numbers<[1], [0], [0], [1], [0, 0, 1, 1], [], []>} : vector<64x128xbf16>, vector<128x512xbf16>, vector<64x512xf32> -> vector<64x512xf32>
    %c0_15 = arith.constant 0 : index
    %c0_16 = arith.constant 0 : index
    %19 = vector.load %arg6[%c0_15, %c0_16] : memref<256x512xbf16, #tpu.memory_space<vmem>>, vector<256x512xbf16>
    %cst_17 = arith.constant dense<0.000000e+00> : vector<64x512xf32>
    %20 = tpu.matmul %16, %19, %cst_17 {dimension_numbers = #tpu.dot_dimension_numbers<[1], [0], [0], [1], [0, 0, 1, 1], [], []>} : vector<64x256xbf16>, vector<256x512xbf16>, vector<64x512xf32> -> vector<64x512xf32>
    %21 = arith.addf %18, %20 : vector<64x512xf32>
    %c0_18 = arith.constant 0 : index
    %c0_19 = arith.constant 0 : index
    %22 = vector.load %arg7[%c0_18, %c0_19] : memref<1x512xf32, #tpu.memory_space<vmem>>, vector<1x512xf32>
    %23 = vector.broadcast %22 : vector<1x512xf32> to vector<64x512xf32>
    %24 = arith.addf %21, %23 : vector<64x512xf32>
    %cst_20 = arith.constant 0.000000e+00 : f32
    %25 = vector.broadcast %cst_20 : f32 to vector<64x512xf32>
    %26 = arith.maximumf %24, %25 : vector<64x512xf32>
    %27 = arith.truncf %26 : vector<64x512xf32> to vector<64x512xbf16>
    %c0_21 = arith.constant 0 : index
    %c0_22 = arith.constant 0 : index
    %28 = vector.load %arg8[%c0_21, %c0_22] : memref<512x1024xbf16, #tpu.memory_space<vmem>>, vector<512x1024xbf16>
    %cst_23 = arith.constant dense<0.000000e+00> : vector<64x1024xf32>
    %29 = tpu.matmul %27, %28, %cst_23 {dimension_numbers = #tpu.dot_dimension_numbers<[1], [0], [0], [1], [0, 0, 1, 1], [], []>} : vector<64x512xbf16>, vector<512x1024xbf16>, vector<64x1024xf32> -> vector<64x1024xf32>
    %c0_24 = arith.constant 0 : index
    %c0_25 = arith.constant 0 : index
    %30 = vector.load %arg9[%c0_24, %c0_25] : memref<1x1024xf32, #tpu.memory_space<vmem>>, vector<1x1024xf32>
    %31 = vector.broadcast %30 : vector<1x1024xf32> to vector<64x1024xf32>
    %32 = arith.addf %29, %31 : vector<64x1024xf32>
    %cst_26 = arith.constant 0.000000e+00 : f32
    %33 = vector.broadcast %cst_26 : f32 to vector<64x1024xf32>
    %34 = arith.maximumf %32, %33 : vector<64x1024xf32>
    %cst_27 = arith.constant dense<0.000000e+00> : vector<1024xf32>
    %35 = vector.multi_reduction <add>, %34, %cst_27 [0] : vector<64x1024xf32> to vector<1024xf32>
    %36 = vector.shape_cast %35 : vector<1024xf32> to vector<1x1024xf32>
    %cst_28 = arith.constant 1.562500e-02 : f32
    %37 = vector.broadcast %cst_28 : f32 to vector<1x1024xf32>
    %38 = arith.mulf %36, %37 : vector<1x1024xf32>
    %c0_29 = arith.constant 0 : index
    %c0_30 = arith.constant 0 : index
    %39 = vector.load %arg10[%c0_29, %c0_30] : memref<1024x1024xbf16, #tpu.memory_space<vmem>>, vector<1024x1024xbf16>
    %40 = arith.extf %39 : vector<1024x1024xbf16> to vector<1024x1024xf32>
    %cst_31 = arith.constant dense<0.000000e+00> : vector<1x1024xf32>
    %41 = tpu.matmul %38, %40, %cst_31 {dimension_numbers = #tpu.dot_dimension_numbers<[1], [0], [0], [1], [0, 0, 1, 1], [], []>} : vector<1x1024xf32>, vector<1024x1024xf32>, vector<1x1024xf32> -> vector<1x1024xf32>
    %c0_32 = arith.constant 0 : index
    %c0_33 = arith.constant 0 : index
    %42 = vector.load %arg11[%c0_32, %c0_33] : memref<1x1024xf32, #tpu.memory_space<vmem>>, vector<1x1024xf32>
    %43 = arith.addf %41, %42 : vector<1x1024xf32>
    %cst_34 = arith.constant 0.000000e+00 : f32
    %44 = vector.broadcast %cst_34 : f32 to vector<1x1024xf32>
    %45 = arith.maximumf %43, %44 : vector<1x1024xf32>
    %c0_35 = arith.constant 0 : index
    %c0_36 = arith.constant 0 : index
    %46 = vector.load %arg12[%c0_35, %c0_36] : memref<1024x256xbf16, #tpu.memory_space<vmem>>, vector<1024x256xbf16>
    %47 = arith.extf %46 : vector<1024x256xbf16> to vector<1024x256xf32>
    %cst_37 = arith.constant dense<0.000000e+00> : vector<1x256xf32>
    %48 = tpu.matmul %45, %47, %cst_37 {dimension_numbers = #tpu.dot_dimension_numbers<[1], [0], [0], [1], [0, 0, 1, 1], [], []>} : vector<1x1024xf32>, vector<1024x256xf32>, vector<1x256xf32> -> vector<1x256xf32>
    %c0_38 = arith.constant 0 : index
    %c0_39 = arith.constant 0 : index
    %49 = vector.load %arg13[%c0_38, %c0_39] : memref<1x256xf32, #tpu.memory_space<vmem>>, vector<1x256xf32>
    %50 = arith.addf %48, %49 : vector<1x256xf32>
    %cst_40 = arith.constant 0.000000e+00 : f32
    %51 = vector.broadcast %cst_40 : f32 to vector<1x256xf32>
    %52 = arith.maximumf %50, %51 : vector<1x256xf32>
    %c0_41 = arith.constant 0 : index
    %c0_42 = arith.constant 0 : index
    %53 = vector.load %arg14[%c0_41, %c0_42] : memref<256x128xbf16, #tpu.memory_space<vmem>>, vector<256x128xbf16>
    %54 = arith.extf %53 : vector<256x128xbf16> to vector<256x128xf32>
    %cst_43 = arith.constant dense<0.000000e+00> : vector<1x128xf32>
    %55 = tpu.matmul %52, %54, %cst_43 {dimension_numbers = #tpu.dot_dimension_numbers<[1], [0], [0], [1], [0, 0, 1, 1], [], []>} : vector<1x256xf32>, vector<256x128xf32>, vector<1x128xf32> -> vector<1x128xf32>
    %c0_44 = arith.constant 0 : index
    %c0_45 = arith.constant 0 : index
    %56 = vector.load %arg15[%c0_44, %c0_45] : memref<1x128xf32, #tpu.memory_space<vmem>>, vector<1x128xf32>
    %57 = arith.addf %55, %56 : vector<1x128xf32>
    %c0_46 = arith.constant 0 : index
    %c0_47 = arith.constant 0 : index
    %58 = vector.load %arg16[%c0_46, %c0_47] : memref<1x128xf32, #tpu.memory_space<vmem>>, vector<1x128xf32>
    tpu.vector_store %arg16[%c0_46, %c0_47], %57 {strides = array<i32>} : memref<1x128xf32, #tpu.memory_space<vmem>>, vector<1x128xf32>,
    return
  }
}

</mosaic_0001>

<llo_original>
// kernel: pose_refine_net.1
$region0: #{pose_refine_net.1}
  #allocation0 [shape = 'u32[]', space=smem, size = 0x4, offset = 0x4, fixed_abs, tag = 'smem constant byte address 0x4 - core index']
  #allocation1 [shape = 'u32[144,128]{1,0:T(1,128)}', space=vmem, size = 0x12000, scoped, tag = 'internal scratch']
  %s0 = inlined_call_operand.vmem [shape: bf16[64,35], index: 0, kind: input, shape index: {}]
  %s1 = inlined_call_operand.hbm [shape: bf16[35,128], index: 1, kind: input, shape index: {}]
  %s2 = inlined_call_operand.hbm [shape: f32[1,128], index: 2, kind: input, shape index: {}]
  %s3 = inlined_call_operand.hbm [shape: bf16[128,256], index: 3, kind: input, shape index: {}]
  %s4 = inlined_call_operand.hbm [shape: f32[1,256], index: 4, kind: input, shape index: {}]
  %s5 = inlined_call_operand.hbm [shape: bf16[128,512], index: 5, kind: input, shape index: {}]
  %s6 = inlined_call_operand.hbm [shape: bf16[256,512], index: 6, kind: input, shape index: {}]
  %s7 = inlined_call_operand.hbm [shape: f32[1,512], index: 7, kind: input, shape index: {}]
  %s8 = inlined_call_operand.hbm [shape: bf16[512,1024], index: 8, kind: input, shape index: {}]
  %s9 = inlined_call_operand.hbm [shape: f32[1,1024], index: 9, kind: input, shape index: {}]
  %s10 = inlined_call_operand.hbm [shape: bf16[1024,1024], index: 10, kind: input, shape index: {}]
  %s11 = inlined_call_operand.hbm [shape: f32[1,1024], index: 11, kind: input, shape index: {}]
  %s12 = inlined_call_operand.hbm [shape: bf16[1024,256], index: 12, kind: input, shape index: {}]
  %s13 = inlined_call_operand.hbm [shape: f32[1,256], index: 13, kind: input, shape index: {}]
  %s14 = inlined_call_operand.hbm [shape: bf16[256,128], index: 14, kind: input, shape index: {}]
  %s15 = inlined_call_operand.hbm [shape: f32[1,128], index: 15, kind: input, shape index: {}]
  %s16 = inlined_call_operand.vmem [shape: f32[1,128], index: 16, kind: output, shape index: {}]
  %s17 = sld [smem:[#allocation0]]
  $region134: #{pose_refine_net.1} parent=0
    _
  %s19 = ssub.s32 1, %s17
  %s20 = scalar_select 0, %s19, %s17
  $region1: #{pose_refine_net.1} parent=0
    #allocation2 [shape = 'u8[10240]{0}', space=vmem, size = 0x2800, scoped, tag = 'input window, operand 1, single buffered']
    #allocation3 [shape = 's32[1]{0}', space=sflag, size = 0x4, scoped, tag = 'scoped memory for pose_refine_net.1']
    #allocation4 [shape = 'u8[512]{0}', space=vmem, size = 0x400, scoped, tag = 'input window, operand 2, single buffered']
    #allocation5 [shape = 's32[1]{0}', space=sflag, size = 0x4, scoped, tag = 'scoped memory for pose_refine_net.1']
    #allocation6 [shape = 'u8[65536]{0}', space=vmem, size = 0x10000, scoped, tag = 'input window, operand 3, single buffered']
    #allocation7 [shape = 'u8[1024]{0}', space=vmem, size = 0x400, scoped, tag = 'input window, operand 4, single buffered']
    #allocation8 [shape = 's32[1]{0}', space=sflag, size = 0x4, scoped, tag = 'scoped memory for pose_refine_net.1']
    #allocation9 [shape = 'u8[131072]{0}', space=vmem, size = 0x20000, scoped, tag = 'input window, operand 5, single buffered']
    #allocation10 [shape = 'u8[262144]{0}', space=vmem, size = 0x40000, scoped, tag = 'input window, operand 6, single buffered']
    #allocation11 [shape = 's32[1]{0}', space=sflag, size = 0x4, scoped, tag = 'scoped memory for pose_refine_net.1']
    #allocation12 [shape = 'u8[2048]{0}', space=vmem, size = 0x800, scoped, tag = 'input window, operand 7, single buffered']
    #allocation13 [shape = 'u8[1048576]{0}', space=vmem, size = 0x100000, scoped, tag = 'input window, operand 8, single buffered']
    #allocation14 [shape = 's32[1]{0}', space=sflag, size = 0x4, scoped, tag = 'scoped memory for pose_refine_net.1']
    #allocation15 [shape = 'u8[4096]{0}', space=vmem, size = 0x1000, scoped, tag = 'input window, operand 9, single buffered']
    #allocation16 [shape = 'u8[2097152]{0}', space=vmem, size = 0x200000, scoped, tag = 'input window, operand 10, single buffered']
    #allocation17 [shape = 's32[1]{0}', space=sflag, size = 0x4, scoped, tag = 'scoped memory for pose_refine_net.1']
    #allocation18 [shape = 'u8[4096]{0}', space=vmem, size = 0x1000, scoped, tag = 'input window, operand 11, single buffered']
    #allocation19 [shape = 'u8[524288]{0}', space=vmem, size = 0x80000, scoped, tag = 'input window, operand 12, single buffered']
    #allocation20 [shape = 's32[1]{0}', space=sflag, size = 0x4, scoped, tag = 'scoped memory for pose_refine_net.1']
    #allocation21 [shape = 'u8[1024]{0}', space=vmem, size = 0x400, scoped, tag = 'input window, operand 13, single buffered']
    #allocation22 [shape = 'u8[65536]{0}', space=vmem, size = 0x10000, scoped, tag = 'input window, operand 14, single buffered']
    #allocation23 [shape = 's32[1]{0}', space=sflag, size = 0x4, scoped, tag = 'scoped memory for pose_refine_net.1']
    #allocation24 [shape = 'u8[512]{0}', space=vmem, size = 0x400, scoped, tag = 'input window, operand 15, single buffered']
    %21 = vsyncpa [#allocation3], 0
    %22 = vsyncpa [#allocation5], 0
    %23 = vsyncpa [#allocation8], 0
    %24 = vsyncpa [#allocation11], 0
    %25 = vsyncpa [#allocation14], 0
    %26 = vsyncpa [#allocation17], 0
    %27 = vsyncpa [#allocation20], 0
    %28 = vsyncpa [#allocation23], 0
    // Predicated region
    $region2: #{pose_refine_net.1} parent=1 // pred_check
      _
    $region3: #{pose_refine_net.1} parent=1 // pred_check_branch
      %30 = sbr.rel (0) target = $region5
    $region4: #{pose_refine_net.1} parent=1 // pred_region
      _
    $region5: #{pose_refine_net.1} parent=1 // pred_fallthru
      _
    // Predicated region
    $region6: #{pose_refine_net.1} parent=1 // pred_check
      _
    $region7: #{pose_refine_net.1} parent=1 // pred_check_branch
      %32 = sbr.rel (0) target = $region9
    $region8: #{pose_refine_net.1} parent=1 // pred_region
      %s34 = ssub.s32 320, 320
      %35 = vsyncadd [#allocation3], %s34
      %s36 = sshll.u32 [#allocation2], 4
      %s37 = int_to_ptr.vmem [resolvable:$true] %s36
      %42 = dma.hbm_to_vmem [thread:$0]  %s1, 320, %s37, [#allocation3], 64, 64, 4
    $region9: #{pose_refine_net.1} parent=1 // pred_fallthru
      _
    // Predicated region
    $region10: #{pose_refine_net.1} parent=1 // pred_check
      _
    $region11: #{pose_refine_net.1} parent=1 // pred_check_branch
      %44 = sbr.rel (0) target = $region13
    $region12: #{pose_refine_net.1} parent=1 // pred_region
      %s46 = ssub.s32 16, 16
      %47 = vsyncadd [#allocation5], %s46
      %s49 = sshll.u32 [#allocation4], 4
      %s50 = int_to_ptr.vmem [resolvable:$true] %s49
      %52 = dma.hbm_to_vmem [thread:$0]  %s2, 16, %s50, [#allocation5]
    $region13: #{pose_refine_net.1} parent=1 // pred_fallthru
      _
    // Predicated region
    $region14: #{pose_refine_net.1} parent=1 // pred_check
      _
    $region15: #{pose_refine_net.1} parent=1 // pred_check_branch
      %54 = sbr.rel (0) target = $region17
    $region16: #{pose_refine_net.1} parent=1 // pred_region
      %s56 = ssub.s32 2048, 2048
      %57 = vsyncadd [#allocation5], %s56
      %s58 = sshll.u32 [#allocation6], 4
      %s59 = int_to_ptr.vmem [resolvable:$true] %s58
      %64 = dma.hbm_to_vmem [thread:$0]  %s3, 2048, %s59, [#allocation5], 128, 128, 8
    $region17: #{pose_refine_net.1} parent=1 // pred_fallthru
      _
    // Predicated region
    $region18: #{pose_refine_net.1} parent=1 // pred_check
      _
    $region19: #{pose_refine_net.1} parent=1 // pred_check_branch
      %66 = sbr.rel (0) target = $region21
    $region20: #{pose_refine_net.1} parent=1 // pred_region
      %s68 = ssub.s32 32, 32
      %69 = vsyncadd [#allocation8], %s68
      %s71 = sshll.u32 [#allocation7], 4
      %s72 = int_to_ptr.vmem [resolvable:$true] %s71
      %74 = dma.hbm_to_vmem [thread:$0]  %s4, 32, %s72, [#allocation8]
    $region21: #{pose_refine_net.1} parent=1 // pred_fallthru
      _
    // Predicated region
    $region22: #{pose_refine_net.1} parent=1 // pred_check
      _
    $region23: #{pose_refine_net.1} parent=1 // pred_check_branch
      %76 = sbr.rel (0) target = $region25
    $region24: #{pose_refine_net.1} parent=1 // pred_region
      %s78 = ssub.s32 4096, 4096
      %79 = vsyncadd [#allocation8], %s78
      %s80 = sshll.u32 [#allocation9], 4
      %s81 = int_to_ptr.vmem [resolvable:$true] %s80
      %86 = dma.hbm_to_vmem [thread:$0]  %s5, 4096, %s81, [#allocation8], 256, 256, 16
    $region25: #{pose_refine_net.1} parent=1 // pred_fallthru
      _
    // Predicated region
    $region26: #{pose_refine_net.1} parent=1 // pred_check
      _
    $region27: #{pose_refine_net.1} parent=1 // pred_check_branch
      %88 = sbr.rel (0) target = $region29
    $region28: #{pose_refine_net.1} parent=1 // pred_region
      %s90 = ssub.s32 8192, 8192
      %91 = vsyncadd [#allocation11], %s90
      %s92 = sshll.u32 [#allocation10], 4
      %s93 = int_to_ptr.vmem [resolvable:$true] %s92
      %98 = dma.hbm_to_vmem [thread:$0]  %s6, 8192, %s93, [#allocation11], 256, 256, 16
    $region29: #{pose_refine_net.1} parent=1 // pred_fallthru
      _
    // Predicated region
    $region30: #{pose_refine_net.1} parent=1 // pred_check
      _
    $region31: #{pose_refine_net.1} parent=1 // pred_check_branch
      %100 = sbr.rel (0) target = $region33
    $region32: #{pose_refine_net.1} parent=1 // pred_region
      %s102 = ssub.s32 64, 64
      %103 = vsyncadd [#allocation11], %s102
      %s105 = sshll.u32 [#allocation12], 4
      %s106 = int_to_ptr.vmem [resolvable:$true] %s105
      %108 = dma.hbm_to_vmem [thread:$0]  %s7, 64, %s106, [#allocation11]
    $region33: #{pose_refine_net.1} parent=1 // pred_fallthru
      _
    // Predicated region
    $region34: #{pose_refine_net.1} parent=1 // pred_check
      _
    $region35: #{pose_refine_net.1} parent=1 // pred_check_branch
      %110 = sbr.rel (0) target = $region37
    $region36: #{pose_refine_net.1} parent=1 // pred_region
      %s112 = ssub.s32 32768, 32768
      %113 = vsyncadd [#allocation14], %s112
      %s114 = sshll.u32 [#allocation13], 4
      %s115 = int_to_ptr.vmem [resolvable:$true] %s114
      %120 = dma.hbm_to_vmem [thread:$0]  %s8, 32768, %s115, [#allocation14], 512, 512, 32
    $region37: #{pose_refine_net.1} parent=1 // pred_fallthru
      _
    // Predicated region
    $region38: #{pose_refine_net.1} parent=1 // pred_check
      _
    $region39: #{pose_refine_net.1} parent=1 // pred_check_branch
      %122 = sbr.rel (0) target = $region41
    $region40: #{pose_refine_net.1} parent=1 // pred_region
      %s124 = ssub.s32 128, 128
      %125 = vsyncadd [#allocation14], %s124
      %s127 = sshll.u32 [#allocation15], 4
      %s128 = int_to_ptr.vmem [resolvable:$true] %s127
      %130 = dma.hbm_to_vmem [thread:$0]  %s9, 128, %s128, [#allocation14]
    $region41: #{pose_refine_net.1} parent=1 // pred_fallthru
      _
    // Predicated region
    $region42: #{pose_refine_net.1} parent=1 // pred_check
      _
    $region43: #{pose_refine_net.1} parent=1 // pred_check_branch
      %132 = sbr.rel (0) target = $region45
    $region44: #{pose_refine_net.1} parent=1 // pred_region
      %s134 = ssub.s32 65536, 65536
      %135 = vsyncadd [#allocation17], %s134
      %s136 = sshll.u32 [#allocation16], 4
      %s137 = int_to_ptr.vmem [resolvable:$true] %s136
      %142 = dma.hbm_to_vmem [thread:$0]  %s10, 65536, %s137, [#allocation17], 512, 512, 32
    $region45: #{pose_refine_net.1} parent=1 // pred_fallthru
      _
    // Predicated region
    $region46: #{pose_refine_net.1} parent=1 // pred_check
      _
    $region47: #{pose_refine_net.1} parent=1 // pred_check_branch
      %144 = sbr.rel (0) target = $region49
    $region48: #{pose_refine_net.1} parent=1 // pred_region
      %s146 = ssub.s32 128, 128
      %147 = vsyncadd [#allocation17], %s146
      %s149 = sshll.u32 [#allocation18], 4
      %s150 = int_to_ptr.vmem [resolvable:$true] %s149
      %152 = dma.hbm_to_vmem [thread:$0]  %s11, 128, %s150, [#allocation17]
    $region49: #{pose_refine_net.1} parent=1 // pred_fallthru
      _
    // Predicated region
    $region50: #{pose_refine_net.1} parent=1 // pred_check
      _
    $region51: #{pose_refine_net.1} parent=1 // pred_check_branch
      %154 = sbr.rel (0) target = $region53
    $region52: #{pose_refine_net.1} parent=1 // pred_region
      %s156 = ssub.s32 16384, 16384
      %157 = vsyncadd [#allocation20], %s156
      %s158 = sshll.u32 [#allocation19], 4
      %s159 = int_to_ptr.vmem [resolvable:$true] %s158
      %164 = dma.hbm_to_vmem [thread:$0]  %s12, 16384, %s159, [#allocation20], 128, 128, 8
    $region53: #{pose_refine_net.1} parent=1 // pred_fallthru
      _
    // Predicated region
    $region54: #{pose_refine_net.1} parent=1 // pred_check
      _
    $region55: #{pose_refine_net.1} parent=1 // pred_check_branch
      %166 = sbr.rel (0) target = $region57
    $region56: #{pose_refine_net.1} parent=1 // pred_region
      %s168 = ssub.s32 32, 32
      %169 = vsyncadd [#allocation20], %s168
      %s171 = sshll.u32 [#allocation21], 4
      %s172 = int_to_ptr.vmem [resolvable:$true] %s171
      %174 = dma.hbm_to_vmem [thread:$0]  %s13, 32, %s172, [#allocation20]
    $region57: #{pose_refine_net.1} parent=1 // pred_fallthru
      _
    // Predicated region
    $region58: #{pose_refine_net.1} parent=1 // pred_check
      _
    $region59: #{pose_refine_net.1} parent=1 // pred_check_branch
      %176 = sbr.rel (0) target = $region61
    $region60: #{pose_refine_net.1} parent=1 // pred_region
      %s178 = ssub.s32 2048, 2048
      %179 = vsyncadd [#allocation23], %s178
      %s180 = sshll.u32 [#allocation22], 4
      %s181 = int_to_ptr.vmem [resolvable:$true] %s180
      %186 = dma.hbm_to_vmem [thread:$0]  %s14, 2048, %s181, [#allocation23], 64, 64, 4
    $region61: #{pose_refine_net.1} parent=1 // pred_fallthru
      _
    // Predicated region
    $region62: #{pose_refine_net.1} parent=1 // pred_check
      _
    $region63: #{pose_refine_net.1} parent=1 // pred_check_branch
      %188 = sbr.rel (0) target = $region65
    $region64: #{pose_refine_net.1} parent=1 // pred_region
      %s190 = ssub.s32 16, 16
      %191 = vsyncadd [#allocation23], %s190
      %s193 = sshll.u32 [#allocation24], 4
      %s194 = int_to_ptr.vmem [resolvable:$true] %s193
      %196 = dma.hbm_to_vmem [thread:$0]  %s15, 16, %s194, [#allocation23]
    $region65: #{pose_refine_net.1} parent=1 // pred_fallthru
      _
    // Predicated region
    $region66: #{pose_refine_net.1} parent=1 // pred_check
      _
    $region67: #{pose_refine_net.1} parent=1 // pred_check_branch
      %198 = sbr.rel (0) target = $region69
    $region68: #{pose_refine_net.1} parent=1 // pred_region
      %199 = dma.done [#allocation3], 320
    $region69: #{pose_refine_net.1} parent=1 // pred_fallthru
      _
    // Predicated region
    $region70: #{pose_refine_net.1} parent=1 // pred_check
      _
    $region71: #{pose_refine_net.1} parent=1 // pred_check_branch
      %201 = sbr.rel (0) target = $region73
    $region72: #{pose_refine_net.1} parent=1 // pred_region
      %202 = dma.done [#allocation5], 16
    $region73: #{pose_refine_net.1} parent=1 // pred_fallthru
      _
    // Predicated region
    $region74: #{pose_refine_net.1} parent=1 // pred_check
      _
    $region75: #{pose_refine_net.1} parent=1 // pred_check_branch
      %204 = sbr.rel (0) target = $region77
    $region76: #{pose_refine_net.1} parent=1 // pred_region
      %205 = dma.done [#allocation5], 2048
    $region77: #{pose_refine_net.1} parent=1 // pred_fallthru
      _
    // Predicated region
    $region78: #{pose_refine_net.1} parent=1 // pred_check
      _
    $region79: #{pose_refine_net.1} parent=1 // pred_check_branch
      %207 = sbr.rel (0) target = $region81
    $region80: #{pose_refine_net.1} parent=1 // pred_region
      %208 = dma.done [#allocation8], 32
    $region81: #{pose_refine_net.1} parent=1 // pred_fallthru
      _
    // Predicated region
    $region82: #{pose_refine_net.1} parent=1 // pred_check
      _
    $region83: #{pose_refine_net.1} parent=1 // pred_check_branch
      %210 = sbr.rel (0) target = $region85
    $region84: #{pose_refine_net.1} parent=1 // pred_region
      %211 = dma.done [#allocation8], 4096
    $region85: #{pose_refine_net.1} parent=1 // pred_fallthru
      _
    // Predicated region
    $region86: #{pose_refine_net.1} parent=1 // pred_check
      _
    $region87: #{pose_refine_net.1} parent=1 // pred_check_branch
      %213 = sbr.rel (0) target = $region89
    $region88: #{pose_refine_net.1} parent=1 // pred_region
      %214 = dma.done [#allocation11], 8192
    $region89: #{pose_refine_net.1} parent=1 // pred_fallthru
      _
    // Predicated region
    $region90: #{pose_refine_net.1} parent=1 // pred_check
      _
    $region91: #{pose_refine_net.1} parent=1 // pred_check_branch
      %216 = sbr.rel (0) target = $region93
    $region92: #{pose_refine_net.1} parent=1 // pred_region
      %217 = dma.done [#allocation11], 64
    $region93: #{pose_refine_net.1} parent=1 // pred_fallthru
      _
    // Predicated region
    $region94: #{pose_refine_net.1} parent=1 // pred_check
      _
    $region95: #{pose_refine_net.1} parent=1 // pred_check_branch
      %219 = sbr.rel (0) target = $region97
    $region96: #{pose_refine_net.1} parent=1 // pred_region
      %220 = dma.done [#allocation14], 32768
    $region97: #{pose_refine_net.1} parent=1 // pred_fallthru
      _
    // Predicated region
    $region98: #{pose_refine_net.1} parent=1 // pred_check
      _
    $region99: #{pose_refine_net.1} parent=1 // pred_check_branch
      %222 = sbr.rel (0) target = $region101
    $region100: #{pose_refine_net.1} parent=1 // pred_region
      %223 = dma.done [#allocation14], 128
    $region101: #{pose_refine_net.1} parent=1 // pred_fallthru
      _
    // Predicated region
    $region102: #{pose_refine_net.1} parent=1 // pred_check
      _
    $region103: #{pose_refine_net.1} parent=1 // pred_check_branch
      %225 = sbr.rel (0) target = $region105
    $region104: #{pose_refine_net.1} parent=1 // pred_region
      %226 = dma.done [#allocation17], 65536
    $region105: #{pose_refine_net.1} parent=1 // pred_fallthru
      _
    // Predicated region
    $region106: #{pose_refine_net.1} parent=1 // pred_check
      _
    $region107: #{pose_refine_net.1} parent=1 // pred_check_branch
      %228 = sbr.rel (0) target = $region109
    $region108: #{pose_refine_net.1} parent=1 // pred_region
      %229 = dma.done [#allocation17], 128
    $region109: #{pose_refine_net.1} parent=1 // pred_fallthru
      _
    // Predicated region
    $region110: #{pose_refine_net.1} parent=1 // pred_check
      _
    $region111: #{pose_refine_net.1} parent=1 // pred_check_branch
      %231 = sbr.rel (0) target = $region113
    $region112: #{pose_refine_net.1} parent=1 // pred_region
      %232 = dma.done [#allocation20], 16384
    $region113: #{pose_refine_net.1} parent=1 // pred_fallthru
      _
    // Predicated region
    $region114: #{pose_refine_net.1} parent=1 // pred_check
      _
    $region115: #{pose_refine_net.1} parent=1 // pred_check_branch
      %234 = sbr.rel (0) target = $region117
    $region116: #{pose_refine_net.1} parent=1 // pred_region
      %235 = dma.done [#allocation20], 32
    $region117: #{pose_refine_net.1} parent=1 // pred_fallthru
      _
    // Predicated region
    $region118: #{pose_refine_net.1} parent=1 // pred_check
      _
    $region119: #{pose_refine_net.1} parent=1 // pred_check_branch
      %237 = sbr.rel (0) target = $region121
    $region120: #{pose_refine_net.1} parent=1 // pred_region
      %238 = dma.done [#allocation23], 2048
    $region121: #{pose_refine_net.1} parent=1 // pred_fallthru
      _
    // Predicated region
    $region122: #{pose_refine_net.1} parent=1 // pred_check
      _
    $region123: #{pose_refine_net.1} parent=1 // pred_check_branch
      %240 = sbr.rel (0) target = $region125
    $region124: #{pose_refine_net.1} parent=1 // pred_region
      %241 = dma.done [#allocation23], 16
    $region125: #{pose_refine_net.1} parent=1 // pred_fallthru
      _
    %v243 = vld [vmem:[%s0] sm:$0xf]
    %v244 = vld [vmem:[%s0 + $0x4] sm:$0xf]
    %v245 = vld [vmem:[%s0 + $0x8] sm:$0xf]
    %v246 = vld [vmem:[%s0 + $0xc] sm:$0xf]
    %v247 = vld [vmem:[%s0 + $0x10] sm:$0xf]
    %v248 = vld [vmem:[%s0 + $0x14] sm:$0xf]
    %v249 = vld [vmem:[%s0 + $0x18] sm:$0xf]
    %v250 = vld [vmem:[%s0 + $0x1c] sm:$0xf]
    %v251 = vld [vmem:[#allocation2] sm:$0xf]
    %v252 = vld [vmem:[#allocation2 + $0x4] sm:$0xf]
    %v253 = vld [vmem:[#allocation2 + $0x8] sm:$0xf]
    %v254 = vld [vmem:[#allocation2 + $0xc] sm:$0xf]
    %v255 = vld [vmem:[#allocation2 + $0x10] sm:$0x3]
    %v256 = vld [vmem:[#allocation4] sm:$0x1]
    %v258 = vlaneseq
    %v259 = vshrl.u32 %v258, 7
    %v260 = vsub.s32 0, %v259
    %v261 = vrot.slane %v256, %v260
    %v271 = vunpack.c.l.b16 %v243
    %v272 = vunpack.c.l.b16 %v244
    %v273 = vunpack.c.l.b16 %v245
    %v274 = vunpack.c.l.b16 %v246
    %v275 = vunpack.c.l.b16 %v247
    %v276 = vunpack.c.l.b16 %v248
    %v277 = vunpack.c.l.b16 %v249
    %v278 = vunpack.c.l.b16 %v250
    %v279 = vpack.c.b16 %v272, %v271
    %v280 = vpack.c.b16 %v274, %v273
    %v281 = vpack.c.b16 %v276, %v275
    %v282 = vpack.c.b16 %v278, %v277
    %v288 = vunpack.c.l.b16 %v251
    %v289 = vunpack.c.l.b16 %v252
    %v290 = vunpack.c.l.b16 %v253
    %v291 = vunpack.c.l.b16 %v254
    %v292 = vunpack.c.l.b16 %v255
    %v293 = vpack.c.b16 %v289, %v288
    %v294 = vpack.c.b16 %v291, %v290
    %v295 = vpack.c.b16 %v292, %v292
    %vm298 = vcmask 285696
    %v300 = vsel %vm298, %v279, 0
    %v303 = vsel %vm298, %v280, 0
    %v306 = vsel %vm298, %v281, 0
    %v309 = vsel %vm298, %v282, 0
    %vm311 = vcmask 1040384
    %vm312 = vcmask 1041408
    %v313 = vsel %vm311, 4294967295, 65535
    %v314 = vsel %vm312, %v313, 0
    %v316 = vand.u32 %v295, %v314
    %318 = vmatprep.subr.bf16.mxu0 0
    %319 = vmatpush1.bf16.msra.mxu0 0
    %320 = vmatprep.subr.bf16.mxu0 0
    %321 = vmatpush1.bf16.msra.mxu0 0
    %322 = vmatprep.subr.bf16.mxu0 0
    %323 = vmatpush1.bf16.msra.mxu0 0
    %324 = vmatprep.subr.bf16.mxu0 0
    %325 = vmatpush1.bf16.msra.mxu0 0
    %326 = vmatprep.subr.bf16.mxu0 0
    %327 = vmatpush1.bf16.msra.mxu0 0
    %328 = vmatprep.subr.bf16.mxu0 0
    %329 = vmatpush1.bf16.msra.mxu0 %v316
    %330 = vmatprep.subr.bf16.mxu0 0
    %331 = vmatpush1.bf16.msra.mxu0 %v294
    %332 = vmatprep.subr.bf16.mxu0 0
    %333 = vmatpush1.bf16.msra.mxu0 %v293
    %334 = vmatprep.subr.bf16.mxu0 0
    %335 = vmatpush2.bf16.msra.mxu0 0
    %336 = vmatprep.subr.bf16.mxu0 0
    %337 = vmatpush2.bf16.msra.mxu0 0
    %338 = vmatprep.subr.bf16.mxu0 0
    %339 = vmatpush2.bf16.msra.mxu0 0
    %340 = vmatprep.subr.bf16.mxu0 0
    %341 = vmatpush2.bf16.msra.mxu0 0
    %342 = vmatprep.subr.bf16.mxu0 0
    %343 = vmatpush2.bf16.msra.mxu0 0
    %344 = vmatprep.subr.bf16.mxu0 0
    %345 = vmatpush2.bf16.msra.mxu0 0
    %346 = vmatprep.subr.bf16.mxu0 0
    %347 = vmatpush2.bf16.msra.mxu0 0
    %348 = vmatprep.subr.bf16.mxu0 0
    %349 = vmatpush2.bf16.msra.mxu0 0
    %350 = vmatprep.mubr.bf16.mxu0 0
    %351 = vmatmul.mubr.bf16.gmra.mxu0 %v300
    %v352 = vpop.f32.mrf.mxu0
    %v353 = vadd.f32 %v261, %v352
    %v354 = vpop.f32.mrf.mxu0
    %v355 = vpop.f32.mrf.mxu0
    %v356 = vadd.f32 %v261, %v355
    %v357 = vpop.f32.mrf.mxu0
    %358 = vmatprep.mubr.bf16.mxu0 0
    %359 = vmatmul.mubr.bf16.gmra.mxu0 %v303
    %v360 = vpop.f32.mrf.mxu0
    %v361 = vadd.f32 %v261, %v360
    %v362 = vpop.f32.mrf.mxu0
    %v363 = vpop.f32.mrf.mxu0
    %v364 = vadd.f32 %v261, %v363
    %v365 = vpop.f32.mrf.mxu0
    %366 = vmatprep.mubr.bf16.mxu0 0
    %367 = vmatmul.mubr.bf16.gmra.mxu0 %v306
    %v368 = vpop.f32.mrf.mxu0
    %v369 = vadd.f32 %v261, %v368
    %v370 = vpop.f32.mrf.mxu0
    %v371 = vpop.f32.mrf.mxu0
    %v372 = vadd.f32 %v261, %v371
    %v373 = vpop.f32.mrf.mxu0
    %374 = vmatprep.mubr.bf16.mxu0 0
    %375 = vmatmul.mubr.bf16.gmra.mxu0 %v309
    %v376 = vpop.f32.mrf.mxu0
    %v377 = vadd.f32 %v261, %v376
    %v378 = vpop.f32.mrf.mxu0
    %v379 = vpop.f32.mrf.mxu0
    %v380 = vadd.f32 %v261, %v379
    %v381 = vpop.f32.mrf.mxu0
    %382 = vdwg.mxu0
    %v383 = vmax.f32 %v353, 0.0
    %v384 = vmax.f32 %v356, 0.0
    %v385 = vmax.f32 %v361, 0.0
    %v386 = vmax.f32 %v364, 0.0
    %v387 = vmax.f32 %v369, 0.0
    %v388 = vmax.f32 %v372, 0.0
    %v389 = vmax.f32 %v377, 0.0
    %v390 = vmax.f32 %v380, 0.0
    %v391 = vpack.c.bf16 %v384, %v383
    %v392 = vpack.c.bf16 %v386, %v385
    %v393 = vpack.c.bf16 %v388, %v387
    %v394 = vpack.c.bf16 %v390, %v389
    %v395 = vld [vmem:[#allocation6] sm:$0xff]
    %v396 = vld [vmem:[#allocation6 + $0x8] sm:$0xff]
    %v397 = vld [vmem:[#allocation6 + $0x10] sm:$0xff]
    %v398 = vld [vmem:[#allocation6 + $0x18] sm:$0xff]
    %v399 = vld [vmem:[#allocation6 + $0x20] sm:$0xff]
    %v400 = vld [vmem:[#allocation6 + $0x28] sm:$0xff]
    %v401 = vld [vmem:[#allocation6 + $0x30] sm:$0xff]
    %v402 = vld [vmem:[#allocation6 + $0x38] sm:$0xff]
    %v403 = vld [vmem:[#allocation6 + $0x40] sm:$0xff]
    %v404 = vld [vmem:[#allocation6 + $0x48] sm:$0xff]
    %v405 = vld [vmem:[#allocation6 + $0x50] sm:$0xff]
    %v406 = vld [vmem:[#allocation6 + $0x58] sm:$0xff]
    %v407 = vld [vmem:[#allocation6 + $0x60] sm:$0xff]
    %v408 = vld [vmem:[#allocation6 + $0x68] sm:$0xff]
    %v409 = vld [vmem:[#allocation6 + $0x70] sm:$0xff]
    %v410 = vld [vmem:[#allocation6 + $0x78] sm:$0xff]
    %v411 = vld [vmem:[#allocation7] sm:$0x3]
    %v413 = vlaneseq
    %v414 = vshrl.u32 %v413, 7
    %v415 = vsub.s32 0, %v414
    %v416 = vrot.slane %v411, %v415
    %v417 = vlaneseq
    %v418 = vshrl.u32 %v417, 7
    %v419 = vsub.s32 1, %v418
    %v420 = vrot.slane %v411, %v419
    %v439 = vunpack.c.l.b16 %v395
    %v440 = vunpack.c.h.b16 %v395
    %v441 = vunpack.c.l.b16 %v396
    %v442 = vunpack.c.h.b16 %v396
    %v443 = vunpack.c.l.b16 %v397
    %v444 = vunpack.c.h.b16 %v397
    %v445 = vunpack.c.l.b16 %v398
    %v446 = vunpack.c.h.b16 %v398
    %v447 = vunpack.c.l.b16 %v399
    %v448 = vunpack.c.h.b16 %v399
    %v449 = vunpack.c.l.b16 %v400
    %v450 = vunpack.c.h.b16 %v400
    %v451 = vunpack.c.l.b16 %v401
    %v452 = vunpack.c.h.b16 %v401
    %v453 = vunpack.c.l.b16 %v402
    %v454 = vunpack.c.h.b16 %v402
    %v455 = vunpack.c.l.b16 %v403
    %v456 = vunpack.c.h.b16 %v403
    %v457 = vunpack.c.l.b16 %v404
    %v458 = vunpack.c.h.b16 %v404
    %v459 = vunpack.c.l.b16 %v405
    %v460 = vunpack.c.h.b16 %v405
    %v461 = vunpack.c.l.b16 %v406
    %v462 = vunpack.c.h.b16 %v406
    %v463 = vunpack.c.l.b16 %v407
    %v464 = vunpack.c.h.b16 %v407
    %v465 = vunpack.c.l.b16 %v408
    %v466 = vunpack.c.h.b16 %v408
    %v467 = vunpack.c.l.b16 %v409
    %v468 = vunpack.c.h.b16 %v409
    %v469 = vunpack.c.l.b16 %v410
    %v470 = vunpack.c.h.b16 %v410
    %v471 = vpack.c.b16 %v441, %v439
    %v472 = vpack.c.b16 %v442, %v440
    %v473 = vpack.c.b16 %v445, %v443
    %v474 = vpack.c.b16 %v446, %v444
    %v475 = vpack.c.b16 %v449, %v447
    %v476 = vpack.c.b16 %v450, %v448
    %v477 = vpack.c.b16 %v453, %v451
    %v478 = vpack.c.b16 %v454, %v452
    %v479 = vpack.c.b16 %v457, %v455
    %v480 = vpack.c.b16 %v458, %v456
    %v481 = vpack.c.b16 %v461, %v459
    %v482 = vpack.c.b16 %v462, %v460
    %v483 = vpack.c.b16 %v465, %v463
    %v484 = vpack.c.b16 %v466, %v464
    %v485 = vpack.c.b16 %v469, %v467
    %v486 = vpack.c.b16 %v470, %v468
    %503 = vmatprep.subr.bf16.mxu0 %v486
    %504 = vmatpush1.bf16.msra.mxu0 %v485
    %505 = vmatprep.subr.bf16.mxu0 %v484
    %506 = vmatpush1.bf16.msra.mxu0 %v483
    %507 = vmatprep.subr.bf16.mxu0 %v482
    %508 = vmatpush1.bf16.msra.mxu0 %v481
    %509 = vmatprep.subr.bf16.mxu0 %v480
    %510 = vmatpush1.bf16.msra.mxu0 %v479
    %511 = vmatprep.subr.bf16.mxu0 %v478
    %512 = vmatpush1.bf16.msra.mxu0 %v477
    %513 = vmatprep.subr.bf16.mxu0 %v476
    %514 = vmatpush1.bf16.msra.mxu0 %v475
    %515 = vmatprep.subr.bf16.mxu0 %v474
    %516 = vmatpush1.bf16.msra.mxu0 %v473
    %517 = vmatprep.subr.bf16.mxu0 %v472
    %518 = vmatpush1.bf16.msra.mxu0 %v471
    %519 = vmatprep.subr.bf16.mxu0 0
    %520 = vmatpush2.bf16.msra.mxu0 0
    %521 = vmatprep.subr.bf16.mxu0 0
    %522 = vmatpush2.bf16.msra.mxu0 0
    %523 = vmatprep.subr.bf16.mxu0 0
    %524 = vmatpush2.bf16.msra.mxu0 0
    %525 = vmatprep.subr.bf16.mxu0 0
    %526 = vmatpush2.bf16.msra.mxu0 0
    %527 = vmatprep.subr.bf16.mxu0 0
    %528 = vmatpush2.bf16.msra.mxu0 0
    %529 = vmatprep.subr.bf16.mxu0 0
    %530 = vmatpush2.bf16.msra.mxu0 0
    %531 = vmatprep.subr.bf16.mxu0 0
    %532 = vmatpush2.bf16.msra.mxu0 0
    %533 = vmatprep.subr.bf16.mxu0 0
    %534 = vmatpush2.bf16.msra.mxu0 0
    %535 = vmatprep.mubr.bf16.mxu0 0
    %536 = vmatmul.mubr.bf16.gmra.mxu0 %v391
    %v537 = vpop.f32.mrf.mxu0
    %v538 = vadd.f32 %v416, %v537
    %v539 = vpop.f32.mrf.mxu0
    %v540 = vadd.f32 %v420, %v539
    %v541 = vpop.f32.mrf.mxu0
    %v542 = vadd.f32 %v416, %v541
    %v543 = vpop.f32.mrf.mxu0
    %v544 = vadd.f32 %v420, %v543
    %545 = vmatprep.mubr.bf16.mxu0 0
    %546 = vmatmul.mubr.bf16.gmra.mxu0 %v392
    %v547 = vpop.f32.mrf.mxu0
    %v548 = vadd.f32 %v416, %v547
    %v549 = vpop.f32.mrf.mxu0
    %v550 = vadd.f32 %v420, %v549
    %v551 = vpop.f32.mrf.mxu0
    %v552 = vadd.f32 %v416, %v551
    %v553 = vpop.f32.mrf.mxu0
    %v554 = vadd.f32 %v420, %v553
    %555 = vmatprep.mubr.bf16.mxu0 0
    %556 = vmatmul.mubr.bf16.gmra.mxu0 %v393
    %v557 = vpop.f32.mrf.mxu0
    %v558 = vadd.f32 %v416, %v557
    %v559 = vpop.f32.mrf.mxu0
    %v560 = vadd.f32 %v420, %v559
    %v561 = vpop.f32.mrf.mxu0
    %v562 = vadd.f32 %v416, %v561
    %v563 = vpop.f32.mrf.mxu0
    %v564 = vadd.f32 %v420, %v563
    %565 = vmatprep.mubr.bf16.mxu0 0
    %566 = vmatmul.mubr.bf16.gmra.mxu0 %v394
    %v567 = vpop.f32.mrf.mxu0
    %v568 = vadd.f32 %v416, %v567
    %v569 = vpop.f32.mrf.mxu0
    %v570 = vadd.f32 %v420, %v569
    %v571 = vpop.f32.mrf.mxu0
    %v572 = vadd.f32 %v416, %v571
    %v573 = vpop.f32.mrf.mxu0
    %v574 = vadd.f32 %v420, %v573
    %575 = vdwg.mxu0
    %v576 = vmax.f32 %v538, 0.0
    %v577 = vmax.f32 %v540, 0.0
    %v578 = vmax.f32 %v542, 0.0
    %v579 = vmax.f32 %v544, 0.0
    %v580 = vmax.f32 %v548, 0.0
    %v581 = vmax.f32 %v550, 0.0
    %v582 = vmax.f32 %v552, 0.0
    %v583 = vmax.f32 %v554, 0.0
    %v584 = vmax.f32 %v558, 0.0
    %v585 = vmax.f32 %v560, 0.0
    %v586 = vmax.f32 %v562, 0.0
    %v587 = vmax.f32 %v564, 0.0
    %v588 = vmax.f32 %v568, 0.0
    %v589 = vmax.f32 %v570, 0.0
    %v590 = vmax.f32 %v572, 0.0
    %v591 = vmax.f32 %v574, 0.0
    %v592 = vpack.c.bf16 %v578, %v576
    %v593 = vpack.c.bf16 %v579, %v577
    %v594 = vpack.c.bf16 %v582, %v580
    %v595 = vpack.c.bf16 %v583, %v581
    %v596 = vpack.c.bf16 %v586, %v584
    %v597 = vpack.c.bf16 %v587, %v585
    %v598 = vpack.c.bf16 %v590, %v588
    %v599 = vpack.c.bf16 %v591, %v589
    %v600 = vld [vmem:[#allocation9] sm:$0xff]
    %v601 = vld [vmem:[#allocation9 + $0x8] sm:$0xff]
    %v602 = vld [vmem:[#allocation9 + $0x10] sm:$0xff]
    %v603 = vld [vmem:[#allocation9 + $0x18] sm:$0xff]
    %v604 = vld [vmem:[#allocation9 + $0x20] sm:$0xff]
    %v605 = vld [vmem:[#allocation9 + $0x28] sm:$0xff]
    %v606 = vld [vmem:[#allocation9 + $0x30] sm:$0xff]
    %v607 = vld [vmem:[#allocation9 + $0x38] sm:$0xff]
    %v608 = vld [vmem:[#allocation9 + $0x40] sm:$0xff]
    %v609 = vld [vmem:[#allocation9 + $0x48] sm:$0xff]
    %v610 = vld [vmem:[#allocation9 + $0x50] sm:$0xff]
    %v611 = vld [vmem:[#allocation9 + $0x58] sm:$0xff]
    %v612 = vld [vmem:[#allocation9 + $0x60] sm:$0xff]
    %v613 = vld [vmem:[#allocation9 + $0x68] sm:$0xff]
    %v614 = vld [vmem:[#allocation9 + $0x70] sm:$0xff]
    %v615 = vld [vmem:[#allocation9 + $0x78] sm:$0xff]
    %v616 = vld [vmem:[#allocation9 + $0x80] sm:$0xff]
    %v617 = vld [vmem:[#allocation9 + $0x88] sm:$0xff]
    %v618 = vld [vmem:[#allocation9 + $0x90] sm:$0xff]
    %v619 = vld [vmem:[#allocation9 + $0x98] sm:$0xff]
    %v620 = vld [vmem:[#allocation9 + $0xa0] sm:$0xff]
    %v621 = vld [vmem:[#allocation9 + $0xa8] sm:$0xff]
    %v622 = vld [vmem:[#allocation9 + $0xb0] sm:$0xff]
    %v623 = vld [vmem:[#allocation9 + $0xb8] sm:$0xff]
    %v624 = vld [vmem:[#allocation9 + $0xc0] sm:$0xff]
    %v625 = vld [vmem:[#allocation9 + $0xc8] sm:$0xff]
    %v626 = vld [vmem:[#allocation9 + $0xd0] sm:$0xff]
    %v627 = vld [vmem:[#allocation9 + $0xd8] sm:$0xff]
    %v628 = vld [vmem:[#allocation9 + $0xe0] sm:$0xff]
    %v629 = vld [vmem:[#allocation9 + $0xe8] sm:$0xff]
    %v630 = vld [vmem:[#allocation9 + $0xf0] sm:$0xff]
    %v631 = vld [vmem:[#allocation9 + $0xf8] sm:$0xff]
    %v632 = vld [vmem:[#allocation10] sm:$0xff]
    %v633 = vld [vmem:[#allocation10 + $0x8] sm:$0xff]
    %v634 = vld [vmem:[#allocation10 + $0x10] sm:$0xff]
    %v635 = vld [vmem:[#allocation10 + $0x18] sm:$0xff]
    %v636 = vld [vmem:[#allocation10 + $0x20] sm:$0xff]
    %v637 = vld [vmem:[#allocation10 + $0x28] sm:$0xff]
    %v638 = vld [vmem:[#allocation10 + $0x30] sm:$0xff]
    %v639 = vld [vmem:[#allocation10 + $0x38] sm:$0xff]
    %v640 = vld [vmem:[#allocation10 + $0x40] sm:$0xff]
    %v641 = vld [vmem:[#allocation10 + $0x48] sm:$0xff]
    %v642 = vld [vmem:[#allocation10 + $0x50] sm:$0xff]
    %v643 = vld [vmem:[#allocation10 + $0x58] sm:$0xff]
    %v644 = vld [vmem:[#allocation10 + $0x60] sm:$0xff]
    %v645 = vld [vmem:[#allocation10 + $0x68] sm:$0xff]
    %v646 = vld [vmem:[#allocation10 + $0x70] sm:$0xff]
    %v647 = vld [vmem:[#allocation10 + $0x78] sm:$0xff]
    %v648 = vld [vmem:[#allocation10 + $0x80] sm:$0xff]
    %v649 = vld [vmem:[#allocation10 + $0x88] sm:$0xff]
    %v650 = vld [vmem:[#allocation10 + $0x90] sm:$0xff]
    %v651 = vld [vmem:[#allocation10 + $0x98] sm:$0xff]
    %v652 = vld [vmem:[#allocation10 + $0xa0] sm:$0xff]
    %v653 = vld [vmem:[#allocation10 + $0xa8] sm:$0xff]
    %v654 = vld [vmem:[#allocation10 + $0xb0] sm:$0xff]
    %v655 = vld [vmem:[#allocation10 + $0xb8] sm:$0xff]
    %v656 = vld [vmem:[#allocation10 + $0xc0] sm:$0xff]
    %v657 = vld [vmem:[#allocation10 + $0xc8] sm:$0xff]
    %v658 = vld [vmem:[#allocation10 + $0xd0] sm:$0xff]
    %v659 = vld [vmem:[#allocation10 + $0xd8] sm:$0xff]
    %v660 = vld [vmem:[#allocation10 + $0xe0] sm:$0xff]
    %v661 = vld [vmem:[#allocation10 + $0xe8] sm:$0xff]
    %v662 = vld [vmem:[#allocation10 + $0xf0] sm:$0xff]
    %v663 = vld [vmem:[#allocation10 + $0xf8] sm:$0xff]
    %v664 = vld [vmem:[#allocation10 + $0x100] sm:$0xff]
    %v665 = vld [vmem:[#allocation10 + $0x108] sm:$0xff]
    %v666 = vld [vmem:[#allocation10 + $0x110] sm:$0xff]
    %v667 = vld [vmem:[#allocation10 + $0x118] sm:$0xff]
    %v668 = vld [vmem:[#allocation10 + $0x120] sm:$0xff]
    %v669 = vld [vmem:[#allocation10 + $0x128] sm:$0xff]
    %v670 = vld [vmem:[#allocation10 + $0x130] sm:$0xff]
    %v671 = vld [vmem:[#allocation10 + $0x138] sm:$0xff]
    %v672 = vld [vmem:[#allocation10 + $0x140] sm:$0xff]
    %v673 = vld [vmem:[#allocation10 + $0x148] sm:$0xff]
    %v674 = vld [vmem:[#allocation10 + $0x150] sm:$0xff]
    %v675 = vld [vmem:[#allocation10 + $0x158] sm:$0xff]
    %v676 = vld [vmem:[#allocation10 + $0x160] sm:$0xff]
    %v677 = vld [vmem:[#allocation10 + $0x168] sm:$0xff]
    %v678 = vld [vmem:[#allocation10 + $0x170] sm:$0xff]
    %v679 = vld [vmem:[#allocation10 + $0x178] sm:$0xff]
    %v680 = vld [vmem:[#allocation10 + $0x180] sm:$0xff]
    %v681 = vld [vmem:[#allocation10 + $0x188] sm:$0xff]
    %v682 = vld [vmem:[#allocation10 + $0x190] sm:$0xff]
    %v683 = vld [vmem:[#allocation10 + $0x198] sm:$0xff]
    %v684 = vld [vmem:[#allocation10 + $0x1a0] sm:$0xff]
    %v685 = vld [vmem:[#allocation10 + $0x1a8] sm:$0xff]
    %v686 = vld [vmem:[#allocation10 + $0x1b0] sm:$0xff]
    %v687 = vld [vmem:[#allocation10 + $0x1b8] sm:$0xff]
    %v688 = vld [vmem:[#allocation10 + $0x1c0] sm:$0xff]
    %v689 = vld [vmem:[#allocation10 + $0x1c8] sm:$0xff]
    %v690 = vld [vmem:[#allocation10 + $0x1d0] sm:$0xff]
    %v691 = vld [vmem:[#allocation10 + $0x1d8] sm:$0xff]
    %v692 = vld [vmem:[#allocation10 + $0x1e0] sm:$0xff]
    %v693 = vld [vmem:[#allocation10 + $0x1e8] sm:$0xff]
    %v694 = vld [vmem:[#allocation10 + $0x1f0] sm:$0xff]
    %v695 = vld [vmem:[#allocation10 + $0x1f8] sm:$0xff]
    %v760 = vunpack.c.l.b16 %v632
    %v761 = vunpack.c.h.b16 %v632
    %v762 = vunpack.c.l.b16 %v633
    %v763 = vunpack.c.h.b16 %v633
    %v764 = vunpack.c.l.b16 %v634
    %v765 = vunpack.c.h.b16 %v634
    %v766 = vunpack.c.l.b16 %v635
    %v767 = vunpack.c.h.b16 %v635
    %v768 = vunpack.c.l.b16 %v636
    %v769 = vunpack.c.h.b16 %v636
    %v770 = vunpack.c.l.b16 %v637
    %v771 = vunpack.c.h.b16 %v637
    %v772 = vunpack.c.l.b16 %v638
    %v773 = vunpack.c.h.b16 %v638
    %v774 = vunpack.c.l.b16 %v639
    %v775 = vunpack.c.h.b16 %v639
    %v776 = vunpack.c.l.b16 %v640
    %v777 = vunpack.c.h.b16 %v640
    %v778 = vunpack.c.l.b16 %v641
    %v779 = vunpack.c.h.b16 %v641
    %v780 = vunpack.c.l.b16 %v642
    %v781 = vunpack.c.h.b16 %v642
    %v782 = vunpack.c.l.b16 %v643
    %v783 = vunpack.c.h.b16 %v643
    %v784 = vunpack.c.l.b16 %v644
    %v785 = vunpack.c.h.b16 %v644
    %v786 = vunpack.c.l.b16 %v645
    %v787 = vunpack.c.h.b16 %v645
    %v788 = vunpack.c.l.b16 %v646
    %v789 = vunpack.c.h.b16 %v646
    %v790 = vunpack.c.l.b16 %v647
    %v791 = vunpack.c.h.b16 %v647
    %v792 = vunpack.c.l.b16 %v648
    %v793 = vunpack.c.h.b16 %v648
    %v794 = vunpack.c.l.b16 %v649
    %v795 = vunpack.c.h.b16 %v649
    %v796 = vunpack.c.l.b16 %v650
    %v797 = vunpack.c.h.b16 %v650
    %v798 = vunpack.c.l.b16 %v651
    %v799 = vunpack.c.h.b16 %v651
    %v800 = vunpack.c.l.b16 %v652
    %v801 = vunpack.c.h.b16 %v652
    %v802 = vunpack.c.l.b16 %v653
    %v803 = vunpack.c.h.b16 %v653
    %v804 = vunpack.c.l.b16 %v654
    %v805 = vunpack.c.h.b16 %v654
    %v806 = vunpack.c.l.b16 %v655
    %v807 = vunpack.c.h.b16 %v655
    %v808 = vunpack.c.l.b16 %v656
    %v809 = vunpack.c.h.b16 %v656
    %v810 = vunpack.c.l.b16 %v657
    %v811 = vunpack.c.h.b16 %v657
    %v812 = vunpack.c.l.b16 %v658
    %v813 = vunpack.c.h.b16 %v658
    %v814 = vunpack.c.l.b16 %v659
    %v815 = vunpack.c.h.b16 %v659
    %v816 = vunpack.c.l.b16 %v660
    %v817 = vunpack.c.h.b16 %v660
    %v818 = vunpack.c.l.b16 %v661
    %v819 = vunpack.c.h.b16 %v661
    %v820 = vunpack.c.l.b16 %v662
    %v821 = vunpack.c.h.b16 %v662
    %v822 = vunpack.c.l.b16 %v663
    %v823 = vunpack.c.h.b16 %v663
    %v824 = vunpack.c.l.b16 %v664
    %v825 = vunpack.c.h.b16 %v664
    %v826 = vunpack.c.l.b16 %v665
    %v827 = vunpack.c.h.b16 %v665
    %v828 = vunpack.c.l.b16 %v666
    %v829 = vunpack.c.h.b16 %v666
    %v830 = vunpack.c.l.b16 %v667
    %v831 = vunpack.c.h.b16 %v667
    %v832 = vunpack.c.l.b16 %v668
    %v833 = vunpack.c.h.b16 %v668
    %v834 = vunpack.c.l.b16 %v669
    %v835 = vunpack.c.h.b16 %v669
    %v836 = vunpack.c.l.b16 %v670
    %v837 = vunpack.c.h.b16 %v670
    %v838 = vunpack.c.l.b16 %v671
    %v839 = vunpack.c.h.b16 %v671
    %v840 = vunpack.c.l.b16 %v672
    %v841 = vunpack.c.h.b16 %v672
    %v842 = vunpack.c.l.b16 %v673
    %v843 = vunpack.c.h.b16 %v673
    %v844 = vunpack.c.l.b16 %v674
    %v845 = vunpack.c.h.b16 %v674
    %v846 = vunpack.c.l.b16 %v675
    %v847 = vunpack.c.h.b16 %v675
    %v848 = vunpack.c.l.b16 %v676
    %v849 = vunpack.c.h.b16 %v676
    %v850 = vunpack.c.l.b16 %v677
    %v851 = vunpack.c.h.b16 %v677
    %v852 = vunpack.c.l.b16 %v678
    %v853 = vunpack.c.h.b16 %v678
    %v854 = vunpack.c.l.b16 %v679
    %v855 = vunpack.c.h.b16 %v679
    %v856 = vunpack.c.l.b16 %v680
    %v857 = vunpack.c.h.b16 %v680
    %v858 = vunpack.c.l.b16 %v681
    %v859 = vunpack.c.h.b16 %v681
    %v860 = vunpack.c.l.b16 %v682
    %v861 = vunpack.c.h.b16 %v682
    %v862 = vunpack.c.l.b16 %v683
    %v863 = vunpack.c.h.b16 %v683
    %v864 = vunpack.c.l.b16 %v684
    %v865 = vunpack.c.h.b16 %v684
    %v866 = vunpack.c.l.b16 %v685
    %v867 = vunpack.c.h.b16 %v685
    %v868 = vunpack.c.l.b16 %v686
    %v869 = vunpack.c.h.b16 %v686
    %v870 = vunpack.c.l.b16 %v687
    %v871 = vunpack.c.h.b16 %v687
    %v872 = vunpack.c.l.b16 %v688
    %v873 = vunpack.c.h.b16 %v688
    %v874 = vunpack.c.l.b16 %v689
    %v875 = vunpack.c.h.b16 %v689
    %v876 = vunpack.c.l.b16 %v690
    %v877 = vunpack.c.h.b16 %v690
    %v878 = vunpack.c.l.b16 %v691
    %v879 = vunpack.c.h.b16 %v691
    %v880 = vunpack.c.l.b16 %v692
    %v881 = vunpack.c.h.b16 %v692
    %v882 = vunpack.c.l.b16 %v693
    %v883 = vunpack.c.h.b16 %v693
    %v884 = vunpack.c.l.b16 %v694
    %v885 = vunpack.c.h.b16 %v694
    %v886 = vunpack.c.l.b16 %v695
    %v887 = vunpack.c.h.b16 %v695
    %v888 = vpack.c.b16 %v764, %v760
    %v889 = vpack.c.b16 %v765, %v761
    %v890 = vpack.c.b16 %v766, %v762
    %v891 = vpack.c.b16 %v767, %v763
    %v892 = vpack.c.b16 %v772, %v768
    %v893 = vpack.c.b16 %v773, %v769
    %v894 = vpack.c.b16 %v774, %v770
    %v895 = vpack.c.b16 %v775, %v771
    %v896 = vpack.c.b16 %v780, %v776
    %v897 = vpack.c.b16 %v781, %v777
    %v898 = vpack.c.b16 %v782, %v778
    %v899 = vpack.c.b16 %v783, %v779
    %v900 = vpack.c.b16 %v788, %v784
    %v901 = vpack.c.b16 %v789, %v785
    %v902 = vpack.c.b16 %v790, %v786
    %v903 = vpack.c.b16 %v791, %v787
    %v904 = vpack.c.b16 %v796, %v792
    %v905 = vpack.c.b16 %v797, %v793
    %v906 = vpack.c.b16 %v798, %v794
    %v907 = vpack.c.b16 %v799, %v795
    %v908 = vpack.c.b16 %v804, %v800
    %v909 = vpack.c.b16 %v805, %v801
    %v910 = vpack.c.b16 %v806, %v802
    %v911 = vpack.c.b16 %v807, %v803
    %v912 = vpack.c.b16 %v812, %v808
    %v913 = vpack.c.b16 %v813, %v809
    %v914 = vpack.c.b16 %v814, %v810
    %v915 = vpack.c.b16 %v815, %v811
    %v916 = vpack.c.b16 %v820, %v816
    %v917 = vpack.c.b16 %v821, %v817
    %v918 = vpack.c.b16 %v822, %v818
    %v919 = vpack.c.b16 %v823, %v819
    %v920 = vpack.c.b16 %v828, %v824
    %v921 = vpack.c.b16 %v829, %v825
    %v922 = vpack.c.b16 %v830, %v826
    %v923 = vpack.c.b16 %v831, %v827
    %v924 = vpack.c.b16 %v836, %v832
    %v925 = vpack.c.b16 %v837, %v833
    %v926 = vpack.c.b16 %v838, %v834
    %v927 = vpack.c.b16 %v839, %v835
    %v928 = vpack.c.b16 %v844, %v840
    %v929 = vpack.c.b16 %v845, %v841
    %v930 = vpack.c.b16 %v846, %v842
    %v931 = vpack.c.b16 %v847, %v843
    %v932 = vpack.c.b16 %v852, %v848
    %v933 = vpack.c.b16 %v853, %v849
    %v934 = vpack.c.b16 %v854, %v850
    %v935 = vpack.c.b16 %v855, %v851
    %v936 = vpack.c.b16 %v860, %v856
    %v937 = vpack.c.b16 %v861, %v857
    %v938 = vpack.c.b16 %v862, %v858
    %v939 = vpack.c.b16 %v863, %v859
    %v940 = vpack.c.b16 %v868, %v864
    %v941 = vpack.c.b16 %v869, %v865
    %v942 = vpack.c.b16 %v870, %v866
    %v943 = vpack.c.b16 %v871, %v867
    %v944 = vpack.c.b16 %v876, %v872
    %v945 = vpack.c.b16 %v877, %v873
    %v946 = vpack.c.b16 %v878, %v874
    %v947 = vpack.c.b16 %v879, %v875
    %v948 = vpack.c.b16 %v884, %v880
    %v949 = vpack.c.b16 %v885, %v881
    %v950 = vpack.c.b16 %v886, %v882
    %v951 = vpack.c.b16 %v887, %v883
    %1016 = vmatprep.subr.bf16.mxu0 %v917
    %1017 = vmatpush1.bf16.msra.mxu0 %v916
    %1018 = vmatprep.subr.bf16.mxu0 %v913
    %1019 = vmatpush1.bf16.msra.mxu0 %v912
    %1020 = vmatprep.subr.bf16.mxu0 %v909
    %1021 = vmatpush1.bf16.msra.mxu0 %v908
    %1022 = vmatprep.subr.bf16.mxu0 %v905
    %1023 = vmatpush1.bf16.msra.mxu0 %v904
    %1024 = vmatprep.subr.bf16.mxu0 %v901
    %1025 = vmatpush1.bf16.msra.mxu0 %v900
    %1026 = vmatprep.subr.bf16.mxu0 %v897
    %1027 = vmatpush1.bf16.msra.mxu0 %v896
    %1028 = vmatprep.subr.bf16.mxu0 %v893
    %1029 = vmatpush1.bf16.msra.mxu0 %v892
    %1030 = vmatprep.subr.bf16.mxu0 %v889
    %1031 = vmatpush1.bf16.msra.mxu0 %v888
    %1032 = vmatprep.subr.bf16.mxu0 %v949
    %1033 = vmatpush2.bf16.msra.mxu0 %v948
    %1034 = vmatprep.subr.bf16.mxu0 %v945
    %1035 = vmatpush2.bf16.msra.mxu0 %v944
    %1036 = vmatprep.subr.bf16.mxu0 %v941
    %1037 = vmatpush2.bf16.msra.mxu0 %v940
    %1038 = vmatprep.subr.bf16.mxu0 %v937
    %1039 = vmatpush2.bf16.msra.mxu0 %v936
    %1040 = vmatprep.subr.bf16.mxu0 %v933
    %1041 = vmatpush2.bf16.msra.mxu0 %v932
    %1042 = vmatprep.subr.bf16.mxu0 %v929
    %1043 = vmatpush2.bf16.msra.mxu0 %v928
    %1044 = vmatprep.subr.bf16.mxu0 %v925
    %1045 = vmatpush2.bf16.msra.mxu0 %v924
    %1046 = vmatprep.subr.bf16.mxu0 %v921
    %1047 = vmatpush2.bf16.msra.mxu0 %v920
    %1048 = vmatprep.mubr.bf16.mxu0 %v593
    %1049 = vmatmul.mubr.bf16.gmra.mxu0 %v592
    %v1050 = vpop.f32.mrf.mxu0
    %v1051 = vadd.f32 0.0, %v1050
    %v1052 = vpop.f32.mrf.mxu0
    %v1053 = vadd.f32 0.0, %v1052
    %v1054 = vpop.f32.mrf.mxu0
    %v1055 = vadd.f32 0.0, %v1054
    %v1056 = vpop.f32.mrf.mxu0
    %v1057 = vadd.f32 0.0, %v1056
    %1058 = vmatprep.mubr.bf16.mxu0 %v595
    %1059 = vmatmul.mubr.bf16.gmra.mxu0 %v594
    %v1060 = vpop.f32.mrf.mxu0
    %v1061 = vadd.f32 0.0, %v1060
    %v1062 = vpop.f32.mrf.mxu0
    %v1063 = vadd.f32 0.0, %v1062
    %v1064 = vpop.f32.mrf.mxu0
    %v1065 = vadd.f32 0.0, %v1064
    %v1066 = vpop.f32.mrf.mxu0
    %v1067 = vadd.f32 0.0, %v1066
    %1068 = vmatprep.mubr.bf16.mxu0 %v597
    %1069 = vmatmul.mubr.bf16.gmra.mxu0 %v596
    %v1070 = vpop.f32.mrf.mxu0
    %v1071 = vadd.f32 0.0, %v1070
    %v1072 = vpop.f32.mrf.mxu0
    %v1073 = vadd.f32 0.0, %v1072
    %v1074 = vpop.f32.mrf.mxu0
    %v1075 = vadd.f32 0.0, %v1074
    %v1076 = vpop.f32.mrf.mxu0
    %v1077 = vadd.f32 0.0, %v1076
    %1078 = vmatprep.mubr.bf16.mxu0 %v599
    %1079 = vmatmul.mubr.bf16.gmra.mxu0 %v598
    %v1080 = vpop.f32.mrf.mxu0
    %v1081 = vadd.f32 0.0, %v1080
    %v1082 = vpop.f32.mrf.mxu0
    %v1083 = vadd.f32 0.0, %v1082
    %v1084 = vpop.f32.mrf.mxu0
    %v1085 = vadd.f32 0.0, %v1084
    %v1086 = vpop.f32.mrf.mxu0
    %v1087 = vadd.f32 0.0, %v1086
    %1088 = vdwg.mxu0
    %1089 = vmatprep.subr.bf16.mxu0 %v919
    %1090 = vmatpush1.bf16.msra.mxu0 %v918
    %1091 = vmatprep.subr.bf16.mxu0 %v915
    %1092 = vmatpush1.bf16.msra.mxu0 %v914
    %1093 = vmatprep.subr.bf16.mxu0 %v911
    %1094 = vmatpush1.bf16.msra.mxu0 %v910
    %1095 = vmatprep.subr.bf16.mxu0 %v907
    %1096 = vmatpush1.bf16.msra.mxu0 %v906
    %1097 = vmatprep.subr.bf16.mxu0 %v903
    %1098 = vmatpush1.bf16.msra.mxu0 %v902
    %1099 = vmatprep.subr.bf16.mxu0 %v899
    %1100 = vmatpush1.bf16.msra.mxu0 %v898
    %1101 = vmatprep.subr.bf16.mxu0 %v895
    %1102 = vmatpush1.bf16.msra.mxu0 %v894
    %1103 = vmatprep.subr.bf16.mxu0 %v891
    %1104 = vmatpush1.bf16.msra.mxu0 %v890
    %1105 = vmatprep.subr.bf16.mxu0 %v951
    %1106 = vmatpush2.bf16.msra.mxu0 %v950
    %1107 = vmatprep.subr.bf16.mxu0 %v947
    %1108 = vmatpush2.bf16.msra.mxu0 %v946
    %1109 = vmatprep.subr.bf16.mxu0 %v943
    %1110 = vmatpush2.bf16.msra.mxu0 %v942
    %1111 = vmatprep.subr.bf16.mxu0 %v939
    %1112 = vmatpush2.bf16.msra.mxu0 %v938
    %1113 = vmatprep.subr.bf16.mxu0 %v935
    %1114 = vmatpush2.bf16.msra.mxu0 %v934
    %1115 = vmatprep.subr.bf16.mxu0 %v931
    %1116 = vmatpush2.bf16.msra.mxu0 %v930
    %1117 = vmatprep.subr.bf16.mxu0 %v927
    %1118 = vmatpush2.bf16.msra.mxu0 %v926
    %1119 = vmatprep.subr.bf16.mxu0 %v923
    %1120 = vmatpush2.bf16.msra.mxu0 %v922
    %1121 = vmatprep.mubr.bf16.mxu0 %v593
    %1122 = vmatmul.mubr.bf16.gmra.mxu0 %v592
    %v1123 = vpop.f32.mrf.mxu0
    %v1124 = vadd.f32 0.0, %v1123
    %v1125 = vpop.f32.mrf.mxu0
    %v1126 = vadd.f32 0.0, %v1125
    %v1127 = vpop.f32.mrf.mxu0
    %v1128 = vadd.f32 0.0, %v1127
    %v1129 = vpop.f32.mrf.mxu0
    %v1130 = vadd.f32 0.0, %v1129
    %1131 = vmatprep.mubr.bf16.mxu0 %v595
    %1132 = vmatmul.mubr.bf16.gmra.mxu0 %v594
    %v1133 = vpop.f32.mrf.mxu0
    %v1134 = vadd.f32 0.0, %v1133
    %v1135 = vpop.f32.mrf.mxu0
    %v1136 = vadd.f32 0.0, %v1135
    %v1137 = vpop.f32.mrf.mxu0
    %v1138 = vadd.f32 0.0, %v1137
    %v1139 = vpop.f32.mrf.mxu0
    %v1140 = vadd.f32 0.0, %v1139
    %1141 = vmatprep.mubr.bf16.mxu0 %v597
    %1142 = vmatmul.mubr.bf16.gmra.mxu0 %v596
    %v1143 = vpop.f32.mrf.mxu0
    %v1144 = vadd.f32 0.0, %v1143
    %v1145 = vpop.f32.mrf.mxu0
    %v1146 = vadd.f32 0.0, %v1145
    %v1147 = vpop.f32.mrf.mxu0
    %v1148 = vadd.f32 0.0, %v1147
    %v1149 = vpop.f32.mrf.mxu0
    %v1150 = vadd.f32 0.0, %v1149
    %1151 = vmatprep.mubr.bf16.mxu0 %v599
    %1152 = vmatmul.mubr.bf16.gmra.mxu0 %v598
    %v1153 = vpop.f32.mrf.mxu0
    %v1154 = vadd.f32 0.0, %v1153
    %v1155 = vpop.f32.mrf.mxu0
    %v1156 = vadd.f32 0.0, %v1155
    %v1157 = vpop.f32.mrf.mxu0
    %v1158 = vadd.f32 0.0, %v1157
    %v1159 = vpop.f32.mrf.mxu0
    %v1160 = vadd.f32 0.0, %v1159
    %1161 = vdwg.mxu0
    %v1194 = vunpack.c.l.b16 %v600
    %v1195 = vunpack.c.h.b16 %v600
    %v1196 = vunpack.c.l.b16 %v601
    %v1197 = vunpack.c.h.b16 %v601
    %v1198 = vunpack.c.l.b16 %v602
    %v1199 = vunpack.c.h.b16 %v602
    %v1200 = vunpack.c.l.b16 %v603
    %v1201 = vunpack.c.h.b16 %v603
    %v1202 = vunpack.c.l.b16 %v604
    %v1203 = vunpack.c.h.b16 %v604
    %v1204 = vunpack.c.l.b16 %v605
    %v1205 = vunpack.c.h.b16 %v605
    %v1206 = vunpack.c.l.b16 %v606
    %v1207 = vunpack.c.h.b16 %v606
    %v1208 = vunpack.c.l.b16 %v607
    %v1209 = vunpack.c.h.b16 %v607
    %v1210 = vunpack.c.l.b16 %v608
    %v1211 = vunpack.c.h.b16 %v608
    %v1212 = vunpack.c.l.b16 %v609
    %v1213 = vunpack.c.h.b16 %v609
    %v1214 = vunpack.c.l.b16 %v610
    %v1215 = vunpack.c.h.b16 %v610
    %v1216 = vunpack.c.l.b16 %v611
    %v1217 = vunpack.c.h.b16 %v611
    %v1218 = vunpack.c.l.b16 %v612
    %v1219 = vunpack.c.h.b16 %v612
    %v1220 = vunpack.c.l.b16 %v613
    %v1221 = vunpack.c.h.b16 %v613
    %v1222 = vunpack.c.l.b16 %v614
    %v1223 = vunpack.c.h.b16 %v614
    %v1224 = vunpack.c.l.b16 %v615
    %v1225 = vunpack.c.h.b16 %v615
    %v1226 = vunpack.c.l.b16 %v616
    %v1227 = vunpack.c.h.b16 %v616
    %v1228 = vunpack.c.l.b16 %v617
    %v1229 = vunpack.c.h.b16 %v617
    %v1230 = vunpack.c.l.b16 %v618
    %v1231 = vunpack.c.h.b16 %v618
    %v1232 = vunpack.c.l.b16 %v619
    %v1233 = vunpack.c.h.b16 %v619
    %v1234 = vunpack.c.l.b16 %v620
    %v1235 = vunpack.c.h.b16 %v620
    %v1236 = vunpack.c.l.b16 %v621
    %v1237 = vunpack.c.h.b16 %v621
    %v1238 = vunpack.c.l.b16 %v622
    %v1239 = vunpack.c.h.b16 %v622
    %v1240 = vunpack.c.l.b16 %v623
    %v1241 = vunpack.c.h.b16 %v623
    %v1242 = vunpack.c.l.b16 %v624
    %v1243 = vunpack.c.h.b16 %v624
    %v1244 = vunpack.c.l.b16 %v625
    %v1245 = vunpack.c.h.b16 %v625
    %v1246 = vunpack.c.l.b16 %v626
    %v1247 = vunpack.c.h.b16 %v626
    %v1248 = vunpack.c.l.b16 %v627
    %v1249 = vunpack.c.h.b16 %v627
    %v1250 = vunpack.c.l.b16 %v628
    %v1251 = vunpack.c.h.b16 %v628
    %v1252 = vunpack.c.l.b16 %v629
    %v1253 = vunpack.c.h.b16 %v629
    %v1254 = vunpack.c.l.b16 %v630
    %v1255 = vunpack.c.h.b16 %v630
    %v1256 = vunpack.c.l.b16 %v631
    %v1257 = vunpack.c.h.b16 %v631
    %v1258 = vpack.c.b16 %v1198, %v1194
    %v1259 = vpack.c.b16 %v1199, %v1195
    %v1260 = vpack.c.b16 %v1200, %v1196
    %v1261 = vpack.c.b16 %v1201, %v1197
    %v1262 = vpack.c.b16 %v1206, %v1202
    %v1263 = vpack.c.b16 %v1207, %v1203
    %v1264 = vpack.c.b16 %v1208, %v1204
    %v1265 = vpack.c.b16 %v1209, %v1205
    %v1266 = vpack.c.b16 %v1214, %v1210
    %v1267 = vpack.c.b16 %v1215, %v1211
    %v1268 = vpack.c.b16 %v1216, %v1212
    %v1269 = vpack.c.b16 %v1217, %v1213
    %v1270 = vpack.c.b16 %v1222, %v1218
    %v1271 = vpack.c.b16 %v1223, %v1219
    %v1272 = vpack.c.b16 %v1224, %v1220
    %v1273 = vpack.c.b16 %v1225, %v1221
    %v1274 = vpack.c.b16 %v1230, %v1226
    %v1275 = vpack.c.b16 %v1231, %v1227
    %v1276 = vpack.c.b16 %v1232, %v1228
    %v1277 = vpack.c.b16 %v1233, %v1229
    %v1278 = vpack.c.b16 %v1238, %v1234
    %v1279 = vpack.c.b16 %v1239, %v1235
    %v1280 = vpack.c.b16 %v1240, %v1236
    %v1281 = vpack.c.b16 %v1241, %v1237
    %v1282 = vpack.c.b16 %v1246, %v1242
    %v1283 = vpack.c.b16 %v1247, %v1243
    %v1284 = vpack.c.b16 %v1248, %v1244
    %v1285 = vpack.c.b16 %v1249, %v1245
    %v1286 = vpack.c.b16 %v1254, %v1250
    %v1287 = vpack.c.b16 %v1255, %v1251
    %v1288 = vpack.c.b16 %v1256, %v1252
    %v1289 = vpack.c.b16 %v1257, %v1253
    %1322 = vmatprep.subr.bf16.mxu0 %v1287
    %1323 = vmatpush1.bf16.msra.mxu0 %v1286
    %1324 = vmatprep.subr.bf16.mxu0 %v1283
    %1325 = vmatpush1.bf16.msra.mxu0 %v1282
    %1326 = vmatprep.subr.bf16.mxu0 %v1279
    %1327 = vmatpush1.bf16.msra.mxu0 %v1278
    %1328 = vmatprep.subr.bf16.mxu0 %v1275
    %1329 = vmatpush1.bf16.msra.mxu0 %v1274
    %1330 = vmatprep.subr.bf16.mxu0 %v1271
    %1331 = vmatpush1.bf16.msra.mxu0 %v1270
    %1332 = vmatprep.subr.bf16.mxu0 %v1267
    %1333 = vmatpush1.bf16.msra.mxu0 %v1266
    %1334 = vmatprep.subr.bf16.mxu0 %v1263
    %1335 = vmatpush1.bf16.msra.mxu0 %v1262
    %1336 = vmatprep.subr.bf16.mxu0 %v1259
    %1337 = vmatpush1.bf16.msra.mxu0 %v1258
    %1338 = vmatprep.subr.bf16.mxu0 0
    %1339 = vmatpush2.bf16.msra.mxu0 0
    %1340 = vmatprep.subr.bf16.mxu0 0
    %1341 = vmatpush2.bf16.msra.mxu0 0
    %1342 = vmatprep.subr.bf16.mxu0 0
    %1343 = vmatpush2.bf16.msra.mxu0 0
    %1344 = vmatprep.subr.bf16.mxu0 0
    %1345 = vmatpush2.bf16.msra.mxu0 0
    %1346 = vmatprep.subr.bf16.mxu0 0
    %1347 = vmatpush2.bf16.msra.mxu0 0
    %1348 = vmatprep.subr.bf16.mxu0 0
    %1349 = vmatpush2.bf16.msra.mxu0 0
    %1350 = vmatprep.subr.bf16.mxu0 0
    %1351 = vmatpush2.bf16.msra.mxu0 0
    %1352 = vmatprep.subr.bf16.mxu0 0
    %1353 = vmatpush2.bf16.msra.mxu0 0
    %1354 = vmatprep.mubr.bf16.mxu0 0
    %1355 = vmatmul.mubr.bf16.gmra.mxu0 %v391
    %v1356 = vpop.f32.mrf.mxu0
    %v1357 = vadd.f32 %v1051, %v1356
    %v1358 = vpop.f32.mrf.mxu0
    %v1359 = vadd.f32 %v1053, %v1358
    %v1360 = vpop.f32.mrf.mxu0
    %v1361 = vadd.f32 %v1055, %v1360
    %v1362 = vpop.f32.mrf.mxu0
    %v1363 = vadd.f32 %v1057, %v1362
    %1364 = vmatprep.mubr.bf16.mxu0 0
    %1365 = vmatmul.mubr.bf16.gmra.mxu0 %v392
    %v1366 = vpop.f32.mrf.mxu0
    %v1367 = vadd.f32 %v1061, %v1366
    %v1368 = vpop.f32.mrf.mxu0
    %v1369 = vadd.f32 %v1063, %v1368
    %v1370 = vpop.f32.mrf.mxu0
    %v1371 = vadd.f32 %v1065, %v1370
    %v1372 = vpop.f32.mrf.mxu0
    %v1373 = vadd.f32 %v1067, %v1372
    %1374 = vmatprep.mubr.bf16.mxu0 0
    %1375 = vmatmul.mubr.bf16.gmra.mxu0 %v393
    %v1376 = vpop.f32.mrf.mxu0
    %v1377 = vadd.f32 %v1071, %v1376
    %v1378 = vpop.f32.mrf.mxu0
    %v1379 = vadd.f32 %v1073, %v1378
    %v1380 = vpop.f32.mrf.mxu0
    %v1381 = vadd.f32 %v1075, %v1380
    %v1382 = vpop.f32.mrf.mxu0
    %v1383 = vadd.f32 %v1077, %v1382
    %1384 = vmatprep.mubr.bf16.mxu0 0
    %1385 = vmatmul.mubr.bf16.gmra.mxu0 %v394
    %v1386 = vpop.f32.mrf.mxu0
    %v1387 = vadd.f32 %v1081, %v1386
    %v1388 = vpop.f32.mrf.mxu0
    %v1389 = vadd.f32 %v1083, %v1388
    %v1390 = vpop.f32.mrf.mxu0
    %v1391 = vadd.f32 %v1085, %v1390
    %v1392 = vpop.f32.mrf.mxu0
    %v1393 = vadd.f32 %v1087, %v1392
    %1394 = vdwg.mxu0
    %1395 = vmatprep.subr.bf16.mxu0 %v1289
    %1396 = vmatpush1.bf16.msra.mxu0 %v1288
    %1397 = vmatprep.subr.bf16.mxu0 %v1285
    %1398 = vmatpush1.bf16.msra.mxu0 %v1284
    %1399 = vmatprep.subr.bf16.mxu0 %v1281
    %1400 = vmatpush1.bf16.msra.mxu0 %v1280
    %1401 = vmatprep.subr.bf16.mxu0 %v1277
    %1402 = vmatpush1.bf16.msra.mxu0 %v1276
    %1403 = vmatprep.subr.bf16.mxu0 %v1273
    %1404 = vmatpush1.bf16.msra.mxu0 %v1272
    %1405 = vmatprep.subr.bf16.mxu0 %v1269
    %1406 = vmatpush1.bf16.msra.mxu0 %v1268
    %1407 = vmatprep.subr.bf16.mxu0 %v1265
    %1408 = vmatpush1.bf16.msra.mxu0 %v1264
    %1409 = vmatprep.subr.bf16.mxu0 %v1261
    %1410 = vmatpush1.bf16.msra.mxu0 %v1260
    %1411 = vmatprep.subr.bf16.mxu0 0
    %1412 = vmatpush2.bf16.msra.mxu0 0
    %1413 = vmatprep.subr.bf16.mxu0 0
    %1414 = vmatpush2.bf16.msra.mxu0 0
    %1415 = vmatprep.subr.bf16.mxu0 0
    %1416 = vmatpush2.bf16.msra.mxu0 0
    %1417 = vmatprep.subr.bf16.mxu0 0
    %1418 = vmatpush2.bf16.msra.mxu0 0
    %1419 = vmatprep.subr.bf16.mxu0 0
    %1420 = vmatpush2.bf16.msra.mxu0 0
    %1421 = vmatprep.subr.bf16.mxu0 0
    %1422 = vmatpush2.bf16.msra.mxu0 0
    %1423 = vmatprep.subr.bf16.mxu0 0
    %1424 = vmatpush2.bf16.msra.mxu0 0
    %1425 = vmatprep.subr.bf16.mxu0 0
    %1426 = vmatpush2.bf16.msra.mxu0 0
    %1427 = vmatprep.mubr.bf16.mxu0 0
    %1428 = vmatmul.mubr.bf16.gmra.mxu0 %v391
    %v1429 = vpop.f32.mrf.mxu0
    %v1430 = vadd.f32 %v1124, %v1429
    %v1431 = vpop.f32.mrf.mxu0
    %v1432 = vadd.f32 %v1126, %v1431
    %v1433 = vpop.f32.mrf.mxu0
    %v1434 = vadd.f32 %v1128, %v1433
    %v1435 = vpop.f32.mrf.mxu0
    %v1436 = vadd.f32 %v1130, %v1435
    %1437 = vmatprep.mubr.bf16.mxu0 0
    %1438 = vmatmul.mubr.bf16.gmra.mxu0 %v392
    %v1439 = vpop.f32.mrf.mxu0
    %v1440 = vadd.f32 %v1134, %v1439
    %v1441 = vpop.f32.mrf.mxu0
    %v1442 = vadd.f32 %v1136, %v1441
    %v1443 = vpop.f32.mrf.mxu0
    %v1444 = vadd.f32 %v1138, %v1443
    %v1445 = vpop.f32.mrf.mxu0
    %v1446 = vadd.f32 %v1140, %v1445
    %1447 = vmatprep.mubr.bf16.mxu0 0
    %1448 = vmatmul.mubr.bf16.gmra.mxu0 %v393
    %v1449 = vpop.f32.mrf.mxu0
    %v1450 = vadd.f32 %v1144, %v1449
    %v1451 = vpop.f32.mrf.mxu0
    %v1452 = vadd.f32 %v1146, %v1451
    %v1453 = vpop.f32.mrf.mxu0
    %v1454 = vadd.f32 %v1148, %v1453
    %v1455 = vpop.f32.mrf.mxu0
    %v1456 = vadd.f32 %v1150, %v1455
    %1457 = vmatprep.mubr.bf16.mxu0 0
    %1458 = vmatmul.mubr.bf16.gmra.mxu0 %v394
    %v1459 = vpop.f32.mrf.mxu0
    %v1460 = vadd.f32 %v1154, %v1459
    %v1461 = vpop.f32.mrf.mxu0
    %v1462 = vadd.f32 %v1156, %v1461
    %v1463 = vpop.f32.mrf.mxu0
    %v1464 = vadd.f32 %v1158, %v1463
    %v1465 = vpop.f32.mrf.mxu0
    %v1466 = vadd.f32 %v1160, %v1465
    %1467 = vdwg.mxu0
    %v1468 = vld [vmem:[#allocation12] sm:$0xf]
    %v1470 = vlaneseq
    %v1471 = vshrl.u32 %v1470, 7
    %v1472 = vsub.s32 0, %v1471
    %v1473 = vrot.slane %v1468, %v1472
    %v1474 = vlaneseq
    %v1475 = vshrl.u32 %v1474, 7
    %v1476 = vsub.s32 1, %v1475
    %v1477 = vrot.slane %v1468, %v1476
    %v1478 = vlaneseq
    %v1479 = vshrl.u32 %v1478, 7
    %v1480 = vsub.s32 2, %v1479
    %v1481 = vrot.slane %v1468, %v1480
    %v1482 = vlaneseq
    %v1483 = vshrl.u32 %v1482, 7
    %v1484 = vsub.s32 3, %v1483
    %v1485 = vrot.slane %v1468, %v1484
    %v1490 = vadd.f32 %v1357, %v1473
    %v1491 = vadd.f32 %v1359, %v1477
    %v1492 = vadd.f32 %v1430, %v1481
    %v1493 = vadd.f32 %v1432, %v1485
    %v1494 = vadd.f32 %v1361, %v1473
    %v1495 = vadd.f32 %v1363, %v1477
    %v1496 = vadd.f32 %v1434, %v1481
    %v1497 = vadd.f32 %v1436, %v1485
    %v1498 = vadd.f32 %v1367, %v1473
    %v1499 = vadd.f32 %v1369, %v1477
    %v1500 = vadd.f32 %v1440, %v1481
    %v1501 = vadd.f32 %v1442, %v1485
    %v1502 = vadd.f32 %v1371, %v1473
    %v1503 = vadd.f32 %v1373, %v1477
    %v1504 = vadd.f32 %v1444, %v1481
    %v1505 = vadd.f32 %v1446, %v1485
    %v1506 = vadd.f32 %v1377, %v1473
    %v1507 = vadd.f32 %v1379, %v1477
    %v1508 = vadd.f32 %v1450, %v1481
    %v1509 = vadd.f32 %v1452, %v1485
    %v1510 = vadd.f32 %v1381, %v1473
    %v1511 = vadd.f32 %v1383, %v1477
    %v1512 = vadd.f32 %v1454, %v1481
    %v1513 = vadd.f32 %v1456, %v1485
    %v1514 = vadd.f32 %v1387, %v1473
    %v1515 = vadd.f32 %v1389, %v1477
    %v1516 = vadd.f32 %v1460, %v1481
    %v1517 = vadd.f32 %v1462, %v1485
    %v1518 = vadd.f32 %v1391, %v1473
    %v1519 = vadd.f32 %v1393, %v1477
    %v1520 = vadd.f32 %v1464, %v1481
    %v1521 = vadd.f32 %v1466, %v1485
    %v1522 = vmax.f32 %v1490, 0.0
    %v1523 = vmax.f32 %v1491, 0.0
    %v1524 = vmax.f32 %v1492, 0.0
    %v1525 = vmax.f32 %v1493, 0.0
    %v1526 = vmax.f32 %v1494, 0.0
    %v1527 = vmax.f32 %v1495, 0.0
    %v1528 = vmax.f32 %v1496, 0.0
    %v1529 = vmax.f32 %v1497, 0.0
    %v1530 = vmax.f32 %v1498, 0.0
    %v1531 = vmax.f32 %v1499, 0.0
    %v1532 = vmax.f32 %v1500, 0.0
    %v1533 = vmax.f32 %v1501, 0.0
    %v1534 = vmax.f32 %v1502, 0.0
    %v1535 = vmax.f32 %v1503, 0.0
    %v1536 = vmax.f32 %v1504, 0.0
    %v1537 = vmax.f32 %v1505, 0.0
    %v1538 = vmax.f32 %v1506, 0.0
    %v1539 = vmax.f32 %v1507, 0.0
    %v1540 = vmax.f32 %v1508, 0.0
    %v1541 = vmax.f32 %v1509, 0.0
    %v1542 = vmax.f32 %v1510, 0.0
    %v1543 = vmax.f32 %v1511, 0.0
    %v1544 = vmax.f32 %v1512, 0.0
    %v1545 = vmax.f32 %v1513, 0.0
    %v1546 = vmax.f32 %v1514, 0.0
    %v1547 = vmax.f32 %v1515, 0.0
    %v1548 = vmax.f32 %v1516, 0.0
    %v1549 = vmax.f32 %v1517, 0.0
    %v1550 = vmax.f32 %v1518, 0.0
    %v1551 = vmax.f32 %v1519, 0.0
    %v1552 = vmax.f32 %v1520, 0.0
    %v1553 = vmax.f32 %v1521, 0.0
    %v1554 = vpack.c.bf16 %v1526, %v1522
    %v1555 = vpack.c.bf16 %v1527, %v1523
    %v1556 = vpack.c.bf16 %v1528, %v1524
    %v1557 = vpack.c.bf16 %v1529, %v1525
    %v1558 = vpack.c.bf16 %v1534, %v1530
    %v1559 = vpack.c.bf16 %v1535, %v1531
    %v1560 = vpack.c.bf16 %v1536, %v1532
    %v1561 = vpack.c.bf16 %v1537, %v1533
    %v1562 = vpack.c.bf16 %v1542, %v1538
    %v1563 = vpack.c.bf16 %v1543, %v1539
    %v1564 = vpack.c.bf16 %v1544, %v1540
    %v1565 = vpack.c.bf16 %v1545, %v1541
    %v1566 = vpack.c.bf16 %v1550, %v1546
    %v1567 = vpack.c.bf16 %v1551, %v1547
    %v1568 = vpack.c.bf16 %v1552, %v1548
    %v1569 = vpack.c.bf16 %v1553, %v1549
    %v1570 = vld [vmem:[#allocation13] sm:$0xff]
    %v1571 = vld [vmem:[#allocation13 + $0x8] sm:$0xff]
    %v1572 = vld [vmem:[#allocation13 + $0x10] sm:$0xff]
    %v1573 = vld [vmem:[#allocation13 + $0x18] sm:$0xff]
    %v1574 = vld [vmem:[#allocation13 + $0x20] sm:$0xff]
    %v1575 = vld [vmem:[#allocation13 + $0x28] sm:$0xff]
    %v1576 = vld [vmem:[#allocation13 + $0x30] sm:$0xff]
    %v1577 = vld [vmem:[#allocation13 + $0x38] sm:$0xff]
    %v1578 = vld [vmem:[#allocation13 + $0x40] sm:$0xff]
    %v1579 = vld [vmem:[#allocation13 + $0x48] sm:$0xff]
    %v1580 = vld [vmem:[#allocation13 + $0x50] sm:$0xff]
    %v1581 = vld [vmem:[#allocation13 + $0x58] sm:$0xff]
    %v1582 = vld [vmem:[#allocation13 + $0x60] sm:$0xff]
    %v1583 = vld [vmem:[#allocation13 + $0x68] sm:$0xff]
    %v1584 = vld [vmem:[#allocation13 + $0x70] sm:$0xff]
    %v1585 = vld [vmem:[#allocation13 + $0x78] sm:$0xff]
    %v1586 = vld [vmem:[#allocation13 + $0x80] sm:$0xff]
    %v1587 = vld [vmem:[#allocation13 + $0x88] sm:$0xff]
    %v1588 = vld [vmem:[#allocation13 + $0x90] sm:$0xff]
    %v1589 = vld [vmem:[#allocation13 + $0x98] sm:$0xff]
    %v1590 = vld [vmem:[#allocation13 + $0xa0] sm:$0xff]
    %v1591 = vld [vmem:[#allocation13 + $0xa8] sm:$0xff]
    %v1592 = vld [vmem:[#allocation13 + $0xb0] sm:$0xff]
    %v1593 = vld [vmem:[#allocation13 + $0xb8] sm:$0xff]
    %v1594 = vld [vmem:[#allocation13 + $0xc0] sm:$0xff]
    %v1595 = vld [vmem:[#allocation13 + $0xc8] sm:$0xff]
    %v1596 = vld [vmem:[#allocation13 + $0xd0] sm:$0xff]
    %v1597 = vld [vmem:[#allocation13 + $0xd8] sm:$0xff]
    %v1598 = vld [vmem:[#allocation13 + $0xe0] sm:$0xff]
    %v1599 = vld [vmem:[#allocation13 + $0xe8] sm:$0xff]
    %v1600 = vld [vmem:[#allocation13 + $0xf0] sm:$0xff]
    %v1601 = vld [vmem:[#allocation13 + $0xf8] sm:$0xff]
    %v1602 = vld [vmem:[#allocation13 + $0x100] sm:$0xff]
    %v1603 = vld [vmem:[#allocation13 + $0x108] sm:$0xff]
    %v1604 = vld [vmem:[#allocation13 + $0x110] sm:$0xff]
    %v1605 = vld [vmem:[#allocation13 + $0x118] sm:$0xff]
    %v1606 = vld [vmem:[#allocation13 + $0x120] sm:$0xff]
    %v1607 = vld [vmem:[#allocation13 + $0x128] sm:$0xff]
    %v1608 = vld [vmem:[#allocation13 + $0x130] sm:$0xff]
    %v1609 = vld [vmem:[#allocation13 + $0x138] sm:$0xff]
    %v1610 = vld [vmem:[#allocation13 + $0x140] sm:$0xff]
    %v1611 = vld [vmem:[#allocation13 + $0x148] sm:$0xff]
    %v1612 = vld [vmem:[#allocation13 + $0x150] sm:$0xff]
    %v1613 = vld [vmem:[#allocation13 + $0x158] sm:$0xff]
    %v1614 = vld [vmem:[#allocation13 + $0x160] sm:$0xff]
    %v1615 = vld [vmem:[#allocation13 + $0x168] sm:$0xff]
    %v1616 = vld [vmem:[#allocation13 + $0x170] sm:$0xff]
    %v1617 = vld [vmem:[#allocation13 + $0x178] sm:$0xff]
    %v1618 = vld [vmem:[#allocation13 + $0x180] sm:$0xff]
    %v1619 = vld [vmem:[#allocation13 + $0x188] sm:$0xff]
    %v1620 = vld [vmem:[#allocation13 + $0x190] sm:$0xff]
    %v1621 = vld [vmem:[#allocation13 + $0x198] sm:$0xff]
    %v1622 = vld [vmem:[#allocation13 + $0x1a0] sm:$0xff]
    %v1623 = vld [vmem:[#allocation13 + $0x1a8] sm:$0xff]
    %v1624 = vld [vmem:[#allocation13 + $0x1b0] sm:$0xff]
    %v1625 = vld [vmem:[#allocation13 + $0x1b8] sm:$0xff]
    %v1626 = vld [vmem:[#allocation13 + $0x1c0] sm:$0xff]
    %v1627 = vld [vmem:[#allocation13 + $0x1c8] sm:$0xff]
    %v1628 = vld [vmem:[#allocation13 + $0x1d0] sm:$0xff]
    %v1629 = vld [vmem:[#allocation13 + $0x1d8] sm:$0xff]
    %v1630 = vld [vmem:[#allocation13 + $0x1e0] sm:$0xff]
    %v1631 = vld [vmem:[#allocation13 + $0x1e8] sm:$0xff]
    %v1632 = vld [vmem:[#allocation13 + $0x1f0] sm:$0xff]
    %v1633 = vld [vmem:[#allocation13 + $0x1f8] sm:$0xff]
    %v1634 = vld [vmem:[#allocation13 + $0x200] sm:$0xff]
    %v1635 = vld [vmem:[#allocation13 + $0x208] sm:$0xff]
    %v1636 = vld [vmem:[#allocation13 + $0x210] sm:$0xff]
    %v1637 = vld [vmem:[#allocation13 + $0x218] sm:$0xff]
    %v1638 = vld [vmem:[#allocation13 + $0x220] sm:$0xff]
    %v1639 = vld [vmem:[#allocation13 + $0x228] sm:$0xff]
    %v1640 = vld [vmem:[#allocation13 + $0x230] sm:$0xff]
    %v1641 = vld [vmem:[#allocation13 + $0x238] sm:$0xff]
    %v1642 = vld [vmem:[#allocation13 + $0x240] sm:$0xff]
    %v1643 = vld [vmem:[#allocation13 + $0x248] sm:$0xff]
    %v1644 = vld [vmem:[#allocation13 + $0x250] sm:$0xff]
    %v1645 = vld [vmem:[#allocation13 + $0x258] sm:$0xff]
    %v1646 = vld [vmem:[#allocation13 + $0x260] sm:$0xff]
    %v1647 = vld [vmem:[#allocation13 + $0x268] sm:$0xff]
    %v1648 = vld [vmem:[#allocation13 + $0x270] sm:$0xff]
    %v1649 = vld [vmem:[#allocation13 + $0x278] sm:$0xff]
    %v1650 = vld [vmem:[#allocation13 + $0x280] sm:$0xff]
    %v1651 = vld [vmem:[#allocation13 + $0x288] sm:$0xff]
    %v1652 = vld [vmem:[#allocation13 + $0x290] sm:$0xff]
    %v1653 = vld [vmem:[#allocation13 + $0x298] sm:$0xff]
    %v1654 = vld [vmem:[#allocation13 + $0x2a0] sm:$0xff]
    %v1655 = vld [vmem:[#allocation13 + $0x2a8] sm:$0xff]
    %v1656 = vld [vmem:[#allocation13 + $0x2b0] sm:$0xff]
    %v1657 = vld [vmem:[#allocation13 + $0x2b8] sm:$0xff]
    %v1658 = vld [vmem:[#allocation13 + $0x2c0] sm:$0xff]
    %v1659 = vld [vmem:[#allocation13 + $0x2c8] sm:$0xff]
    %v1660 = vld [vmem:[#allocation13 + $0x2d0] sm:$0xff]
    %v1661 = vld [vmem:[#allocation13 + $0x2d8] sm:$0xff]
    %v1662 = vld [vmem:[#allocation13 + $0x2e0] sm:$0xff]
    %v1663 = vld [vmem:[#allocation13 + $0x2e8] sm:$0xff]
    %v1664 = vld [vmem:[#allocation13 + $0x2f0] sm:$0xff]
    %v1665 = vld [vmem:[#allocation13 + $0x2f8] sm:$0xff]
    %v1666 = vld [vmem:[#allocation13 + $0x300] sm:$0xff]
    %v1667 = vld [vmem:[#allocation13 + $0x308] sm:$0xff]
    %v1668 = vld [vmem:[#allocation13 + $0x310] sm:$0xff]
    %v1669 = vld [vmem:[#allocation13 + $0x318] sm:$0xff]
    %v1670 = vld [vmem:[#allocation13 + $0x320] sm:$0xff]
    %v1671 = vld [vmem:[#allocation13 + $0x328] sm:$0xff]
    %v1672 = vld [vmem:[#allocation13 + $0x330] sm:$0xff]
    %v1673 = vld [vmem:[#allocation13 + $0x338] sm:$0xff]
    %v1674 = vld [vmem:[#allocation13 + $0x340] sm:$0xff]
    %v1675 = vld [vmem:[#allocation13 + $0x348] sm:$0xff]
    %v1676 = vld [vmem:[#allocation13 + $0x350] sm:$0xff]
    %v1677 = vld [vmem:[#allocation13 + $0x358] sm:$0xff]
    %v1678 = vld [vmem:[#allocation13 + $0x360] sm:$0xff]
    %v1679 = vld [vmem:[#allocation13 + $0x368] sm:$0xff]
    %v1680 = vld [vmem:[#allocation13 + $0x370] sm:$0xff]
    %v1681 = vld [vmem:[#allocation13 + $0x378] sm:$0xff]
    %v1682 = vld [vmem:[#allocation13 + $0x380] sm:$0xff]
    %v1683 = vld [vmem:[#allocation13 + $0x388] sm:$0xff]
    %v1684 = vld [vmem:[#allocation13 + $0x390] sm:$0xff]
    %v1685 = vld [vmem:[#allocation13 + $0x398] sm:$0xff]
    %v1686 = vld [vmem:[#allocation13 + $0x3a0] sm:$0xff]
    %v1687 = vld [vmem:[#allocation13 + $0x3a8] sm:$0xff]
    %v1688 = vld [vmem:[#allocation13 + $0x3b0] sm:$0xff]
    %v1689 = vld [vmem:[#allocation13 + $0x3b8] sm:$0xff]
    %v1690 = vld [vmem:[#allocation13 + $0x3c0] sm:$0xff]
    %v1691 = vld [vmem:[#allocation13 + $0x3c8] sm:$0xff]
    %v1692 = vld [vmem:[#allocation13 + $0x3d0] sm:$0xff]
    %v1693 = vld [vmem:[#allocation13 + $0x3d8] sm:$0xff]
    %v1694 = vld [vmem:[#allocation13 + $0x3e0] sm:$0xff]
    %v1695 = vld [vmem:[#allocation13 + $0x3e8] sm:$0xff]
    %v1696 = vld [vmem:[#allocation13 + $0x3f0] sm:$0xff]
    %v1697 = vld [vmem:[#allocation13 + $0x3f8] sm:$0xff]
    %v1698 = vld [vmem:[#allocation13 + $0x400] sm:$0xff]
    %v1699 = vld [vmem:[#allocation13 + $0x408] sm:$0xff]
    %v1700 = vld [vmem:[#allocation13 + $0x410] sm:$0xff]
    %v1701 = vld [vmem:[#allocation13 + $0x418] sm:$0xff]
    %v1702 = vld [vmem:[#allocation13 + $0x420] sm:$0xff]
    %v1703 = vld [vmem:[#allocation13 + $0x428] sm:$0xff]
    %v1704 = vld [vmem:[#allocation13 + $0x430] sm:$0xff]
    %v1705 = vld [vmem:[#allocation13 + $0x438] sm:$0xff]
    %v1706 = vld [vmem:[#allocation13 + $0x440] sm:$0xff]
    %v1707 = vld [vmem:[#allocation13 + $0x448] sm:$0xff]
    %v1708 = vld [vmem:[#allocation13 + $0x450] sm:$0xff]
    %v1709 = vld [vmem:[#allocation13 + $0x458] sm:$0xff]
    %v1710 = vld [vmem:[#allocation13 + $0x460] sm:$0xff]
    %v1711 = vld [vmem:[#allocation13 + $0x468] sm:$0xff]
    %v1712 = vld [vmem:[#allocation13 + $0x470] sm:$0xff]
    %v1713 = vld [vmem:[#allocation13 + $0x478] sm:$0xff]
    %v1714 = vld [vmem:[#allocation13 + $0x480] sm:$0xff]
    %v1715 = vld [vmem:[#allocation13 + $0x488] sm:$0xff]
    %v1716 = vld [vmem:[#allocation13 + $0x490] sm:$0xff]
    %v1717 = vld [vmem:[#allocation13 + $0x498] sm:$0xff]
    %v1718 = vld [vmem:[#allocation13 + $0x4a0] sm:$0xff]
    %v1719 = vld [vmem:[#allocation13 + $0x4a8] sm:$0xff]
    %v1720 = vld [vmem:[#allocation13 + $0x4b0] sm:$0xff]
    %v1721 = vld [vmem:[#allocation13 + $0x4b8] sm:$0xff]
    %v1722 = vld [vmem:[#allocation13 + $0x4c0] sm:$0xff]
    %v1723 = vld [vmem:[#allocation13 + $0x4c8] sm:$0xff]
    %v1724 = vld [vmem:[#allocation13 + $0x4d0] sm:$0xff]
    %v1725 = vld [vmem:[#allocation13 + $0x4d8] sm:$0xff]
    %v1726 = vld [vmem:[#allocation13 + $0x4e0] sm:$0xff]
    %v1727 = vld [vmem:[#allocation13 + $0x4e8] sm:$0xff]
    %v1728 = vld [vmem:[#allocation13 + $0x4f0] sm:$0xff]
    %v1729 = vld [vmem:[#allocation13 + $0x4f8] sm:$0xff]
    %v1730 = vld [vmem:[#allocation13 + $0x500] sm:$0xff]
    %v1731 = vld [vmem:[#allocation13 + $0x508] sm:$0xff]
    %v1732 = vld [vmem:[#allocation13 + $0x510] sm:$0xff]
    %v1733 = vld [vmem:[#allocation13 + $0x518] sm:$0xff]
    %v1734 = vld [vmem:[#allocation13 + $0x520] sm:$0xff]
    %v1735 = vld [vmem:[#allocation13 + $0x528] sm:$0xff]
    %v1736 = vld [vmem:[#allocation13 + $0x530] sm:$0xff]
    %v1737 = vld [vmem:[#allocation13 + $0x538] sm:$0xff]
    %v1738 = vld [vmem:[#allocation13 + $0x540] sm:$0xff]
    %v1739 = vld [vmem:[#allocation13 + $0x548] sm:$0xff]
    %v1740 = vld [vmem:[#allocation13 + $0x550] sm:$0xff]
    %v1741 = vld [vmem:[#allocation13 + $0x558] sm:$0xff]
    %v1742 = vld [vmem:[#allocation13 + $0x560] sm:$0xff]
    %v1743 = vld [vmem:[#allocation13 + $0x568] sm:$0xff]
    %v1744 = vld [vmem:[#allocation13 + $0x570] sm:$0xff]
    %v1745 = vld [vmem:[#allocation13 + $0x578] sm:$0xff]
    %v1746 = vld [vmem:[#allocation13 + $0x580] sm:$0xff]
    %v1747 = vld [vmem:[#allocation13 + $0x588] sm:$0xff]
    %v1748 = vld [vmem:[#allocation13 + $0x590] sm:$0xff]
    %v1749 = vld [vmem:[#allocation13 + $0x598] sm:$0xff]
    %v1750 = vld [vmem:[#allocation13 + $0x5a0] sm:$0xff]
    %v1751 = vld [vmem:[#allocation13 + $0x5a8] sm:$0xff]
    %v1752 = vld [vmem:[#allocation13 + $0x5b0] sm:$0xff]
    %v1753 = vld [vmem:[#allocation13 + $0x5b8] sm:$0xff]
    %v1754 = vld [vmem:[#allocation13 + $0x5c0] sm:$0xff]
    %v1755 = vld [vmem:[#allocation13 + $0x5c8] sm:$0xff]
    %v1756 = vld [vmem:[#allocation13 + $0x5d0] sm:$0xff]
    %v1757 = vld [vmem:[#allocation13 + $0x5d8] sm:$0xff]
    %v1758 = vld [vmem:[#allocation13 + $0x5e0] sm:$0xff]
    %v1759 = vld [vmem:[#allocation13 + $0x5e8] sm:$0xff]
    %v1760 = vld [vmem:[#allocation13 + $0x5f0] sm:$0xff]
    %v1761 = vld [vmem:[#allocation13 + $0x5f8] sm:$0xff]
    %v1762 = vld [vmem:[#allocation13 + $0x600] sm:$0xff]
    %v1763 = vld [vmem:[#allocation13 + $0x608] sm:$0xff]
    %v1764 = vld [vmem:[#allocation13 + $0x610] sm:$0xff]
    %v1765 = vld [vmem:[#allocation13 + $0x618] sm:$0xff]
    %v1766 = vld [vmem:[#allocation13 + $0x620] sm:$0xff]
    %v1767 = vld [vmem:[#allocation13 + $0x628] sm:$0xff]
    %v1768 = vld [vmem:[#allocation13 + $0x630] sm:$0xff]
    %v1769 = vld [vmem:[#allocation13 + $0x638] sm:$0xff]
    %v1770 = vld [vmem:[#allocation13 + $0x640] sm:$0xff]
    %v1771 = vld [vmem:[#allocation13 + $0x648] sm:$0xff]
    %v1772 = vld [vmem:[#allocation13 + $0x650] sm:$0xff]
    %v1773 = vld [vmem:[#allocation13 + $0x658] sm:$0xff]
    %v1774 = vld [vmem:[#allocation13 + $0x660] sm:$0xff]
    %v1775 = vld [vmem:[#allocation13 + $0x668] sm:$0xff]
    %v1776 = vld [vmem:[#allocation13 + $0x670] sm:$0xff]
    %v1777 = vld [vmem:[#allocation13 + $0x678] sm:$0xff]
    %v1778 = vld [vmem:[#allocation13 + $0x680] sm:$0xff]
    %v1779 = vld [vmem:[#allocation13 + $0x688] sm:$0xff]
    %v1780 = vld [vmem:[#allocation13 + $0x690] sm:$0xff]
    %v1781 = vld [vmem:[#allocation13 + $0x698] sm:$0xff]
    %v1782 = vld [vmem:[#allocation13 + $0x6a0] sm:$0xff]
    %v1783 = vld [vmem:[#allocation13 + $0x6a8] sm:$0xff]
    %v1784 = vld [vmem:[#allocation13 + $0x6b0] sm:$0xff]
    %v1785 = vld [vmem:[#allocation13 + $0x6b8] sm:$0xff]
    %v1786 = vld [vmem:[#allocation13 + $0x6c0] sm:$0xff]
    %v1787 = vld [vmem:[#allocation13 + $0x6c8] sm:$0xff]
    %v1788 = vld [vmem:[#allocation13 + $0x6d0] sm:$0xff]
    %v1789 = vld [vmem:[#allocation13 + $0x6d8] sm:$0xff]
    %v1790 = vld [vmem:[#allocation13 + $0x6e0] sm:$0xff]
    %v1791 = vld [vmem:[#allocation13 + $0x6e8] sm:$0xff]
    %v1792 = vld [vmem:[#allocation13 + $0x6f0] sm:$0xff]
    %v1793 = vld [vmem:[#allocation13 + $0x6f8] sm:$0xff]
    %v1794 = vld [vmem:[#allocation13 + $0x700] sm:$0xff]
    %v1795 = vld [vmem:[#allocation13 + $0x708] sm:$0xff]
    %v1796 = vld [vmem:[#allocation13 + $0x710] sm:$0xff]
    %v1797 = vld [vmem:[#allocation13 + $0x718] sm:$0xff]
    %v1798 = vld [vmem:[#allocation13 + $0x720] sm:$0xff]
    %v1799 = vld [vmem:[#allocation13 + $0x728] sm:$0xff]
    %v1800 = vld [vmem:[#allocation13 + $0x730] sm:$0xff]
    %v1801 = vld [vmem:[#allocation13 + $0x738] sm:$0xff]
    %v1802 = vld [vmem:[#allocation13 + $0x740] sm:$0xff]
    %v1803 = vld [vmem:[#allocation13 + $0x748] sm:$0xff]
    %v1804 = vld [vmem:[#allocation13 + $0x750] sm:$0xff]
    %v1805 = vld [vmem:[#allocation13 + $0x758] sm:$0xff]
    %v1806 = vld [vmem:[#allocation13 + $0x760] sm:$0xff]
    %v1807 = vld [vmem:[#allocation13 + $0x768] sm:$0xff]
    %v1808 = vld [vmem:[#allocation13 + $0x770] sm:$0xff]
    %v1809 = vld [vmem:[#allocation13 + $0x778] sm:$0xff]
    %v1810 = vld [vmem:[#allocation13 + $0x780] sm:$0xff]
    %v1811 = vld [vmem:[#allocation13 + $0x788] sm:$0xff]
    %v1812 = vld [vmem:[#allocation13 + $0x790] sm:$0xff]
    %v1813 = vld [vmem:[#allocation13 + $0x798] sm:$0xff]
    %v1814 = vld [vmem:[#allocation13 + $0x7a0] sm:$0xff]
    %v1815 = vld [vmem:[#allocation13 + $0x7a8] sm:$0xff]
    %v1816 = vld [vmem:[#allocation13 + $0x7b0] sm:$0xff]
    %v1817 = vld [vmem:[#allocation13 + $0x7b8] sm:$0xff]
    %v1818 = vld [vmem:[#allocation13 + $0x7c0] sm:$0xff]
    %v1819 = vld [vmem:[#allocation13 + $0x7c8] sm:$0xff]
    %v1820 = vld [vmem:[#allocation13 + $0x7d0] sm:$0xff]
    %v1821 = vld [vmem:[#allocation13 + $0x7d8] sm:$0xff]
    %v1822 = vld [vmem:[#allocation13 + $0x7e0] sm:$0xff]
    %v1823 = vld [vmem:[#allocation13 + $0x7e8] sm:$0xff]
    %v1824 = vld [vmem:[#allocation13 + $0x7f0] sm:$0xff]
    %v1825 = vld [vmem:[#allocation13 + $0x7f8] sm:$0xff]
    %v1826 = vld [vmem:[#allocation15] sm:$0xff]
    %v1828 = vlaneseq
    %v1829 = vshrl.u32 %v1828, 7
    %v1830 = vsub.s32 0, %v1829
    %v1831 = vrot.slane %v1826, %v1830
    %v1832 = vlaneseq
    %v1833 = vshrl.u32 %v1832, 7
    %v1834 = vsub.s32 1, %v1833
    %v1835 = vrot.slane %v1826, %v1834
    %v1836 = vlaneseq
    %v1837 = vshrl.u32 %v1836, 7
    %v1838 = vsub.s32 2, %v1837
    %v1839 = vrot.slane %v1826, %v1838
    %v1840 = vlaneseq
    %v1841 = vshrl.u32 %v1840, 7
    %v1842 = vsub.s32 3, %v1841
    %v1843 = vrot.slane %v1826, %v1842
    %v1844 = vlaneseq
    %v1845 = vshrl.u32 %v1844, 7
    %v1846 = vsub.s32 4, %v1845
    %v1847 = vrot.slane %v1826, %v1846
    %v1848 = vlaneseq
    %v1849 = vshrl.u32 %v1848, 7
    %v1850 = vsub.s32 5, %v1849
    %v1851 = vrot.slane %v1826, %v1850
    %v1852 = vlaneseq
    %v1853 = vshrl.u32 %v1852, 7
    %v1854 = vsub.s32 6, %v1853
    %v1855 = vrot.slane %v1826, %v1854
    %v1856 = vlaneseq
    %v1857 = vshrl.u32 %v1856, 7
    %v1858 = vsub.s32 7, %v1857
    %v1859 = vrot.slane %v1826, %v1858
    %v2124 = vunpack.c.l.b16 %v1570
    %v2125 = vunpack.c.h.b16 %v1570
    %v2126 = vunpack.c.l.b16 %v1571
    %v2127 = vunpack.c.h.b16 %v1571
    %v2128 = vunpack.c.l.b16 %v1572
    %v2129 = vunpack.c.h.b16 %v1572
    %v2130 = vunpack.c.l.b16 %v1573
    %v2131 = vunpack.c.h.b16 %v1573
    %v2132 = vunpack.c.l.b16 %v1574
    %v2133 = vunpack.c.h.b16 %v1574
    %v2134 = vunpack.c.l.b16 %v1575
    %v2135 = vunpack.c.h.b16 %v1575
    %v2136 = vunpack.c.l.b16 %v1576
    %v2137 = vunpack.c.h.b16 %v1576
    %v2138 = vunpack.c.l.b16 %v1577
    %v2139 = vunpack.c.h.b16 %v1577
    %v2140 = vunpack.c.l.b16 %v1578
    %v2141 = vunpack.c.h.b16 %v1578
    %v2142 = vunpack.c.l.b16 %v1579
    %v2143 = vunpack.c.h.b16 %v1579
    %v2144 = vunpack.c.l.b16 %v1580
    %v2145 = vunpack.c.h.b16 %v1580
    %v2146 = vunpack.c.l.b16 %v1581
    %v2147 = vunpack.c.h.b16 %v1581
    %v2148 = vunpack.c.l.b16 %v1582
    %v2149 = vunpack.c.h.b16 %v1582
    %v2150 = vunpack.c.l.b16 %v1583
    %v2151 = vunpack.c.h.b16 %v1583
    %v2152 = vunpack.c.l.b16 %v1584
    %v2153 = vunpack.c.h.b16 %v1584
    %v2154 = vunpack.c.l.b16 %v1585
    %v2155 = vunpack.c.h.b16 %v1585
    %v2156 = vunpack.c.l.b16 %v1586
    %v2157 = vunpack.c.h.b16 %v1586
    %v2158 = vunpack.c.l.b16 %v1587
    %v2159 = vunpack.c.h.b16 %v1587
    %v2160 = vunpack.c.l.b16 %v1588
    %v2161 = vunpack.c.h.b16 %v1588
    %v2162 = vunpack.c.l.b16 %v1589
    %v2163 = vunpack.c.h.b16 %v1589
    %v2164 = vunpack.c.l.b16 %v1590
    %v2165 = vunpack.c.h.b16 %v1590
    %v2166 = vunpack.c.l.b16 %v1591
    %v2167 = vunpack.c.h.b16 %v1591
    %v2168 = vunpack.c.l.b16 %v1592
    %v2169 = vunpack.c.h.b16 %v1592
    %v2170 = vunpack.c.l.b16 %v1593
    %v2171 = vunpack.c.h.b16 %v1593
    %v2172 = vunpack.c.l.b16 %v1594
    %v2173 = vunpack.c.h.b16 %v1594
    %v2174 = vunpack.c.l.b16 %v1595
    %v2175 = vunpack.c.h.b16 %v1595
    %v2176 = vunpack.c.l.b16 %v1596
    %v2177 = vunpack.c.h.b16 %v1596
    %v2178 = vunpack.c.l.b16 %v1597
    %v2179 = vunpack.c.h.b16 %v1597
    %v2180 = vunpack.c.l.b16 %v1598
    %v2181 = vunpack.c.h.b16 %v1598
    %v2182 = vunpack.c.l.b16 %v1599
    %v2183 = vunpack.c.h.b16 %v1599
    %v2184 = vunpack.c.l.b16 %v1600
    %v2185 = vunpack.c.h.b16 %v1600
    %v2186 = vunpack.c.l.b16 %v1601
    %v2187 = vunpack.c.h.b16 %v1601
    %v2188 = vunpack.c.l.b16 %v1602
    %v2189 = vunpack.c.h.b16 %v1602
    %v2190 = vunpack.c.l.b16 %v1603
    %v2191 = vunpack.c.h.b16 %v1603
    %v2192 = vunpack.c.l.b16 %v1604
    %v2193 = vunpack.c.h.b16 %v1604
    %v2194 = vunpack.c.l.b16 %v1605
    %v2195 = vunpack.c.h.b16 %v1605
    %v2196 = vunpack.c.l.b16 %v1606
    %v2197 = vunpack.c.h.b16 %v1606
    %v2198 = vunpack.c.l.b16 %v1607
    %v2199 = vunpack.c.h.b16 %v1607
    %v2200 = vunpack.c.l.b16 %v1608
    %v2201 = vunpack.c.h.b16 %v1608
    %v2202 = vunpack.c.l.b16 %v1609
    %v2203 = vunpack.c.h.b16 %v1609
    %v2204 = vunpack.c.l.b16 %v1610
    %v2205 = vunpack.c.h.b16 %v1610
    %v2206 = vunpack.c.l.b16 %v1611
    %v2207 = vunpack.c.h.b16 %v1611
    %v2208 = vunpack.c.l.b16 %v1612
    %v2209 = vunpack.c.h.b16 %v1612
    %v2210 = vunpack.c.l.b16 %v1613
    %v2211 = vunpack.c.h.b16 %v1613
    %v2212 = vunpack.c.l.b16 %v1614
    %v2213 = vunpack.c.h.b16 %v1614
    %v2214 = vunpack.c.l.b16 %v1615
    %v2215 = vunpack.c.h.b16 %v1615
    %v2216 = vunpack.c.l.b16 %v1616
    %v2217 = vunpack.c.h.b16 %v1616
    %v2218 = vunpack.c.l.b16 %v1617
    %v2219 = vunpack.c.h.b16 %v1617
    %v2220 = vunpack.c.l.b16 %v1618
    %v2221 = vunpack.c.h.b16 %v1618
    %v2222 = vunpack.c.l.b16 %v1619
    %v2223 = vunpack.c.h.b16 %v1619
    %v2224 = vunpack.c.l.b16 %v1620
    %v2225 = vunpack.c.h.b16 %v1620
    %v2226 = vunpack.c.l.b16 %v1621
    %v2227 = vunpack.c.h.b16 %v1621
    %v2228 = vunpack.c.l.b16 %v1622
    %v2229 = vunpack.c.h.b16 %v1622
    %v2230 = vunpack.c.l.b16 %v1623
    %v2231 = vunpack.c.h.b16 %v1623
    %v2232 = vunpack.c.l.b16 %v1624
    %v2233 = vunpack.c.h.b16 %v1624
    %v2234 = vunpack.c.l.b16 %v1625
    %v2235 = vunpack.c.h.b16 %v1625
    %v2236 = vunpack.c.l.b16 %v1626
    %v2237 = vunpack.c.h.b16 %v1626
    %v2238 = vunpack.c.l.b16 %v1627
    %v2239 = vunpack.c.h.b16 %v1627
    %v2240 = vunpack.c.l.b16 %v1628
    %v2241 = vunpack.c.h.b16 %v1628
    %v2242 = vunpack.c.l.b16 %v1629
    %v2243 = vunpack.c.h.b16 %v1629
    %v2244 = vunpack.c.l.b16 %v1630
    %v2245 = vunpack.c.h.b16 %v1630
    %v2246 = vunpack.c.l.b16 %v1631
    %v2247 = vunpack.c.h.b16 %v1631
    %v2248 = vunpack.c.l.b16 %v1632
    %v2249 = vunpack.c.h.b16 %v1632
    %v2250 = vunpack.c.l.b16 %v1633
    %v2251 = vunpack.c.h.b16 %v1633
    %v2252 = vunpack.c.l.b16 %v1634
    %v2253 = vunpack.c.h.b16 %v1634
    %v2254 = vunpack.c.l.b16 %v1635
    %v2255 = vunpack.c.h.b16 %v1635
    %v2256 = vunpack.c.l.b16 %v1636
    %v2257 = vunpack.c.h.b16 %v1636
    %v2258 = vunpack.c.l.b16 %v1637
    %v2259 = vunpack.c.h.b16 %v1637
    %v2260 = vunpack.c.l.b16 %v1638
    %v2261 = vunpack.c.h.b16 %v1638
    %v2262 = vunpack.c.l.b16 %v1639
    %v2263 = vunpack.c.h.b16 %v1639
    %v2264 = vunpack.c.l.b16 %v1640
    %v2265 = vunpack.c.h.b16 %v1640
    %v2266 = vunpack.c.l.b16 %v1641
    %v2267 = vunpack.c.h.b16 %v1641
    %v2268 = vunpack.c.l.b16 %v1642
    %v2269 = vunpack.c.h.b16 %v1642
    %v2270 = vunpack.c.l.b16 %v1643
    %v2271 = vunpack.c.h.b16 %v1643
    %v2272 = vunpack.c.l.b16 %v1644
    %v2273 = vunpack.c.h.b16 %v1644
    %v2274 = vunpack.c.l.b16 %v1645
    %v2275 = vunpack.c.h.b16 %v1645
    %v2276 = vunpack.c.l.b16 %v1646
    %v2277 = vunpack.c.h.b16 %v1646
    %v2278 = vunpack.c.l.b16 %v1647
    %v2279 = vunpack.c.h.b16 %v1647
    %v2280 = vunpack.c.l.b16 %v1648
    %v2281 = vunpack.c.h.b16 %v1648
    %v2282 = vunpack.c.l.b16 %v1649
    %v2283 = vunpack.c.h.b16 %v1649
    %v2284 = vunpack.c.l.b16 %v1650
    %v2285 = vunpack.c.h.b16 %v1650
    %v2286 = vunpack.c.l.b16 %v1651
    %v2287 = vunpack.c.h.b16 %v1651
    %v2288 = vunpack.c.l.b16 %v1652
    %v2289 = vunpack.c.h.b16 %v1652
    %v2290 = vunpack.c.l.b16 %v1653
    %v2291 = vunpack.c.h.b16 %v1653
    %v2292 = vunpack.c.l.b16 %v1654
    %v2293 = vunpack.c.h.b16 %v1654
    %v2294 = vunpack.c.l.b16 %v1655
    %v2295 = vunpack.c.h.b16 %v1655
    %v2296 = vunpack.c.l.b16 %v1656
    %v2297 = vunpack.c.h.b16 %v1656
    %v2298 = vunpack.c.l.b16 %v1657
    %v2299 = vunpack.c.h.b16 %v1657
    %v2300 = vunpack.c.l.b16 %v1658
    %v2301 = vunpack.c.h.b16 %v1658
    %v2302 = vunpack.c.l.b16 %v1659
    %v2303 = vunpack.c.h.b16 %v1659
    %v2304 = vunpack.c.l.b16 %v1660
    %v2305 = vunpack.c.h.b16 %v1660
    %v2306 = vunpack.c.l.b16 %v1661
    %v2307 = vunpack.c.h.b16 %v1661
    %v2308 = vunpack.c.l.b16 %v1662
    %v2309 = vunpack.c.h.b16 %v1662
    %v2310 = vunpack.c.l.b16 %v1663
    %v2311 = vunpack.c.h.b16 %v1663
    %v2312 = vunpack.c.l.b16 %v1664
    %v2313 = vunpack.c.h.b16 %v1664
    %v2314 = vunpack.c.l.b16 %v1665
    %v2315 = vunpack.c.h.b16 %v1665
    %v2316 = vunpack.c.l.b16 %v1666
    %v2317 = vunpack.c.h.b16 %v1666
    %v2318 = vunpack.c.l.b16 %v1667
    %v2319 = vunpack.c.h.b16 %v1667
    %v2320 = vunpack.c.l.b16 %v1668
    %v2321 = vunpack.c.h.b16 %v1668
    %v2322 = vunpack.c.l.b16 %v1669
    %v2323 = vunpack.c.h.b16 %v1669
    %v2324 = vunpack.c.l.b16 %v1670
    %v2325 = vunpack.c.h.b16 %v1670
    %v2326 = vunpack.c.l.b16 %v1671
    %v2327 = vunpack.c.h.b16 %v1671
    %v2328 = vunpack.c.l.b16 %v1672
    %v2329 = vunpack.c.h.b16 %v1672
    %v2330 = vunpack.c.l.b16 %v1673
    %v2331 = vunpack.c.h.b16 %v1673
    %v2332 = vunpack.c.l.b16 %v1674
    %v2333 = vunpack.c.h.b16 %v1674
    %v2334 = vunpack.c.l.b16 %v1675
    %v2335 = vunpack.c.h.b16 %v1675
    %v2336 = vunpack.c.l.b16 %v1676
    %v2337 = vunpack.c.h.b16 %v1676
    %v2338 = vunpack.c.l.b16 %v1677
    %v2339 = vunpack.c.h.b16 %v1677
    %v2340 = vunpack.c.l.b16 %v1678
    %v2341 = vunpack.c.h.b16 %v1678
    %v2342 = vunpack.c.l.b16 %v1679
    %v2343 = vunpack.c.h.b16 %v1679
    %v2344 = vunpack.c.l.b16 %v1680
    %v2345 = vunpack.c.h.b16 %v1680
    %v2346 = vunpack.c.l.b16 %v1681
    %v2347 = vunpack.c.h.b16 %v1681
    %v2348 = vunpack.c.l.b16 %v1682
    %v2349 = vunpack.c.h.b16 %v1682
    %v2350 = vunpack.c.l.b16 %v1683
    %v2351 = vunpack.c.h.b16 %v1683
    %v2352 = vunpack.c.l.b16 %v1684
    %v2353 = vunpack.c.h.b16 %v1684
    %v2354 = vunpack.c.l.b16 %v1685
    %v2355 = vunpack.c.h.b16 %v1685
    %v2356 = vunpack.c.l.b16 %v1686
    %v2357 = vunpack.c.h.b16 %v1686
    %v2358 = vunpack.c.l.b16 %v1687
    %v2359 = vunpack.c.h.b16 %v1687
    %v2360 = vunpack.c.l.b16 %v1688
    %v2361 = vunpack.c.h.b16 %v1688
    %v2362 = vunpack.c.l.b16 %v1689
    %v2363 = vunpack.c.h.b16 %v1689
    %v2364 = vunpack.c.l.b16 %v1690
    %v2365 = vunpack.c.h.b16 %v1690
    %v2366 = vunpack.c.l.b16 %v1691
    %v2367 = vunpack.c.h.b16 %v1691
    %v2368 = vunpack.c.l.b16 %v1692
    %v2369 = vunpack.c.h.b16 %v1692
    %v2370 = vunpack.c.l.b16 %v1693
    %v2371 = vunpack.c.h.b16 %v1693
    %v2372 = vunpack.c.l.b16 %v1694
    %v2373 = vunpack.c.h.b16 %v1694
    %v2374 = vunpack.c.l.b16 %v1695
    %v2375 = vunpack.c.h.b16 %v1695
    %v2376 = vunpack.c.l.b16 %v1696
    %v2377 = vunpack.c.h.b16 %v1696
    %v2378 = vunpack.c.l.b16 %v1697
    %v2379 = vunpack.c.h.b16 %v1697
    %v2380 = vunpack.c.l.b16 %v1698
    %v2381 = vunpack.c.h.b16 %v1698
    %v2382 = vunpack.c.l.b16 %v1699
    %v2383 = vunpack.c.h.b16 %v1699
    %v2384 = vunpack.c.l.b16 %v1700
    %v2385 = vunpack.c.h.b16 %v1700
    %v2386 = vunpack.c.l.b16 %v1701
    %v2387 = vunpack.c.h.b16 %v1701
    %v2388 = vunpack.c.l.b16 %v1702
    %v2389 = vunpack.c.h.b16 %v1702
    %v2390 = vunpack.c.l.b16 %v1703
    %v2391 = vunpack.c.h.b16 %v1703
    %v2392 = vunpack.c.l.b16 %v1704
    %v2393 = vunpack.c.h.b16 %v1704
    %v2394 = vunpack.c.l.b16 %v1705
    %v2395 = vunpack.c.h.b16 %v1705
    %v2396 = vunpack.c.l.b16 %v1706
    %v2397 = vunpack.c.h.b16 %v1706
    %v2398 = vunpack.c.l.b16 %v1707
    %v2399 = vunpack.c.h.b16 %v1707
    %v2400 = vunpack.c.l.b16 %v1708
    %v2401 = vunpack.c.h.b16 %v1708
    %v2402 = vunpack.c.l.b16 %v1709
    %v2403 = vunpack.c.h.b16 %v1709
    %v2404 = vunpack.c.l.b16 %v1710
    %v2405 = vunpack.c.h.b16 %v1710
    %v2406 = vunpack.c.l.b16 %v1711
    %v2407 = vunpack.c.h.b16 %v1711
    %v2408 = vunpack.c.l.b16 %v1712
    %v2409 = vunpack.c.h.b16 %v1712
    %v2410 = vunpack.c.l.b16 %v1713
    %v2411 = vunpack.c.h.b16 %v1713
    %v2412 = vunpack.c.l.b16 %v1714
    %v2413 = vunpack.c.h.b16 %v1714
    %v2414 = vunpack.c.l.b16 %v1715
    %v2415 = vunpack.c.h.b16 %v1715
    %v2416 = vunpack.c.l.b16 %v1716
    %v2417 = vunpack.c.h.b16 %v1716
    %v2418 = vunpack.c.l.b16 %v1717
    %v2419 = vunpack.c.h.b16 %v1717
    %v2420 = vunpack.c.l.b16 %v1718
    %v2421 = vunpack.c.h.b16 %v1718
    %v2422 = vunpack.c.l.b16 %v1719
    %v2423 = vunpack.c.h.b16 %v1719
    %v2424 = vunpack.c.l.b16 %v1720
    %v2425 = vunpack.c.h.b16 %v1720
    %v2426 = vunpack.c.l.b16 %v1721
    %v2427 = vunpack.c.h.b16 %v1721
    %v2428 = vunpack.c.l.b16 %v1722
    %v2429 = vunpack.c.h.b16 %v1722
    %v2430 = vunpack.c.l.b16 %v1723
    %v2431 = vunpack.c.h.b16 %v1723
    %v2432 = vunpack.c.l.b16 %v1724
    %v2433 = vunpack.c.h.b16 %v1724
    %v2434 = vunpack.c.l.b16 %v1725
    %v2435 = vunpack.c.h.b16 %v1725
    %v2436 = vunpack.c.l.b16 %v1726
    %v2437 = vunpack.c.h.b16 %v1726
    %v2438 = vunpack.c.l.b16 %v1727
    %v2439 = vunpack.c.h.b16 %v1727
    %v2440 = vunpack.c.l.b16 %v1728
    %v2441 = vunpack.c.h.b16 %v1728
    %v2442 = vunpack.c.l.b16 %v1729
    %v2443 = vunpack.c.h.b16 %v1729
    %v2444 = vunpack.c.l.b16 %v1730
    %v2445 = vunpack.c.h.b16 %v1730
    %v2446 = vunpack.c.l.b16 %v1731
    %v2447 = vunpack.c.h.b16 %v1731
    %v2448 = vunpack.c.l.b16 %v1732
    %v2449 = vunpack.c.h.b16 %v1732
    %v2450 = vunpack.c.l.b16 %v1733
    %v2451 = vunpack.c.h.b16 %v1733
    %v2452 = vunpack.c.l.b16 %v1734
    %v2453 = vunpack.c.h.b16 %v1734
    %v2454 = vunpack.c.l.b16 %v1735
    %v2455 = vunpack.c.h.b16 %v1735
    %v2456 = vunpack.c.l.b16 %v1736
    %v2457 = vunpack.c.h.b16 %v1736
    %v2458 = vunpack.c.l.b16 %v1737
    %v2459 = vunpack.c.h.b16 %v1737
    %v2460 = vunpack.c.l.b16 %v1738
    %v2461 = vunpack.c.h.b16 %v1738
    %v2462 = vunpack.c.l.b16 %v1739
    %v2463 = vunpack.c.h.b16 %v1739
    %v2464 = vunpack.c.l.b16 %v1740
    %v2465 = vunpack.c.h.b16 %v1740
    %v2466 = vunpack.c.l.b16 %v1741
    %v2467 = vunpack.c.h.b16 %v1741
    %v2468 = vunpack.c.l.b16 %v1742
    %v2469 = vunpack.c.h.b16 %v1742
    %v2470 = vunpack.c.l.b16 %v1743
    %v2471 = vunpack.c.h.b16 %v1743
    %v2472 = vunpack.c.l.b16 %v1744
    %v2473 = vunpack.c.h.b16 %v1744
    %v2474 = vunpack.c.l.b16 %v1745
    %v2475 = vunpack.c.h.b16 %v1745
    %v2476 = vunpack.c.l.b16 %v1746
    %v2477 = vunpack.c.h.b16 %v1746
    %v2478 = vunpack.c.l.b16 %v1747
    %v2479 = vunpack.c.h.b16 %v1747
    %v2480 = vunpack.c.l.b16 %v1748
    %v2481 = vunpack.c.h.b16 %v1748
    %v2482 = vunpack.c.l.b16 %v1749
    %v2483 = vunpack.c.h.b16 %v1749
    %v2484 = vunpack.c.l.b16 %v1750
    %v2485 = vunpack.c.h.b16 %v1750
    %v2486 = vunpack.c.l.b16 %v1751
    %v2487 = vunpack.c.h.b16 %v1751
    %v2488 = vunpack.c.l.b16 %v1752
    %v2489 = vunpack.c.h.b16 %v1752
    %v2490 = vunpack.c.l.b16 %v1753
    %v2491 = vunpack.c.h.b16 %v1753
    %v2492 = vunpack.c.l.b16 %v1754
    %v2493 = vunpack.c.h.b16 %v1754
    %v2494 = vunpack.c.l.b16 %v1755
    %v2495 = vunpack.c.h.b16 %v1755
    %v2496 = vunpack.c.l.b16 %v1756
    %v2497 = vunpack.c.h.b16 %v1756
    %v2498 = vunpack.c.l.b16 %v1757
    %v2499 = vunpack.c.h.b16 %v1757
    %v2500 = vunpack.c.l.b16 %v1758
    %v2501 = vunpack.c.h.b16 %v1758
    %v2502 = vunpack.c.l.b16 %v1759
    %v2503 = vunpack.c.h.b16 %v1759
    %v2504 = vunpack.c.l.b16 %v1760
    %v2505 = vunpack.c.h.b16 %v1760
    %v2506 = vunpack.c.l.b16 %v1761
    %v2507 = vunpack.c.h.b16 %v1761
    %v2508 = vunpack.c.l.b16 %v1762
    %v2509 = vunpack.c.h.b16 %v1762
    %v2510 = vunpack.c.l.b16 %v1763
    %v2511 = vunpack.c.h.b16 %v1763
    %v2512 = vunpack.c.l.b16 %v1764
    %v2513 = vunpack.c.h.b16 %v1764
    %v2514 = vunpack.c.l.b16 %v1765
    %v2515 = vunpack.c.h.b16 %v1765
    %v2516 = vunpack.c.l.b16 %v1766
    %v2517 = vunpack.c.h.b16 %v1766
    %v2518 = vunpack.c.l.b16 %v1767
    %v2519 = vunpack.c.h.b16 %v1767
    %v2520 = vunpack.c.l.b16 %v1768
    %v2521 = vunpack.c.h.b16 %v1768
    %v2522 = vunpack.c.l.b16 %v1769
    %v2523 = vunpack.c.h.b16 %v1769
    %v2524 = vunpack.c.l.b16 %v1770
    %v2525 = vunpack.c.h.b16 %v1770
    %v2526 = vunpack.c.l.b16 %v1771
    %v2527 = vunpack.c.h.b16 %v1771
    %v2528 = vunpack.c.l.b16 %v1772
    %v2529 = vunpack.c.h.b16 %v1772
    %v2530 = vunpack.c.l.b16 %v1773
    %v2531 = vunpack.c.h.b16 %v1773
    %v2532 = vunpack.c.l.b16 %v1774
    %v2533 = vunpack.c.h.b16 %v1774
    %v2534 = vunpack.c.l.b16 %v1775
    %v2535 = vunpack.c.h.b16 %v1775
    %v2536 = vunpack.c.l.b16 %v1776
    %v2537 = vunpack.c.h.b16 %v1776
    %v2538 = vunpack.c.l.b16 %v1777
    %v2539 = vunpack.c.h.b16 %v1777
    %v2540 = vunpack.c.l.b16 %v1778
    %v2541 = vunpack.c.h.b16 %v1778
    %v2542 = vunpack.c.l.b16 %v1779
    %v2543 = vunpack.c.h.b16 %v1779
    %v2544 = vunpack.c.l.b16 %v1780
    %v2545 = vunpack.c.h.b16 %v1780
    %v2546 = vunpack.c.l.b16 %v1781
    %v2547 = vunpack.c.h.b16 %v1781
    %v2548 = vunpack.c.l.b16 %v1782
    %v2549 = vunpack.c.h.b16 %v1782
    %v2550 = vunpack.c.l.b16 %v1783
    %v2551 = vunpack.c.h.b16 %v1783
    %v2552 = vunpack.c.l.b16 %v1784
    %v2553 = vunpack.c.h.b16 %v1784
    %v2554 = vunpack.c.l.b16 %v1785
    %v2555 = vunpack.c.h.b16 %v1785
    %v2556 = vunpack.c.l.b16 %v1786
    %v2557 = vunpack.c.h.b16 %v1786
    %v2558 = vunpack.c.l.b16 %v1787
    %v2559 = vunpack.c.h.b16 %v1787
    %v2560 = vunpack.c.l.b16 %v1788
    %v2561 = vunpack.c.h.b16 %v1788
    %v2562 = vunpack.c.l.b16 %v1789
    %v2563 = vunpack.c.h.b16 %v1789
    %v2564 = vunpack.c.l.b16 %v1790
    %v2565 = vunpack.c.h.b16 %v1790
    %v2566 = vunpack.c.l.b16 %v1791
    %v2567 = vunpack.c.h.b16 %v1791
    %v2568 = vunpack.c.l.b16 %v1792
    %v2569 = vunpack.c.h.b16 %v1792
    %v2570 = vunpack.c.l.b16 %v1793
    %v2571 = vunpack.c.h.b16 %v1793
    %v2572 = vunpack.c.l.b16 %v1794
    %v2573 = vunpack.c.h.b16 %v1794
    %v2574 = vunpack.c.l.b16 %v1795
    %v2575 = vunpack.c.h.b16 %v1795
    %v2576 = vunpack.c.l.b16 %v1796
    %v2577 = vunpack.c.h.b16 %v1796
    %v2578 = vunpack.c.l.b16 %v1797
    %v2579 = vunpack.c.h.b16 %v1797
    %v2580 = vunpack.c.l.b16 %v1798
    %v2581 = vunpack.c.h.b16 %v1798
    %v2582 = vunpack.c.l.b16 %v1799
    %v2583 = vunpack.c.h.b16 %v1799
    %v2584 = vunpack.c.l.b16 %v1800
    %v2585 = vunpack.c.h.b16 %v1800
    %v2586 = vunpack.c.l.b16 %v1801
    %v2587 = vunpack.c.h.b16 %v1801
    %v2588 = vunpack.c.l.b16 %v1802
    %v2589 = vunpack.c.h.b16 %v1802
    %v2590 = vunpack.c.l.b16 %v1803
    %v2591 = vunpack.c.h.b16 %v1803
    %v2592 = vunpack.c.l.b16 %v1804
    %v2593 = vunpack.c.h.b16 %v1804
    %v2594 = vunpack.c.l.b16 %v1805
    %v2595 = vunpack.c.h.b16 %v1805
    %v2596 = vunpack.c.l.b16 %v1806
    %v2597 = vunpack.c.h.b16 %v1806
    %v2598 = vunpack.c.l.b16 %v1807
    %v2599 = vunpack.c.h.b16 %v1807
    %v2600 = vunpack.c.l.b16 %v1808
    %v2601 = vunpack.c.h.b16 %v1808
    %v2602 = vunpack.c.l.b16 %v1809
    %v2603 = vunpack.c.h.b16 %v1809
    %v2604 = vunpack.c.l.b16 %v1810
    %v2605 = vunpack.c.h.b16 %v1810
    %v2606 = vunpack.c.l.b16 %v1811
    %v2607 = vunpack.c.h.b16 %v1811
    %v2608 = vunpack.c.l.b16 %v1812
    %v2609 = vunpack.c.h.b16 %v1812
    %v2610 = vunpack.c.l.b16 %v1813
    %v2611 = vunpack.c.h.b16 %v1813
    %v2612 = vunpack.c.l.b16 %v1814
    %v2613 = vunpack.c.h.b16 %v1814
    %v2614 = vunpack.c.l.b16 %v1815
    %v2615 = vunpack.c.h.b16 %v1815
    %v2616 = vunpack.c.l.b16 %v1816
    %v2617 = vunpack.c.h.b16 %v1816
    %v2618 = vunpack.c.l.b16 %v1817
    %v2619 = vunpack.c.h.b16 %v1817
    %v2620 = vunpack.c.l.b16 %v1818
    %v2621 = vunpack.c.h.b16 %v1818
    %v2622 = vunpack.c.l.b16 %v1819
    %v2623 = vunpack.c.h.b16 %v1819
    %v2624 = vunpack.c.l.b16 %v1820
    %v2625 = vunpack.c.h.b16 %v1820
    %v2626 = vunpack.c.l.b16 %v1821
    %v2627 = vunpack.c.h.b16 %v1821
    %v2628 = vunpack.c.l.b16 %v1822
    %v2629 = vunpack.c.h.b16 %v1822
    %v2630 = vunpack.c.l.b16 %v1823
    %v2631 = vunpack.c.h.b16 %v1823
    %v2632 = vunpack.c.l.b16 %v1824
    %v2633 = vunpack.c.h.b16 %v1824
    %v2634 = vunpack.c.l.b16 %v1825
    %v2635 = vunpack.c.h.b16 %v1825
    %v2636 = vpack.c.b16 %v2132, %v2124
    %v2637 = vpack.c.b16 %v2133, %v2125
    %v2638 = vpack.c.b16 %v2134, %v2126
    %v2639 = vpack.c.b16 %v2135, %v2127
    %v2640 = vpack.c.b16 %v2136, %v2128
    %v2641 = vpack.c.b16 %v2137, %v2129
    %v2642 = vpack.c.b16 %v2138, %v2130
    %v2643 = vpack.c.b16 %v2139, %v2131
    %v2644 = vpack.c.b16 %v2148, %v2140
    %v2645 = vpack.c.b16 %v2149, %v2141
    %v2646 = vpack.c.b16 %v2150, %v2142
    %v2647 = vpack.c.b16 %v2151, %v2143
    %v2648 = vpack.c.b16 %v2152, %v2144
    %v2649 = vpack.c.b16 %v2153, %v2145
    %v2650 = vpack.c.b16 %v2154, %v2146
    %v2651 = vpack.c.b16 %v2155, %v2147
    %v2652 = vpack.c.b16 %v2164, %v2156
    %v2653 = vpack.c.b16 %v2165, %v2157
    %v2654 = vpack.c.b16 %v2166, %v2158
    %v2655 = vpack.c.b16 %v2167, %v2159
    %v2656 = vpack.c.b16 %v2168, %v2160
    %v2657 = vpack.c.b16 %v2169, %v2161
    %v2658 = vpack.c.b16 %v2170, %v2162
    %v2659 = vpack.c.b16 %v2171, %v2163
    %v2660 = vpack.c.b16 %v2180, %v2172
    %v2661 = vpack.c.b16 %v2181, %v2173
    %v2662 = vpack.c.b16 %v2182, %v2174
    %v2663 = vpack.c.b16 %v2183, %v2175
    %v2664 = vpack.c.b16 %v2184, %v2176
    %v2665 = vpack.c.b16 %v2185, %v2177
    %v2666 = vpack.c.b16 %v2186, %v2178
    %v2667 = vpack.c.b16 %v2187, %v2179
    %v2668 = vpack.c.b16 %v2196, %v2188
    %v2669 = vpack.c.b16 %v2197, %v2189
    %v2670 = vpack.c.b16 %v2198, %v2190
    %v2671 = vpack.c.b16 %v2199, %v2191
    %v2672 = vpack.c.b16 %v2200, %v2192
    %v2673 = vpack.c.b16 %v2201, %v2193
    %v2674 = vpack.c.b16 %v2202, %v2194
    %v2675 = vpack.c.b16 %v2203, %v2195
    %v2676 = vpack.c.b16 %v2212, %v2204
    %v2677 = vpack.c.b16 %v2213, %v2205
    %v2678 = vpack.c.b16 %v2214, %v2206
    %v2679 = vpack.c.b16 %v2215, %v2207
    %v2680 = vpack.c.b16 %v2216, %v2208
    %v2681 = vpack.c.b16 %v2217, %v2209
    %v2682 = vpack.c.b16 %v2218, %v2210
    %v2683 = vpack.c.b16 %v2219, %v2211
    %v2684 = vpack.c.b16 %v2228, %v2220
    %v2685 = vpack.c.b16 %v2229, %v2221
    %v2686 = vpack.c.b16 %v2230, %v2222
    %v2687 = vpack.c.b16 %v2231, %v2223
    %v2688 = vpack.c.b16 %v2232, %v2224
    %v2689 = vpack.c.b16 %v2233, %v2225
    %v2690 = vpack.c.b16 %v2234, %v2226
    %v2691 = vpack.c.b16 %v2235, %v2227
    %v2692 = vpack.c.b16 %v2244, %v2236
    %v2693 = vpack.c.b16 %v2245, %v2237
    %v2694 = vpack.c.b16 %v2246, %v2238
    %v2695 = vpack.c.b16 %v2247, %v2239
    %v2696 = vpack.c.b16 %v2248, %v2240
    %v2697 = vpack.c.b16 %v2249, %v2241
    %v2698 = vpack.c.b16 %v2250, %v2242
    %v2699 = vpack.c.b16 %v2251, %v2243
    %v2700 = vpack.c.b16 %v2260, %v2252
    %v2701 = vpack.c.b16 %v2261, %v2253
    %v2702 = vpack.c.b16 %v2262, %v2254
    %v2703 = vpack.c.b16 %v2263, %v2255
    %v2704 = vpack.c.b16 %v2264, %v2256
    %v2705 = vpack.c.b16 %v2265, %v2257
    %v2706 = vpack.c.b16 %v2266, %v2258
    %v2707 = vpack.c.b16 %v2267, %v2259
    %v2708 = vpack.c.b16 %v2276, %v2268
    %v2709 = vpack.c.b16 %v2277, %v2269
    %v2710 = vpack.c.b16 %v2278, %v2270
    %v2711 = vpack.c.b16 %v2279, %v2271
    %v2712 = vpack.c.b16 %v2280, %v2272
    %v2713 = vpack.c.b16 %v2281, %v2273
    %v2714 = vpack.c.b16 %v2282, %v2274
    %v2715 = vpack.c.b16 %v2283, %v2275
    %v2716 = vpack.c.b16 %v2292, %v2284
    %v2717 = vpack.c.b16 %v2293, %v2285
    %v2718 = vpack.c.b16 %v2294, %v2286
    %v2719 = vpack.c.b16 %v2295, %v2287
    %v2720 = vpack.c.b16 %v2296, %v2288
    %v2721 = vpack.c.b16 %v2297, %v2289
    %v2722 = vpack.c.b16 %v2298, %v2290
    %v2723 = vpack.c.b16 %v2299, %v2291
    %v2724 = vpack.c.b16 %v2308, %v2300
    %v2725 = vpack.c.b16 %v2309, %v2301
    %v2726 = vpack.c.b16 %v2310, %v2302
    %v2727 = vpack.c.b16 %v2311, %v2303
    %v2728 = vpack.c.b16 %v2312, %v2304
    %v2729 = vpack.c.b16 %v2313, %v2305
    %v2730 = vpack.c.b16 %v2314, %v2306
    %v2731 = vpack.c.b16 %v2315, %v2307
    %v2732 = vpack.c.b16 %v2324, %v2316
    %v2733 = vpack.c.b16 %v2325, %v2317
    %v2734 = vpack.c.b16 %v2326, %v2318
    %v2735 = vpack.c.b16 %v2327, %v2319
    %v2736 = vpack.c.b16 %v2328, %v2320
    %v2737 = vpack.c.b16 %v2329, %v2321
    %v2738 = vpack.c.b16 %v2330, %v2322
    %v2739 = vpack.c.b16 %v2331, %v2323
    %v2740 = vpack.c.b16 %v2340, %v2332
    %v2741 = vpack.c.b16 %v2341, %v2333
    %v2742 = vpack.c.b16 %v2342, %v2334
    %v2743 = vpack.c.b16 %v2343, %v2335
    %v2744 = vpack.c.b16 %v2344, %v2336
    %v2745 = vpack.c.b16 %v2345, %v2337
    %v2746 = vpack.c.b16 %v2346, %v2338
    %v2747 = vpack.c.b16 %v2347, %v2339
    %v2748 = vpack.c.b16 %v2356, %v2348
    %v2749 = vpack.c.b16 %v2357, %v2349
    %v2750 = vpack.c.b16 %v2358, %v2350
    %v2751 = vpack.c.b16 %v2359, %v2351
    %v2752 = vpack.c.b16 %v2360, %v2352
    %v2753 = vpack.c.b16 %v2361, %v2353
    %v2754 = vpack.c.b16 %v2362, %v2354
    %v2755 = vpack.c.b16 %v2363, %v2355
    %v2756 = vpack.c.b16 %v2372, %v2364
    %v2757 = vpack.c.b16 %v2373, %v2365
    %v2758 = vpack.c.b16 %v2374, %v2366
    %v2759 = vpack.c.b16 %v2375, %v2367
    %v2760 = vpack.c.b16 %v2376, %v2368
    %v2761 = vpack.c.b16 %v2377, %v2369
    %v2762 = vpack.c.b16 %v2378, %v2370
    %v2763 = vpack.c.b16 %v2379, %v2371
    %v2764 = vpack.c.b16 %v2388, %v2380
    %v2765 = vpack.c.b16 %v2389, %v2381
    %v2766 = vpack.c.b16 %v2390, %v2382
    %v2767 = vpack.c.b16 %v2391, %v2383
    %v2768 = vpack.c.b16 %v2392, %v2384
    %v2769 = vpack.c.b16 %v2393, %v2385
    %v2770 = vpack.c.b16 %v2394, %v2386
    %v2771 = vpack.c.b16 %v2395, %v2387
    %v2772 = vpack.c.b16 %v2404, %v2396
    %v2773 = vpack.c.b16 %v2405, %v2397
    %v2774 = vpack.c.b16 %v2406, %v2398
    %v2775 = vpack.c.b16 %v2407, %v2399
    %v2776 = vpack.c.b16 %v2408, %v2400
    %v2777 = vpack.c.b16 %v2409, %v2401
    %v2778 = vpack.c.b16 %v2410, %v2402
    %v2779 = vpack.c.b16 %v2411, %v2403
    %v2780 = vpack.c.b16 %v2420, %v2412
    %v2781 = vpack.c.b16 %v2421, %v2413
    %v2782 = vpack.c.b16 %v2422, %v2414
    %v2783 = vpack.c.b16 %v2423, %v2415
    %v2784 = vpack.c.b16 %v2424, %v2416
    %v2785 = vpack.c.b16 %v2425, %v2417
    %v2786 = vpack.c.b16 %v2426, %v2418
    %v2787 = vpack.c.b16 %v2427, %v2419
    %v2788 = vpack.c.b16 %v2436, %v2428
    %v2789 = vpack.c.b16 %v2437, %v2429
    %v2790 = vpack.c.b16 %v2438, %v2430
    %v2791 = vpack.c.b16 %v2439, %v2431
    %v2792 = vpack.c.b16 %v2440, %v2432
    %v2793 = vpack.c.b16 %v2441, %v2433
    %v2794 = vpack.c.b16 %v2442, %v2434
    %v2795 = vpack.c.b16 %v2443, %v2435
    %v2796 = vpack.c.b16 %v2452, %v2444
    %v2797 = vpack.c.b16 %v2453, %v2445
    %v2798 = vpack.c.b16 %v2454, %v2446
    %v2799 = vpack.c.b16 %v2455, %v2447
    %v2800 = vpack.c.b16 %v2456, %v2448
    %v2801 = vpack.c.b16 %v2457, %v2449
    %v2802 = vpack.c.b16 %v2458, %v2450
    %v2803 = vpack.c.b16 %v2459, %v2451
    %v2804 = vpack.c.b16 %v2468, %v2460
    %v2805 = vpack.c.b16 %v2469, %v2461
    %v2806 = vpack.c.b16 %v2470, %v2462
    %v2807 = vpack.c.b16 %v2471, %v2463
    %v2808 = vpack.c.b16 %v2472, %v2464
    %v2809 = vpack.c.b16 %v2473, %v2465
    %v2810 = vpack.c.b16 %v2474, %v2466
    %v2811 = vpack.c.b16 %v2475, %v2467
    %v2812 = vpack.c.b16 %v2484, %v2476
    %v2813 = vpack.c.b16 %v2485, %v2477
    %v2814 = vpack.c.b16 %v2486, %v2478
    %v2815 = vpack.c.b16 %v2487, %v2479
    %v2816 = vpack.c.b16 %v2488, %v2480
    %v2817 = vpack.c.b16 %v2489, %v2481
    %v2818 = vpack.c.b16 %v2490, %v2482
    %v2819 = vpack.c.b16 %v2491, %v2483
    %v2820 = vpack.c.b16 %v2500, %v2492
    %v2821 = vpack.c.b16 %v2501, %v2493
    %v2822 = vpack.c.b16 %v2502, %v2494
    %v2823 = vpack.c.b16 %v2503, %v2495
    %v2824 = vpack.c.b16 %v2504, %v2496
    %v2825 = vpack.c.b16 %v2505, %v2497
    %v2826 = vpack.c.b16 %v2506, %v2498
    %v2827 = vpack.c.b16 %v2507, %v2499
    %v2828 = vpack.c.b16 %v2516, %v2508
    %v2829 = vpack.c.b16 %v2517, %v2509
    %v2830 = vpack.c.b16 %v2518, %v2510
    %v2831 = vpack.c.b16 %v2519, %v2511
    %v2832 = vpack.c.b16 %v2520, %v2512
    %v2833 = vpack.c.b16 %v2521, %v2513
    %v2834 = vpack.c.b16 %v2522, %v2514
    %v2835 = vpack.c.b16 %v2523, %v2515
    %v2836 = vpack.c.b16 %v2532, %v2524
    %v2837 = vpack.c.b16 %v2533, %v2525
    %v2838 = vpack.c.b16 %v2534, %v2526
    %v2839 = vpack.c.b16 %v2535, %v2527
    %v2840 = vpack.c.b16 %v2536, %v2528
    %v2841 = vpack.c.b16 %v2537, %v2529
    %v2842 = vpack.c.b16 %v2538, %v2530
    %v2843 = vpack.c.b16 %v2539, %v2531
    %v2844 = vpack.c.b16 %v2548, %v2540
    %v2845 = vpack.c.b16 %v2549, %v2541
    %v2846 = vpack.c.b16 %v2550, %v2542
    %v2847 = vpack.c.b16 %v2551, %v2543
    %v2848 = vpack.c.b16 %v2552, %v2544
    %v2849 = vpack.c.b16 %v2553, %v2545
    %v2850 = vpack.c.b16 %v2554, %v2546
    %v2851 = vpack.c.b16 %v2555, %v2547
    %v2852 = vpack.c.b16 %v2564, %v2556
    %v2853 = vpack.c.b16 %v2565, %v2557
    %v2854 = vpack.c.b16 %v2566, %v2558
    %v2855 = vpack.c.b16 %v2567, %v2559
    %v2856 = vpack.c.b16 %v2568, %v2560
    %v2857 = vpack.c.b16 %v2569, %v2561
    %v2858 = vpack.c.b16 %v2570, %v2562
    %v2859 = vpack.c.b16 %v2571, %v2563
    %v2860 = vpack.c.b16 %v2580, %v2572
    %v2861 = vpack.c.b16 %v2581, %v2573
    %v2862 = vpack.c.b16 %v2582, %v2574
    %v2863 = vpack.c.b16 %v2583, %v2575
    %v2864 = vpack.c.b16 %v2584, %v2576
    %v2865 = vpack.c.b16 %v2585, %v2577
    %v2866 = vpack.c.b16 %v2586, %v2578
    %v2867 = vpack.c.b16 %v2587, %v2579
    %v2868 = vpack.c.b16 %v2596, %v2588
    %v2869 = vpack.c.b16 %v2597, %v2589
    %v2870 = vpack.c.b16 %v2598, %v2590
    %v2871 = vpack.c.b16 %v2599, %v2591
    %v2872 = vpack.c.b16 %v2600, %v2592
    %v2873 = vpack.c.b16 %v2601, %v2593
    %v2874 = vpack.c.b16 %v2602, %v2594
    %v2875 = vpack.c.b16 %v2603, %v2595
    %v2876 = vpack.c.b16 %v2612, %v2604
    %v2877 = vpack.c.b16 %v2613, %v2605
    %v2878 = vpack.c.b16 %v2614, %v2606
    %v2879 = vpack.c.b16 %v2615, %v2607
    %v2880 = vpack.c.b16 %v2616, %v2608
    %v2881 = vpack.c.b16 %v2617, %v2609
    %v2882 = vpack.c.b16 %v2618, %v2610
    %v2883 = vpack.c.b16 %v2619, %v2611
    %v2884 = vpack.c.b16 %v2628, %v2620
    %v2885 = vpack.c.b16 %v2629, %v2621
    %v2886 = vpack.c.b16 %v2630, %v2622
    %v2887 = vpack.c.b16 %v2631, %v2623
    %v2888 = vpack.c.b16 %v2632, %v2624
    %v2889 = vpack.c.b16 %v2633, %v2625
    %v2890 = vpack.c.b16 %v2634, %v2626
    %v2891 = vpack.c.b16 %v2635, %v2627
    %3148 = vmatprep.subr.bf16.mxu0 %v2693
    %3149 = vmatpush1.bf16.msra.mxu0 %v2692
    %3150 = vmatprep.subr.bf16.mxu0 %v2685
    %3151 = vmatpush1.bf16.msra.mxu0 %v2684
    %3152 = vmatprep.subr.bf16.mxu0 %v2677
    %3153 = vmatpush1.bf16.msra.mxu0 %v2676
    %3154 = vmatprep.subr.bf16.mxu0 %v2669
    %3155 = vmatpush1.bf16.msra.mxu0 %v2668
    %3156 = vmatprep.subr.bf16.mxu0 %v2661
    %3157 = vmatpush1.bf16.msra.mxu0 %v2660
    %3158 = vmatprep.subr.bf16.mxu0 %v2653
    %3159 = vmatpush1.bf16.msra.mxu0 %v2652
    %3160 = vmatprep.subr.bf16.mxu0 %v2645
    %3161 = vmatpush1.bf16.msra.mxu0 %v2644
    %3162 = vmatprep.subr.bf16.mxu0 %v2637
    %3163 = vmatpush1.bf16.msra.mxu0 %v2636
    %3164 = vmatprep.subr.bf16.mxu0 %v2757
    %3165 = vmatpush2.bf16.msra.mxu0 %v2756
    %3166 = vmatprep.subr.bf16.mxu0 %v2749
    %3167 = vmatpush2.bf16.msra.mxu0 %v2748
    %3168 = vmatprep.subr.bf16.mxu0 %v2741
    %3169 = vmatpush2.bf16.msra.mxu0 %v2740
    %3170 = vmatprep.subr.bf16.mxu0 %v2733
    %3171 = vmatpush2.bf16.msra.mxu0 %v2732
    %3172 = vmatprep.subr.bf16.mxu0 %v2725
    %3173 = vmatpush2.bf16.msra.mxu0 %v2724
    %3174 = vmatprep.subr.bf16.mxu0 %v2717
    %3175 = vmatpush2.bf16.msra.mxu0 %v2716
    %3176 = vmatprep.subr.bf16.mxu0 %v2709
    %3177 = vmatpush2.bf16.msra.mxu0 %v2708
    %3178 = vmatprep.subr.bf16.mxu0 %v2701
    %3179 = vmatpush2.bf16.msra.mxu0 %v2700
    %3180 = vmatprep.mubr.bf16.mxu0 %v1555
    %3181 = vmatmul.mubr.bf16.gmra.mxu0 %v1554
    %v3182 = vpop.f32.mrf.mxu0
    %v3183 = vadd.f32 %v1831, %v3182
    %v3184 = vpop.f32.mrf.mxu0
    %v3185 = vadd.f32 %v1835, %v3184
    %v3186 = vpop.f32.mrf.mxu0
    %v3187 = vadd.f32 %v1831, %v3186
    %v3188 = vpop.f32.mrf.mxu0
    %v3189 = vadd.f32 %v1835, %v3188
    %3190 = vmatprep.mubr.bf16.mxu0 %v1559
    %3191 = vmatmul.mubr.bf16.gmra.mxu0 %v1558
    %v3192 = vpop.f32.mrf.mxu0
    %v3193 = vadd.f32 %v1831, %v3192
    %v3194 = vpop.f32.mrf.mxu0
    %v3195 = vadd.f32 %v1835, %v3194
    %v3196 = vpop.f32.mrf.mxu0
    %v3197 = vadd.f32 %v1831, %v3196
    %v3198 = vpop.f32.mrf.mxu0
    %v3199 = vadd.f32 %v1835, %v3198
    %3200 = vmatprep.mubr.bf16.mxu0 %v1563
    %3201 = vmatmul.mubr.bf16.gmra.mxu0 %v1562
    %v3202 = vpop.f32.mrf.mxu0
    %v3203 = vadd.f32 %v1831, %v3202
    %v3204 = vpop.f32.mrf.mxu0
    %v3205 = vadd.f32 %v1835, %v3204
    %v3206 = vpop.f32.mrf.mxu0
    %v3207 = vadd.f32 %v1831, %v3206
    %v3208 = vpop.f32.mrf.mxu0
    %v3209 = vadd.f32 %v1835, %v3208
    %3210 = vmatprep.mubr.bf16.mxu0 %v1567
    %3211 = vmatmul.mubr.bf16.gmra.mxu0 %v1566
    %v3212 = vpop.f32.mrf.mxu0
    %v3213 = vadd.f32 %v1831, %v3212
    %v3214 = vpop.f32.mrf.mxu0
    %v3215 = vadd.f32 %v1835, %v3214
    %v3216 = vpop.f32.mrf.mxu0
    %v3217 = vadd.f32 %v1831, %v3216
    %v3218 = vpop.f32.mrf.mxu0
    %v3219 = vadd.f32 %v1835, %v3218
    %3220 = vdwg.mxu0
    %3221 = vmatprep.subr.bf16.mxu0 %v2821
    %3222 = vmatpush1.bf16.msra.mxu0 %v2820
    %3223 = vmatprep.subr.bf16.mxu0 %v2813
    %3224 = vmatpush1.bf16.msra.mxu0 %v2812
    %3225 = vmatprep.subr.bf16.mxu0 %v2805
    %3226 = vmatpush1.bf16.msra.mxu0 %v2804
    %3227 = vmatprep.subr.bf16.mxu0 %v2797
    %3228 = vmatpush1.bf16.msra.mxu0 %v2796
    %3229 = vmatprep.subr.bf16.mxu0 %v2789
    %3230 = vmatpush1.bf16.msra.mxu0 %v2788
    %3231 = vmatprep.subr.bf16.mxu0 %v2781
    %3232 = vmatpush1.bf16.msra.mxu0 %v2780
    %3233 = vmatprep.subr.bf16.mxu0 %v2773
    %3234 = vmatpush1.bf16.msra.mxu0 %v2772
    %3235 = vmatprep.subr.bf16.mxu0 %v2765
    %3236 = vmatpush1.bf16.msra.mxu0 %v2764
    %3237 = vmatprep.subr.bf16.mxu0 %v2885
    %3238 = vmatpush2.bf16.msra.mxu0 %v2884
    %3239 = vmatprep.subr.bf16.mxu0 %v2877
    %3240 = vmatpush2.bf16.msra.mxu0 %v2876
    %3241 = vmatprep.subr.bf16.mxu0 %v2869
    %3242 = vmatpush2.bf16.msra.mxu0 %v2868
    %3243 = vmatprep.subr.bf16.mxu0 %v2861
    %3244 = vmatpush2.bf16.msra.mxu0 %v2860
    %3245 = vmatprep.subr.bf16.mxu0 %v2853
    %3246 = vmatpush2.bf16.msra.mxu0 %v2852
    %3247 = vmatprep.subr.bf16.mxu0 %v2845
    %3248 = vmatpush2.bf16.msra.mxu0 %v2844
    %3249 = vmatprep.subr.bf16.mxu0 %v2837
    %3250 = vmatpush2.bf16.msra.mxu0 %v2836
    %3251 = vmatprep.subr.bf16.mxu0 %v2829
    %3252 = vmatpush2.bf16.msra.mxu0 %v2828
    %3253 = vmatprep.mubr.bf16.mxu0 %v1557
    %3254 = vmatmul.mubr.bf16.gmra.mxu0 %v1556
    %v3255 = vpop.f32.mrf.mxu0
    %v3256 = vadd.f32 %v3183, %v3255
    %v3257 = vpop.f32.mrf.mxu0
    %v3258 = vadd.f32 %v3185, %v3257
    %v3259 = vpop.f32.mrf.mxu0
    %v3260 = vadd.f32 %v3187, %v3259
    %v3261 = vpop.f32.mrf.mxu0
    %v3262 = vadd.f32 %v3189, %v3261
    %3263 = vmatprep.mubr.bf16.mxu0 %v1561
    %3264 = vmatmul.mubr.bf16.gmra.mxu0 %v1560
    %v3265 = vpop.f32.mrf.mxu0
    %v3266 = vadd.f32 %v3193, %v3265
    %v3267 = vpop.f32.mrf.mxu0
    %v3268 = vadd.f32 %v3195, %v3267
    %v3269 = vpop.f32.mrf.mxu0
    %v3270 = vadd.f32 %v3197, %v3269
    %v3271 = vpop.f32.mrf.mxu0
    %v3272 = vadd.f32 %v3199, %v3271
    %3273 = vmatprep.mubr.bf16.mxu0 %v1565
    %3274 = vmatmul.mubr.bf16.gmra.mxu0 %v1564
    %v3275 = vpop.f32.mrf.mxu0
    %v3276 = vadd.f32 %v3203, %v3275
    %v3277 = vpop.f32.mrf.mxu0
    %v3278 = vadd.f32 %v3205, %v3277
    %v3279 = vpop.f32.mrf.mxu0
    %v3280 = vadd.f32 %v3207, %v3279
    %v3281 = vpop.f32.mrf.mxu0
    %v3282 = vadd.f32 %v3209, %v3281
    %3283 = vmatprep.mubr.bf16.mxu0 %v1569
    %3284 = vmatmul.mubr.bf16.gmra.mxu0 %v1568
    %v3285 = vpop.f32.mrf.mxu0
    %v3286 = vadd.f32 %v3213, %v3285
    %v3287 = vpop.f32.mrf.mxu0
    %v3288 = vadd.f32 %v3215, %v3287
    %v3289 = vpop.f32.mrf.mxu0
    %v3290 = vadd.f32 %v3217, %v3289
    %v3291 = vpop.f32.mrf.mxu0
    %v3292 = vadd.f32 %v3219, %v3291
    %3293 = vdwg.mxu0
    %3294 = vmatprep.subr.bf16.mxu0 %v2695
    %3295 = vmatpush1.bf16.msra.mxu0 %v2694
    %3296 = vmatprep.subr.bf16.mxu0 %v2687
    %3297 = vmatpush1.bf16.msra.mxu0 %v2686
    %3298 = vmatprep.subr.bf16.mxu0 %v2679
    %3299 = vmatpush1.bf16.msra.mxu0 %v2678
    %3300 = vmatprep.subr.bf16.mxu0 %v2671
    %3301 = vmatpush1.bf16.msra.mxu0 %v2670
    %3302 = vmatprep.subr.bf16.mxu0 %v2663
    %3303 = vmatpush1.bf16.msra.mxu0 %v2662
    %3304 = vmatprep.subr.bf16.mxu0 %v2655
    %3305 = vmatpush1.bf16.msra.mxu0 %v2654
    %3306 = vmatprep.subr.bf16.mxu0 %v2647
    %3307 = vmatpush1.bf16.msra.mxu0 %v2646
    %3308 = vmatprep.subr.bf16.mxu0 %v2639
    %3309 = vmatpush1.bf16.msra.mxu0 %v2638
    %3310 = vmatprep.subr.bf16.mxu0 %v2759
    %3311 = vmatpush2.bf16.msra.mxu0 %v2758
    %3312 = vmatprep.subr.bf16.mxu0 %v2751
    %3313 = vmatpush2.bf16.msra.mxu0 %v2750
    %3314 = vmatprep.subr.bf16.mxu0 %v2743
    %3315 = vmatpush2.bf16.msra.mxu0 %v2742
    %3316 = vmatprep.subr.bf16.mxu0 %v2735
    %3317 = vmatpush2.bf16.msra.mxu0 %v2734
    %3318 = vmatprep.subr.bf16.mxu0 %v2727
    %3319 = vmatpush2.bf16.msra.mxu0 %v2726
    %3320 = vmatprep.subr.bf16.mxu0 %v2719
    %3321 = vmatpush2.bf16.msra.mxu0 %v2718
    %3322 = vmatprep.subr.bf16.mxu0 %v2711
    %3323 = vmatpush2.bf16.msra.mxu0 %v2710
    %3324 = vmatprep.subr.bf16.mxu0 %v2703
    %3325 = vmatpush2.bf16.msra.mxu0 %v2702
    %3326 = vmatprep.mubr.bf16.mxu0 %v1555
    %3327 = vmatmul.mubr.bf16.gmra.mxu0 %v1554
    %v3328 = vpop.f32.mrf.mxu0
    %v3329 = vadd.f32 %v1839, %v3328
    %v3330 = vpop.f32.mrf.mxu0
    %v3331 = vadd.f32 %v1843, %v3330
    %v3332 = vpop.f32.mrf.mxu0
    %v3333 = vadd.f32 %v1839, %v3332
    %v3334 = vpop.f32.mrf.mxu0
    %v3335 = vadd.f32 %v1843, %v3334
    %3336 = vmatprep.mubr.bf16.mxu0 %v1559
    %3337 = vmatmul.mubr.bf16.gmra.mxu0 %v1558
    %v3338 = vpop.f32.mrf.mxu0
    %v3339 = vadd.f32 %v1839, %v3338
    %v3340 = vpop.f32.mrf.mxu0
    %v3341 = vadd.f32 %v1843, %v3340
    %v3342 = vpop.f32.mrf.mxu0
    %v3343 = vadd.f32 %v1839, %v3342
    %v3344 = vpop.f32.mrf.mxu0
    %v3345 = vadd.f32 %v1843, %v3344
    %3346 = vmatprep.mubr.bf16.mxu0 %v1563
    %3347 = vmatmul.mubr.bf16.gmra.mxu0 %v1562
    %v3348 = vpop.f32.mrf.mxu0
    %v3349 = vadd.f32 %v1839, %v3348
    %v3350 = vpop.f32.mrf.mxu0
    %v3351 = vadd.f32 %v1843, %v3350
    %v3352 = vpop.f32.mrf.mxu0
    %v3353 = vadd.f32 %v1839, %v3352
    %v3354 = vpop.f32.mrf.mxu0
    %v3355 = vadd.f32 %v1843, %v3354
    %3356 = vmatprep.mubr.bf16.mxu0 %v1567
    %3357 = vmatmul.mubr.bf16.gmra.mxu0 %v1566
    %v3358 = vpop.f32.mrf.mxu0
    %v3359 = vadd.f32 %v1839, %v3358
    %v3360 = vpop.f32.mrf.mxu0
    %v3361 = vadd.f32 %v1843, %v3360
    %v3362 = vpop.f32.mrf.mxu0
    %v3363 = vadd.f32 %v1839, %v3362
    %v3364 = vpop.f32.mrf.mxu0
    %v3365 = vadd.f32 %v1843, %v3364
    %3366 = vdwg.mxu0
    %3367 = vmatprep.subr.bf16.mxu0 %v2823
    %3368 = vmatpush1.bf16.msra.mxu0 %v2822
    %3369 = vmatprep.subr.bf16.mxu0 %v2815
    %3370 = vmatpush1.bf16.msra.mxu0 %v2814
    %3371 = vmatprep.subr.bf16.mxu0 %v2807
    %3372 = vmatpush1.bf16.msra.mxu0 %v2806
    %3373 = vmatprep.subr.bf16.mxu0 %v2799
    %3374 = vmatpush1.bf16.msra.mxu0 %v2798
    %3375 = vmatprep.subr.bf16.mxu0 %v2791
    %3376 = vmatpush1.bf16.msra.mxu0 %v2790
    %3377 = vmatprep.subr.bf16.mxu0 %v2783
    %3378 = vmatpush1.bf16.msra.mxu0 %v2782
    %3379 = vmatprep.subr.bf16.mxu0 %v2775
    %3380 = vmatpush1.bf16.msra.mxu0 %v2774
    %3381 = vmatprep.subr.bf16.mxu0 %v2767
    %3382 = vmatpush1.bf16.msra.mxu0 %v2766
    %3383 = vmatprep.subr.bf16.mxu0 %v2887
    %3384 = vmatpush2.bf16.msra.mxu0 %v2886
    %3385 = vmatprep.subr.bf16.mxu0 %v2879
    %3386 = vmatpush2.bf16.msra.mxu0 %v2878
    %3387 = vmatprep.subr.bf16.mxu0 %v2871
    %3388 = vmatpush2.bf16.msra.mxu0 %v2870
    %3389 = vmatprep.subr.bf16.mxu0 %v2863
    %3390 = vmatpush2.bf16.msra.mxu0 %v2862
    %3391 = vmatprep.subr.bf16.mxu0 %v2855
    %3392 = vmatpush2.bf16.msra.mxu0 %v2854
    %3393 = vmatprep.subr.bf16.mxu0 %v2847
    %3394 = vmatpush2.bf16.msra.mxu0 %v2846
    %3395 = vmatprep.subr.bf16.mxu0 %v2839
    %3396 = vmatpush2.bf16.msra.mxu0 %v2838
    %3397 = vmatprep.subr.bf16.mxu0 %v2831
    %3398 = vmatpush2.bf16.msra.mxu0 %v2830
    %3399 = vmatprep.mubr.bf16.mxu0 %v1557
    %3400 = vmatmul.mubr.bf16.gmra.mxu0 %v1556
    %v3401 = vpop.f32.mrf.mxu0
    %v3402 = vadd.f32 %v3329, %v3401
    %v3403 = vpop.f32.mrf.mxu0
    %v3404 = vadd.f32 %v3331, %v3403
    %v3405 = vpop.f32.mrf.mxu0
    %v3406 = vadd.f32 %v3333, %v3405
    %v3407 = vpop.f32.mrf.mxu0
    %v3408 = vadd.f32 %v3335, %v3407
    %3409 = vmatprep.mubr.bf16.mxu0 %v1561
    %3410 = vmatmul.mubr.bf16.gmra.mxu0 %v1560
    %v3411 = vpop.f32.mrf.mxu0
    %v3412 = vadd.f32 %v3339, %v3411
    %v3413 = vpop.f32.mrf.mxu0
    %v3414 = vadd.f32 %v3341, %v3413
    %v3415 = vpop.f32.mrf.mxu0
    %v3416 = vadd.f32 %v3343, %v3415
    %v3417 = vpop.f32.mrf.mxu0
    %v3418 = vadd.f32 %v3345, %v3417
    %3419 = vmatprep.mubr.bf16.mxu0 %v1565
    %3420 = vmatmul.mubr.bf16.gmra.mxu0 %v1564
    %v3421 = vpop.f32.mrf.mxu0
    %v3422 = vadd.f32 %v3349, %v3421
    %v3423 = vpop.f32.mrf.mxu0
    %v3424 = vadd.f32 %v3351, %v3423
    %v3425 = vpop.f32.mrf.mxu0
    %v3426 = vadd.f32 %v3353, %v3425
    %v3427 = vpop.f32.mrf.mxu0
    %v3428 = vadd.f32 %v3355, %v3427
    %3429 = vmatprep.mubr.bf16.mxu0 %v1569
    %3430 = vmatmul.mubr.bf16.gmra.mxu0 %v1568
    %v3431 = vpop.f32.mrf.mxu0
    %v3432 = vadd.f32 %v3359, %v3431
    %v3433 = vpop.f32.mrf.mxu0
    %v3434 = vadd.f32 %v3361, %v3433
    %v3435 = vpop.f32.mrf.mxu0
    %v3436 = vadd.f32 %v3363, %v3435
    %v3437 = vpop.f32.mrf.mxu0
    %v3438 = vadd.f32 %v3365, %v3437
    %3439 = vdwg.mxu0
    %3440 = vmatprep.subr.bf16.mxu0 %v2697
    %3441 = vmatpush1.bf16.msra.mxu0 %v2696
    %3442 = vmatprep.subr.bf16.mxu0 %v2689
    %3443 = vmatpush1.bf16.msra.mxu0 %v2688
    %3444 = vmatprep.subr.bf16.mxu0 %v2681
    %3445 = vmatpush1.bf16.msra.mxu0 %v2680
    %3446 = vmatprep.subr.bf16.mxu0 %v2673
    %3447 = vmatpush1.bf16.msra.mxu0 %v2672
    %3448 = vmatprep.subr.bf16.mxu0 %v2665
    %3449 = vmatpush1.bf16.msra.mxu0 %v2664
    %3450 = vmatprep.subr.bf16.mxu0 %v2657
    %3451 = vmatpush1.bf16.msra.mxu0 %v2656
    %3452 = vmatprep.subr.bf16.mxu0 %v2649
    %3453 = vmatpush1.bf16.msra.mxu0 %v2648
    %3454 = vmatprep.subr.bf16.mxu0 %v2641
    %3455 = vmatpush1.bf16.msra.mxu0 %v2640
    %3456 = vmatprep.subr.bf16.mxu0 %v2761
    %3457 = vmatpush2.bf16.msra.mxu0 %v2760
    %3458 = vmatprep.subr.bf16.mxu0 %v2753
    %3459 = vmatpush2.bf16.msra.mxu0 %v2752
    %3460 = vmatprep.subr.bf16.mxu0 %v2745
    %3461 = vmatpush2.bf16.msra.mxu0 %v2744
    %3462 = vmatprep.subr.bf16.mxu0 %v2737
    %3463 = vmatpush2.bf16.msra.mxu0 %v2736
    %3464 = vmatprep.subr.bf16.mxu0 %v2729
    %3465 = vmatpush2.bf16.msra.mxu0 %v2728
    %3466 = vmatprep.subr.bf16.mxu0 %v2721
    %3467 = vmatpush2.bf16.msra.mxu0 %v2720
    %3468 = vmatprep.subr.bf16.mxu0 %v2713
    %3469 = vmatpush2.bf16.msra.mxu0 %v2712
    %3470 = vmatprep.subr.bf16.mxu0 %v2705
    %3471 = vmatpush2.bf16.msra.mxu0 %v2704
    %3472 = vmatprep.mubr.bf16.mxu0 %v1555
    %3473 = vmatmul.mubr.bf16.gmra.mxu0 %v1554
    %v3474 = vpop.f32.mrf.mxu0
    %v3475 = vadd.f32 %v1847, %v3474
    %v3476 = vpop.f32.mrf.mxu0
    %v3477 = vadd.f32 %v1851, %v3476
    %v3478 = vpop.f32.mrf.mxu0
    %v3479 = vadd.f32 %v1847, %v3478
    %v3480 = vpop.f32.mrf.mxu0
    %v3481 = vadd.f32 %v1851, %v3480
    %3482 = vmatprep.mubr.bf16.mxu0 %v1559
    %3483 = vmatmul.mubr.bf16.gmra.mxu0 %v1558
    %v3484 = vpop.f32.mrf.mxu0
    %v3485 = vadd.f32 %v1847, %v3484
    %v3486 = vpop.f32.mrf.mxu0
    %v3487 = vadd.f32 %v1851, %v3486
    %v3488 = vpop.f32.mrf.mxu0
    %v3489 = vadd.f32 %v1847, %v3488
    %v3490 = vpop.f32.mrf.mxu0
    %v3491 = vadd.f32 %v1851, %v3490
    %3492 = vmatprep.mubr.bf16.mxu0 %v1563
    %3493 = vmatmul.mubr.bf16.gmra.mxu0 %v1562
    %v3494 = vpop.f32.mrf.mxu0
    %v3495 = vadd.f32 %v1847, %v3494
    %v3496 = vpop.f32.mrf.mxu0
    %v3497 = vadd.f32 %v1851, %v3496
    %v3498 = vpop.f32.mrf.mxu0
    %v3499 = vadd.f32 %v1847, %v3498
    %v3500 = vpop.f32.mrf.mxu0
    %v3501 = vadd.f32 %v1851, %v3500
    %3502 = vmatprep.mubr.bf16.mxu0 %v1567
    %3503 = vmatmul.mubr.bf16.gmra.mxu0 %v1566
    %v3504 = vpop.f32.mrf.mxu0
    %v3505 = vadd.f32 %v1847, %v3504
    %v3506 = vpop.f32.mrf.mxu0
    %v3507 = vadd.f32 %v1851, %v3506
    %v3508 = vpop.f32.mrf.mxu0
    %v3509 = vadd.f32 %v1847, %v3508
    %v3510 = vpop.f32.mrf.mxu0
    %v3511 = vadd.f32 %v1851, %v3510
    %3512 = vdwg.mxu0
    %3513 = vmatprep.subr.bf16.mxu0 %v2825
    %3514 = vmatpush1.bf16.msra.mxu0 %v2824
    %3515 = vmatprep.subr.bf16.mxu0 %v2817
    %3516 = vmatpush1.bf16.msra.mxu0 %v2816
    %3517 = vmatprep.subr.bf16.mxu0 %v2809
    %3518 = vmatpush1.bf16.msra.mxu0 %v2808
    %3519 = vmatprep.subr.bf16.mxu0 %v2801
    %3520 = vmatpush1.bf16.msra.mxu0 %v2800
    %3521 = vmatprep.subr.bf16.mxu0 %v2793
    %3522 = vmatpush1.bf16.msra.mxu0 %v2792
    %3523 = vmatprep.subr.bf16.mxu0 %v2785
    %3524 = vmatpush1.bf16.msra.mxu0 %v2784
    %3525 = vmatprep.subr.bf16.mxu0 %v2777
    %3526 = vmatpush1.bf16.msra.mxu0 %v2776
    %3527 = vmatprep.subr.bf16.mxu0 %v2769
    %3528 = vmatpush1.bf16.msra.mxu0 %v2768
    %3529 = vmatprep.subr.bf16.mxu0 %v2889
    %3530 = vmatpush2.bf16.msra.mxu0 %v2888
    %3531 = vmatprep.subr.bf16.mxu0 %v2881
    %3532 = vmatpush2.bf16.msra.mxu0 %v2880
    %3533 = vmatprep.subr.bf16.mxu0 %v2873
    %3534 = vmatpush2.bf16.msra.mxu0 %v2872
    %3535 = vmatprep.subr.bf16.mxu0 %v2865
    %3536 = vmatpush2.bf16.msra.mxu0 %v2864
    %3537 = vmatprep.subr.bf16.mxu0 %v2857
    %3538 = vmatpush2.bf16.msra.mxu0 %v2856
    %3539 = vmatprep.subr.bf16.mxu0 %v2849
    %3540 = vmatpush2.bf16.msra.mxu0 %v2848
    %3541 = vmatprep.subr.bf16.mxu0 %v2841
    %3542 = vmatpush2.bf16.msra.mxu0 %v2840
    %3543 = vmatprep.subr.bf16.mxu0 %v2833
    %3544 = vmatpush2.bf16.msra.mxu0 %v2832
    %3545 = vmatprep.mubr.bf16.mxu0 %v1557
    %3546 = vmatmul.mubr.bf16.gmra.mxu0 %v1556
    %v3547 = vpop.f32.mrf.mxu0
    %v3548 = vadd.f32 %v3475, %v3547
    %v3549 = vpop.f32.mrf.mxu0
    %v3550 = vadd.f32 %v3477, %v3549
    %v3551 = vpop.f32.mrf.mxu0
    %v3552 = vadd.f32 %v3479, %v3551
    %v3553 = vpop.f32.mrf.mxu0
    %v3554 = vadd.f32 %v3481, %v3553
    %3555 = vmatprep.mubr.bf16.mxu0 %v1561
    %3556 = vmatmul.mubr.bf16.gmra.mxu0 %v1560
    %v3557 = vpop.f32.mrf.mxu0
    %v3558 = vadd.f32 %v3485, %v3557
    %v3559 = vpop.f32.mrf.mxu0
    %v3560 = vadd.f32 %v3487, %v3559
    %v3561 = vpop.f32.mrf.mxu0
    %v3562 = vadd.f32 %v3489, %v3561
    %v3563 = vpop.f32.mrf.mxu0
    %v3564 = vadd.f32 %v3491, %v3563
    %3565 = vmatprep.mubr.bf16.mxu0 %v1565
    %3566 = vmatmul.mubr.bf16.gmra.mxu0 %v1564
    %v3567 = vpop.f32.mrf.mxu0
    %v3568 = vadd.f32 %v3495, %v3567
    %v3569 = vpop.f32.mrf.mxu0
    %v3570 = vadd.f32 %v3497, %v3569
    %v3571 = vpop.f32.mrf.mxu0
    %v3572 = vadd.f32 %v3499, %v3571
    %v3573 = vpop.f32.mrf.mxu0
    %v3574 = vadd.f32 %v3501, %v3573
    %3575 = vmatprep.mubr.bf16.mxu0 %v1569
    %3576 = vmatmul.mubr.bf16.gmra.mxu0 %v1568
    %v3577 = vpop.f32.mrf.mxu0
    %v3578 = vadd.f32 %v3505, %v3577
    %v3579 = vpop.f32.mrf.mxu0
    %v3580 = vadd.f32 %v3507, %v3579
    %v3581 = vpop.f32.mrf.mxu0
    %v3582 = vadd.f32 %v3509, %v3581
    %v3583 = vpop.f32.mrf.mxu0
    %v3584 = vadd.f32 %v3511, %v3583
    %3585 = vdwg.mxu0
    %3586 = vmatprep.subr.bf16.mxu0 %v2699
    %3587 = vmatpush1.bf16.msra.mxu0 %v2698
    %3588 = vmatprep.subr.bf16.mxu0 %v2691
    %3589 = vmatpush1.bf16.msra.mxu0 %v2690
    %3590 = vmatprep.subr.bf16.mxu0 %v2683
    %3591 = vmatpush1.bf16.msra.mxu0 %v2682
    %3592 = vmatprep.subr.bf16.mxu0 %v2675
    %3593 = vmatpush1.bf16.msra.mxu0 %v2674
    %3594 = vmatprep.subr.bf16.mxu0 %v2667
    %3595 = vmatpush1.bf16.msra.mxu0 %v2666
    %3596 = vmatprep.subr.bf16.mxu0 %v2659
    %3597 = vmatpush1.bf16.msra.mxu0 %v2658
    %3598 = vmatprep.subr.bf16.mxu0 %v2651
    %3599 = vmatpush1.bf16.msra.mxu0 %v2650
    %3600 = vmatprep.subr.bf16.mxu0 %v2643
    %3601 = vmatpush1.bf16.msra.mxu0 %v2642
    %3602 = vmatprep.subr.bf16.mxu0 %v2763
    %3603 = vmatpush2.bf16.msra.mxu0 %v2762
    %3604 = vmatprep.subr.bf16.mxu0 %v2755
    %3605 = vmatpush2.bf16.msra.mxu0 %v2754
    %3606 = vmatprep.subr.bf16.mxu0 %v2747
    %3607 = vmatpush2.bf16.msra.mxu0 %v2746
    %3608 = vmatprep.subr.bf16.mxu0 %v2739
    %3609 = vmatpush2.bf16.msra.mxu0 %v2738
    %3610 = vmatprep.subr.bf16.mxu0 %v2731
    %3611 = vmatpush2.bf16.msra.mxu0 %v2730
    %3612 = vmatprep.subr.bf16.mxu0 %v2723
    %3613 = vmatpush2.bf16.msra.mxu0 %v2722
    %3614 = vmatprep.subr.bf16.mxu0 %v2715
    %3615 = vmatpush2.bf16.msra.mxu0 %v2714
    %3616 = vmatprep.subr.bf16.mxu0 %v2707
    %3617 = vmatpush2.bf16.msra.mxu0 %v2706
    %3618 = vmatprep.mubr.bf16.mxu0 %v1555
    %3619 = vmatmul.mubr.bf16.gmra.mxu0 %v1554
    %v3620 = vpop.f32.mrf.mxu0
    %v3621 = vadd.f32 %v1855, %v3620
    %v3622 = vpop.f32.mrf.mxu0
    %v3623 = vadd.f32 %v1859, %v3622
    %v3624 = vpop.f32.mrf.mxu0
    %v3625 = vadd.f32 %v1855, %v3624
    %v3626 = vpop.f32.mrf.mxu0
    %v3627 = vadd.f32 %v1859, %v3626
    %3628 = vmatprep.mubr.bf16.mxu0 %v1559
    %3629 = vmatmul.mubr.bf16.gmra.mxu0 %v1558
    %v3630 = vpop.f32.mrf.mxu0
    %v3631 = vadd.f32 %v1855, %v3630
    %v3632 = vpop.f32.mrf.mxu0
    %v3633 = vadd.f32 %v1859, %v3632
    %v3634 = vpop.f32.mrf.mxu0
    %v3635 = vadd.f32 %v1855, %v3634
    %v3636 = vpop.f32.mrf.mxu0
    %v3637 = vadd.f32 %v1859, %v3636
    %3638 = vmatprep.mubr.bf16.mxu0 %v1563
    %3639 = vmatmul.mubr.bf16.gmra.mxu0 %v1562
    %v3640 = vpop.f32.mrf.mxu0
    %v3641 = vadd.f32 %v1855, %v3640
    %v3642 = vpop.f32.mrf.mxu0
    %v3643 = vadd.f32 %v1859, %v3642
    %v3644 = vpop.f32.mrf.mxu0
    %v3645 = vadd.f32 %v1855, %v3644
    %v3646 = vpop.f32.mrf.mxu0
    %v3647 = vadd.f32 %v1859, %v3646
    %3648 = vmatprep.mubr.bf16.mxu0 %v1567
    %3649 = vmatmul.mubr.bf16.gmra.mxu0 %v1566
    %v3650 = vpop.f32.mrf.mxu0
    %v3651 = vadd.f32 %v1855, %v3650
    %v3652 = vpop.f32.mrf.mxu0
    %v3653 = vadd.f32 %v1859, %v3652
    %v3654 = vpop.f32.mrf.mxu0
    %v3655 = vadd.f32 %v1855, %v3654
    %v3656 = vpop.f32.mrf.mxu0
    %v3657 = vadd.f32 %v1859, %v3656
    %3658 = vdwg.mxu0
    %3659 = vmatprep.subr.bf16.mxu0 %v2827
    %3660 = vmatpush1.bf16.msra.mxu0 %v2826
    %3661 = vmatprep.subr.bf16.mxu0 %v2819
    %3662 = vmatpush1.bf16.msra.mxu0 %v2818
    %3663 = vmatprep.subr.bf16.mxu0 %v2811
    %3664 = vmatpush1.bf16.msra.mxu0 %v2810
    %3665 = vmatprep.subr.bf16.mxu0 %v2803
    %3666 = vmatpush1.bf16.msra.mxu0 %v2802
    %3667 = vmatprep.subr.bf16.mxu0 %v2795
    %3668 = vmatpush1.bf16.msra.mxu0 %v2794
    %3669 = vmatprep.subr.bf16.mxu0 %v2787
    %3670 = vmatpush1.bf16.msra.mxu0 %v2786
    %3671 = vmatprep.subr.bf16.mxu0 %v2779
    %3672 = vmatpush1.bf16.msra.mxu0 %v2778
    %3673 = vmatprep.subr.bf16.mxu0 %v2771
    %3674 = vmatpush1.bf16.msra.mxu0 %v2770
    %3675 = vmatprep.subr.bf16.mxu0 %v2891
    %3676 = vmatpush2.bf16.msra.mxu0 %v2890
    %3677 = vmatprep.subr.bf16.mxu0 %v2883
    %3678 = vmatpush2.bf16.msra.mxu0 %v2882
    %3679 = vmatprep.subr.bf16.mxu0 %v2875
    %3680 = vmatpush2.bf16.msra.mxu0 %v2874
    %3681 = vmatprep.subr.bf16.mxu0 %v2867
    %3682 = vmatpush2.bf16.msra.mxu0 %v2866
    %3683 = vmatprep.subr.bf16.mxu0 %v2859
    %3684 = vmatpush2.bf16.msra.mxu0 %v2858
    %3685 = vmatprep.subr.bf16.mxu0 %v2851
    %3686 = vmatpush2.bf16.msra.mxu0 %v2850
    %3687 = vmatprep.subr.bf16.mxu0 %v2843
    %3688 = vmatpush2.bf16.msra.mxu0 %v2842
    %3689 = vmatprep.subr.bf16.mxu0 %v2835
    %3690 = vmatpush2.bf16.msra.mxu0 %v2834
    %3691 = vmatprep.mubr.bf16.mxu0 %v1557
    %3692 = vmatmul.mubr.bf16.gmra.mxu0 %v1556
    %v3693 = vpop.f32.mrf.mxu0
    %v3694 = vadd.f32 %v3621, %v3693
    %v3695 = vpop.f32.mrf.mxu0
    %v3696 = vadd.f32 %v3623, %v3695
    %v3697 = vpop.f32.mrf.mxu0
    %v3698 = vadd.f32 %v3625, %v3697
    %v3699 = vpop.f32.mrf.mxu0
    %v3700 = vadd.f32 %v3627, %v3699
    %3701 = vmatprep.mubr.bf16.mxu0 %v1561
    %3702 = vmatmul.mubr.bf16.gmra.mxu0 %v1560
    %v3703 = vpop.f32.mrf.mxu0
    %v3704 = vadd.f32 %v3631, %v3703
    %v3705 = vpop.f32.mrf.mxu0
    %v3706 = vadd.f32 %v3633, %v3705
    %v3707 = vpop.f32.mrf.mxu0
    %v3708 = vadd.f32 %v3635, %v3707
    %v3709 = vpop.f32.mrf.mxu0
    %v3710 = vadd.f32 %v3637, %v3709
    %3711 = vmatprep.mubr.bf16.mxu0 %v1565
    %3712 = vmatmul.mubr.bf16.gmra.mxu0 %v1564
    %v3713 = vpop.f32.mrf.mxu0
    %v3714 = vadd.f32 %v3641, %v3713
    %v3715 = vpop.f32.mrf.mxu0
    %v3716 = vadd.f32 %v3643, %v3715
    %v3717 = vpop.f32.mrf.mxu0
    %v3718 = vadd.f32 %v3645, %v3717
    %v3719 = vpop.f32.mrf.mxu0
    %v3720 = vadd.f32 %v3647, %v3719
    %3721 = vmatprep.mubr.bf16.mxu0 %v1569
    %3722 = vmatmul.mubr.bf16.gmra.mxu0 %v1568
    %v3723 = vpop.f32.mrf.mxu0
    %v3724 = vadd.f32 %v3651, %v3723
    %v3725 = vpop.f32.mrf.mxu0
    %v3726 = vadd.f32 %v3653, %v3725
    %v3727 = vpop.f32.mrf.mxu0
    %v3728 = vadd.f32 %v3655, %v3727
    %v3729 = vpop.f32.mrf.mxu0
    %v3730 = vadd.f32 %v3657, %v3729
    %3731 = vdwg.mxu0
    %v3732 = vmax.f32 %v3256, 0.0
    %v3733 = vmax.f32 %v3258, 0.0
    %v3734 = vmax.f32 %v3402, 0.0
    %v3735 = vmax.f32 %v3404, 0.0
    %v3736 = vmax.f32 %v3548, 0.0
    %v3737 = vmax.f32 %v3550, 0.0
    %v3738 = vmax.f32 %v3694, 0.0
    %v3739 = vmax.f32 %v3696, 0.0
    %v3740 = vmax.f32 %v3260, 0.0
    %v3741 = vmax.f32 %v3262, 0.0
    %v3742 = vmax.f32 %v3406, 0.0
    %v3743 = vmax.f32 %v3408, 0.0
    %v3744 = vmax.f32 %v3552, 0.0
    %v3745 = vmax.f32 %v3554, 0.0
    %v3746 = vmax.f32 %v3698, 0.0
    %v3747 = vmax.f32 %v3700, 0.0
    %v3748 = vmax.f32 %v3266, 0.0
    %v3749 = vmax.f32 %v3268, 0.0
    %v3750 = vmax.f32 %v3412, 0.0
    %v3751 = vmax.f32 %v3414, 0.0
    %v3752 = vmax.f32 %v3558, 0.0
    %v3753 = vmax.f32 %v3560, 0.0
    %v3754 = vmax.f32 %v3704, 0.0
    %v3755 = vmax.f32 %v3706, 0.0
    %v3756 = vmax.f32 %v3270, 0.0
    %v3757 = vmax.f32 %v3272, 0.0
    %v3758 = vmax.f32 %v3416, 0.0
    %v3759 = vmax.f32 %v3418, 0.0
    %v3760 = vmax.f32 %v3562, 0.0
    %v3761 = vmax.f32 %v3564, 0.0
    %v3762 = vmax.f32 %v3708, 0.0
    %v3763 = vmax.f32 %v3710, 0.0
    %v3764 = vmax.f32 %v3276, 0.0
    %v3765 = vmax.f32 %v3278, 0.0
    %v3766 = vmax.f32 %v3422, 0.0
    %v3767 = vmax.f32 %v3424, 0.0
    %v3768 = vmax.f32 %v3568, 0.0
    %v3769 = vmax.f32 %v3570, 0.0
    %v3770 = vmax.f32 %v3714, 0.0
    %v3771 = vmax.f32 %v3716, 0.0
    %v3772 = vmax.f32 %v3280, 0.0
    %v3773 = vmax.f32 %v3282, 0.0
    %v3774 = vmax.f32 %v3426, 0.0
    %v3775 = vmax.f32 %v3428, 0.0
    %v3776 = vmax.f32 %v3572, 0.0
    %v3777 = vmax.f32 %v3574, 0.0
    %v3778 = vmax.f32 %v3718, 0.0
    %v3779 = vmax.f32 %v3720, 0.0
    %v3780 = vmax.f32 %v3286, 0.0
    %v3781 = vmax.f32 %v3288, 0.0
    %v3782 = vmax.f32 %v3432, 0.0
    %v3783 = vmax.f32 %v3434, 0.0
    %v3784 = vmax.f32 %v3578, 0.0
    %v3785 = vmax.f32 %v3580, 0.0
    %v3786 = vmax.f32 %v3724, 0.0
    %v3787 = vmax.f32 %v3726, 0.0
    %v3788 = vmax.f32 %v3290, 0.0
    %v3789 = vmax.f32 %v3292, 0.0
    %v3790 = vmax.f32 %v3436, 0.0
    %v3791 = vmax.f32 %v3438, 0.0
    %v3792 = vmax.f32 %v3582, 0.0
    %v3793 = vmax.f32 %v3584, 0.0
    %v3794 = vmax.f32 %v3728, 0.0
    %v3795 = vmax.f32 %v3730, 0.0
    %v3796 = vadd.f32 %v3732, %v3740
    %v3797 = vadd.f32 %v3796, %v3748
    %v3798 = vadd.f32 %v3797, %v3756
    %v3799 = vadd.f32 %v3798, %v3764
    %v3800 = vadd.f32 %v3799, %v3772
    %v3801 = vadd.f32 %v3800, %v3780
    %v3802 = vadd.f32 %v3801, %v3788
    %v3803 = vrot.slane %v3802, 4
    %v3804 = vadd.f32 %v3802, %v3803
    %v3805 = vrot.slane %v3804, 2
    %v3806 = vadd.f32 %v3804, %v3805
    %v3807 = vrot.slane %v3806, 1
    %v3808 = vadd.f32 %v3806, %v3807
    %v3809 = vadd.f32 %v3733, %v3741
    %v3810 = vadd.f32 %v3809, %v3749
    %v3811 = vadd.f32 %v3810, %v3757
    %v3812 = vadd.f32 %v3811, %v3765
    %v3813 = vadd.f32 %v3812, %v3773
    %v3814 = vadd.f32 %v3813, %v3781
    %v3815 = vadd.f32 %v3814, %v3789
    %v3816 = vrot.slane %v3815, 4
    %v3817 = vadd.f32 %v3815, %v3816
    %v3818 = vrot.slane %v3817, 2
    %v3819 = vadd.f32 %v3817, %v3818
    %v3820 = vrot.slane %v3819, 1
    %v3821 = vadd.f32 %v3819, %v3820
    %v3822 = vadd.f32 %v3734, %v3742
    %v3823 = vadd.f32 %v3822, %v3750
    %v3824 = vadd.f32 %v3823, %v3758
    %v3825 = vadd.f32 %v3824, %v3766
    %v3826 = vadd.f32 %v3825, %v3774
    %v3827 = vadd.f32 %v3826, %v3782
    %v3828 = vadd.f32 %v3827, %v3790
    %v3829 = vrot.slane %v3828, 4
    %v3830 = vadd.f32 %v3828, %v3829
    %v3831 = vrot.slane %v3830, 2
    %v3832 = vadd.f32 %v3830, %v3831
    %v3833 = vrot.slane %v3832, 1
    %v3834 = vadd.f32 %v3832, %v3833
    %v3835 = vadd.f32 %v3735, %v3743
    %v3836 = vadd.f32 %v3835, %v3751
    %v3837 = vadd.f32 %v3836, %v3759
    %v3838 = vadd.f32 %v3837, %v3767
    %v3839 = vadd.f32 %v3838, %v3775
    %v3840 = vadd.f32 %v3839, %v3783
    %v3841 = vadd.f32 %v3840, %v3791
    %v3842 = vrot.slane %v3841, 4
    %v3843 = vadd.f32 %v3841, %v3842
    %v3844 = vrot.slane %v3843, 2
    %v3845 = vadd.f32 %v3843, %v3844
    %v3846 = vrot.slane %v3845, 1
    %v3847 = vadd.f32 %v3845, %v3846
    %v3848 = vadd.f32 %v3736, %v3744
    %v3849 = vadd.f32 %v3848, %v3752
    %v3850 = vadd.f32 %v3849, %v3760
    %v3851 = vadd.f32 %v3850, %v3768
    %v3852 = vadd.f32 %v3851, %v3776
    %v3853 = vadd.f32 %v3852, %v3784
    %v3854 = vadd.f32 %v3853, %v3792
    %v3855 = vrot.slane %v3854, 4
    %v3856 = vadd.f32 %v3854, %v3855
    %v3857 = vrot.slane %v3856, 2
    %v3858 = vadd.f32 %v3856, %v3857
    %v3859 = vrot.slane %v3858, 1
    %v3860 = vadd.f32 %v3858, %v3859
    %v3861 = vadd.f32 %v3737, %v3745
    %v3862 = vadd.f32 %v3861, %v3753
    %v3863 = vadd.f32 %v3862, %v3761
    %v3864 = vadd.f32 %v3863, %v3769
    %v3865 = vadd.f32 %v3864, %v3777
    %v3866 = vadd.f32 %v3865, %v3785
    %v3867 = vadd.f32 %v3866, %v3793
    %v3868 = vrot.slane %v3867, 4
    %v3869 = vadd.f32 %v3867, %v3868
    %v3870 = vrot.slane %v3869, 2
    %v3871 = vadd.f32 %v3869, %v3870
    %v3872 = vrot.slane %v3871, 1
    %v3873 = vadd.f32 %v3871, %v3872
    %v3874 = vadd.f32 %v3738, %v3746
    %v3875 = vadd.f32 %v3874, %v3754
    %v3876 = vadd.f32 %v3875, %v3762
    %v3877 = vadd.f32 %v3876, %v3770
    %v3878 = vadd.f32 %v3877, %v3778
    %v3879 = vadd.f32 %v3878, %v3786
    %v3880 = vadd.f32 %v3879, %v3794
    %v3881 = vrot.slane %v3880, 4
    %v3882 = vadd.f32 %v3880, %v3881
    %v3883 = vrot.slane %v3882, 2
    %v3884 = vadd.f32 %v3882, %v3883
    %v3885 = vrot.slane %v3884, 1
    %v3886 = vadd.f32 %v3884, %v3885
    %v3887 = vadd.f32 %v3739, %v3747
    %v3888 = vadd.f32 %v3887, %v3755
    %v3889 = vadd.f32 %v3888, %v3763
    %v3890 = vadd.f32 %v3889, %v3771
    %v3891 = vadd.f32 %v3890, %v3779
    %v3892 = vadd.f32 %v3891, %v3787
    %v3893 = vadd.f32 %v3892, %v3795
    %v3894 = vrot.slane %v3893, 4
    %v3895 = vadd.f32 %v3893, %v3894
    %v3896 = vrot.slane %v3895, 2
    %v3897 = vadd.f32 %v3895, %v3896
    %v3898 = vrot.slane %v3897, 1
    %v3899 = vadd.f32 %v3897, %v3898
    %v3900 = vmul.f32 %v3808, 0.015625
    %v3901 = vmul.f32 %v3821, 0.015625
    %v3902 = vmul.f32 %v3834, 0.015625
    %v3903 = vmul.f32 %v3847, 0.015625
    %v3904 = vmul.f32 %v3860, 0.015625
    %v3905 = vmul.f32 %v3873, 0.015625
    %v3906 = vmul.f32 %v3886, 0.015625
    %v3907 = vmul.f32 %v3899, 0.015625
    %v3908 = vld [vmem:[#allocation16] sm:$0xff]
    %v3909 = vld [vmem:[#allocation16 + $0x8] sm:$0xff]
    %v3910 = vld [vmem:[#allocation16 + $0x10] sm:$0xff]
    %v3911 = vld [vmem:[#allocation16 + $0x18] sm:$0xff]
    %v3912 = vld [vmem:[#allocation16 + $0x20] sm:$0xff]
    %v3913 = vld [vmem:[#allocation16 + $0x28] sm:$0xff]
    %v3914 = vld [vmem:[#allocation16 + $0x30] sm:$0xff]
    %v3915 = vld [vmem:[#allocation16 + $0x38] sm:$0xff]
    %v3916 = vld [vmem:[#allocation16 + $0x40] sm:$0xff]
    %v3917 = vld [vmem:[#allocation16 + $0x48] sm:$0xff]
    %v3918 = vld [vmem:[#allocation16 + $0x50] sm:$0xff]
    %v3919 = vld [vmem:[#allocation16 + $0x58] sm:$0xff]
    %v3920 = vld [vmem:[#allocation16 + $0x60] sm:$0xff]
    %v3921 = vld [vmem:[#allocation16 + $0x68] sm:$0xff]
    %v3922 = vld [vmem:[#allocation16 + $0x70] sm:$0xff]
    %v3923 = vld [vmem:[#allocation16 + $0x78] sm:$0xff]
    %v3924 = vld [vmem:[#allocation16 + $0x80] sm:$0xff]
    %v3925 = vld [vmem:[#allocation16 + $0x88] sm:$0xff]
    %v3926 = vld [vmem:[#allocation16 + $0x90] sm:$0xff]
    %v3927 = vld [vmem:[#allocation16 + $0x98] sm:$0xff]
    %v3928 = vld [vmem:[#allocation16 + $0xa0] sm:$0xff]
    %v3929 = vld [vmem:[#allocation16 + $0xa8] sm:$0xff]
    %v3930 = vld [vmem:[#allocation16 + $0xb0] sm:$0xff]
    %v3931 = vld [vmem:[#allocation16 + $0xb8] sm:$0xff]
    %v3932 = vld [vmem:[#allocation16 + $0xc0] sm:$0xff]
    %v3933 = vld [vmem:[#allocation16 + $0xc8] sm:$0xff]
    %v3934 = vld [vmem:[#allocation16 + $0xd0] sm:$0xff]
    %v3935 = vld [vmem:[#allocation16 + $0xd8] sm:$0xff]
    %v3936 = vld [vmem:[#allocation16 + $0xe0] sm:$0xff]
    %v3937 = vld [vmem:[#allocation16 + $0xe8] sm:$0xff]
    %v3938 = vld [vmem:[#allocation16 + $0xf0] sm:$0xff]
    %v3939 = vld [vmem:[#allocation16 + $0xf8] sm:$0xff]
    %v3940 = vld [vmem:[#allocation16 + $0x100] sm:$0xff]
    %v3941 = vld [vmem:[#allocation16 + $0x108] sm:$0xff]
    %v3942 = vld [vmem:[#allocation16 + $0x110] sm:$0xff]
    %v3943 = vld [vmem:[#allocation16 + $0x118] sm:$0xff]
    %v3944 = vld [vmem:[#allocation16 + $0x120] sm:$0xff]
    %v3945 = vld [vmem:[#allocation16 + $0x128] sm:$0xff]
    %v3946 = vld [vmem:[#allocation16 + $0x130] sm:$0xff]
    %v3947 = vld [vmem:[#allocation16 + $0x138] sm:$0xff]
    %v3948 = vld [vmem:[#allocation16 + $0x140] sm:$0xff]
    %v3949 = vld [vmem:[#allocation16 + $0x148] sm:$0xff]
    %v3950 = vld [vmem:[#allocation16 + $0x150] sm:$0xff]
    %v3951 = vld [vmem:[#allocation16 + $0x158] sm:$0xff]
    %v3952 = vld [vmem:[#allocation16 + $0x160] sm:$0xff]
    %v3953 = vld [vmem:[#allocation16 + $0x168] sm:$0xff]
    %v3954 = vld [vmem:[#allocation16 + $0x170] sm:$0xff]
    %v3955 = vld [vmem:[#allocation16 + $0x178] sm:$0xff]
    %v3956 = vld [vmem:[#allocation16 + $0x180] sm:$0xff]
    %v3957 = vld [vmem:[#allocation16 + $0x188] sm:$0xff]
    %v3958 = vld [vmem:[#allocation16 + $0x190] sm:$0xff]
    %v3959 = vld [vmem:[#allocation16 + $0x198] sm:$0xff]
    %v3960 = vld [vmem:[#allocation16 + $0x1a0] sm:$0xff]
    %v3961 = vld [vmem:[#allocation16 + $0x1a8] sm:$0xff]
    %v3962 = vld [vmem:[#allocation16 + $0x1b0] sm:$0xff]
    %v3963 = vld [vmem:[#allocation16 + $0x1b8] sm:$0xff]
    %v3964 = vld [vmem:[#allocation16 + $0x1c0] sm:$0xff]
    %v3965 = vld [vmem:[#allocation16 + $0x1c8] sm:$0xff]
    %v3966 = vld [vmem:[#allocation16 + $0x1d0] sm:$0xff]
    %v3967 = vld [vmem:[#allocation16 + $0x1d8] sm:$0xff]
    %v3968 = vld [vmem:[#allocation16 + $0x1e0] sm:$0xff]
    %v3969 = vld [vmem:[#allocation16 + $0x1e8] sm:$0xff]
    %v3970 = vld [vmem:[#allocation16 + $0x1f0] sm:$0xff]
    %v3971 = vld [vmem:[#allocation16 + $0x1f8] sm:$0xff]
    %v3972 = vld [vmem:[#allocation16 + $0x200] sm:$0xff]
    %v3973 = vld [vmem:[#allocation16 + $0x208] sm:$0xff]
    %v3974 = vld [vmem:[#allocation16 + $0x210] sm:$0xff]
    %v3975 = vld [vmem:[#allocation16 + $0x218] sm:$0xff]
    %v3976 = vld [vmem:[#allocation16 + $0x220] sm:$0xff]
    %v3977 = vld [vmem:[#allocation16 + $0x228] sm:$0xff]
    %v3978 = vld [vmem:[#allocation16 + $0x230] sm:$0xff]
    %v3979 = vld [vmem:[#allocation16 + $0x238] sm:$0xff]
    %v3980 = vld [vmem:[#allocation16 + $0x240] sm:$0xff]
    %v3981 = vld [vmem:[#allocation16 + $0x248] sm:$0xff]
    %v3982 = vld [vmem:[#allocation16 + $0x250] sm:$0xff]
    %v3983 = vld [vmem:[#allocation16 + $0x258] sm:$0xff]
    %v3984 = vld [vmem:[#allocation16 + $0x260] sm:$0xff]
    %v3985 = vld [vmem:[#allocation16 + $0x268] sm:$0xff]
    %v3986 = vld [vmem:[#allocation16 + $0x270] sm:$0xff]
    %v3987 = vld [vmem:[#allocation16 + $0x278] sm:$0xff]
    %v3988 = vld [vmem:[#allocation16 + $0x280] sm:$0xff]
    %v3989 = vld [vmem:[#allocation16 + $0x288] sm:$0xff]
    %v3990 = vld [vmem:[#allocation16 + $0x290] sm:$0xff]
    %v3991 = vld [vmem:[#allocation16 + $0x298] sm:$0xff]
    %v3992 = vld [vmem:[#allocation16 + $0x2a0] sm:$0xff]
    %v3993 = vld [vmem:[#allocation16 + $0x2a8] sm:$0xff]
    %v3994 = vld [vmem:[#allocation16 + $0x2b0] sm:$0xff]
    %v3995 = vld [vmem:[#allocation16 + $0x2b8] sm:$0xff]
    %v3996 = vld [vmem:[#allocation16 + $0x2c0] sm:$0xff]
    %v3997 = vld [vmem:[#allocation16 + $0x2c8] sm:$0xff]
    %v3998 = vld [vmem:[#allocation16 + $0x2d0] sm:$0xff]
    %v3999 = vld [vmem:[#allocation16 + $0x2d8] sm:$0xff]
    %v4000 = vld [vmem:[#allocation16 + $0x2e0] sm:$0xff]
    %v4001 = vld [vmem:[#allocation16 + $0x2e8] sm:$0xff]
    %v4002 = vld [vmem:[#allocation16 + $0x2f0] sm:$0xff]
    %v4003 = vld [vmem:[#allocation16 + $0x2f8] sm:$0xff]
    %v4004 = vld [vmem:[#allocation16 + $0x300] sm:$0xff]
    %v4005 = vld [vmem:[#allocation16 + $0x308] sm:$0xff]
    %v4006 = vld [vmem:[#allocation16 + $0x310] sm:$0xff]
    %v4007 = vld [vmem:[#allocation16 + $0x318] sm:$0xff]
    %v4008 = vld [vmem:[#allocation16 + $0x320] sm:$0xff]
    %v4009 = vld [vmem:[#allocation16 + $0x328] sm:$0xff]
    %v4010 = vld [vmem:[#allocation16 + $0x330] sm:$0xff]
    %v4011 = vld [vmem:[#allocation16 + $0x338] sm:$0xff]
    %v4012 = vld [vmem:[#allocation16 + $0x340] sm:$0xff]
    %v4013 = vld [vmem:[#allocation16 + $0x348] sm:$0xff]
    %v4014 = vld [vmem:[#allocation16 + $0x350] sm:$0xff]
    %v4015 = vld [vmem:[#allocation16 + $0x358] sm:$0xff]
    %v4016 = vld [vmem:[#allocation16 + $0x360] sm:$0xff]
    %v4017 = vld [vmem:[#allocation16 + $0x368] sm:$0xff]
    %v4018 = vld [vmem:[#allocation16 + $0x370] sm:$0xff]
    %v4019 = vld [vmem:[#allocation16 + $0x378] sm:$0xff]
    %v4020 = vld [vmem:[#allocation16 + $0x380] sm:$0xff]
    %v4021 = vld [vmem:[#allocation16 + $0x388] sm:$0xff]
    %v4022 = vld [vmem:[#allocation16 + $0x390] sm:$0xff]
    %v4023 = vld [vmem:[#allocation16 + $0x398] sm:$0xff]
    %v4024 = vld [vmem:[#allocation16 + $0x3a0] sm:$0xff]
    %v4025 = vld [vmem:[#allocation16 + $0x3a8] sm:$0xff]
    %v4026 = vld [vmem:[#allocation16 + $0x3b0] sm:$0xff]
    %v4027 = vld [vmem:[#allocation16 + $0x3b8] sm:$0xff]
    %v4028 = vld [vmem:[#allocation16 + $0x3c0] sm:$0xff]
    %v4029 = vld [vmem:[#allocation16 + $0x3c8] sm:$0xff]
    %v4030 = vld [vmem:[#allocation16 + $0x3d0] sm:$0xff]
    %v4031 = vld [vmem:[#allocation16 + $0x3d8] sm:$0xff]
    %v4032 = vld [vmem:[#allocation16 + $0x3e0] sm:$0xff]
    %v4033 = vld [vmem:[#allocation16 + $0x3e8] sm:$0xff]
    %v4034 = vld [vmem:[#allocation16 + $0x3f0] sm:$0xff]
    %v4035 = vld [vmem:[#allocation16 + $0x3f8] sm:$0xff]
    %v4036 = vld [vmem:[#allocation16 + $0x400] sm:$0xff]
    %v4037 = vld [vmem:[#allocation16 + $0x408] sm:$0xff]
    %v4038 = vld [vmem:[#allocation16 + $0x410] sm:$0xff]
    %v4039 = vld [vmem:[#allocation16 + $0x418] sm:$0xff]
    %v4040 = vld [vmem:[#allocation16 + $0x420] sm:$0xff]
    %v4041 = vld [vmem:[#allocation16 + $0x428] sm:$0xff]
    %v4042 = vld [vmem:[#allocation16 + $0x430] sm:$0xff]
    %v4043 = vld [vmem:[#allocation16 + $0x438] sm:$0xff]
    %v4044 = vld [vmem:[#allocation16 + $0x440] sm:$0xff]
    %v4045 = vld [vmem:[#allocation16 + $0x448] sm:$0xff]
    %v4046 = vld [vmem:[#allocation16 + $0x450] sm:$0xff]
    %v4047 = vld [vmem:[#allocation16 + $0x458] sm:$0xff]
    %v4048 = vld [vmem:[#allocation16 + $0x460] sm:$0xff]
    %v4049 = vld [vmem:[#allocation16 + $0x468] sm:$0xff]
    %v4050 = vld [vmem:[#allocation16 + $0x470] sm:$0xff]
    %v4051 = vld [vmem:[#allocation16 + $0x478] sm:$0xff]
    %v4052 = vld [vmem:[#allocation16 + $0x480] sm:$0xff]
    %v4053 = vld [vmem:[#allocation16 + $0x488] sm:$0xff]
    %v4054 = vld [vmem:[#allocation16 + $0x490] sm:$0xff]
    %v4055 = vld [vmem:[#allocation16 + $0x498] sm:$0xff]
    %v4056 = vld [vmem:[#allocation16 + $0x4a0] sm:$0xff]
    %v4057 = vld [vmem:[#allocation16 + $0x4a8] sm:$0xff]
    %v4058 = vld [vmem:[#allocation16 + $0x4b0] sm:$0xff]
    %v4059 = vld [vmem:[#allocation16 + $0x4b8] sm:$0xff]
    %v4060 = vld [vmem:[#allocation16 + $0x4c0] sm:$0xff]
    %v4061 = vld [vmem:[#allocation16 + $0x4c8] sm:$0xff]
    %v4062 = vld [vmem:[#allocation16 + $0x4d0] sm:$0xff]
    %v4063 = vld [vmem:[#allocation16 + $0x4d8] sm:$0xff]
    %v4064 = vld [vmem:[#allocation16 + $0x4e0] sm:$0xff]
    %v4065 = vld [vmem:[#allocation16 + $0x4e8] sm:$0xff]
    %v4066 = vld [vmem:[#allocation16 + $0x4f0] sm:$0xff]
    %v4067 = vld [vmem:[#allocation16 + $0x4f8] sm:$0xff]
    %v4068 = vld [vmem:[#allocation16 + $0x500] sm:$0xff]
    %v4069 = vld [vmem:[#allocation16 + $0x508] sm:$0xff]
    %v4070 = vld [vmem:[#allocation16 + $0x510] sm:$0xff]
    %v4071 = vld [vmem:[#allocation16 + $0x518] sm:$0xff]
    %v4072 = vld [vmem:[#allocation16 + $0x520] sm:$0xff]
    %v4073 = vld [vmem:[#allocation16 + $0x528] sm:$0xff]
    %v4074 = vld [vmem:[#allocation16 + $0x530] sm:$0xff]
    %v4075 = vld [vmem:[#allocation16 + $0x538] sm:$0xff]
    %v4076 = vld [vmem:[#allocation16 + $0x540] sm:$0xff]
    %v4077 = vld [vmem:[#allocation16 + $0x548] sm:$0xff]
    %v4078 = vld [vmem:[#allocation16 + $0x550] sm:$0xff]
    %v4079 = vld [vmem:[#allocation16 + $0x558] sm:$0xff]
    %v4080 = vld [vmem:[#allocation16 + $0x560] sm:$0xff]
    %v4081 = vld [vmem:[#allocation16 + $0x568] sm:$0xff]
    %v4082 = vld [vmem:[#allocation16 + $0x570] sm:$0xff]
    %v4083 = vld [vmem:[#allocation16 + $0x578] sm:$0xff]
    %v4084 = vld [vmem:[#allocation16 + $0x580] sm:$0xff]
    %v4085 = vld [vmem:[#allocation16 + $0x588] sm:$0xff]
    %v4086 = vld [vmem:[#allocation16 + $0x590] sm:$0xff]
    %v4087 = vld [vmem:[#allocation16 + $0x598] sm:$0xff]
    %v4088 = vld [vmem:[#allocation16 + $0x5a0] sm:$0xff]
    %v4089 = vld [vmem:[#allocation16 + $0x5a8] sm:$0xff]
    %v4090 = vld [vmem:[#allocation16 + $0x5b0] sm:$0xff]
    %v4091 = vld [vmem:[#allocation16 + $0x5b8] sm:$0xff]
    %v4092 = vld [vmem:[#allocation16 + $0x5c0] sm:$0xff]
    %v4093 = vld [vmem:[#allocation16 + $0x5c8] sm:$0xff]
    %v4094 = vld [vmem:[#allocation16 + $0x5d0] sm:$0xff]
    %v4095 = vld [vmem:[#allocation16 + $0x5d8] sm:$0xff]
    %v4096 = vld [vmem:[#allocation16 + $0x5e0] sm:$0xff]
    %v4097 = vld [vmem:[#allocation16 + $0x5e8] sm:$0xff]
    %v4098 = vld [vmem:[#allocation16 + $0x5f0] sm:$0xff]
    %v4099 = vld [vmem:[#allocation16 + $0x5f8] sm:$0xff]
    %v4100 = vld [vmem:[#allocation16 + $0x600] sm:$0xff]
    %v4101 = vld [vmem:[#allocation16 + $0x608] sm:$0xff]
    %v4102 = vld [vmem:[#allocation16 + $0x610] sm:$0xff]
    %v4103 = vld [vmem:[#allocation16 + $0x618] sm:$0xff]
    %v4104 = vld [vmem:[#allocation16 + $0x620] sm:$0xff]
    %v4105 = vld [vmem:[#allocation16 + $0x628] sm:$0xff]
    %v4106 = vld [vmem:[#allocation16 + $0x630] sm:$0xff]
    %v4107 = vld [vmem:[#allocation16 + $0x638] sm:$0xff]
    %v4108 = vld [vmem:[#allocation16 + $0x640] sm:$0xff]
    %v4109 = vld [vmem:[#allocation16 + $0x648] sm:$0xff]
    %v4110 = vld [vmem:[#allocation16 + $0x650] sm:$0xff]
    %v4111 = vld [vmem:[#allocation16 + $0x658] sm:$0xff]
    %v4112 = vld [vmem:[#allocation16 + $0x660] sm:$0xff]
    %v4113 = vld [vmem:[#allocation16 + $0x668] sm:$0xff]
    %v4114 = vld [vmem:[#allocation16 + $0x670] sm:$0xff]
    %v4115 = vld [vmem:[#allocation16 + $0x678] sm:$0xff]
    %v4116 = vld [vmem:[#allocation16 + $0x680] sm:$0xff]
    %v4117 = vld [vmem:[#allocation16 + $0x688] sm:$0xff]
    %v4118 = vld [vmem:[#allocation16 + $0x690] sm:$0xff]
    %v4119 = vld [vmem:[#allocation16 + $0x698] sm:$0xff]
    %v4120 = vld [vmem:[#allocation16 + $0x6a0] sm:$0xff]
    %v4121 = vld [vmem:[#allocation16 + $0x6a8] sm:$0xff]
    %v4122 = vld [vmem:[#allocation16 + $0x6b0] sm:$0xff]
    %v4123 = vld [vmem:[#allocation16 + $0x6b8] sm:$0xff]
    %v4124 = vld [vmem:[#allocation16 + $0x6c0] sm:$0xff]
    %v4125 = vld [vmem:[#allocation16 + $0x6c8] sm:$0xff]
    %v4126 = vld [vmem:[#allocation16 + $0x6d0] sm:$0xff]
    %v4127 = vld [vmem:[#allocation16 + $0x6d8] sm:$0xff]
    %v4128 = vld [vmem:[#allocation16 + $0x6e0] sm:$0xff]
    %v4129 = vld [vmem:[#allocation16 + $0x6e8] sm:$0xff]
    %v4130 = vld [vmem:[#allocation16 + $0x6f0] sm:$0xff]
    %v4131 = vld [vmem:[#allocation16 + $0x6f8] sm:$0xff]
    %v4132 = vld [vmem:[#allocation16 + $0x700] sm:$0xff]
    %v4133 = vld [vmem:[#allocation16 + $0x708] sm:$0xff]
    %v4134 = vld [vmem:[#allocation16 + $0x710] sm:$0xff]
    %v4135 = vld [vmem:[#allocation16 + $0x718] sm:$0xff]
    %v4136 = vld [vmem:[#allocation16 + $0x720] sm:$0xff]
    %v4137 = vld [vmem:[#allocation16 + $0x728] sm:$0xff]
    %v4138 = vld [vmem:[#allocation16 + $0x730] sm:$0xff]
    %v4139 = vld [vmem:[#allocation16 + $0x738] sm:$0xff]
    %v4140 = vld [vmem:[#allocation16 + $0x740] sm:$0xff]
    %v4141 = vld [vmem:[#allocation16 + $0x748] sm:$0xff]
    %v4142 = vld [vmem:[#allocation16 + $0x750] sm:$0xff]
    %v4143 = vld [vmem:[#allocation16 + $0x758] sm:$0xff]
    %v4144 = vld [vmem:[#allocation16 + $0x760] sm:$0xff]
    %v4145 = vld [vmem:[#allocation16 + $0x768] sm:$0xff]
    %v4146 = vld [vmem:[#allocation16 + $0x770] sm:$0xff]
    %v4147 = vld [vmem:[#allocation16 + $0x778] sm:$0xff]
    %v4148 = vld [vmem:[#allocation16 + $0x780] sm:$0xff]
    %v4149 = vld [vmem:[#allocation16 + $0x788] sm:$0xff]
    %v4150 = vld [vmem:[#allocation16 + $0x790] sm:$0xff]
    %v4151 = vld [vmem:[#allocation16 + $0x798] sm:$0xff]
    %v4152 = vld [vmem:[#allocation16 + $0x7a0] sm:$0xff]
    %v4153 = vld [vmem:[#allocation16 + $0x7a8] sm:$0xff]
    %v4154 = vld [vmem:[#allocation16 + $0x7b0] sm:$0xff]
    %v4155 = vld [vmem:[#allocation16 + $0x7b8] sm:$0xff]
    %v4156 = vld [vmem:[#allocation16 + $0x7c0] sm:$0xff]
    %v4157 = vld [vmem:[#allocation16 + $0x7c8] sm:$0xff]
    %v4158 = vld [vmem:[#allocation16 + $0x7d0] sm:$0xff]
    %v4159 = vld [vmem:[#allocation16 + $0x7d8] sm:$0xff]
    %v4160 = vld [vmem:[#allocation16 + $0x7e0] sm:$0xff]
    %v4161 = vld [vmem:[#allocation16 + $0x7e8] sm:$0xff]
    %v4162 = vld [vmem:[#allocation16 + $0x7f0] sm:$0xff]
    %v4163 = vld [vmem:[#allocation16 + $0x7f8] sm:$0xff]
    %v4164 = vld [vmem:[#allocation16 + $0x800] sm:$0xff]
    %v4165 = vld [vmem:[#allocation16 + $0x808] sm:$0xff]
    %v4166 = vld [vmem:[#allocation16 + $0x810] sm:$0xff]
    %v4167 = vld [vmem:[#allocation16 + $0x818] sm:$0xff]
    %v4168 = vld [vmem:[#allocation16 + $0x820] sm:$0xff]
    %v4169 = vld [vmem:[#allocation16 + $0x828] sm:$0xff]
    %v4170 = vld [vmem:[#allocation16 + $0x830] sm:$0xff]
    %v4171 = vld [vmem:[#allocation16 + $0x838] sm:$0xff]
    %v4172 = vld [vmem:[#allocation16 + $0x840] sm:$0xff]
    %v4173 = vld [vmem:[#allocation16 + $0x848] sm:$0xff]
    %v4174 = vld [vmem:[#allocation16 + $0x850] sm:$0xff]
    %v4175 = vld [vmem:[#allocation16 + $0x858] sm:$0xff]
    %v4176 = vld [vmem:[#allocation16 + $0x860] sm:$0xff]
    %v4177 = vld [vmem:[#allocation16 + $0x868] sm:$0xff]
    %v4178 = vld [vmem:[#allocation16 + $0x870] sm:$0xff]
    %v4179 = vld [vmem:[#allocation16 + $0x878] sm:$0xff]
    %v4180 = vld [vmem:[#allocation16 + $0x880] sm:$0xff]
    %v4181 = vld [vmem:[#allocation16 + $0x888] sm:$0xff]
    %v4182 = vld [vmem:[#allocation16 + $0x890] sm:$0xff]
    %v4183 = vld [vmem:[#allocation16 + $0x898] sm:$0xff]
    %v4184 = vld [vmem:[#allocation16 + $0x8a0] sm:$0xff]
    %v4185 = vld [vmem:[#allocation16 + $0x8a8] sm:$0xff]
    %v4186 = vld [vmem:[#allocation16 + $0x8b0] sm:$0xff]
    %v4187 = vld [vmem:[#allocation16 + $0x8b8] sm:$0xff]
    %v4188 = vld [vmem:[#allocation16 + $0x8c0] sm:$0xff]
    %v4189 = vld [vmem:[#allocation16 + $0x8c8] sm:$0xff]
    %v4190 = vld [vmem:[#allocation16 + $0x8d0] sm:$0xff]
    %v4191 = vld [vmem:[#allocation16 + $0x8d8] sm:$0xff]
    %v4192 = vld [vmem:[#allocation16 + $0x8e0] sm:$0xff]
    %v4193 = vld [vmem:[#allocation16 + $0x8e8] sm:$0xff]
    %v4194 = vld [vmem:[#allocation16 + $0x8f0] sm:$0xff]
    %v4195 = vld [vmem:[#allocation16 + $0x8f8] sm:$0xff]
    %v4196 = vld [vmem:[#allocation16 + $0x900] sm:$0xff]
    %v4197 = vld [vmem:[#allocation16 + $0x908] sm:$0xff]
    %v4198 = vld [vmem:[#allocation16 + $0x910] sm:$0xff]
    %v4199 = vld [vmem:[#allocation16 + $0x918] sm:$0xff]
    %v4200 = vld [vmem:[#allocation16 + $0x920] sm:$0xff]
    %v4201 = vld [vmem:[#allocation16 + $0x928] sm:$0xff]
    %v4202 = vld [vmem:[#allocation16 + $0x930] sm:$0xff]
    %v4203 = vld [vmem:[#allocation16 + $0x938] sm:$0xff]
    %v4204 = vld [vmem:[#allocation16 + $0x940] sm:$0xff]
    %v4205 = vld [vmem:[#allocation16 + $0x948] sm:$0xff]
    %v4206 = vld [vmem:[#allocation16 + $0x950] sm:$0xff]
    %v4207 = vld [vmem:[#allocation16 + $0x958] sm:$0xff]
    %v4208 = vld [vmem:[#allocation16 + $0x960] sm:$0xff]
    %v4209 = vld [vmem:[#allocation16 + $0x968] sm:$0xff]
    %v4210 = vld [vmem:[#allocation16 + $0x970] sm:$0xff]
    %v4211 = vld [vmem:[#allocation16 + $0x978] sm:$0xff]
    %v4212 = vld [vmem:[#allocation16 + $0x980] sm:$0xff]
    %v4213 = vld [vmem:[#allocation16 + $0x988] sm:$0xff]
    %v4214 = vld [vmem:[#allocation16 + $0x990] sm:$0xff]
    %v4215 = vld [vmem:[#allocation16 + $0x998] sm:$0xff]
    %v4216 = vld [vmem:[#allocation16 + $0x9a0] sm:$0xff]
    %v4217 = vld [vmem:[#allocation16 + $0x9a8] sm:$0xff]
    %v4218 = vld [vmem:[#allocation16 + $0x9b0] sm:$0xff]
    %v4219 = vld [vmem:[#allocation16 + $0x9b8] sm:$0xff]
    %v4220 = vld [vmem:[#allocation16 + $0x9c0] sm:$0xff]
    %v4221 = vld [vmem:[#allocation16 + $0x9c8] sm:$0xff]
    %v4222 = vld [vmem:[#allocation16 + $0x9d0] sm:$0xff]
    %v4223 = vld [vmem:[#allocation16 + $0x9d8] sm:$0xff]
    %v4224 = vld [vmem:[#allocation16 + $0x9e0] sm:$0xff]
    %v4225 = vld [vmem:[#allocation16 + $0x9e8] sm:$0xff]
    %v4226 = vld [vmem:[#allocation16 + $0x9f0] sm:$0xff]
    %v4227 = vld [vmem:[#allocation16 + $0x9f8] sm:$0xff]
    %v4228 = vld [vmem:[#allocation16 + $0xa00] sm:$0xff]
    %v4229 = vld [vmem:[#allocation16 + $0xa08] sm:$0xff]
    %v4230 = vld [vmem:[#allocation16 + $0xa10] sm:$0xff]
    %v4231 = vld [vmem:[#allocation16 + $0xa18] sm:$0xff]
    %v4232 = vld [vmem:[#allocation16 + $0xa20] sm:$0xff]
    %v4233 = vld [vmem:[#allocation16 + $0xa28] sm:$0xff]
    %v4234 = vld [vmem:[#allocation16 + $0xa30] sm:$0xff]
    %v4235 = vld [vmem:[#allocation16 + $0xa38] sm:$0xff]
    %v4236 = vld [vmem:[#allocation16 + $0xa40] sm:$0xff]
    %v4237 = vld [vmem:[#allocation16 + $0xa48] sm:$0xff]
    %v4238 = vld [vmem:[#allocation16 + $0xa50] sm:$0xff]
    %v4239 = vld [vmem:[#allocation16 + $0xa58] sm:$0xff]
    %v4240 = vld [vmem:[#allocation16 + $0xa60] sm:$0xff]
    %v4241 = vld [vmem:[#allocation16 + $0xa68] sm:$0xff]
    %v4242 = vld [vmem:[#allocation16 + $0xa70] sm:$0xff]
    %v4243 = vld [vmem:[#allocation16 + $0xa78] sm:$0xff]
    %v4244 = vld [vmem:[#allocation16 + $0xa80] sm:$0xff]
    %v4245 = vld [vmem:[#allocation16 + $0xa88] sm:$0xff]
    %v4246 = vld [vmem:[#allocation16 + $0xa90] sm:$0xff]
    %v4247 = vld [vmem:[#allocation16 + $0xa98] sm:$0xff]
    %v4248 = vld [vmem:[#allocation16 + $0xaa0] sm:$0xff]
    %v4249 = vld [vmem:[#allocation16 + $0xaa8] sm:$0xff]
    %v4250 = vld [vmem:[#allocation16 + $0xab0] sm:$0xff]
    %v4251 = vld [vmem:[#allocation16 + $0xab8] sm:$0xff]
    %v4252 = vld [vmem:[#allocation16 + $0xac0] sm:$0xff]
    %v4253 = vld [vmem:[#allocation16 + $0xac8] sm:$0xff]
    %v4254 = vld [vmem:[#allocation16 + $0xad0] sm:$0xff]
    %v4255 = vld [vmem:[#allocation16 + $0xad8] sm:$0xff]
    %v4256 = vld [vmem:[#allocation16 + $0xae0] sm:$0xff]
    %v4257 = vld [vmem:[#allocation16 + $0xae8] sm:$0xff]
    %v4258 = vld [vmem:[#allocation16 + $0xaf0] sm:$0xff]
    %v4259 = vld [vmem:[#allocation16 + $0xaf8] sm:$0xff]
    %v4260 = vld [vmem:[#allocation16 + $0xb00] sm:$0xff]
    %v4261 = vld [vmem:[#allocation16 + $0xb08] sm:$0xff]
    %v4262 = vld [vmem:[#allocation16 + $0xb10] sm:$0xff]
    %v4263 = vld [vmem:[#allocation16 + $0xb18] sm:$0xff]
    %v4264 = vld [vmem:[#allocation16 + $0xb20] sm:$0xff]
    %v4265 = vld [vmem:[#allocation16 + $0xb28] sm:$0xff]
    %v4266 = vld [vmem:[#allocation16 + $0xb30] sm:$0xff]
    %v4267 = vld [vmem:[#allocation16 + $0xb38] sm:$0xff]
    %v4268 = vld [vmem:[#allocation16 + $0xb40] sm:$0xff]
    %v4269 = vld [vmem:[#allocation16 + $0xb48] sm:$0xff]
    %v4270 = vld [vmem:[#allocation16 + $0xb50] sm:$0xff]
    %v4271 = vld [vmem:[#allocation16 + $0xb58] sm:$0xff]
    %v4272 = vld [vmem:[#allocation16 + $0xb60] sm:$0xff]
    %v4273 = vld [vmem:[#allocation16 + $0xb68] sm:$0xff]
    %v4274 = vld [vmem:[#allocation16 + $0xb70] sm:$0xff]
    %v4275 = vld [vmem:[#allocation16 + $0xb78] sm:$0xff]
    %v4276 = vld [vmem:[#allocation16 + $0xb80] sm:$0xff]
    %v4277 = vld [vmem:[#allocation16 + $0xb88] sm:$0xff]
    %v4278 = vld [vmem:[#allocation16 + $0xb90] sm:$0xff]
    %v4279 = vld [vmem:[#allocation16 + $0xb98] sm:$0xff]
    %v4280 = vld [vmem:[#allocation16 + $0xba0] sm:$0xff]
    %v4281 = vld [vmem:[#allocation16 + $0xba8] sm:$0xff]
    %v4282 = vld [vmem:[#allocation16 + $0xbb0] sm:$0xff]
    %v4283 = vld [vmem:[#allocation16 + $0xbb8] sm:$0xff]
    %v4284 = vld [vmem:[#allocation16 + $0xbc0] sm:$0xff]
    %v4285 = vld [vmem:[#allocation16 + $0xbc8] sm:$0xff]
    %v4286 = vld [vmem:[#allocation16 + $0xbd0] sm:$0xff]
    %v4287 = vld [vmem:[#allocation16 + $0xbd8] sm:$0xff]
    %v4288 = vld [vmem:[#allocation16 + $0xbe0] sm:$0xff]
    %v4289 = vld [vmem:[#allocation16 + $0xbe8] sm:$0xff]
    %v4290 = vld [vmem:[#allocation16 + $0xbf0] sm:$0xff]
    %v4291 = vld [vmem:[#allocation16 + $0xbf8] sm:$0xff]
    %v4292 = vld [vmem:[#allocation16 + $0xc00] sm:$0xff]
    %v4293 = vld [vmem:[#allocation16 + $0xc08] sm:$0xff]
    %v4294 = vld [vmem:[#allocation16 + $0xc10] sm:$0xff]
    %v4295 = vld [vmem:[#allocation16 + $0xc18] sm:$0xff]
    %v4296 = vld [vmem:[#allocation16 + $0xc20] sm:$0xff]
    %v4297 = vld [vmem:[#allocation16 + $0xc28] sm:$0xff]
    %v4298 = vld [vmem:[#allocation16 + $0xc30] sm:$0xff]
    %v4299 = vld [vmem:[#allocation16 + $0xc38] sm:$0xff]
    %v4300 = vld [vmem:[#allocation16 + $0xc40] sm:$0xff]
    %v4301 = vld [vmem:[#allocation16 + $0xc48] sm:$0xff]
    %v4302 = vld [vmem:[#allocation16 + $0xc50] sm:$0xff]
    %v4303 = vld [vmem:[#allocation16 + $0xc58] sm:$0xff]
    %v4304 = vld [vmem:[#allocation16 + $0xc60] sm:$0xff]
    %v4305 = vld [vmem:[#allocation16 + $0xc68] sm:$0xff]
    %v4306 = vld [vmem:[#allocation16 + $0xc70] sm:$0xff]
    %v4307 = vld [vmem:[#allocation16 + $0xc78] sm:$0xff]
    %v4308 = vld [vmem:[#allocation16 + $0xc80] sm:$0xff]
    %v4309 = vld [vmem:[#allocation16 + $0xc88] sm:$0xff]
    %v4310 = vld [vmem:[#allocation16 + $0xc90] sm:$0xff]
    %v4311 = vld [vmem:[#allocation16 + $0xc98] sm:$0xff]
    %v4312 = vld [vmem:[#allocation16 + $0xca0] sm:$0xff]
    %v4313 = vld [vmem:[#allocation16 + $0xca8] sm:$0xff]
    %v4314 = vld [vmem:[#allocation16 + $0xcb0] sm:$0xff]
    %v4315 = vld [vmem:[#allocation16 + $0xcb8] sm:$0xff]
    %v4316 = vld [vmem:[#allocation16 + $0xcc0] sm:$0xff]
    %v4317 = vld [vmem:[#allocation16 + $0xcc8] sm:$0xff]
    %v4318 = vld [vmem:[#allocation16 + $0xcd0] sm:$0xff]
    %v4319 = vld [vmem:[#allocation16 + $0xcd8] sm:$0xff]
    %v4320 = vld [vmem:[#allocation16 + $0xce0] sm:$0xff]
    %v4321 = vld [vmem:[#allocation16 + $0xce8] sm:$0xff]
    %v4322 = vld [vmem:[#allocation16 + $0xcf0] sm:$0xff]
    %v4323 = vld [vmem:[#allocation16 + $0xcf8] sm:$0xff]
    %v4324 = vld [vmem:[#allocation16 + $0xd00] sm:$0xff]
    %v4325 = vld [vmem:[#allocation16 + $0xd08] sm:$0xff]
    %v4326 = vld [vmem:[#allocation16 + $0xd10] sm:$0xff]
    %v4327 = vld [vmem:[#allocation16 + $0xd18] sm:$0xff]
    %v4328 = vld [vmem:[#allocation16 + $0xd20] sm:$0xff]
    %v4329 = vld [vmem:[#allocation16 + $0xd28] sm:$0xff]
    %v4330 = vld [vmem:[#allocation16 + $0xd30] sm:$0xff]
    %v4331 = vld [vmem:[#allocation16 + $0xd38] sm:$0xff]
    %v4332 = vld [vmem:[#allocation16 + $0xd40] sm:$0xff]
    %v4333 = vld [vmem:[#allocation16 + $0xd48] sm:$0xff]
    %v4334 = vld [vmem:[#allocation16 + $0xd50] sm:$0xff]
    %v4335 = vld [vmem:[#allocation16 + $0xd58] sm:$0xff]
    %v4336 = vld [vmem:[#allocation16 + $0xd60] sm:$0xff]
    %v4337 = vld [vmem:[#allocation16 + $0xd68] sm:$0xff]
    %v4338 = vld [vmem:[#allocation16 + $0xd70] sm:$0xff]
    %v4339 = vld [vmem:[#allocation16 + $0xd78] sm:$0xff]
    %v4340 = vld [vmem:[#allocation16 + $0xd80] sm:$0xff]
    %v4341 = vld [vmem:[#allocation16 + $0xd88] sm:$0xff]
    %v4342 = vld [vmem:[#allocation16 + $0xd90] sm:$0xff]
    %v4343 = vld [vmem:[#allocation16 + $0xd98] sm:$0xff]
    %v4344 = vld [vmem:[#allocation16 + $0xda0] sm:$0xff]
    %v4345 = vld [vmem:[#allocation16 + $0xda8] sm:$0xff]
    %v4346 = vld [vmem:[#allocation16 + $0xdb0] sm:$0xff]
    %v4347 = vld [vmem:[#allocation16 + $0xdb8] sm:$0xff]
    %v4348 = vld [vmem:[#allocation16 + $0xdc0] sm:$0xff]
    %v4349 = vld [vmem:[#allocation16 + $0xdc8] sm:$0xff]
    %v4350 = vld [vmem:[#allocation16 + $0xdd0] sm:$0xff]
    %v4351 = vld [vmem:[#allocation16 + $0xdd8] sm:$0xff]
    %v4352 = vld [vmem:[#allocation16 + $0xde0] sm:$0xff]
    %v4353 = vld [vmem:[#allocation16 + $0xde8] sm:$0xff]
    %v4354 = vld [vmem:[#allocation16 + $0xdf0] sm:$0xff]
    %v4355 = vld [vmem:[#allocation16 + $0xdf8] sm:$0xff]
    %v4356 = vld [vmem:[#allocation16 + $0xe00] sm:$0xff]
    %v4357 = vld [vmem:[#allocation16 + $0xe08] sm:$0xff]
    %v4358 = vld [vmem:[#allocation16 + $0xe10] sm:$0xff]
    %v4359 = vld [vmem:[#allocation16 + $0xe18] sm:$0xff]
    %v4360 = vld [vmem:[#allocation16 + $0xe20] sm:$0xff]
    %v4361 = vld [vmem:[#allocation16 + $0xe28] sm:$0xff]
    %v4362 = vld [vmem:[#allocation16 + $0xe30] sm:$0xff]
    %v4363 = vld [vmem:[#allocation16 + $0xe38] sm:$0xff]
    %v4364 = vld [vmem:[#allocation16 + $0xe40] sm:$0xff]
    %v4365 = vld [vmem:[#allocation16 + $0xe48] sm:$0xff]
    %v4366 = vld [vmem:[#allocation16 + $0xe50] sm:$0xff]
    %v4367 = vld [vmem:[#allocation16 + $0xe58] sm:$0xff]
    %v4368 = vld [vmem:[#allocation16 + $0xe60] sm:$0xff]
    %v4369 = vld [vmem:[#allocation16 + $0xe68] sm:$0xff]
    %v4370 = vld [vmem:[#allocation16 + $0xe70] sm:$0xff]
    %v4371 = vld [vmem:[#allocation16 + $0xe78] sm:$0xff]
    %v4372 = vld [vmem:[#allocation16 + $0xe80] sm:$0xff]
    %v4373 = vld [vmem:[#allocation16 + $0xe88] sm:$0xff]
    %v4374 = vld [vmem:[#allocation16 + $0xe90] sm:$0xff]
    %v4375 = vld [vmem:[#allocation16 + $0xe98] sm:$0xff]
    %v4376 = vld [vmem:[#allocation16 + $0xea0] sm:$0xff]
    %v4377 = vld [vmem:[#allocation16 + $0xea8] sm:$0xff]
    %v4378 = vld [vmem:[#allocation16 + $0xeb0] sm:$0xff]
    %v4379 = vld [vmem:[#allocation16 + $0xeb8] sm:$0xff]
    %v4380 = vld [vmem:[#allocation16 + $0xec0] sm:$0xff]
    %v4381 = vld [vmem:[#allocation16 + $0xec8] sm:$0xff]
    %v4382 = vld [vmem:[#allocation16 + $0xed0] sm:$0xff]
    %v4383 = vld [vmem:[#allocation16 + $0xed8] sm:$0xff]
    %v4384 = vld [vmem:[#allocation16 + $0xee0] sm:$0xff]
    %v4385 = vld [vmem:[#allocation16 + $0xee8] sm:$0xff]
    %v4386 = vld [vmem:[#allocation16 + $0xef0] sm:$0xff]
    %v4387 = vld [vmem:[#allocation16 + $0xef8] sm:$0xff]
    %v4388 = vld [vmem:[#allocation16 + $0xf00] sm:$0xff]
    %v4389 = vld [vmem:[#allocation16 + $0xf08] sm:$0xff]
    %v4390 = vld [vmem:[#allocation16 + $0xf10] sm:$0xff]
    %v4391 = vld [vmem:[#allocation16 + $0xf18] sm:$0xff]
    %v4392 = vld [vmem:[#allocation16 + $0xf20] sm:$0xff]
    %v4393 = vld [vmem:[#allocation16 + $0xf28] sm:$0xff]
    %v4394 = vld [vmem:[#allocation16 + $0xf30] sm:$0xff]
    %v4395 = vld [vmem:[#allocation16 + $0xf38] sm:$0xff]
    %v4396 = vld [vmem:[#allocation16 + $0xf40] sm:$0xff]
    %v4397 = vld [vmem:[#allocation16 + $0xf48] sm:$0xff]
    %v4398 = vld [vmem:[#allocation16 + $0xf50] sm:$0xff]
    %v4399 = vld [vmem:[#allocation16 + $0xf58] sm:$0xff]
    %v4400 = vld [vmem:[#allocation16 + $0xf60] sm:$0xff]
    %v4401 = vld [vmem:[#allocation16 + $0xf68] sm:$0xff]
    %v4402 = vld [vmem:[#allocation16 + $0xf70] sm:$0xff]
    %v4403 = vld [vmem:[#allocation16 + $0xf78] sm:$0xff]
    %v4404 = vld [vmem:[#allocation16 + $0xf80] sm:$0xff]
    %v4405 = vld [vmem:[#allocation16 + $0xf88] sm:$0xff]
    %v4406 = vld [vmem:[#allocation16 + $0xf90] sm:$0xff]
    %v4407 = vld [vmem:[#allocation16 + $0xf98] sm:$0xff]
    %v4408 = vld [vmem:[#allocation16 + $0xfa0] sm:$0xff]
    %v4409 = vld [vmem:[#allocation16 + $0xfa8] sm:$0xff]
    %v4410 = vld [vmem:[#allocation16 + $0xfb0] sm:$0xff]
    %v4411 = vld [vmem:[#allocation16 + $0xfb8] sm:$0xff]
    %v4412 = vld [vmem:[#allocation16 + $0xfc0] sm:$0xff]
    %v4413 = vld [vmem:[#allocation16 + $0xfc8] sm:$0xff]
    %v4414 = vld [vmem:[#allocation16 + $0xfd0] sm:$0xff]
    %v4415 = vld [vmem:[#allocation16 + $0xfd8] sm:$0xff]
    %v4416 = vld [vmem:[#allocation16 + $0xfe0] sm:$0xff]
    %v4417 = vld [vmem:[#allocation16 + $0xfe8] sm:$0xff]
    %v4418 = vld [vmem:[#allocation16 + $0xff0] sm:$0xff]
    %v4419 = vld [vmem:[#allocation16 + $0xff8] sm:$0xff]
    %v4420 = vunpack.c.l.bf16 %v3908
    %v4421 = vunpack.c.h.bf16 %v3908
    %v4422 = vunpack.c.l.bf16 %v3909
    %v4423 = vunpack.c.h.bf16 %v3909
    %v4424 = vunpack.c.l.bf16 %v3910
    %v4425 = vunpack.c.h.bf16 %v3910
    %v4426 = vunpack.c.l.bf16 %v3911
    %v4427 = vunpack.c.h.bf16 %v3911
    %v4428 = vunpack.c.l.bf16 %v3912
    %v4429 = vunpack.c.h.bf16 %v3912
    %v4430 = vunpack.c.l.bf16 %v3913
    %v4431 = vunpack.c.h.bf16 %v3913
    %v4432 = vunpack.c.l.bf16 %v3914
    %v4433 = vunpack.c.h.bf16 %v3914
    %v4434 = vunpack.c.l.bf16 %v3915
    %v4435 = vunpack.c.h.bf16 %v3915
    %v4436 = vunpack.c.l.bf16 %v3916
    %v4437 = vunpack.c.h.bf16 %v3916
    %v4438 = vunpack.c.l.bf16 %v3917
    %v4439 = vunpack.c.h.bf16 %v3917
    %v4440 = vunpack.c.l.bf16 %v3918
    %v4441 = vunpack.c.h.bf16 %v3918
    %v4442 = vunpack.c.l.bf16 %v3919
    %v4443 = vunpack.c.h.bf16 %v3919
    %v4444 = vunpack.c.l.bf16 %v3920
    %v4445 = vunpack.c.h.bf16 %v3920
    %v4446 = vunpack.c.l.bf16 %v3921
    %v4447 = vunpack.c.h.bf16 %v3921
    %v4448 = vunpack.c.l.bf16 %v3922
    %v4449 = vunpack.c.h.bf16 %v3922
    %v4450 = vunpack.c.l.bf16 %v3923
    %v4451 = vunpack.c.h.bf16 %v3923
    %v4452 = vunpack.c.l.bf16 %v3924
    %v4453 = vunpack.c.h.bf16 %v3924
    %v4454 = vunpack.c.l.bf16 %v3925
    %v4455 = vunpack.c.h.bf16 %v3925
    %v4456 = vunpack.c.l.bf16 %v3926
    %v4457 = vunpack.c.h.bf16 %v3926
    %v4458 = vunpack.c.l.bf16 %v3927
    %v4459 = vunpack.c.h.bf16 %v3927
    %v4460 = vunpack.c.l.bf16 %v3928
    %v4461 = vunpack.c.h.bf16 %v3928
    %v4462 = vunpack.c.l.bf16 %v3929
    %v4463 = vunpack.c.h.bf16 %v3929
    %v4464 = vunpack.c.l.bf16 %v3930
    %v4465 = vunpack.c.h.bf16 %v3930
    %v4466 = vunpack.c.l.bf16 %v3931
    %v4467 = vunpack.c.h.bf16 %v3931
    %v4468 = vunpack.c.l.bf16 %v3932
    %v4469 = vunpack.c.h.bf16 %v3932
    %v4470 = vunpack.c.l.bf16 %v3933
    %v4471 = vunpack.c.h.bf16 %v3933
    %v4472 = vunpack.c.l.bf16 %v3934
    %v4473 = vunpack.c.h.bf16 %v3934
    %v4474 = vunpack.c.l.bf16 %v3935
    %v4475 = vunpack.c.h.bf16 %v3935
    %v4476 = vunpack.c.l.bf16 %v3936
    %v4477 = vunpack.c.h.bf16 %v3936
    %v4478 = vunpack.c.l.bf16 %v3937
    %v4479 = vunpack.c.h.bf16 %v3937
    %v4480 = vunpack.c.l.bf16 %v3938
    %v4481 = vunpack.c.h.bf16 %v3938
    %v4482 = vunpack.c.l.bf16 %v3939
    %v4483 = vunpack.c.h.bf16 %v3939
    %v4484 = vunpack.c.l.bf16 %v3940
    %v4485 = vunpack.c.h.bf16 %v3940
    %v4486 = vunpack.c.l.bf16 %v3941
    %v4487 = vunpack.c.h.bf16 %v3941
    %v4488 = vunpack.c.l.bf16 %v3942
    %v4489 = vunpack.c.h.bf16 %v3942
    %v4490 = vunpack.c.l.bf16 %v3943
    %v4491 = vunpack.c.h.bf16 %v3943
    %v4492 = vunpack.c.l.bf16 %v3944
    %v4493 = vunpack.c.h.bf16 %v3944
    %v4494 = vunpack.c.l.bf16 %v3945
    %v4495 = vunpack.c.h.bf16 %v3945
    %v4496 = vunpack.c.l.bf16 %v3946
    %v4497 = vunpack.c.h.bf16 %v3946
    %v4498 = vunpack.c.l.bf16 %v3947
    %v4499 = vunpack.c.h.bf16 %v3947
    %v4500 = vunpack.c.l.bf16 %v3948
    %v4501 = vunpack.c.h.bf16 %v3948
    %v4502 = vunpack.c.l.bf16 %v3949
    %v4503 = vunpack.c.h.bf16 %v3949
    %v4504 = vunpack.c.l.bf16 %v3950
    %v4505 = vunpack.c.h.bf16 %v3950
    %v4506 = vunpack.c.l.bf16 %v3951
    %v4507 = vunpack.c.h.bf16 %v3951
    %v4508 = vunpack.c.l.bf16 %v3952
    %v4509 = vunpack.c.h.bf16 %v3952
    %v4510 = vunpack.c.l.bf16 %v3953
    %v4511 = vunpack.c.h.bf16 %v3953
    %v4512 = vunpack.c.l.bf16 %v3954
    %v4513 = vunpack.c.h.bf16 %v3954
    %v4514 = vunpack.c.l.bf16 %v3955
    %v4515 = vunpack.c.h.bf16 %v3955
    %v4516 = vunpack.c.l.bf16 %v3956
    %v4517 = vunpack.c.h.bf16 %v3956
    %v4518 = vunpack.c.l.bf16 %v3957
    %v4519 = vunpack.c.h.bf16 %v3957
    %v4520 = vunpack.c.l.bf16 %v3958
    %v4521 = vunpack.c.h.bf16 %v3958
    %v4522 = vunpack.c.l.bf16 %v3959
    %v4523 = vunpack.c.h.bf16 %v3959
    %v4524 = vunpack.c.l.bf16 %v3960
    %v4525 = vunpack.c.h.bf16 %v3960
    %v4526 = vunpack.c.l.bf16 %v3961
    %v4527 = vunpack.c.h.bf16 %v3961
    %v4528 = vunpack.c.l.bf16 %v3962
    %v4529 = vunpack.c.h.bf16 %v3962
    %v4530 = vunpack.c.l.bf16 %v3963
    %v4531 = vunpack.c.h.bf16 %v3963
    %v4532 = vunpack.c.l.bf16 %v3964
    %v4533 = vunpack.c.h.bf16 %v3964
    %v4534 = vunpack.c.l.bf16 %v3965
    %v4535 = vunpack.c.h.bf16 %v3965
    %v4536 = vunpack.c.l.bf16 %v3966
    %v4537 = vunpack.c.h.bf16 %v3966
    %v4538 = vunpack.c.l.bf16 %v3967
    %v4539 = vunpack.c.h.bf16 %v3967
    %v4540 = vunpack.c.l.bf16 %v3968
    %v4541 = vunpack.c.h.bf16 %v3968
    %v4542 = vunpack.c.l.bf16 %v3969
    %v4543 = vunpack.c.h.bf16 %v3969
    %v4544 = vunpack.c.l.bf16 %v3970
    %v4545 = vunpack.c.h.bf16 %v3970
    %v4546 = vunpack.c.l.bf16 %v3971
    %v4547 = vunpack.c.h.bf16 %v3971
    %v4548 = vunpack.c.l.bf16 %v3972
    %v4549 = vunpack.c.h.bf16 %v3972
    %v4550 = vunpack.c.l.bf16 %v3973
    %v4551 = vunpack.c.h.bf16 %v3973
    %v4552 = vunpack.c.l.bf16 %v3974
    %v4553 = vunpack.c.h.bf16 %v3974
    %v4554 = vunpack.c.l.bf16 %v3975
    %v4555 = vunpack.c.h.bf16 %v3975
    %v4556 = vunpack.c.l.bf16 %v3976
    %v4557 = vunpack.c.h.bf16 %v3976
    %v4558 = vunpack.c.l.bf16 %v3977
    %v4559 = vunpack.c.h.bf16 %v3977
    %v4560 = vunpack.c.l.bf16 %v3978
    %v4561 = vunpack.c.h.bf16 %v3978
    %v4562 = vunpack.c.l.bf16 %v3979
    %v4563 = vunpack.c.h.bf16 %v3979
    %v4564 = vunpack.c.l.bf16 %v3980
    %v4565 = vunpack.c.h.bf16 %v3980
    %v4566 = vunpack.c.l.bf16 %v3981
    %v4567 = vunpack.c.h.bf16 %v3981
    %v4568 = vunpack.c.l.bf16 %v3982
    %v4569 = vunpack.c.h.bf16 %v3982
    %v4570 = vunpack.c.l.bf16 %v3983
    %v4571 = vunpack.c.h.bf16 %v3983
    %v4572 = vunpack.c.l.bf16 %v3984
    %v4573 = vunpack.c.h.bf16 %v3984
    %v4574 = vunpack.c.l.bf16 %v3985
    %v4575 = vunpack.c.h.bf16 %v3985
    %v4576 = vunpack.c.l.bf16 %v3986
    %v4577 = vunpack.c.h.bf16 %v3986
    %v4578 = vunpack.c.l.bf16 %v3987
    %v4579 = vunpack.c.h.bf16 %v3987
    %v4580 = vunpack.c.l.bf16 %v3988
    %v4581 = vunpack.c.h.bf16 %v3988
    %v4582 = vunpack.c.l.bf16 %v3989
    %v4583 = vunpack.c.h.bf16 %v3989
    %v4584 = vunpack.c.l.bf16 %v3990
    %v4585 = vunpack.c.h.bf16 %v3990
    %v4586 = vunpack.c.l.bf16 %v3991
    %v4587 = vunpack.c.h.bf16 %v3991
    %v4588 = vunpack.c.l.bf16 %v3992
    %v4589 = vunpack.c.h.bf16 %v3992
    %v4590 = vunpack.c.l.bf16 %v3993
    %v4591 = vunpack.c.h.bf16 %v3993
    %v4592 = vunpack.c.l.bf16 %v3994
    %v4593 = vunpack.c.h.bf16 %v3994
    %v4594 = vunpack.c.l.bf16 %v3995
    %v4595 = vunpack.c.h.bf16 %v3995
    %v4596 = vunpack.c.l.bf16 %v3996
    %v4597 = vunpack.c.h.bf16 %v3996
    %v4598 = vunpack.c.l.bf16 %v3997
    %v4599 = vunpack.c.h.bf16 %v3997
    %v4600 = vunpack.c.l.bf16 %v3998
    %v4601 = vunpack.c.h.bf16 %v3998
    %v4602 = vunpack.c.l.bf16 %v3999
    %v4603 = vunpack.c.h.bf16 %v3999
    %v4604 = vunpack.c.l.bf16 %v4000
    %v4605 = vunpack.c.h.bf16 %v4000
    %v4606 = vunpack.c.l.bf16 %v4001
    %v4607 = vunpack.c.h.bf16 %v4001
    %v4608 = vunpack.c.l.bf16 %v4002
    %v4609 = vunpack.c.h.bf16 %v4002
    %v4610 = vunpack.c.l.bf16 %v4003
    %v4611 = vunpack.c.h.bf16 %v4003
    %v4612 = vunpack.c.l.bf16 %v4004
    %v4613 = vunpack.c.h.bf16 %v4004
    %v4614 = vunpack.c.l.bf16 %v4005
    %v4615 = vunpack.c.h.bf16 %v4005
    %v4616 = vunpack.c.l.bf16 %v4006
    %v4617 = vunpack.c.h.bf16 %v4006
    %v4618 = vunpack.c.l.bf16 %v4007
    %v4619 = vunpack.c.h.bf16 %v4007
    %v4620 = vunpack.c.l.bf16 %v4008
    %v4621 = vunpack.c.h.bf16 %v4008
    %v4622 = vunpack.c.l.bf16 %v4009
    %v4623 = vunpack.c.h.bf16 %v4009
    %v4624 = vunpack.c.l.bf16 %v4010
    %v4625 = vunpack.c.h.bf16 %v4010
    %v4626 = vunpack.c.l.bf16 %v4011
    %v4627 = vunpack.c.h.bf16 %v4011
    %v4628 = vunpack.c.l.bf16 %v4012
    %v4629 = vunpack.c.h.bf16 %v4012
    %v4630 = vunpack.c.l.bf16 %v4013
    %v4631 = vunpack.c.h.bf16 %v4013
    %v4632 = vunpack.c.l.bf16 %v4014
    %v4633 = vunpack.c.h.bf16 %v4014
    %v4634 = vunpack.c.l.bf16 %v4015
    %v4635 = vunpack.c.h.bf16 %v4015
    %v4636 = vunpack.c.l.bf16 %v4016
    %v4637 = vunpack.c.h.bf16 %v4016
    %v4638 = vunpack.c.l.bf16 %v4017
    %v4639 = vunpack.c.h.bf16 %v4017
    %v4640 = vunpack.c.l.bf16 %v4018
    %v4641 = vunpack.c.h.bf16 %v4018
    %v4642 = vunpack.c.l.bf16 %v4019
    %v4643 = vunpack.c.h.bf16 %v4019
    %v4644 = vunpack.c.l.bf16 %v4020
    %v4645 = vunpack.c.h.bf16 %v4020
    %v4646 = vunpack.c.l.bf16 %v4021
    %v4647 = vunpack.c.h.bf16 %v4021
    %v4648 = vunpack.c.l.bf16 %v4022
    %v4649 = vunpack.c.h.bf16 %v4022
    %v4650 = vunpack.c.l.bf16 %v4023
    %v4651 = vunpack.c.h.bf16 %v4023
    %v4652 = vunpack.c.l.bf16 %v4024
    %v4653 = vunpack.c.h.bf16 %v4024
    %v4654 = vunpack.c.l.bf16 %v4025
    %v4655 = vunpack.c.h.bf16 %v4025
    %v4656 = vunpack.c.l.bf16 %v4026
    %v4657 = vunpack.c.h.bf16 %v4026
    %v4658 = vunpack.c.l.bf16 %v4027
    %v4659 = vunpack.c.h.bf16 %v4027
    %v4660 = vunpack.c.l.bf16 %v4028
    %v4661 = vunpack.c.h.bf16 %v4028
    %v4662 = vunpack.c.l.bf16 %v4029
    %v4663 = vunpack.c.h.bf16 %v4029
    %v4664 = vunpack.c.l.bf16 %v4030
    %v4665 = vunpack.c.h.bf16 %v4030
    %v4666 = vunpack.c.l.bf16 %v4031
    %v4667 = vunpack.c.h.bf16 %v4031
    %v4668 = vunpack.c.l.bf16 %v4032
    %v4669 = vunpack.c.h.bf16 %v4032
    %v4670 = vunpack.c.l.bf16 %v4033
    %v4671 = vunpack.c.h.bf16 %v4033
    %v4672 = vunpack.c.l.bf16 %v4034
    %v4673 = vunpack.c.h.bf16 %v4034
    %v4674 = vunpack.c.l.bf16 %v4035
    %v4675 = vunpack.c.h.bf16 %v4035
    %v4676 = vunpack.c.l.bf16 %v4036
    %v4677 = vunpack.c.h.bf16 %v4036
    %v4678 = vunpack.c.l.bf16 %v4037
    %v4679 = vunpack.c.h.bf16 %v4037
    %v4680 = vunpack.c.l.bf16 %v4038
    %v4681 = vunpack.c.h.bf16 %v4038
    %v4682 = vunpack.c.l.bf16 %v4039
    %v4683 = vunpack.c.h.bf16 %v4039
    %v4684 = vunpack.c.l.bf16 %v4040
    %v4685 = vunpack.c.h.bf16 %v4040
    %v4686 = vunpack.c.l.bf16 %v4041
    %v4687 = vunpack.c.h.bf16 %v4041
    %v4688 = vunpack.c.l.bf16 %v4042
    %v4689 = vunpack.c.h.bf16 %v4042
    %v4690 = vunpack.c.l.bf16 %v4043
    %v4691 = vunpack.c.h.bf16 %v4043
    %v4692 = vunpack.c.l.bf16 %v4044
    %v4693 = vunpack.c.h.bf16 %v4044
    %v4694 = vunpack.c.l.bf16 %v4045
    %v4695 = vunpack.c.h.bf16 %v4045
    %v4696 = vunpack.c.l.bf16 %v4046
    %v4697 = vunpack.c.h.bf16 %v4046
    %v4698 = vunpack.c.l.bf16 %v4047
    %v4699 = vunpack.c.h.bf16 %v4047
    %v4700 = vunpack.c.l.bf16 %v4048
    %v4701 = vunpack.c.h.bf16 %v4048
    %v4702 = vunpack.c.l.bf16 %v4049
    %v4703 = vunpack.c.h.bf16 %v4049
    %v4704 = vunpack.c.l.bf16 %v4050
    %v4705 = vunpack.c.h.bf16 %v4050
    %v4706 = vunpack.c.l.bf16 %v4051
    %v4707 = vunpack.c.h.bf16 %v4051
    %v4708 = vunpack.c.l.bf16 %v4052
    %v4709 = vunpack.c.h.bf16 %v4052
    %v4710 = vunpack.c.l.bf16 %v4053
    %v4711 = vunpack.c.h.bf16 %v4053
    %v4712 = vunpack.c.l.bf16 %v4054
    %v4713 = vunpack.c.h.bf16 %v4054
    %v4714 = vunpack.c.l.bf16 %v4055
    %v4715 = vunpack.c.h.bf16 %v4055
    %v4716 = vunpack.c.l.bf16 %v4056
    %v4717 = vunpack.c.h.bf16 %v4056
    %v4718 = vunpack.c.l.bf16 %v4057
    %v4719 = vunpack.c.h.bf16 %v4057
    %v4720 = vunpack.c.l.bf16 %v4058
    %v4721 = vunpack.c.h.bf16 %v4058
    %v4722 = vunpack.c.l.bf16 %v4059
    %v4723 = vunpack.c.h.bf16 %v4059
    %v4724 = vunpack.c.l.bf16 %v4060
    %v4725 = vunpack.c.h.bf16 %v4060
    %v4726 = vunpack.c.l.bf16 %v4061
    %v4727 = vunpack.c.h.bf16 %v4061
    %v4728 = vunpack.c.l.bf16 %v4062
    %v4729 = vunpack.c.h.bf16 %v4062
    %v4730 = vunpack.c.l.bf16 %v4063
    %v4731 = vunpack.c.h.bf16 %v4063
    %v4732 = vunpack.c.l.bf16 %v4064
    %v4733 = vunpack.c.h.bf16 %v4064
    %v4734 = vunpack.c.l.bf16 %v4065
    %v4735 = vunpack.c.h.bf16 %v4065
    %v4736 = vunpack.c.l.bf16 %v4066
    %v4737 = vunpack.c.h.bf16 %v4066
    %v4738 = vunpack.c.l.bf16 %v4067
    %v4739 = vunpack.c.h.bf16 %v4067
    %v4740 = vunpack.c.l.bf16 %v4068
    %v4741 = vunpack.c.h.bf16 %v4068
    %v4742 = vunpack.c.l.bf16 %v4069
    %v4743 = vunpack.c.h.bf16 %v4069
    %v4744 = vunpack.c.l.bf16 %v4070
    %v4745 = vunpack.c.h.bf16 %v4070
    %v4746 = vunpack.c.l.bf16 %v4071
    %v4747 = vunpack.c.h.bf16 %v4071
    %v4748 = vunpack.c.l.bf16 %v4072
    %v4749 = vunpack.c.h.bf16 %v4072
    %v4750 = vunpack.c.l.bf16 %v4073
    %v4751 = vunpack.c.h.bf16 %v4073
    %v4752 = vunpack.c.l.bf16 %v4074
    %v4753 = vunpack.c.h.bf16 %v4074
    %v4754 = vunpack.c.l.bf16 %v4075
    %v4755 = vunpack.c.h.bf16 %v4075
    %v4756 = vunpack.c.l.bf16 %v4076
    %v4757 = vunpack.c.h.bf16 %v4076
    %v4758 = vunpack.c.l.bf16 %v4077
    %v4759 = vunpack.c.h.bf16 %v4077
    %v4760 = vunpack.c.l.bf16 %v4078
    %v4761 = vunpack.c.h.bf16 %v4078
    %v4762 = vunpack.c.l.bf16 %v4079
    %v4763 = vunpack.c.h.bf16 %v4079
    %v4764 = vunpack.c.l.bf16 %v4080
    %v4765 = vunpack.c.h.bf16 %v4080
    %v4766 = vunpack.c.l.bf16 %v4081
    %v4767 = vunpack.c.h.bf16 %v4081
    %v4768 = vunpack.c.l.bf16 %v4082
    %v4769 = vunpack.c.h.bf16 %v4082
    %v4770 = vunpack.c.l.bf16 %v4083
    %v4771 = vunpack.c.h.bf16 %v4083
    %v4772 = vunpack.c.l.bf16 %v4084
    %v4773 = vunpack.c.h.bf16 %v4084
    %v4774 = vunpack.c.l.bf16 %v4085
    %v4775 = vunpack.c.h.bf16 %v4085
    %v4776 = vunpack.c.l.bf16 %v4086
    %v4777 = vunpack.c.h.bf16 %v4086
    %v4778 = vunpack.c.l.bf16 %v4087
    %v4779 = vunpack.c.h.bf16 %v4087
    %v4780 = vunpack.c.l.bf16 %v4088
    %v4781 = vunpack.c.h.bf16 %v4088
    %v4782 = vunpack.c.l.bf16 %v4089
    %v4783 = vunpack.c.h.bf16 %v4089
    %v4784 = vunpack.c.l.bf16 %v4090
    %v4785 = vunpack.c.h.bf16 %v4090
    %v4786 = vunpack.c.l.bf16 %v4091
    %v4787 = vunpack.c.h.bf16 %v4091
    %v4788 = vunpack.c.l.bf16 %v4092
    %v4789 = vunpack.c.h.bf16 %v4092
    %v4790 = vunpack.c.l.bf16 %v4093
    %v4791 = vunpack.c.h.bf16 %v4093
    %v4792 = vunpack.c.l.bf16 %v4094
    %v4793 = vunpack.c.h.bf16 %v4094
    %v4794 = vunpack.c.l.bf16 %v4095
    %v4795 = vunpack.c.h.bf16 %v4095
    %v4796 = vunpack.c.l.bf16 %v4096
    %v4797 = vunpack.c.h.bf16 %v4096
    %v4798 = vunpack.c.l.bf16 %v4097
    %v4799 = vunpack.c.h.bf16 %v4097
    %v4800 = vunpack.c.l.bf16 %v4098
    %v4801 = vunpack.c.h.bf16 %v4098
    %v4802 = vunpack.c.l.bf16 %v4099
    %v4803 = vunpack.c.h.bf16 %v4099
    %v4804 = vunpack.c.l.bf16 %v4100
    %v4805 = vunpack.c.h.bf16 %v4100
    %v4806 = vunpack.c.l.bf16 %v4101
    %v4807 = vunpack.c.h.bf16 %v4101
    %v4808 = vunpack.c.l.bf16 %v4102
    %v4809 = vunpack.c.h.bf16 %v4102
    %v4810 = vunpack.c.l.bf16 %v4103
    %v4811 = vunpack.c.h.bf16 %v4103
    %v4812 = vunpack.c.l.bf16 %v4104
    %v4813 = vunpack.c.h.bf16 %v4104
    %v4814 = vunpack.c.l.bf16 %v4105
    %v4815 = vunpack.c.h.bf16 %v4105
    %v4816 = vunpack.c.l.bf16 %v4106
    %v4817 = vunpack.c.h.bf16 %v4106
    %v4818 = vunpack.c.l.bf16 %v4107
    %v4819 = vunpack.c.h.bf16 %v4107
    %v4820 = vunpack.c.l.bf16 %v4108
    %v4821 = vunpack.c.h.bf16 %v4108
    %v4822 = vunpack.c.l.bf16 %v4109
    %v4823 = vunpack.c.h.bf16 %v4109
    %v4824 = vunpack.c.l.bf16 %v4110
    %v4825 = vunpack.c.h.bf16 %v4110
    %v4826 = vunpack.c.l.bf16 %v4111
    %v4827 = vunpack.c.h.bf16 %v4111
    %v4828 = vunpack.c.l.bf16 %v4112
    %v4829 = vunpack.c.h.bf16 %v4112
    %v4830 = vunpack.c.l.bf16 %v4113
    %v4831 = vunpack.c.h.bf16 %v4113
    %v4832 = vunpack.c.l.bf16 %v4114
    %v4833 = vunpack.c.h.bf16 %v4114
    %v4834 = vunpack.c.l.bf16 %v4115
    %v4835 = vunpack.c.h.bf16 %v4115
    %v4836 = vunpack.c.l.bf16 %v4116
    %v4837 = vunpack.c.h.bf16 %v4116
    %v4838 = vunpack.c.l.bf16 %v4117
    %v4839 = vunpack.c.h.bf16 %v4117
    %v4840 = vunpack.c.l.bf16 %v4118
    %v4841 = vunpack.c.h.bf16 %v4118
    %v4842 = vunpack.c.l.bf16 %v4119
    %v4843 = vunpack.c.h.bf16 %v4119
    %v4844 = vunpack.c.l.bf16 %v4120
    %v4845 = vunpack.c.h.bf16 %v4120
    %v4846 = vunpack.c.l.bf16 %v4121
    %v4847 = vunpack.c.h.bf16 %v4121
    %v4848 = vunpack.c.l.bf16 %v4122
    %v4849 = vunpack.c.h.bf16 %v4122
    %v4850 = vunpack.c.l.bf16 %v4123
    %v4851 = vunpack.c.h.bf16 %v4123
    %v4852 = vunpack.c.l.bf16 %v4124
    %v4853 = vunpack.c.h.bf16 %v4124
    %v4854 = vunpack.c.l.bf16 %v4125
    %v4855 = vunpack.c.h.bf16 %v4125
    %v4856 = vunpack.c.l.bf16 %v4126
    %v4857 = vunpack.c.h.bf16 %v4126
    %v4858 = vunpack.c.l.bf16 %v4127
    %v4859 = vunpack.c.h.bf16 %v4127
    %v4860 = vunpack.c.l.bf16 %v4128
    %v4861 = vunpack.c.h.bf16 %v4128
    %v4862 = vunpack.c.l.bf16 %v4129
    %v4863 = vunpack.c.h.bf16 %v4129
    %v4864 = vunpack.c.l.bf16 %v4130
    %v4865 = vunpack.c.h.bf16 %v4130
    %v4866 = vunpack.c.l.bf16 %v4131
    %v4867 = vunpack.c.h.bf16 %v4131
    %v4868 = vunpack.c.l.bf16 %v4132
    %v4869 = vunpack.c.h.bf16 %v4132
    %v4870 = vunpack.c.l.bf16 %v4133
    %v4871 = vunpack.c.h.bf16 %v4133
    %v4872 = vunpack.c.l.bf16 %v4134
    %v4873 = vunpack.c.h.bf16 %v4134
    %v4874 = vunpack.c.l.bf16 %v4135
    %v4875 = vunpack.c.h.bf16 %v4135
    %v4876 = vunpack.c.l.bf16 %v4136
    %v4877 = vunpack.c.h.bf16 %v4136
    %v4878 = vunpack.c.l.bf16 %v4137
    %v4879 = vunpack.c.h.bf16 %v4137
    %v4880 = vunpack.c.l.bf16 %v4138
    %v4881 = vunpack.c.h.bf16 %v4138
    %v4882 = vunpack.c.l.bf16 %v4139
    %v4883 = vunpack.c.h.bf16 %v4139
    %v4884 = vunpack.c.l.bf16 %v4140
    %v4885 = vunpack.c.h.bf16 %v4140
    %v4886 = vunpack.c.l.bf16 %v4141
    %v4887 = vunpack.c.h.bf16 %v4141
    %v4888 = vunpack.c.l.bf16 %v4142
    %v4889 = vunpack.c.h.bf16 %v4142
    %v4890 = vunpack.c.l.bf16 %v4143
    %v4891 = vunpack.c.h.bf16 %v4143
    %v4892 = vunpack.c.l.bf16 %v4144
    %v4893 = vunpack.c.h.bf16 %v4144
    %v4894 = vunpack.c.l.bf16 %v4145
    %v4895 = vunpack.c.h.bf16 %v4145
    %v4896 = vunpack.c.l.bf16 %v4146
    %v4897 = vunpack.c.h.bf16 %v4146
    %v4898 = vunpack.c.l.bf16 %v4147
    %v4899 = vunpack.c.h.bf16 %v4147
    %v4900 = vunpack.c.l.bf16 %v4148
    %v4901 = vunpack.c.h.bf16 %v4148
    %v4902 = vunpack.c.l.bf16 %v4149
    %v4903 = vunpack.c.h.bf16 %v4149
    %v4904 = vunpack.c.l.bf16 %v4150
    %v4905 = vunpack.c.h.bf16 %v4150
    %v4906 = vunpack.c.l.bf16 %v4151
    %v4907 = vunpack.c.h.bf16 %v4151
    %v4908 = vunpack.c.l.bf16 %v4152
    %v4909 = vunpack.c.h.bf16 %v4152
    %v4910 = vunpack.c.l.bf16 %v4153
    %v4911 = vunpack.c.h.bf16 %v4153
    %v4912 = vunpack.c.l.bf16 %v4154
    %v4913 = vunpack.c.h.bf16 %v4154
    %v4914 = vunpack.c.l.bf16 %v4155
    %v4915 = vunpack.c.h.bf16 %v4155
    %v4916 = vunpack.c.l.bf16 %v4156
    %v4917 = vunpack.c.h.bf16 %v4156
    %v4918 = vunpack.c.l.bf16 %v4157
    %v4919 = vunpack.c.h.bf16 %v4157
    %v4920 = vunpack.c.l.bf16 %v4158
    %v4921 = vunpack.c.h.bf16 %v4158
    %v4922 = vunpack.c.l.bf16 %v4159
    %v4923 = vunpack.c.h.bf16 %v4159
    %v4924 = vunpack.c.l.bf16 %v4160
    %v4925 = vunpack.c.h.bf16 %v4160
    %v4926 = vunpack.c.l.bf16 %v4161
    %v4927 = vunpack.c.h.bf16 %v4161
    %v4928 = vunpack.c.l.bf16 %v4162
    %v4929 = vunpack.c.h.bf16 %v4162
    %v4930 = vunpack.c.l.bf16 %v4163
    %v4931 = vunpack.c.h.bf16 %v4163
    %v4932 = vunpack.c.l.bf16 %v4164
    %v4933 = vunpack.c.h.bf16 %v4164
    %v4934 = vunpack.c.l.bf16 %v4165
    %v4935 = vunpack.c.h.bf16 %v4165
    %v4936 = vunpack.c.l.bf16 %v4166
    %v4937 = vunpack.c.h.bf16 %v4166
    %v4938 = vunpack.c.l.bf16 %v4167
    %v4939 = vunpack.c.h.bf16 %v4167
    %v4940 = vunpack.c.l.bf16 %v4168
    %v4941 = vunpack.c.h.bf16 %v4168
    %v4942 = vunpack.c.l.bf16 %v4169
    %v4943 = vunpack.c.h.bf16 %v4169
    %v4944 = vunpack.c.l.bf16 %v4170
    %v4945 = vunpack.c.h.bf16 %v4170
    %v4946 = vunpack.c.l.bf16 %v4171
    %v4947 = vunpack.c.h.bf16 %v4171
    %v4948 = vunpack.c.l.bf16 %v4172
    %v4949 = vunpack.c.h.bf16 %v4172
    %v4950 = vunpack.c.l.bf16 %v4173
    %v4951 = vunpack.c.h.bf16 %v4173
    %v4952 = vunpack.c.l.bf16 %v4174
    %v4953 = vunpack.c.h.bf16 %v4174
    %v4954 = vunpack.c.l.bf16 %v4175
    %v4955 = vunpack.c.h.bf16 %v4175
    %v4956 = vunpack.c.l.bf16 %v4176
    %v4957 = vunpack.c.h.bf16 %v4176
    %v4958 = vunpack.c.l.bf16 %v4177
    %v4959 = vunpack.c.h.bf16 %v4177
    %v4960 = vunpack.c.l.bf16 %v4178
    %v4961 = vunpack.c.h.bf16 %v4178
    %v4962 = vunpack.c.l.bf16 %v4179
    %v4963 = vunpack.c.h.bf16 %v4179
    %v4964 = vunpack.c.l.bf16 %v4180
    %v4965 = vunpack.c.h.bf16 %v4180
    %v4966 = vunpack.c.l.bf16 %v4181
    %v4967 = vunpack.c.h.bf16 %v4181
    %v4968 = vunpack.c.l.bf16 %v4182
    %v4969 = vunpack.c.h.bf16 %v4182
    %v4970 = vunpack.c.l.bf16 %v4183
    %v4971 = vunpack.c.h.bf16 %v4183
    %v4972 = vunpack.c.l.bf16 %v4184
    %v4973 = vunpack.c.h.bf16 %v4184
    %v4974 = vunpack.c.l.bf16 %v4185
    %v4975 = vunpack.c.h.bf16 %v4185
    %v4976 = vunpack.c.l.bf16 %v4186
    %v4977 = vunpack.c.h.bf16 %v4186
    %v4978 = vunpack.c.l.bf16 %v4187
    %v4979 = vunpack.c.h.bf16 %v4187
    %v4980 = vunpack.c.l.bf16 %v4188
    %v4981 = vunpack.c.h.bf16 %v4188
    %v4982 = vunpack.c.l.bf16 %v4189
    %v4983 = vunpack.c.h.bf16 %v4189
    %v4984 = vunpack.c.l.bf16 %v4190
    %v4985 = vunpack.c.h.bf16 %v4190
    %v4986 = vunpack.c.l.bf16 %v4191
    %v4987 = vunpack.c.h.bf16 %v4191
    %v4988 = vunpack.c.l.bf16 %v4192
    %v4989 = vunpack.c.h.bf16 %v4192
    %v4990 = vunpack.c.l.bf16 %v4193
    %v4991 = vunpack.c.h.bf16 %v4193
    %v4992 = vunpack.c.l.bf16 %v4194
    %v4993 = vunpack.c.h.bf16 %v4194
    %v4994 = vunpack.c.l.bf16 %v4195
    %v4995 = vunpack.c.h.bf16 %v4195
    %v4996 = vunpack.c.l.bf16 %v4196
    %v4997 = vunpack.c.h.bf16 %v4196
    %v4998 = vunpack.c.l.bf16 %v4197
    %v4999 = vunpack.c.h.bf16 %v4197
    %v5000 = vunpack.c.l.bf16 %v4198
    %v5001 = vunpack.c.h.bf16 %v4198
    %v5002 = vunpack.c.l.bf16 %v4199
    %v5003 = vunpack.c.h.bf16 %v4199
    %v5004 = vunpack.c.l.bf16 %v4200
    %v5005 = vunpack.c.h.bf16 %v4200
    %v5006 = vunpack.c.l.bf16 %v4201
    %v5007 = vunpack.c.h.bf16 %v4201
    %v5008 = vunpack.c.l.bf16 %v4202
    %v5009 = vunpack.c.h.bf16 %v4202
    %v5010 = vunpack.c.l.bf16 %v4203
    %v5011 = vunpack.c.h.bf16 %v4203
    %v5012 = vunpack.c.l.bf16 %v4204
    %v5013 = vunpack.c.h.bf16 %v4204
    %v5014 = vunpack.c.l.bf16 %v4205
    %v5015 = vunpack.c.h.bf16 %v4205
    %v5016 = vunpack.c.l.bf16 %v4206
    %v5017 = vunpack.c.h.bf16 %v4206
    %v5018 = vunpack.c.l.bf16 %v4207
    %v5019 = vunpack.c.h.bf16 %v4207
    %v5020 = vunpack.c.l.bf16 %v4208
    %v5021 = vunpack.c.h.bf16 %v4208
    %v5022 = vunpack.c.l.bf16 %v4209
    %v5023 = vunpack.c.h.bf16 %v4209
    %v5024 = vunpack.c.l.bf16 %v4210
    %v5025 = vunpack.c.h.bf16 %v4210
    %v5026 = vunpack.c.l.bf16 %v4211
    %v5027 = vunpack.c.h.bf16 %v4211
    %v5028 = vunpack.c.l.bf16 %v4212
    %v5029 = vunpack.c.h.bf16 %v4212
    %v5030 = vunpack.c.l.bf16 %v4213
    %v5031 = vunpack.c.h.bf16 %v4213
    %v5032 = vunpack.c.l.bf16 %v4214
    %v5033 = vunpack.c.h.bf16 %v4214
    %v5034 = vunpack.c.l.bf16 %v4215
    %v5035 = vunpack.c.h.bf16 %v4215
    %v5036 = vunpack.c.l.bf16 %v4216
    %v5037 = vunpack.c.h.bf16 %v4216
    %v5038 = vunpack.c.l.bf16 %v4217
    %v5039 = vunpack.c.h.bf16 %v4217
    %v5040 = vunpack.c.l.bf16 %v4218
    %v5041 = vunpack.c.h.bf16 %v4218
    %v5042 = vunpack.c.l.bf16 %v4219
    %v5043 = vunpack.c.h.bf16 %v4219
    %v5044 = vunpack.c.l.bf16 %v4220
    %v5045 = vunpack.c.h.bf16 %v4220
    %v5046 = vunpack.c.l.bf16 %v4221
    %v5047 = vunpack.c.h.bf16 %v4221
    %v5048 = vunpack.c.l.bf16 %v4222
    %v5049 = vunpack.c.h.bf16 %v4222
    %v5050 = vunpack.c.l.bf16 %v4223
    %v5051 = vunpack.c.h.bf16 %v4223
    %v5052 = vunpack.c.l.bf16 %v4224
    %v5053 = vunpack.c.h.bf16 %v4224
    %v5054 = vunpack.c.l.bf16 %v4225
    %v5055 = vunpack.c.h.bf16 %v4225
    %v5056 = vunpack.c.l.bf16 %v4226
    %v5057 = vunpack.c.h.bf16 %v4226
    %v5058 = vunpack.c.l.bf16 %v4227
    %v5059 = vunpack.c.h.bf16 %v4227
    %v5060 = vunpack.c.l.bf16 %v4228
    %v5061 = vunpack.c.h.bf16 %v4228
    %v5062 = vunpack.c.l.bf16 %v4229
    %v5063 = vunpack.c.h.bf16 %v4229
    %v5064 = vunpack.c.l.bf16 %v4230
    %v5065 = vunpack.c.h.bf16 %v4230
    %v5066 = vunpack.c.l.bf16 %v4231
    %v5067 = vunpack.c.h.bf16 %v4231
    %v5068 = vunpack.c.l.bf16 %v4232
    %v5069 = vunpack.c.h.bf16 %v4232
    %v5070 = vunpack.c.l.bf16 %v4233
    %v5071 = vunpack.c.h.bf16 %v4233
    %v5072 = vunpack.c.l.bf16 %v4234
    %v5073 = vunpack.c.h.bf16 %v4234
    %v5074 = vunpack.c.l.bf16 %v4235
    %v5075 = vunpack.c.h.bf16 %v4235
    %v5076 = vunpack.c.l.bf16 %v4236
    %v5077 = vunpack.c.h.bf16 %v4236
    %v5078 = vunpack.c.l.bf16 %v4237
    %v5079 = vunpack.c.h.bf16 %v4237
    %v5080 = vunpack.c.l.bf16 %v4238
    %v5081 = vunpack.c.h.bf16 %v4238
    %v5082 = vunpack.c.l.bf16 %v4239
    %v5083 = vunpack.c.h.bf16 %v4239
    %v5084 = vunpack.c.l.bf16 %v4240
    %v5085 = vunpack.c.h.bf16 %v4240
    %v5086 = vunpack.c.l.bf16 %v4241
    %v5087 = vunpack.c.h.bf16 %v4241
    %v5088 = vunpack.c.l.bf16 %v4242
    %v5089 = vunpack.c.h.bf16 %v4242
    %v5090 = vunpack.c.l.bf16 %v4243
    %v5091 = vunpack.c.h.bf16 %v4243
    %v5092 = vunpack.c.l.bf16 %v4244
    %v5093 = vunpack.c.h.bf16 %v4244
    %v5094 = vunpack.c.l.bf16 %v4245
    %v5095 = vunpack.c.h.bf16 %v4245
    %v5096 = vunpack.c.l.bf16 %v4246
    %v5097 = vunpack.c.h.bf16 %v4246
    %v5098 = vunpack.c.l.bf16 %v4247
    %v5099 = vunpack.c.h.bf16 %v4247
    %v5100 = vunpack.c.l.bf16 %v4248
    %v5101 = vunpack.c.h.bf16 %v4248
    %v5102 = vunpack.c.l.bf16 %v4249
    %v5103 = vunpack.c.h.bf16 %v4249
    %v5104 = vunpack.c.l.bf16 %v4250
    %v5105 = vunpack.c.h.bf16 %v4250
    %v5106 = vunpack.c.l.bf16 %v4251
    %v5107 = vunpack.c.h.bf16 %v4251
    %v5108 = vunpack.c.l.bf16 %v4252
    %v5109 = vunpack.c.h.bf16 %v4252
    %v5110 = vunpack.c.l.bf16 %v4253
    %v5111 = vunpack.c.h.bf16 %v4253
    %v5112 = vunpack.c.l.bf16 %v4254
    %v5113 = vunpack.c.h.bf16 %v4254
    %v5114 = vunpack.c.l.bf16 %v4255
    %v5115 = vunpack.c.h.bf16 %v4255
    %v5116 = vunpack.c.l.bf16 %v4256
    %v5117 = vunpack.c.h.bf16 %v4256
    %v5118 = vunpack.c.l.bf16 %v4257
    %v5119 = vunpack.c.h.bf16 %v4257
    %v5120 = vunpack.c.l.bf16 %v4258
    %v5121 = vunpack.c.h.bf16 %v4258
    %v5122 = vunpack.c.l.bf16 %v4259
    %v5123 = vunpack.c.h.bf16 %v4259
    %v5124 = vunpack.c.l.bf16 %v4260
    %v5125 = vunpack.c.h.bf16 %v4260
    %v5126 = vunpack.c.l.bf16 %v4261
    %v5127 = vunpack.c.h.bf16 %v4261
    %v5128 = vunpack.c.l.bf16 %v4262
    %v5129 = vunpack.c.h.bf16 %v4262
    %v5130 = vunpack.c.l.bf16 %v4263
    %v5131 = vunpack.c.h.bf16 %v4263
    %v5132 = vunpack.c.l.bf16 %v4264
    %v5133 = vunpack.c.h.bf16 %v4264
    %v5134 = vunpack.c.l.bf16 %v4265
    %v5135 = vunpack.c.h.bf16 %v4265
    %v5136 = vunpack.c.l.bf16 %v4266
    %v5137 = vunpack.c.h.bf16 %v4266
    %v5138 = vunpack.c.l.bf16 %v4267
    %v5139 = vunpack.c.h.bf16 %v4267
    %v5140 = vunpack.c.l.bf16 %v4268
    %v5141 = vunpack.c.h.bf16 %v4268
    %v5142 = vunpack.c.l.bf16 %v4269
    %v5143 = vunpack.c.h.bf16 %v4269
    %v5144 = vunpack.c.l.bf16 %v4270
    %v5145 = vunpack.c.h.bf16 %v4270
    %v5146 = vunpack.c.l.bf16 %v4271
    %v5147 = vunpack.c.h.bf16 %v4271
    %v5148 = vunpack.c.l.bf16 %v4272
    %v5149 = vunpack.c.h.bf16 %v4272
    %v5150 = vunpack.c.l.bf16 %v4273
    %v5151 = vunpack.c.h.bf16 %v4273
    %v5152 = vunpack.c.l.bf16 %v4274
    %v5153 = vunpack.c.h.bf16 %v4274
    %v5154 = vunpack.c.l.bf16 %v4275
    %v5155 = vunpack.c.h.bf16 %v4275
    %v5156 = vunpack.c.l.bf16 %v4276
    %v5157 = vunpack.c.h.bf16 %v4276
    %v5158 = vunpack.c.l.bf16 %v4277
    %v5159 = vunpack.c.h.bf16 %v4277
    %v5160 = vunpack.c.l.bf16 %v4278
    %v5161 = vunpack.c.h.bf16 %v4278
    %v5162 = vunpack.c.l.bf16 %v4279
    %v5163 = vunpack.c.h.bf16 %v4279
    %v5164 = vunpack.c.l.bf16 %v4280
    %v5165 = vunpack.c.h.bf16 %v4280
    %v5166 = vunpack.c.l.bf16 %v4281
    %v5167 = vunpack.c.h.bf16 %v4281
    %v5168 = vunpack.c.l.bf16 %v4282
    %v5169 = vunpack.c.h.bf16 %v4282
    %v5170 = vunpack.c.l.bf16 %v4283
    %v5171 = vunpack.c.h.bf16 %v4283
    %v5172 = vunpack.c.l.bf16 %v4284
    %v5173 = vunpack.c.h.bf16 %v4284
    %v5174 = vunpack.c.l.bf16 %v4285
    %v5175 = vunpack.c.h.bf16 %v4285
    %v5176 = vunpack.c.l.bf16 %v4286
    %v5177 = vunpack.c.h.bf16 %v4286
    %v5178 = vunpack.c.l.bf16 %v4287
    %v5179 = vunpack.c.h.bf16 %v4287
    %v5180 = vunpack.c.l.bf16 %v4288
    %v5181 = vunpack.c.h.bf16 %v4288
    %v5182 = vunpack.c.l.bf16 %v4289
    %v5183 = vunpack.c.h.bf16 %v4289
    %v5184 = vunpack.c.l.bf16 %v4290
    %v5185 = vunpack.c.h.bf16 %v4290
    %v5186 = vunpack.c.l.bf16 %v4291
    %v5187 = vunpack.c.h.bf16 %v4291
    %v5188 = vunpack.c.l.bf16 %v4292
    %v5189 = vunpack.c.h.bf16 %v4292
    %v5190 = vunpack.c.l.bf16 %v4293
    %v5191 = vunpack.c.h.bf16 %v4293
    %v5192 = vunpack.c.l.bf16 %v4294
    %v5193 = vunpack.c.h.bf16 %v4294
    %v5194 = vunpack.c.l.bf16 %v4295
    %v5195 = vunpack.c.h.bf16 %v4295
    %v5196 = vunpack.c.l.bf16 %v4296
    %v5197 = vunpack.c.h.bf16 %v4296
    %v5198 = vunpack.c.l.bf16 %v4297
    %v5199 = vunpack.c.h.bf16 %v4297
    %v5200 = vunpack.c.l.bf16 %v4298
    %v5201 = vunpack.c.h.bf16 %v4298
    %v5202 = vunpack.c.l.bf16 %v4299
    %v5203 = vunpack.c.h.bf16 %v4299
    %v5204 = vunpack.c.l.bf16 %v4300
    %v5205 = vunpack.c.h.bf16 %v4300
    %v5206 = vunpack.c.l.bf16 %v4301
    %v5207 = vunpack.c.h.bf16 %v4301
    %v5208 = vunpack.c.l.bf16 %v4302
    %v5209 = vunpack.c.h.bf16 %v4302
    %v5210 = vunpack.c.l.bf16 %v4303
    %v5211 = vunpack.c.h.bf16 %v4303
    %v5212 = vunpack.c.l.bf16 %v4304
    %v5213 = vunpack.c.h.bf16 %v4304
    %v5214 = vunpack.c.l.bf16 %v4305
    %v5215 = vunpack.c.h.bf16 %v4305
    %v5216 = vunpack.c.l.bf16 %v4306
    %v5217 = vunpack.c.h.bf16 %v4306
    %v5218 = vunpack.c.l.bf16 %v4307
    %v5219 = vunpack.c.h.bf16 %v4307
    %v5220 = vunpack.c.l.bf16 %v4308
    %v5221 = vunpack.c.h.bf16 %v4308
    %v5222 = vunpack.c.l.bf16 %v4309
    %v5223 = vunpack.c.h.bf16 %v4309
    %v5224 = vunpack.c.l.bf16 %v4310
    %v5225 = vunpack.c.h.bf16 %v4310
    %v5226 = vunpack.c.l.bf16 %v4311
    %v5227 = vunpack.c.h.bf16 %v4311
    %v5228 = vunpack.c.l.bf16 %v4312
    %v5229 = vunpack.c.h.bf16 %v4312
    %v5230 = vunpack.c.l.bf16 %v4313
    %v5231 = vunpack.c.h.bf16 %v4313
    %v5232 = vunpack.c.l.bf16 %v4314
    %v5233 = vunpack.c.h.bf16 %v4314
    %v5234 = vunpack.c.l.bf16 %v4315
    %v5235 = vunpack.c.h.bf16 %v4315
    %v5236 = vunpack.c.l.bf16 %v4316
    %v5237 = vunpack.c.h.bf16 %v4316
    %v5238 = vunpack.c.l.bf16 %v4317
    %v5239 = vunpack.c.h.bf16 %v4317
    %v5240 = vunpack.c.l.bf16 %v4318
    %v5241 = vunpack.c.h.bf16 %v4318
    %v5242 = vunpack.c.l.bf16 %v4319
    %v5243 = vunpack.c.h.bf16 %v4319
    %v5244 = vunpack.c.l.bf16 %v4320
    %v5245 = vunpack.c.h.bf16 %v4320
    %v5246 = vunpack.c.l.bf16 %v4321
    %v5247 = vunpack.c.h.bf16 %v4321
    %v5248 = vunpack.c.l.bf16 %v4322
    %v5249 = vunpack.c.h.bf16 %v4322
    %v5250 = vunpack.c.l.bf16 %v4323
    %v5251 = vunpack.c.h.bf16 %v4323
    %v5252 = vunpack.c.l.bf16 %v4324
    %v5253 = vunpack.c.h.bf16 %v4324
    %v5254 = vunpack.c.l.bf16 %v4325
    %v5255 = vunpack.c.h.bf16 %v4325
    %v5256 = vunpack.c.l.bf16 %v4326
    %v5257 = vunpack.c.h.bf16 %v4326
    %v5258 = vunpack.c.l.bf16 %v4327
    %v5259 = vunpack.c.h.bf16 %v4327
    %v5260 = vunpack.c.l.bf16 %v4328
    %v5261 = vunpack.c.h.bf16 %v4328
    %v5262 = vunpack.c.l.bf16 %v4329
    %v5263 = vunpack.c.h.bf16 %v4329
    %v5264 = vunpack.c.l.bf16 %v4330
    %v5265 = vunpack.c.h.bf16 %v4330
    %v5266 = vunpack.c.l.bf16 %v4331
    %v5267 = vunpack.c.h.bf16 %v4331
    %v5268 = vunpack.c.l.bf16 %v4332
    %v5269 = vunpack.c.h.bf16 %v4332
    %v5270 = vunpack.c.l.bf16 %v4333
    %v5271 = vunpack.c.h.bf16 %v4333
    %v5272 = vunpack.c.l.bf16 %v4334
    %v5273 = vunpack.c.h.bf16 %v4334
    %v5274 = vunpack.c.l.bf16 %v4335
    %v5275 = vunpack.c.h.bf16 %v4335
    %v5276 = vunpack.c.l.bf16 %v4336
    %v5277 = vunpack.c.h.bf16 %v4336
    %v5278 = vunpack.c.l.bf16 %v4337
    %v5279 = vunpack.c.h.bf16 %v4337
    %v5280 = vunpack.c.l.bf16 %v4338
    %v5281 = vunpack.c.h.bf16 %v4338
    %v5282 = vunpack.c.l.bf16 %v4339
    %v5283 = vunpack.c.h.bf16 %v4339
    %v5284 = vunpack.c.l.bf16 %v4340
    %v5285 = vunpack.c.h.bf16 %v4340
    %v5286 = vunpack.c.l.bf16 %v4341
    %v5287 = vunpack.c.h.bf16 %v4341
    %v5288 = vunpack.c.l.bf16 %v4342
    %v5289 = vunpack.c.h.bf16 %v4342
    %v5290 = vunpack.c.l.bf16 %v4343
    %v5291 = vunpack.c.h.bf16 %v4343
    %v5292 = vunpack.c.l.bf16 %v4344
    %v5293 = vunpack.c.h.bf16 %v4344
    %v5294 = vunpack.c.l.bf16 %v4345
    %v5295 = vunpack.c.h.bf16 %v4345
    %v5296 = vunpack.c.l.bf16 %v4346
    %v5297 = vunpack.c.h.bf16 %v4346
    %v5298 = vunpack.c.l.bf16 %v4347
    %v5299 = vunpack.c.h.bf16 %v4347
    %v5300 = vunpack.c.l.bf16 %v4348
    %v5301 = vunpack.c.h.bf16 %v4348
    %v5302 = vunpack.c.l.bf16 %v4349
    %v5303 = vunpack.c.h.bf16 %v4349
    %v5304 = vunpack.c.l.bf16 %v4350
    %v5305 = vunpack.c.h.bf16 %v4350
    %v5306 = vunpack.c.l.bf16 %v4351
    %v5307 = vunpack.c.h.bf16 %v4351
    %v5308 = vunpack.c.l.bf16 %v4352
    %v5309 = vunpack.c.h.bf16 %v4352
    %v5310 = vunpack.c.l.bf16 %v4353
    %v5311 = vunpack.c.h.bf16 %v4353
    %v5312 = vunpack.c.l.bf16 %v4354
    %v5313 = vunpack.c.h.bf16 %v4354
    %v5314 = vunpack.c.l.bf16 %v4355
    %v5315 = vunpack.c.h.bf16 %v4355
    %v5316 = vunpack.c.l.bf16 %v4356
    %v5317 = vunpack.c.h.bf16 %v4356
    %v5318 = vunpack.c.l.bf16 %v4357
    %v5319 = vunpack.c.h.bf16 %v4357
    %v5320 = vunpack.c.l.bf16 %v4358
    %v5321 = vunpack.c.h.bf16 %v4358
    %v5322 = vunpack.c.l.bf16 %v4359
    %v5323 = vunpack.c.h.bf16 %v4359
    %v5324 = vunpack.c.l.bf16 %v4360
    %v5325 = vunpack.c.h.bf16 %v4360
    %v5326 = vunpack.c.l.bf16 %v4361
    %v5327 = vunpack.c.h.bf16 %v4361
    %v5328 = vunpack.c.l.bf16 %v4362
    %v5329 = vunpack.c.h.bf16 %v4362
    %v5330 = vunpack.c.l.bf16 %v4363
    %v5331 = vunpack.c.h.bf16 %v4363
    %v5332 = vunpack.c.l.bf16 %v4364
    %v5333 = vunpack.c.h.bf16 %v4364
    %v5334 = vunpack.c.l.bf16 %v4365
    %v5335 = vunpack.c.h.bf16 %v4365
    %v5336 = vunpack.c.l.bf16 %v4366
    %v5337 = vunpack.c.h.bf16 %v4366
    %v5338 = vunpack.c.l.bf16 %v4367
    %v5339 = vunpack.c.h.bf16 %v4367
    %v5340 = vunpack.c.l.bf16 %v4368
    %v5341 = vunpack.c.h.bf16 %v4368
    %v5342 = vunpack.c.l.bf16 %v4369
    %v5343 = vunpack.c.h.bf16 %v4369
    %v5344 = vunpack.c.l.bf16 %v4370
    %v5345 = vunpack.c.h.bf16 %v4370
    %v5346 = vunpack.c.l.bf16 %v4371
    %v5347 = vunpack.c.h.bf16 %v4371
    %v5348 = vunpack.c.l.bf16 %v4372
    %v5349 = vunpack.c.h.bf16 %v4372
    %v5350 = vunpack.c.l.bf16 %v4373
    %v5351 = vunpack.c.h.bf16 %v4373
    %v5352 = vunpack.c.l.bf16 %v4374
    %v5353 = vunpack.c.h.bf16 %v4374
    %v5354 = vunpack.c.l.bf16 %v4375
    %v5355 = vunpack.c.h.bf16 %v4375
    %v5356 = vunpack.c.l.bf16 %v4376
    %v5357 = vunpack.c.h.bf16 %v4376
    %v5358 = vunpack.c.l.bf16 %v4377
    %v5359 = vunpack.c.h.bf16 %v4377
    %v5360 = vunpack.c.l.bf16 %v4378
    %v5361 = vunpack.c.h.bf16 %v4378
    %v5362 = vunpack.c.l.bf16 %v4379
    %v5363 = vunpack.c.h.bf16 %v4379
    %v5364 = vunpack.c.l.bf16 %v4380
    %v5365 = vunpack.c.h.bf16 %v4380
    %v5366 = vunpack.c.l.bf16 %v4381
    %v5367 = vunpack.c.h.bf16 %v4381
    %v5368 = vunpack.c.l.bf16 %v4382
    %v5369 = vunpack.c.h.bf16 %v4382
    %v5370 = vunpack.c.l.bf16 %v4383
    %v5371 = vunpack.c.h.bf16 %v4383
    %v5372 = vunpack.c.l.bf16 %v4384
    %v5373 = vunpack.c.h.bf16 %v4384
    %v5374 = vunpack.c.l.bf16 %v4385
    %v5375 = vunpack.c.h.bf16 %v4385
    %v5376 = vunpack.c.l.bf16 %v4386
    %v5377 = vunpack.c.h.bf16 %v4386
    %v5378 = vunpack.c.l.bf16 %v4387
    %v5379 = vunpack.c.h.bf16 %v4387
    %v5380 = vunpack.c.l.bf16 %v4388
    %v5381 = vunpack.c.h.bf16 %v4388
    %v5382 = vunpack.c.l.bf16 %v4389
    %v5383 = vunpack.c.h.bf16 %v4389
    %v5384 = vunpack.c.l.bf16 %v4390
    %v5385 = vunpack.c.h.bf16 %v4390
    %v5386 = vunpack.c.l.bf16 %v4391
    %v5387 = vunpack.c.h.bf16 %v4391
    %v5388 = vunpack.c.l.bf16 %v4392
    %v5389 = vunpack.c.h.bf16 %v4392
    %v5390 = vunpack.c.l.bf16 %v4393
    %v5391 = vunpack.c.h.bf16 %v4393
    %v5392 = vunpack.c.l.bf16 %v4394
    %v5393 = vunpack.c.h.bf16 %v4394
    %v5394 = vunpack.c.l.bf16 %v4395
    %v5395 = vunpack.c.h.bf16 %v4395
    %v5396 = vunpack.c.l.bf16 %v4396
    %v5397 = vunpack.c.h.bf16 %v4396
    %v5398 = vunpack.c.l.bf16 %v4397
    %v5399 = vunpack.c.h.bf16 %v4397
    %v5400 = vunpack.c.l.bf16 %v4398
    %v5401 = vunpack.c.h.bf16 %v4398
    %v5402 = vunpack.c.l.bf16 %v4399
    %v5403 = vunpack.c.h.bf16 %v4399
    %v5404 = vunpack.c.l.bf16 %v4400
    %v5405 = vunpack.c.h.bf16 %v4400
    %v5406 = vunpack.c.l.bf16 %v4401
    %v5407 = vunpack.c.h.bf16 %v4401
    %v5408 = vunpack.c.l.bf16 %v4402
    %v5409 = vunpack.c.h.bf16 %v4402
    %v5410 = vunpack.c.l.bf16 %v4403
    %v5411 = vunpack.c.h.bf16 %v4403
    %v5412 = vunpack.c.l.bf16 %v4404
    %v5413 = vunpack.c.h.bf16 %v4404
    %v5414 = vunpack.c.l.bf16 %v4405
    %v5415 = vunpack.c.h.bf16 %v4405
    %v5416 = vunpack.c.l.bf16 %v4406
    %v5417 = vunpack.c.h.bf16 %v4406
    %v5418 = vunpack.c.l.bf16 %v4407
    %v5419 = vunpack.c.h.bf16 %v4407
    %v5420 = vunpack.c.l.bf16 %v4408
    %v5421 = vunpack.c.h.bf16 %v4408
    %v5422 = vunpack.c.l.bf16 %v4409
    %v5423 = vunpack.c.h.bf16 %v4409
    %v5424 = vunpack.c.l.bf16 %v4410
    %v5425 = vunpack.c.h.bf16 %v4410
    %v5426 = vunpack.c.l.bf16 %v4411
    %v5427 = vunpack.c.h.bf16 %v4411
    %v5428 = vunpack.c.l.bf16 %v4412
    %v5429 = vunpack.c.h.bf16 %v4412
    %v5430 = vunpack.c.l.bf16 %v4413
    %v5431 = vunpack.c.h.bf16 %v4413
    %v5432 = vunpack.c.l.bf16 %v4414
    %v5433 = vunpack.c.h.bf16 %v4414
    %v5434 = vunpack.c.l.bf16 %v4415
    %v5435 = vunpack.c.h.bf16 %v4415
    %v5436 = vunpack.c.l.bf16 %v4416
    %v5437 = vunpack.c.h.bf16 %v4416
    %v5438 = vunpack.c.l.bf16 %v4417
    %v5439 = vunpack.c.h.bf16 %v4417
    %v5440 = vunpack.c.l.bf16 %v4418
    %v5441 = vunpack.c.h.bf16 %v4418
    %v5442 = vunpack.c.l.bf16 %v4419
    %v5443 = vunpack.c.h.bf16 %v4419
    %v5444 = vld [vmem:[#allocation18] sm:$0xff]
    %v5446 = vlaneseq
    %v5447 = vshrl.u32 %v5446, 7
    %v5448 = vsub.s32 0, %v5447
    %v5449 = vrot.slane %v5444, %v5448
    %v5450 = vlaneseq
    %v5451 = vshrl.u32 %v5450, 7
    %v5452 = vsub.s32 1, %v5451
    %v5453 = vrot.slane %v5444, %v5452
    %v5454 = vlaneseq
    %v5455 = vshrl.u32 %v5454, 7
    %v5456 = vsub.s32 2, %v5455
    %v5457 = vrot.slane %v5444, %v5456
    %v5458 = vlaneseq
    %v5459 = vshrl.u32 %v5458, 7
    %v5460 = vsub.s32 3, %v5459
    %v5461 = vrot.slane %v5444, %v5460
    %v5462 = vlaneseq
    %v5463 = vshrl.u32 %v5462, 7
    %v5464 = vsub.s32 4, %v5463
    %v5465 = vrot.slane %v5444, %v5464
    %v5466 = vlaneseq
    %v5467 = vshrl.u32 %v5466, 7
    %v5468 = vsub.s32 5, %v5467
    %v5469 = vrot.slane %v5444, %v5468
    %v5470 = vlaneseq
    %v5471 = vshrl.u32 %v5470, 7
    %v5472 = vsub.s32 6, %v5471
    %v5473 = vrot.slane %v5444, %v5472
    %v5474 = vlaneseq
    %v5475 = vshrl.u32 %v5474, 7
    %v5476 = vsub.s32 7, %v5475
    %v5477 = vrot.slane %v5444, %v5476
    %5486 = vmatprep.subr.mxu0 %v4541
    %5487 = vmatpush1.msra.mxu0 %v4540
    %5488 = vmatprep.subr.mxu0 %v4533
    %5489 = vmatpush1.msra.mxu0 %v4532
    %5490 = vmatprep.subr.mxu0 %v4525
    %5491 = vmatpush1.msra.mxu0 %v4524
    %5492 = vmatprep.subr.mxu0 %v4517
    %5493 = vmatpush1.msra.mxu0 %v4516
    %5494 = vmatprep.subr.mxu0 %v4509
    %5495 = vmatpush1.msra.mxu0 %v4508
    %5496 = vmatprep.subr.mxu0 %v4501
    %5497 = vmatpush1.msra.mxu0 %v4500
    %5498 = vmatprep.subr.mxu0 %v4493
    %5499 = vmatpush1.msra.mxu0 %v4492
    %5500 = vmatprep.subr.mxu0 %v4485
    %5501 = vmatpush1.msra.mxu0 %v4484
    %5502 = vmatprep.subr.mxu0 %v4477
    %5503 = vmatpush1.msra.mxu0 %v4476
    %5504 = vmatprep.subr.mxu0 %v4469
    %5505 = vmatpush1.msra.mxu0 %v4468
    %5506 = vmatprep.subr.mxu0 %v4461
    %5507 = vmatpush1.msra.mxu0 %v4460
    %5508 = vmatprep.subr.mxu0 %v4453
    %5509 = vmatpush1.msra.mxu0 %v4452
    %5510 = vmatprep.subr.mxu0 %v4445
    %5511 = vmatpush1.msra.mxu0 %v4444
    %5512 = vmatprep.subr.mxu0 %v4437
    %5513 = vmatpush1.msra.mxu0 %v4436
    %5514 = vmatprep.subr.mxu0 %v4429
    %5515 = vmatpush1.msra.mxu0 %v4428
    %5516 = vmatprep.subr.mxu0 %v4421
    %5517 = vmatpush1.msra.mxu0 %v4420
    %5518 = vmatprep.subr.mxu0 %v4669
    %5519 = vmatpush2.msra.mxu0 %v4668
    %5520 = vmatprep.subr.mxu0 %v4661
    %5521 = vmatpush2.msra.mxu0 %v4660
    %5522 = vmatprep.subr.mxu0 %v4653
    %5523 = vmatpush2.msra.mxu0 %v4652
    %5524 = vmatprep.subr.mxu0 %v4645
    %5525 = vmatpush2.msra.mxu0 %v4644
    %5526 = vmatprep.subr.mxu0 %v4637
    %5527 = vmatpush2.msra.mxu0 %v4636
    %5528 = vmatprep.subr.mxu0 %v4629
    %5529 = vmatpush2.msra.mxu0 %v4628
    %5530 = vmatprep.subr.mxu0 %v4621
    %5531 = vmatpush2.msra.mxu0 %v4620
    %5532 = vmatprep.subr.mxu0 %v4613
    %5533 = vmatpush2.msra.mxu0 %v4612
    %5534 = vmatprep.subr.mxu0 %v4605
    %5535 = vmatpush2.msra.mxu0 %v4604
    %5536 = vmatprep.subr.mxu0 %v4597
    %5537 = vmatpush2.msra.mxu0 %v4596
    %5538 = vmatprep.subr.mxu0 %v4589
    %5539 = vmatpush2.msra.mxu0 %v4588
    %5540 = vmatprep.subr.mxu0 %v4581
    %5541 = vmatpush2.msra.mxu0 %v4580
    %5542 = vmatprep.subr.mxu0 %v4573
    %5543 = vmatpush2.msra.mxu0 %v4572
    %5544 = vmatprep.subr.mxu0 %v4565
    %5545 = vmatpush2.msra.mxu0 %v4564
    %5546 = vmatprep.subr.mxu0 %v4557
    %5547 = vmatpush2.msra.mxu0 %v4556
    %5548 = vmatprep.subr.mxu0 %v4549
    %5549 = vmatpush2.msra.mxu0 %v4548
    %5550 = vmatprep.mubr.f32.mxu0 %v3901
    %5551 = vmatmul.mubr.f32.gmra.mxu0 %v3900
    %v5552 = vpop.f32.mrf.mxu0
    %v5553 = vadd.f32 %v5449, %v5552
    %v5554 = vpop.f32.mrf.mxu0
    %v5555 = vadd.f32 %v5453, %v5554
    %5556 = vdwg.mxu0
    %5557 = vmatprep.subr.mxu0 %v4797
    %5558 = vmatpush1.msra.mxu0 %v4796
    %5559 = vmatprep.subr.mxu0 %v4789
    %5560 = vmatpush1.msra.mxu0 %v4788
    %5561 = vmatprep.subr.mxu0 %v4781
    %5562 = vmatpush1.msra.mxu0 %v4780
    %5563 = vmatprep.subr.mxu0 %v4773
    %5564 = vmatpush1.msra.mxu0 %v4772
    %5565 = vmatprep.subr.mxu0 %v4765
    %5566 = vmatpush1.msra.mxu0 %v4764
    %5567 = vmatprep.subr.mxu0 %v4757
    %5568 = vmatpush1.msra.mxu0 %v4756
    %5569 = vmatprep.subr.mxu0 %v4749
    %5570 = vmatpush1.msra.mxu0 %v4748
    %5571 = vmatprep.subr.mxu0 %v4741
    %5572 = vmatpush1.msra.mxu0 %v4740
    %5573 = vmatprep.subr.mxu0 %v4733
    %5574 = vmatpush1.msra.mxu0 %v4732
    %5575 = vmatprep.subr.mxu0 %v4725
    %5576 = vmatpush1.msra.mxu0 %v4724
    %5577 = vmatprep.subr.mxu0 %v4717
    %5578 = vmatpush1.msra.mxu0 %v4716
    %5579 = vmatprep.subr.mxu0 %v4709
    %5580 = vmatpush1.msra.mxu0 %v4708
    %5581 = vmatprep.subr.mxu0 %v4701
    %5582 = vmatpush1.msra.mxu0 %v4700
    %5583 = vmatprep.subr.mxu0 %v4693
    %5584 = vmatpush1.msra.mxu0 %v4692
    %5585 = vmatprep.subr.mxu0 %v4685
    %5586 = vmatpush1.msra.mxu0 %v4684
    %5587 = vmatprep.subr.mxu0 %v4677
    %5588 = vmatpush1.msra.mxu0 %v4676
    %5589 = vmatprep.subr.mxu0 %v4925
    %5590 = vmatpush2.msra.mxu0 %v4924
    %5591 = vmatprep.subr.mxu0 %v4917
    %5592 = vmatpush2.msra.mxu0 %v4916
    %5593 = vmatprep.subr.mxu0 %v4909
    %5594 = vmatpush2.msra.mxu0 %v4908
    %5595 = vmatprep.subr.mxu0 %v4901
    %5596 = vmatpush2.msra.mxu0 %v4900
    %5597 = vmatprep.subr.mxu0 %v4893
    %5598 = vmatpush2.msra.mxu0 %v4892
    %5599 = vmatprep.subr.mxu0 %v4885
    %5600 = vmatpush2.msra.mxu0 %v4884
    %5601 = vmatprep.subr.mxu0 %v4877
    %5602 = vmatpush2.msra.mxu0 %v4876
    %5603 = vmatprep.subr.mxu0 %v4869
    %5604 = vmatpush2.msra.mxu0 %v4868
    %5605 = vmatprep.subr.mxu0 %v4861
    %5606 = vmatpush2.msra.mxu0 %v4860
    %5607 = vmatprep.subr.mxu0 %v4853
    %5608 = vmatpush2.msra.mxu0 %v4852
    %5609 = vmatprep.subr.mxu0 %v4845
    %5610 = vmatpush2.msra.mxu0 %v4844
    %5611 = vmatprep.subr.mxu0 %v4837
    %5612 = vmatpush2.msra.mxu0 %v4836
    %5613 = vmatprep.subr.mxu0 %v4829
    %5614 = vmatpush2.msra.mxu0 %v4828
    %5615 = vmatprep.subr.mxu0 %v4821
    %5616 = vmatpush2.msra.mxu0 %v4820
    %5617 = vmatprep.subr.mxu0 %v4813
    %5618 = vmatpush2.msra.mxu0 %v4812
    %5619 = vmatprep.subr.mxu0 %v4805
    %5620 = vmatpush2.msra.mxu0 %v4804
    %5621 = vmatprep.mubr.f32.mxu0 %v3903
    %5622 = vmatmul.mubr.f32.gmra.mxu0 %v3902
    %v5623 = vpop.f32.mrf.mxu0
    %v5624 = vadd.f32 %v5553, %v5623
    %v5625 = vpop.f32.mrf.mxu0
    %v5626 = vadd.f32 %v5555, %v5625
    %5627 = vdwg.mxu0
    %5628 = vmatprep.subr.mxu0 %v5053
    %5629 = vmatpush1.msra.mxu0 %v5052
    %5630 = vmatprep.subr.mxu0 %v5045
    %5631 = vmatpush1.msra.mxu0 %v5044
    %5632 = vmatprep.subr.mxu0 %v5037
    %5633 = vmatpush1.msra.mxu0 %v5036
    %5634 = vmatprep.subr.mxu0 %v5029
    %5635 = vmatpush1.msra.mxu0 %v5028
    %5636 = vmatprep.subr.mxu0 %v5021
    %5637 = vmatpush1.msra.mxu0 %v5020
    %5638 = vmatprep.subr.mxu0 %v5013
    %5639 = vmatpush1.msra.mxu0 %v5012
    %5640 = vmatprep.subr.mxu0 %v5005
    %5641 = vmatpush1.msra.mxu0 %v5004
    %5642 = vmatprep.subr.mxu0 %v4997
    %5643 = vmatpush1.msra.mxu0 %v4996
    %5644 = vmatprep.subr.mxu0 %v4989
    %5645 = vmatpush1.msra.mxu0 %v4988
    %5646 = vmatprep.subr.mxu0 %v4981
    %5647 = vmatpush1.msra.mxu0 %v4980
    %5648 = vmatprep.subr.mxu0 %v4973
    %5649 = vmatpush1.msra.mxu0 %v4972
    %5650 = vmatprep.subr.mxu0 %v4965
    %5651 = vmatpush1.msra.mxu0 %v4964
    %5652 = vmatprep.subr.mxu0 %v4957
    %5653 = vmatpush1.msra.mxu0 %v4956
    %5654 = vmatprep.subr.mxu0 %v4949
    %5655 = vmatpush1.msra.mxu0 %v4948
    %5656 = vmatprep.subr.mxu0 %v4941
    %5657 = vmatpush1.msra.mxu0 %v4940
    %5658 = vmatprep.subr.mxu0 %v4933
    %5659 = vmatpush1.msra.mxu0 %v4932
    %5660 = vmatprep.subr.mxu0 %v5181
    %5661 = vmatpush2.msra.mxu0 %v5180
    %5662 = vmatprep.subr.mxu0 %v5173
    %5663 = vmatpush2.msra.mxu0 %v5172
    %5664 = vmatprep.subr.mxu0 %v5165
    %5665 = vmatpush2.msra.mxu0 %v5164
    %5666 = vmatprep.subr.mxu0 %v5157
    %5667 = vmatpush2.msra.mxu0 %v5156
    %5668 = vmatprep.subr.mxu0 %v5149
    %5669 = vmatpush2.msra.mxu0 %v5148
    %5670 = vmatprep.subr.mxu0 %v5141
    %5671 = vmatpush2.msra.mxu0 %v5140
    %5672 = vmatprep.subr.mxu0 %v5133
    %5673 = vmatpush2.msra.mxu0 %v5132
    %5674 = vmatprep.subr.mxu0 %v5125
    %5675 = vmatpush2.msra.mxu0 %v5124
    %5676 = vmatprep.subr.mxu0 %v5117
    %5677 = vmatpush2.msra.mxu0 %v5116
    %5678 = vmatprep.subr.mxu0 %v5109
    %5679 = vmatpush2.msra.mxu0 %v5108
    %5680 = vmatprep.subr.mxu0 %v5101
    %5681 = vmatpush2.msra.mxu0 %v5100
    %5682 = vmatprep.subr.mxu0 %v5093
    %5683 = vmatpush2.msra.mxu0 %v5092
    %5684 = vmatprep.subr.mxu0 %v5085
    %5685 = vmatpush2.msra.mxu0 %v5084
    %5686 = vmatprep.subr.mxu0 %v5077
    %5687 = vmatpush2.msra.mxu0 %v5076
    %5688 = vmatprep.subr.mxu0 %v5069
    %5689 = vmatpush2.msra.mxu0 %v5068
    %5690 = vmatprep.subr.mxu0 %v5061
    %5691 = vmatpush2.msra.mxu0 %v5060
    %5692 = vmatprep.mubr.f32.mxu0 %v3905
    %5693 = vmatmul.mubr.f32.gmra.mxu0 %v3904
    %v5694 = vpop.f32.mrf.mxu0
    %v5695 = vadd.f32 %v5624, %v5694
    %v5696 = vpop.f32.mrf.mxu0
    %v5697 = vadd.f32 %v5626, %v5696
    %5698 = vdwg.mxu0
    %5699 = vmatprep.subr.mxu0 %v5309
    %5700 = vmatpush1.msra.mxu0 %v5308
    %5701 = vmatprep.subr.mxu0 %v5301
    %5702 = vmatpush1.msra.mxu0 %v5300
    %5703 = vmatprep.subr.mxu0 %v5293
    %5704 = vmatpush1.msra.mxu0 %v5292
    %5705 = vmatprep.subr.mxu0 %v5285
    %5706 = vmatpush1.msra.mxu0 %v5284
    %5707 = vmatprep.subr.mxu0 %v5277
    %5708 = vmatpush1.msra.mxu0 %v5276
    %5709 = vmatprep.subr.mxu0 %v5269
    %5710 = vmatpush1.msra.mxu0 %v5268
    %5711 = vmatprep.subr.mxu0 %v5261
    %5712 = vmatpush1.msra.mxu0 %v5260
    %5713 = vmatprep.subr.mxu0 %v5253
    %5714 = vmatpush1.msra.mxu0 %v5252
    %5715 = vmatprep.subr.mxu0 %v5245
    %5716 = vmatpush1.msra.mxu0 %v5244
    %5717 = vmatprep.subr.mxu0 %v5237
    %5718 = vmatpush1.msra.mxu0 %v5236
    %5719 = vmatprep.subr.mxu0 %v5229
    %5720 = vmatpush1.msra.mxu0 %v5228
    %5721 = vmatprep.subr.mxu0 %v5221
    %5722 = vmatpush1.msra.mxu0 %v5220
    %5723 = vmatprep.subr.mxu0 %v5213
    %5724 = vmatpush1.msra.mxu0 %v5212
    %5725 = vmatprep.subr.mxu0 %v5205
    %5726 = vmatpush1.msra.mxu0 %v5204
    %5727 = vmatprep.subr.mxu0 %v5197
    %5728 = vmatpush1.msra.mxu0 %v5196
    %5729 = vmatprep.subr.mxu0 %v5189
    %5730 = vmatpush1.msra.mxu0 %v5188
    %5731 = vmatprep.subr.mxu0 %v5437
    %5732 = vmatpush2.msra.mxu0 %v5436
    %5733 = vmatprep.subr.mxu0 %v5429
    %5734 = vmatpush2.msra.mxu0 %v5428
    %5735 = vmatprep.subr.mxu0 %v5421
    %5736 = vmatpush2.msra.mxu0 %v5420
    %5737 = vmatprep.subr.mxu0 %v5413
    %5738 = vmatpush2.msra.mxu0 %v5412
    %5739 = vmatprep.subr.mxu0 %v5405
    %5740 = vmatpush2.msra.mxu0 %v5404
    %5741 = vmatprep.subr.mxu0 %v5397
    %5742 = vmatpush2.msra.mxu0 %v5396
    %5743 = vmatprep.subr.mxu0 %v5389
    %5744 = vmatpush2.msra.mxu0 %v5388
    %5745 = vmatprep.subr.mxu0 %v5381
    %5746 = vmatpush2.msra.mxu0 %v5380
    %5747 = vmatprep.subr.mxu0 %v5373
    %5748 = vmatpush2.msra.mxu0 %v5372
    %5749 = vmatprep.subr.mxu0 %v5365
    %5750 = vmatpush2.msra.mxu0 %v5364
    %5751 = vmatprep.subr.mxu0 %v5357
    %5752 = vmatpush2.msra.mxu0 %v5356
    %5753 = vmatprep.subr.mxu0 %v5349
    %5754 = vmatpush2.msra.mxu0 %v5348
    %5755 = vmatprep.subr.mxu0 %v5341
    %5756 = vmatpush2.msra.mxu0 %v5340
    %5757 = vmatprep.subr.mxu0 %v5333
    %5758 = vmatpush2.msra.mxu0 %v5332
    %5759 = vmatprep.subr.mxu0 %v5325
    %5760 = vmatpush2.msra.mxu0 %v5324
    %5761 = vmatprep.subr.mxu0 %v5317
    %5762 = vmatpush2.msra.mxu0 %v5316
    %5763 = vmatprep.mubr.f32.mxu0 %v3907
    %5764 = vmatmul.mubr.f32.gmra.mxu0 %v3906
    %v5765 = vpop.f32.mrf.mxu0
    %v5766 = vadd.f32 %v5695, %v5765
    %v5767 = vpop.f32.mrf.mxu0
    %v5768 = vadd.f32 %v5697, %v5767
    %5769 = vdwg.mxu0
    %5770 = vmatprep.subr.mxu0 %v4543
    %5771 = vmatpush1.msra.mxu0 %v4542
    %5772 = vmatprep.subr.mxu0 %v4535
    %5773 = vmatpush1.msra.mxu0 %v4534
    %5774 = vmatprep.subr.mxu0 %v4527
    %5775 = vmatpush1.msra.mxu0 %v4526
    %5776 = vmatprep.subr.mxu0 %v4519
    %5777 = vmatpush1.msra.mxu0 %v4518
    %5778 = vmatprep.subr.mxu0 %v4511
    %5779 = vmatpush1.msra.mxu0 %v4510
    %5780 = vmatprep.subr.mxu0 %v4503
    %5781 = vmatpush1.msra.mxu0 %v4502
    %5782 = vmatprep.subr.mxu0 %v4495
    %5783 = vmatpush1.msra.mxu0 %v4494
    %5784 = vmatprep.subr.mxu0 %v4487
    %5785 = vmatpush1.msra.mxu0 %v4486
    %5786 = vmatprep.subr.mxu0 %v4479
    %5787 = vmatpush1.msra.mxu0 %v4478
    %5788 = vmatprep.subr.mxu0 %v4471
    %5789 = vmatpush1.msra.mxu0 %v4470
    %5790 = vmatprep.subr.mxu0 %v4463
    %5791 = vmatpush1.msra.mxu0 %v4462
    %5792 = vmatprep.subr.mxu0 %v4455
    %5793 = vmatpush1.msra.mxu0 %v4454
    %5794 = vmatprep.subr.mxu0 %v4447
    %5795 = vmatpush1.msra.mxu0 %v4446
    %5796 = vmatprep.subr.mxu0 %v4439
    %5797 = vmatpush1.msra.mxu0 %v4438
    %5798 = vmatprep.subr.mxu0 %v4431
    %5799 = vmatpush1.msra.mxu0 %v4430
    %5800 = vmatprep.subr.mxu0 %v4423
    %5801 = vmatpush1.msra.mxu0 %v4422
    %5802 = vmatprep.subr.mxu0 %v4671
    %5803 = vmatpush2.msra.mxu0 %v4670
    %5804 = vmatprep.subr.mxu0 %v4663
    %5805 = vmatpush2.msra.mxu0 %v4662
    %5806 = vmatprep.subr.mxu0 %v4655
    %5807 = vmatpush2.msra.mxu0 %v4654
    %5808 = vmatprep.subr.mxu0 %v4647
    %5809 = vmatpush2.msra.mxu0 %v4646
    %5810 = vmatprep.subr.mxu0 %v4639
    %5811 = vmatpush2.msra.mxu0 %v4638
    %5812 = vmatprep.subr.mxu0 %v4631
    %5813 = vmatpush2.msra.mxu0 %v4630
    %5814 = vmatprep.subr.mxu0 %v4623
    %5815 = vmatpush2.msra.mxu0 %v4622
    %5816 = vmatprep.subr.mxu0 %v4615
    %5817 = vmatpush2.msra.mxu0 %v4614
    %5818 = vmatprep.subr.mxu0 %v4607
    %5819 = vmatpush2.msra.mxu0 %v4606
    %5820 = vmatprep.subr.mxu0 %v4599
    %5821 = vmatpush2.msra.mxu0 %v4598
    %5822 = vmatprep.subr.mxu0 %v4591
    %5823 = vmatpush2.msra.mxu0 %v4590
    %5824 = vmatprep.subr.mxu0 %v4583
    %5825 = vmatpush2.msra.mxu0 %v4582
    %5826 = vmatprep.subr.mxu0 %v4575
    %5827 = vmatpush2.msra.mxu0 %v4574
    %5828 = vmatprep.subr.mxu0 %v4567
    %5829 = vmatpush2.msra.mxu0 %v4566
    %5830 = vmatprep.subr.mxu0 %v4559
    %5831 = vmatpush2.msra.mxu0 %v4558
    %5832 = vmatprep.subr.mxu0 %v4551
    %5833 = vmatpush2.msra.mxu0 %v4550
    %5834 = vmatprep.mubr.f32.mxu0 %v3901
    %5835 = vmatmul.mubr.f32.gmra.mxu0 %v3900
    %v5836 = vpop.f32.mrf.mxu0
    %v5837 = vadd.f32 %v5457, %v5836
    %v5838 = vpop.f32.mrf.mxu0
    %v5839 = vadd.f32 %v5461, %v5838
    %5840 = vdwg.mxu0
    %5841 = vmatprep.subr.mxu0 %v4799
    %5842 = vmatpush1.msra.mxu0 %v4798
    %5843 = vmatprep.subr.mxu0 %v4791
    %5844 = vmatpush1.msra.mxu0 %v4790
    %5845 = vmatprep.subr.mxu0 %v4783
    %5846 = vmatpush1.msra.mxu0 %v4782
    %5847 = vmatprep.subr.mxu0 %v4775
    %5848 = vmatpush1.msra.mxu0 %v4774
    %5849 = vmatprep.subr.mxu0 %v4767
    %5850 = vmatpush1.msra.mxu0 %v4766
    %5851 = vmatprep.subr.mxu0 %v4759
    %5852 = vmatpush1.msra.mxu0 %v4758
    %5853 = vmatprep.subr.mxu0 %v4751
    %5854 = vmatpush1.msra.mxu0 %v4750
    %5855 = vmatprep.subr.mxu0 %v4743
    %5856 = vmatpush1.msra.mxu0 %v4742
    %5857 = vmatprep.subr.mxu0 %v4735
    %5858 = vmatpush1.msra.mxu0 %v4734
    %5859 = vmatprep.subr.mxu0 %v4727
    %5860 = vmatpush1.msra.mxu0 %v4726
    %5861 = vmatprep.subr.mxu0 %v4719
    %5862 = vmatpush1.msra.mxu0 %v4718
    %5863 = vmatprep.subr.mxu0 %v4711
    %5864 = vmatpush1.msra.mxu0 %v4710
    %5865 = vmatprep.subr.mxu0 %v4703
    %5866 = vmatpush1.msra.mxu0 %v4702
    %5867 = vmatprep.subr.mxu0 %v4695
    %5868 = vmatpush1.msra.mxu0 %v4694
    %5869 = vmatprep.subr.mxu0 %v4687
    %5870 = vmatpush1.msra.mxu0 %v4686
    %5871 = vmatprep.subr.mxu0 %v4679
    %5872 = vmatpush1.msra.mxu0 %v4678
    %5873 = vmatprep.subr.mxu0 %v4927
    %5874 = vmatpush2.msra.mxu0 %v4926
    %5875 = vmatprep.subr.mxu0 %v4919
    %5876 = vmatpush2.msra.mxu0 %v4918
    %5877 = vmatprep.subr.mxu0 %v4911
    %5878 = vmatpush2.msra.mxu0 %v4910
    %5879 = vmatprep.subr.mxu0 %v4903
    %5880 = vmatpush2.msra.mxu0 %v4902
    %5881 = vmatprep.subr.mxu0 %v4895
    %5882 = vmatpush2.msra.mxu0 %v4894
    %5883 = vmatprep.subr.mxu0 %v4887
    %5884 = vmatpush2.msra.mxu0 %v4886
    %5885 = vmatprep.subr.mxu0 %v4879
    %5886 = vmatpush2.msra.mxu0 %v4878
    %5887 = vmatprep.subr.mxu0 %v4871
    %5888 = vmatpush2.msra.mxu0 %v4870
    %5889 = vmatprep.subr.mxu0 %v4863
    %5890 = vmatpush2.msra.mxu0 %v4862
    %5891 = vmatprep.subr.mxu0 %v4855
    %5892 = vmatpush2.msra.mxu0 %v4854
    %5893 = vmatprep.subr.mxu0 %v4847
    %5894 = vmatpush2.msra.mxu0 %v4846
    %5895 = vmatprep.subr.mxu0 %v4839
    %5896 = vmatpush2.msra.mxu0 %v4838
    %5897 = vmatprep.subr.mxu0 %v4831
    %5898 = vmatpush2.msra.mxu0 %v4830
    %5899 = vmatprep.subr.mxu0 %v4823
    %5900 = vmatpush2.msra.mxu0 %v4822
    %5901 = vmatprep.subr.mxu0 %v4815
    %5902 = vmatpush2.msra.mxu0 %v4814
    %5903 = vmatprep.subr.mxu0 %v4807
    %5904 = vmatpush2.msra.mxu0 %v4806
    %5905 = vmatprep.mubr.f32.mxu0 %v3903
    %5906 = vmatmul.mubr.f32.gmra.mxu0 %v3902
    %v5907 = vpop.f32.mrf.mxu0
    %v5908 = vadd.f32 %v5837, %v5907
    %v5909 = vpop.f32.mrf.mxu0
    %v5910 = vadd.f32 %v5839, %v5909
    %5911 = vdwg.mxu0
    %5912 = vmatprep.subr.mxu0 %v5055
    %5913 = vmatpush1.msra.mxu0 %v5054
    %5914 = vmatprep.subr.mxu0 %v5047
    %5915 = vmatpush1.msra.mxu0 %v5046
    %5916 = vmatprep.subr.mxu0 %v5039
    %5917 = vmatpush1.msra.mxu0 %v5038
    %5918 = vmatprep.subr.mxu0 %v5031
    %5919 = vmatpush1.msra.mxu0 %v5030
    %5920 = vmatprep.subr.mxu0 %v5023
    %5921 = vmatpush1.msra.mxu0 %v5022
    %5922 = vmatprep.subr.mxu0 %v5015
    %5923 = vmatpush1.msra.mxu0 %v5014
    %5924 = vmatprep.subr.mxu0 %v5007
    %5925 = vmatpush1.msra.mxu0 %v5006
    %5926 = vmatprep.subr.mxu0 %v4999
    %5927 = vmatpush1.msra.mxu0 %v4998
    %5928 = vmatprep.subr.mxu0 %v4991
    %5929 = vmatpush1.msra.mxu0 %v4990
    %5930 = vmatprep.subr.mxu0 %v4983
    %5931 = vmatpush1.msra.mxu0 %v4982
    %5932 = vmatprep.subr.mxu0 %v4975
    %5933 = vmatpush1.msra.mxu0 %v4974
    %5934 = vmatprep.subr.mxu0 %v4967
    %5935 = vmatpush1.msra.mxu0 %v4966
    %5936 = vmatprep.subr.mxu0 %v4959
    %5937 = vmatpush1.msra.mxu0 %v4958
    %5938 = vmatprep.subr.mxu0 %v4951
    %5939 = vmatpush1.msra.mxu0 %v4950
    %5940 = vmatprep.subr.mxu0 %v4943
    %5941 = vmatpush1.msra.mxu0 %v4942
    %5942 = vmatprep.subr.mxu0 %v4935
    %5943 = vmatpush1.msra.mxu0 %v4934
    %5944 = vmatprep.subr.mxu0 %v5183
    %5945 = vmatpush2.msra.mxu0 %v5182
    %5946 = vmatprep.subr.mxu0 %v5175
    %5947 = vmatpush2.msra.mxu0 %v5174
    %5948 = vmatprep.subr.mxu0 %v5167
    %5949 = vmatpush2.msra.mxu0 %v5166
    %5950 = vmatprep.subr.mxu0 %v5159
    %5951 = vmatpush2.msra.mxu0 %v5158
    %5952 = vmatprep.subr.mxu0 %v5151
    %5953 = vmatpush2.msra.mxu0 %v5150
    %5954 = vmatprep.subr.mxu0 %v5143
    %5955 = vmatpush2.msra.mxu0 %v5142
    %5956 = vmatprep.subr.mxu0 %v5135
    %5957 = vmatpush2.msra.mxu0 %v5134
    %5958 = vmatprep.subr.mxu0 %v5127
    %5959 = vmatpush2.msra.mxu0 %v5126
    %5960 = vmatprep.subr.mxu0 %v5119
    %5961 = vmatpush2.msra.mxu0 %v5118
    %5962 = vmatprep.subr.mxu0 %v5111
    %5963 = vmatpush2.msra.mxu0 %v5110
    %5964 = vmatprep.subr.mxu0 %v5103
    %5965 = vmatpush2.msra.mxu0 %v5102
    %5966 = vmatprep.subr.mxu0 %v5095
    %5967 = vmatpush2.msra.mxu0 %v5094
    %5968 = vmatprep.subr.mxu0 %v5087
    %5969 = vmatpush2.msra.mxu0 %v5086
    %5970 = vmatprep.subr.mxu0 %v5079
    %5971 = vmatpush2.msra.mxu0 %v5078
    %5972 = vmatprep.subr.mxu0 %v5071
    %5973 = vmatpush2.msra.mxu0 %v5070
    %5974 = vmatprep.subr.mxu0 %v5063
    %5975 = vmatpush2.msra.mxu0 %v5062
    %5976 = vmatprep.mubr.f32.mxu0 %v3905
    %5977 = vmatmul.mubr.f32.gmra.mxu0 %v3904
    %v5978 = vpop.f32.mrf.mxu0
    %v5979 = vadd.f32 %v5908, %v5978
    %v5980 = vpop.f32.mrf.mxu0
    %v5981 = vadd.f32 %v5910, %v5980
    %5982 = vdwg.mxu0
    %5983 = vmatprep.subr.mxu0 %v5311
    %5984 = vmatpush1.msra.mxu0 %v5310
    %5985 = vmatprep.subr.mxu0 %v5303
    %5986 = vmatpush1.msra.mxu0 %v5302
    %5987 = vmatprep.subr.mxu0 %v5295
    %5988 = vmatpush1.msra.mxu0 %v5294
    %5989 = vmatprep.subr.mxu0 %v5287
    %5990 = vmatpush1.msra.mxu0 %v5286
    %5991 = vmatprep.subr.mxu0 %v5279
    %5992 = vmatpush1.msra.mxu0 %v5278
    %5993 = vmatprep.subr.mxu0 %v5271
    %5994 = vmatpush1.msra.mxu0 %v5270
    %5995 = vmatprep.subr.mxu0 %v5263
    %5996 = vmatpush1.msra.mxu0 %v5262
    %5997 = vmatprep.subr.mxu0 %v5255
    %5998 = vmatpush1.msra.mxu0 %v5254
    %5999 = vmatprep.subr.mxu0 %v5247
    %6000 = vmatpush1.msra.mxu0 %v5246
    %6001 = vmatprep.subr.mxu0 %v5239
    %6002 = vmatpush1.msra.mxu0 %v5238
    %6003 = vmatprep.subr.mxu0 %v5231
    %6004 = vmatpush1.msra.mxu0 %v5230
    %6005 = vmatprep.subr.mxu0 %v5223
    %6006 = vmatpush1.msra.mxu0 %v5222
    %6007 = vmatprep.subr.mxu0 %v5215
    %6008 = vmatpush1.msra.mxu0 %v5214
    %6009 = vmatprep.subr.mxu0 %v5207
    %6010 = vmatpush1.msra.mxu0 %v5206
    %6011 = vmatprep.subr.mxu0 %v5199
    %6012 = vmatpush1.msra.mxu0 %v5198
    %6013 = vmatprep.subr.mxu0 %v5191
    %6014 = vmatpush1.msra.mxu0 %v5190
    %6015 = vmatprep.subr.mxu0 %v5439
    %6016 = vmatpush2.msra.mxu0 %v5438
    %6017 = vmatprep.subr.mxu0 %v5431
    %6018 = vmatpush2.msra.mxu0 %v5430
    %6019 = vmatprep.subr.mxu0 %v5423
    %6020 = vmatpush2.msra.mxu0 %v5422
    %6021 = vmatprep.subr.mxu0 %v5415
    %6022 = vmatpush2.msra.mxu0 %v5414
    %6023 = vmatprep.subr.mxu0 %v5407
    %6024 = vmatpush2.msra.mxu0 %v5406
    %6025 = vmatprep.subr.mxu0 %v5399
    %6026 = vmatpush2.msra.mxu0 %v5398
    %6027 = vmatprep.subr.mxu0 %v5391
    %6028 = vmatpush2.msra.mxu0 %v5390
    %6029 = vmatprep.subr.mxu0 %v5383
    %6030 = vmatpush2.msra.mxu0 %v5382
    %6031 = vmatprep.subr.mxu0 %v5375
    %6032 = vmatpush2.msra.mxu0 %v5374
    %6033 = vmatprep.subr.mxu0 %v5367
    %6034 = vmatpush2.msra.mxu0 %v5366
    %6035 = vmatprep.subr.mxu0 %v5359
    %6036 = vmatpush2.msra.mxu0 %v5358
    %6037 = vmatprep.subr.mxu0 %v5351
    %6038 = vmatpush2.msra.mxu0 %v5350
    %6039 = vmatprep.subr.mxu0 %v5343
    %6040 = vmatpush2.msra.mxu0 %v5342
    %6041 = vmatprep.subr.mxu0 %v5335
    %6042 = vmatpush2.msra.mxu0 %v5334
    %6043 = vmatprep.subr.mxu0 %v5327
    %6044 = vmatpush2.msra.mxu0 %v5326
    %6045 = vmatprep.subr.mxu0 %v5319
    %6046 = vmatpush2.msra.mxu0 %v5318
    %6047 = vmatprep.mubr.f32.mxu0 %v3907
    %6048 = vmatmul.mubr.f32.gmra.mxu0 %v3906
    %v6049 = vpop.f32.mrf.mxu0
    %v6050 = vadd.f32 %v5979, %v6049
    %v6051 = vpop.f32.mrf.mxu0
    %v6052 = vadd.f32 %v5981, %v6051
    %6053 = vdwg.mxu0
    %6054 = vmatprep.subr.mxu0 %v4545
    %6055 = vmatpush1.msra.mxu0 %v4544
    %6056 = vmatprep.subr.mxu0 %v4537
    %6057 = vmatpush1.msra.mxu0 %v4536
    %6058 = vmatprep.subr.mxu0 %v4529
    %6059 = vmatpush1.msra.mxu0 %v4528
    %6060 = vmatprep.subr.mxu0 %v4521
    %6061 = vmatpush1.msra.mxu0 %v4520
    %6062 = vmatprep.subr.mxu0 %v4513
    %6063 = vmatpush1.msra.mxu0 %v4512
    %6064 = vmatprep.subr.mxu0 %v4505
    %6065 = vmatpush1.msra.mxu0 %v4504
    %6066 = vmatprep.subr.mxu0 %v4497
    %6067 = vmatpush1.msra.mxu0 %v4496
    %6068 = vmatprep.subr.mxu0 %v4489
    %6069 = vmatpush1.msra.mxu0 %v4488
    %6070 = vmatprep.subr.mxu0 %v4481
    %6071 = vmatpush1.msra.mxu0 %v4480
    %6072 = vmatprep.subr.mxu0 %v4473
    %6073 = vmatpush1.msra.mxu0 %v4472
    %6074 = vmatprep.subr.mxu0 %v4465
    %6075 = vmatpush1.msra.mxu0 %v4464
    %6076 = vmatprep.subr.mxu0 %v4457
    %6077 = vmatpush1.msra.mxu0 %v4456
    %6078 = vmatprep.subr.mxu0 %v4449
    %6079 = vmatpush1.msra.mxu0 %v4448
    %6080 = vmatprep.subr.mxu0 %v4441
    %6081 = vmatpush1.msra.mxu0 %v4440
    %6082 = vmatprep.subr.mxu0 %v4433
    %6083 = vmatpush1.msra.mxu0 %v4432
    %6084 = vmatprep.subr.mxu0 %v4425
    %6085 = vmatpush1.msra.mxu0 %v4424
    %6086 = vmatprep.subr.mxu0 %v4673
    %6087 = vmatpush2.msra.mxu0 %v4672
    %6088 = vmatprep.subr.mxu0 %v4665
    %6089 = vmatpush2.msra.mxu0 %v4664
    %6090 = vmatprep.subr.mxu0 %v4657
    %6091 = vmatpush2.msra.mxu0 %v4656
    %6092 = vmatprep.subr.mxu0 %v4649
    %6093 = vmatpush2.msra.mxu0 %v4648
    %6094 = vmatprep.subr.mxu0 %v4641
    %6095 = vmatpush2.msra.mxu0 %v4640
    %6096 = vmatprep.subr.mxu0 %v4633
    %6097 = vmatpush2.msra.mxu0 %v4632
    %6098 = vmatprep.subr.mxu0 %v4625
    %6099 = vmatpush2.msra.mxu0 %v4624
    %6100 = vmatprep.subr.mxu0 %v4617
    %6101 = vmatpush2.msra.mxu0 %v4616
    %6102 = vmatprep.subr.mxu0 %v4609
    %6103 = vmatpush2.msra.mxu0 %v4608
    %6104 = vmatprep.subr.mxu0 %v4601
    %6105 = vmatpush2.msra.mxu0 %v4600
    %6106 = vmatprep.subr.mxu0 %v4593
    %6107 = vmatpush2.msra.mxu0 %v4592
    %6108 = vmatprep.subr.mxu0 %v4585
    %6109 = vmatpush2.msra.mxu0 %v4584
    %6110 = vmatprep.subr.mxu0 %v4577
    %6111 = vmatpush2.msra.mxu0 %v4576
    %6112 = vmatprep.subr.mxu0 %v4569
    %6113 = vmatpush2.msra.mxu0 %v4568
    %6114 = vmatprep.subr.mxu0 %v4561
    %6115 = vmatpush2.msra.mxu0 %v4560
    %6116 = vmatprep.subr.mxu0 %v4553
    %6117 = vmatpush2.msra.mxu0 %v4552
    %6118 = vmatprep.mubr.f32.mxu0 %v3901
    %6119 = vmatmul.mubr.f32.gmra.mxu0 %v3900
    %v6120 = vpop.f32.mrf.mxu0
    %v6121 = vadd.f32 %v5465, %v6120
    %v6122 = vpop.f32.mrf.mxu0
    %v6123 = vadd.f32 %v5469, %v6122
    %6124 = vdwg.mxu0
    %6125 = vmatprep.subr.mxu0 %v4801
    %6126 = vmatpush1.msra.mxu0 %v4800
    %6127 = vmatprep.subr.mxu0 %v4793
    %6128 = vmatpush1.msra.mxu0 %v4792
    %6129 = vmatprep.subr.mxu0 %v4785
    %6130 = vmatpush1.msra.mxu0 %v4784
    %6131 = vmatprep.subr.mxu0 %v4777
    %6132 = vmatpush1.msra.mxu0 %v4776
    %6133 = vmatprep.subr.mxu0 %v4769
    %6134 = vmatpush1.msra.mxu0 %v4768
    %6135 = vmatprep.subr.mxu0 %v4761
    %6136 = vmatpush1.msra.mxu0 %v4760
    %6137 = vmatprep.subr.mxu0 %v4753
    %6138 = vmatpush1.msra.mxu0 %v4752
    %6139 = vmatprep.subr.mxu0 %v4745
    %6140 = vmatpush1.msra.mxu0 %v4744
    %6141 = vmatprep.subr.mxu0 %v4737
    %6142 = vmatpush1.msra.mxu0 %v4736
    %6143 = vmatprep.subr.mxu0 %v4729
    %6144 = vmatpush1.msra.mxu0 %v4728
    %6145 = vmatprep.subr.mxu0 %v4721
    %6146 = vmatpush1.msra.mxu0 %v4720
    %6147 = vmatprep.subr.mxu0 %v4713
    %6148 = vmatpush1.msra.mxu0 %v4712
    %6149 = vmatprep.subr.mxu0 %v4705
    %6150 = vmatpush1.msra.mxu0 %v4704
    %6151 = vmatprep.subr.mxu0 %v4697
    %6152 = vmatpush1.msra.mxu0 %v4696
    %6153 = vmatprep.subr.mxu0 %v4689
    %6154 = vmatpush1.msra.mxu0 %v4688
    %6155 = vmatprep.subr.mxu0 %v4681
    %6156 = vmatpush1.msra.mxu0 %v4680
    %6157 = vmatprep.subr.mxu0 %v4929
    %6158 = vmatpush2.msra.mxu0 %v4928
    %6159 = vmatprep.subr.mxu0 %v4921
    %6160 = vmatpush2.msra.mxu0 %v4920
    %6161 = vmatprep.subr.mxu0 %v4913
    %6162 = vmatpush2.msra.mxu0 %v4912
    %6163 = vmatprep.subr.mxu0 %v4905
    %6164 = vmatpush2.msra.mxu0 %v4904
    %6165 = vmatprep.subr.mxu0 %v4897
    %6166 = vmatpush2.msra.mxu0 %v4896
    %6167 = vmatprep.subr.mxu0 %v4889
    %6168 = vmatpush2.msra.mxu0 %v4888
    %6169 = vmatprep.subr.mxu0 %v4881
    %6170 = vmatpush2.msra.mxu0 %v4880
    %6171 = vmatprep.subr.mxu0 %v4873
    %6172 = vmatpush2.msra.mxu0 %v4872
    %6173 = vmatprep.subr.mxu0 %v4865
    %6174 = vmatpush2.msra.mxu0 %v4864
    %6175 = vmatprep.subr.mxu0 %v4857
    %6176 = vmatpush2.msra.mxu0 %v4856
    %6177 = vmatprep.subr.mxu0 %v4849
    %6178 = vmatpush2.msra.mxu0 %v4848
    %6179 = vmatprep.subr.mxu0 %v4841
    %6180 = vmatpush2.msra.mxu0 %v4840
    %6181 = vmatprep.subr.mxu0 %v4833
    %6182 = vmatpush2.msra.mxu0 %v4832
    %6183 = vmatprep.subr.mxu0 %v4825
    %6184 = vmatpush2.msra.mxu0 %v4824
    %6185 = vmatprep.subr.mxu0 %v4817
    %6186 = vmatpush2.msra.mxu0 %v4816
    %6187 = vmatprep.subr.mxu0 %v4809
    %6188 = vmatpush2.msra.mxu0 %v4808
    %6189 = vmatprep.mubr.f32.mxu0 %v3903
    %6190 = vmatmul.mubr.f32.gmra.mxu0 %v3902
    %v6191 = vpop.f32.mrf.mxu0
    %v6192 = vadd.f32 %v6121, %v6191
    %v6193 = vpop.f32.mrf.mxu0
    %v6194 = vadd.f32 %v6123, %v6193
    %6195 = vdwg.mxu0
    %6196 = vmatprep.subr.mxu0 %v5057
    %6197 = vmatpush1.msra.mxu0 %v5056
    %6198 = vmatprep.subr.mxu0 %v5049
    %6199 = vmatpush1.msra.mxu0 %v5048
    %6200 = vmatprep.subr.mxu0 %v5041
    %6201 = vmatpush1.msra.mxu0 %v5040
    %6202 = vmatprep.subr.mxu0 %v5033
    %6203 = vmatpush1.msra.mxu0 %v5032
    %6204 = vmatprep.subr.mxu0 %v5025
    %6205 = vmatpush1.msra.mxu0 %v5024
    %6206 = vmatprep.subr.mxu0 %v5017
    %6207 = vmatpush1.msra.mxu0 %v5016
    %6208 = vmatprep.subr.mxu0 %v5009
    %6209 = vmatpush1.msra.mxu0 %v5008
    %6210 = vmatprep.subr.mxu0 %v5001
    %6211 = vmatpush1.msra.mxu0 %v5000
    %6212 = vmatprep.subr.mxu0 %v4993
    %6213 = vmatpush1.msra.mxu0 %v4992
    %6214 = vmatprep.subr.mxu0 %v4985
    %6215 = vmatpush1.msra.mxu0 %v4984
    %6216 = vmatprep.subr.mxu0 %v4977
    %6217 = vmatpush1.msra.mxu0 %v4976
    %6218 = vmatprep.subr.mxu0 %v4969
    %6219 = vmatpush1.msra.mxu0 %v4968
    %6220 = vmatprep.subr.mxu0 %v4961
    %6221 = vmatpush1.msra.mxu0 %v4960
    %6222 = vmatprep.subr.mxu0 %v4953
    %6223 = vmatpush1.msra.mxu0 %v4952
    %6224 = vmatprep.subr.mxu0 %v4945
    %6225 = vmatpush1.msra.mxu0 %v4944
    %6226 = vmatprep.subr.mxu0 %v4937
    %6227 = vmatpush1.msra.mxu0 %v4936
    %6228 = vmatprep.subr.mxu0 %v5185
    %6229 = vmatpush2.msra.mxu0 %v5184
    %6230 = vmatprep.subr.mxu0 %v5177
    %6231 = vmatpush2.msra.mxu0 %v5176
    %6232 = vmatprep.subr.mxu0 %v5169
    %6233 = vmatpush2.msra.mxu0 %v5168
    %6234 = vmatprep.subr.mxu0 %v5161
    %6235 = vmatpush2.msra.mxu0 %v5160
    %6236 = vmatprep.subr.mxu0 %v5153
    %6237 = vmatpush2.msra.mxu0 %v5152
    %6238 = vmatprep.subr.mxu0 %v5145
    %6239 = vmatpush2.msra.mxu0 %v5144
    %6240 = vmatprep.subr.mxu0 %v5137
    %6241 = vmatpush2.msra.mxu0 %v5136
    %6242 = vmatprep.subr.mxu0 %v5129
    %6243 = vmatpush2.msra.mxu0 %v5128
    %6244 = vmatprep.subr.mxu0 %v5121
    %6245 = vmatpush2.msra.mxu0 %v5120
    %6246 = vmatprep.subr.mxu0 %v5113
    %6247 = vmatpush2.msra.mxu0 %v5112
    %6248 = vmatprep.subr.mxu0 %v5105
    %6249 = vmatpush2.msra.mxu0 %v5104
    %6250 = vmatprep.subr.mxu0 %v5097
    %6251 = vmatpush2.msra.mxu0 %v5096
    %6252 = vmatprep.subr.mxu0 %v5089
    %6253 = vmatpush2.msra.mxu0 %v5088
    %6254 = vmatprep.subr.mxu0 %v5081
    %6255 = vmatpush2.msra.mxu0 %v5080
    %6256 = vmatprep.subr.mxu0 %v5073
    %6257 = vmatpush2.msra.mxu0 %v5072
    %6258 = vmatprep.subr.mxu0 %v5065
    %6259 = vmatpush2.msra.mxu0 %v5064
    %6260 = vmatprep.mubr.f32.mxu0 %v3905
    %6261 = vmatmul.mubr.f32.gmra.mxu0 %v3904
    %v6262 = vpop.f32.mrf.mxu0
    %v6263 = vadd.f32 %v6192, %v6262
    %v6264 = vpop.f32.mrf.mxu0
    %v6265 = vadd.f32 %v6194, %v6264
    %6266 = vdwg.mxu0
    %6267 = vmatprep.subr.mxu0 %v5313
    %6268 = vmatpush1.msra.mxu0 %v5312
    %6269 = vmatprep.subr.mxu0 %v5305
    %6270 = vmatpush1.msra.mxu0 %v5304
    %6271 = vmatprep.subr.mxu0 %v5297
    %6272 = vmatpush1.msra.mxu0 %v5296
    %6273 = vmatprep.subr.mxu0 %v5289
    %6274 = vmatpush1.msra.mxu0 %v5288
    %6275 = vmatprep.subr.mxu0 %v5281
    %6276 = vmatpush1.msra.mxu0 %v5280
    %6277 = vmatprep.subr.mxu0 %v5273
    %6278 = vmatpush1.msra.mxu0 %v5272
    %6279 = vmatprep.subr.mxu0 %v5265
    %6280 = vmatpush1.msra.mxu0 %v5264
    %6281 = vmatprep.subr.mxu0 %v5257
    %6282 = vmatpush1.msra.mxu0 %v5256
    %6283 = vmatprep.subr.mxu0 %v5249
    %6284 = vmatpush1.msra.mxu0 %v5248
    %6285 = vmatprep.subr.mxu0 %v5241
    %6286 = vmatpush1.msra.mxu0 %v5240
    %6287 = vmatprep.subr.mxu0 %v5233
    %6288 = vmatpush1.msra.mxu0 %v5232
    %6289 = vmatprep.subr.mxu0 %v5225
    %6290 = vmatpush1.msra.mxu0 %v5224
    %6291 = vmatprep.subr.mxu0 %v5217
    %6292 = vmatpush1.msra.mxu0 %v5216
    %6293 = vmatprep.subr.mxu0 %v5209
    %6294 = vmatpush1.msra.mxu0 %v5208
    %6295 = vmatprep.subr.mxu0 %v5201
    %6296 = vmatpush1.msra.mxu0 %v5200
    %6297 = vmatprep.subr.mxu0 %v5193
    %6298 = vmatpush1.msra.mxu0 %v5192
    %6299 = vmatprep.subr.mxu0 %v5441
    %6300 = vmatpush2.msra.mxu0 %v5440
    %6301 = vmatprep.subr.mxu0 %v5433
    %6302 = vmatpush2.msra.mxu0 %v5432
    %6303 = vmatprep.subr.mxu0 %v5425
    %6304 = vmatpush2.msra.mxu0 %v5424
    %6305 = vmatprep.subr.mxu0 %v5417
    %6306 = vmatpush2.msra.mxu0 %v5416
    %6307 = vmatprep.subr.mxu0 %v5409
    %6308 = vmatpush2.msra.mxu0 %v5408
    %6309 = vmatprep.subr.mxu0 %v5401
    %6310 = vmatpush2.msra.mxu0 %v5400
    %6311 = vmatprep.subr.mxu0 %v5393
    %6312 = vmatpush2.msra.mxu0 %v5392
    %6313 = vmatprep.subr.mxu0 %v5385
    %6314 = vmatpush2.msra.mxu0 %v5384
    %6315 = vmatprep.subr.mxu0 %v5377
    %6316 = vmatpush2.msra.mxu0 %v5376
    %6317 = vmatprep.subr.mxu0 %v5369
    %6318 = vmatpush2.msra.mxu0 %v5368
    %6319 = vmatprep.subr.mxu0 %v5361
    %6320 = vmatpush2.msra.mxu0 %v5360
    %6321 = vmatprep.subr.mxu0 %v5353
    %6322 = vmatpush2.msra.mxu0 %v5352
    %6323 = vmatprep.subr.mxu0 %v5345
    %6324 = vmatpush2.msra.mxu0 %v5344
    %6325 = vmatprep.subr.mxu0 %v5337
    %6326 = vmatpush2.msra.mxu0 %v5336
    %6327 = vmatprep.subr.mxu0 %v5329
    %6328 = vmatpush2.msra.mxu0 %v5328
    %6329 = vmatprep.subr.mxu0 %v5321
    %6330 = vmatpush2.msra.mxu0 %v5320
    %6331 = vmatprep.mubr.f32.mxu0 %v3907
    %6332 = vmatmul.mubr.f32.gmra.mxu0 %v3906
    %v6333 = vpop.f32.mrf.mxu0
    %v6334 = vadd.f32 %v6263, %v6333
    %v6335 = vpop.f32.mrf.mxu0
    %v6336 = vadd.f32 %v6265, %v6335
    %6337 = vdwg.mxu0
    %6338 = vmatprep.subr.mxu0 %v4547
    %6339 = vmatpush1.msra.mxu0 %v4546
    %6340 = vmatprep.subr.mxu0 %v4539
    %6341 = vmatpush1.msra.mxu0 %v4538
    %6342 = vmatprep.subr.mxu0 %v4531
    %6343 = vmatpush1.msra.mxu0 %v4530
    %6344 = vmatprep.subr.mxu0 %v4523
    %6345 = vmatpush1.msra.mxu0 %v4522
    %6346 = vmatprep.subr.mxu0 %v4515
    %6347 = vmatpush1.msra.mxu0 %v4514
    %6348 = vmatprep.subr.mxu0 %v4507
    %6349 = vmatpush1.msra.mxu0 %v4506
    %6350 = vmatprep.subr.mxu0 %v4499
    %6351 = vmatpush1.msra.mxu0 %v4498
    %6352 = vmatprep.subr.mxu0 %v4491
    %6353 = vmatpush1.msra.mxu0 %v4490
    %6354 = vmatprep.subr.mxu0 %v4483
    %6355 = vmatpush1.msra.mxu0 %v4482
    %6356 = vmatprep.subr.mxu0 %v4475
    %6357 = vmatpush1.msra.mxu0 %v4474
    %6358 = vmatprep.subr.mxu0 %v4467
    %6359 = vmatpush1.msra.mxu0 %v4466
    %6360 = vmatprep.subr.mxu0 %v4459
    %6361 = vmatpush1.msra.mxu0 %v4458
    %6362 = vmatprep.subr.mxu0 %v4451
    %6363 = vmatpush1.msra.mxu0 %v4450
    %6364 = vmatprep.subr.mxu0 %v4443
    %6365 = vmatpush1.msra.mxu0 %v4442
    %6366 = vmatprep.subr.mxu0 %v4435
    %6367 = vmatpush1.msra.mxu0 %v4434
    %6368 = vmatprep.subr.mxu0 %v4427
    %6369 = vmatpush1.msra.mxu0 %v4426
    %6370 = vmatprep.subr.mxu0 %v4675
    %6371 = vmatpush2.msra.mxu0 %v4674
    %6372 = vmatprep.subr.mxu0 %v4667
    %6373 = vmatpush2.msra.mxu0 %v4666
    %6374 = vmatprep.subr.mxu0 %v4659
    %6375 = vmatpush2.msra.mxu0 %v4658
    %6376 = vmatprep.subr.mxu0 %v4651
    %6377 = vmatpush2.msra.mxu0 %v4650
    %6378 = vmatprep.subr.mxu0 %v4643
    %6379 = vmatpush2.msra.mxu0 %v4642
    %6380 = vmatprep.subr.mxu0 %v4635
    %6381 = vmatpush2.msra.mxu0 %v4634
    %6382 = vmatprep.subr.mxu0 %v4627
    %6383 = vmatpush2.msra.mxu0 %v4626
    %6384 = vmatprep.subr.mxu0 %v4619
    %6385 = vmatpush2.msra.mxu0 %v4618
    %6386 = vmatprep.subr.mxu0 %v4611
    %6387 = vmatpush2.msra.mxu0 %v4610
    %6388 = vmatprep.subr.mxu0 %v4603
    %6389 = vmatpush2.msra.mxu0 %v4602
    %6390 = vmatprep.subr.mxu0 %v4595
    %6391 = vmatpush2.msra.mxu0 %v4594
    %6392 = vmatprep.subr.mxu0 %v4587
    %6393 = vmatpush2.msra.mxu0 %v4586
    %6394 = vmatprep.subr.mxu0 %v4579
    %6395 = vmatpush2.msra.mxu0 %v4578
    %6396 = vmatprep.subr.mxu0 %v4571
    %6397 = vmatpush2.msra.mxu0 %v4570
    %6398 = vmatprep.subr.mxu0 %v4563
    %6399 = vmatpush2.msra.mxu0 %v4562
    %6400 = vmatprep.subr.mxu0 %v4555
    %6401 = vmatpush2.msra.mxu0 %v4554
    %6402 = vmatprep.mubr.f32.mxu0 %v3901
    %6403 = vmatmul.mubr.f32.gmra.mxu0 %v3900
    %v6404 = vpop.f32.mrf.mxu0
    %v6405 = vadd.f32 %v5473, %v6404
    %v6406 = vpop.f32.mrf.mxu0
    %v6407 = vadd.f32 %v5477, %v6406
    %6408 = vdwg.mxu0
    %6409 = vmatprep.subr.mxu0 %v4803
    %6410 = vmatpush1.msra.mxu0 %v4802
    %6411 = vmatprep.subr.mxu0 %v4795
    %6412 = vmatpush1.msra.mxu0 %v4794
    %6413 = vmatprep.subr.mxu0 %v4787
    %6414 = vmatpush1.msra.mxu0 %v4786
    %6415 = vmatprep.subr.mxu0 %v4779
    %6416 = vmatpush1.msra.mxu0 %v4778
    %6417 = vmatprep.subr.mxu0 %v4771
    %6418 = vmatpush1.msra.mxu0 %v4770
    %6419 = vmatprep.subr.mxu0 %v4763
    %6420 = vmatpush1.msra.mxu0 %v4762
    %6421 = vmatprep.subr.mxu0 %v4755
    %6422 = vmatpush1.msra.mxu0 %v4754
    %6423 = vmatprep.subr.mxu0 %v4747
    %6424 = vmatpush1.msra.mxu0 %v4746
    %6425 = vmatprep.subr.mxu0 %v4739
    %6426 = vmatpush1.msra.mxu0 %v4738
    %6427 = vmatprep.subr.mxu0 %v4731
    %6428 = vmatpush1.msra.mxu0 %v4730
    %6429 = vmatprep.subr.mxu0 %v4723
    %6430 = vmatpush1.msra.mxu0 %v4722
    %6431 = vmatprep.subr.mxu0 %v4715
    %6432 = vmatpush1.msra.mxu0 %v4714
    %6433 = vmatprep.subr.mxu0 %v4707
    %6434 = vmatpush1.msra.mxu0 %v4706
    %6435 = vmatprep.subr.mxu0 %v4699
    %6436 = vmatpush1.msra.mxu0 %v4698
    %6437 = vmatprep.subr.mxu0 %v4691
    %6438 = vmatpush1.msra.mxu0 %v4690
    %6439 = vmatprep.subr.mxu0 %v4683
    %6440 = vmatpush1.msra.mxu0 %v4682
    %6441 = vmatprep.subr.mxu0 %v4931
    %6442 = vmatpush2.msra.mxu0 %v4930
    %6443 = vmatprep.subr.mxu0 %v4923
    %6444 = vmatpush2.msra.mxu0 %v4922
    %6445 = vmatprep.subr.mxu0 %v4915
    %6446 = vmatpush2.msra.mxu0 %v4914
    %6447 = vmatprep.subr.mxu0 %v4907
    %6448 = vmatpush2.msra.mxu0 %v4906
    %6449 = vmatprep.subr.mxu0 %v4899
    %6450 = vmatpush2.msra.mxu0 %v4898
    %6451 = vmatprep.subr.mxu0 %v4891
    %6452 = vmatpush2.msra.mxu0 %v4890
    %6453 = vmatprep.subr.mxu0 %v4883
    %6454 = vmatpush2.msra.mxu0 %v4882
    %6455 = vmatprep.subr.mxu0 %v4875
    %6456 = vmatpush2.msra.mxu0 %v4874
    %6457 = vmatprep.subr.mxu0 %v4867
    %6458 = vmatpush2.msra.mxu0 %v4866
    %6459 = vmatprep.subr.mxu0 %v4859
    %6460 = vmatpush2.msra.mxu0 %v4858
    %6461 = vmatprep.subr.mxu0 %v4851
    %6462 = vmatpush2.msra.mxu0 %v4850
    %6463 = vmatprep.subr.mxu0 %v4843
    %6464 = vmatpush2.msra.mxu0 %v4842
    %6465 = vmatprep.subr.mxu0 %v4835
    %6466 = vmatpush2.msra.mxu0 %v4834
    %6467 = vmatprep.subr.mxu0 %v4827
    %6468 = vmatpush2.msra.mxu0 %v4826
    %6469 = vmatprep.subr.mxu0 %v4819
    %6470 = vmatpush2.msra.mxu0 %v4818
    %6471 = vmatprep.subr.mxu0 %v4811
    %6472 = vmatpush2.msra.mxu0 %v4810
    %6473 = vmatprep.mubr.f32.mxu0 %v3903
    %6474 = vmatmul.mubr.f32.gmra.mxu0 %v3902
    %v6475 = vpop.f32.mrf.mxu0
    %v6476 = vadd.f32 %v6405, %v6475
    %v6477 = vpop.f32.mrf.mxu0
    %v6478 = vadd.f32 %v6407, %v6477
    %6479 = vdwg.mxu0
    %6480 = vmatprep.subr.mxu0 %v5059
    %6481 = vmatpush1.msra.mxu0 %v5058
    %6482 = vmatprep.subr.mxu0 %v5051
    %6483 = vmatpush1.msra.mxu0 %v5050
    %6484 = vmatprep.subr.mxu0 %v5043
    %6485 = vmatpush1.msra.mxu0 %v5042
    %6486 = vmatprep.subr.mxu0 %v5035
    %6487 = vmatpush1.msra.mxu0 %v5034
    %6488 = vmatprep.subr.mxu0 %v5027
    %6489 = vmatpush1.msra.mxu0 %v5026
    %6490 = vmatprep.subr.mxu0 %v5019
    %6491 = vmatpush1.msra.mxu0 %v5018
    %6492 = vmatprep.subr.mxu0 %v5011
    %6493 = vmatpush1.msra.mxu0 %v5010
    %6494 = vmatprep.subr.mxu0 %v5003
    %6495 = vmatpush1.msra.mxu0 %v5002
    %6496 = vmatprep.subr.mxu0 %v4995
    %6497 = vmatpush1.msra.mxu0 %v4994
    %6498 = vmatprep.subr.mxu0 %v4987
    %6499 = vmatpush1.msra.mxu0 %v4986
    %6500 = vmatprep.subr.mxu0 %v4979
    %6501 = vmatpush1.msra.mxu0 %v4978
    %6502 = vmatprep.subr.mxu0 %v4971
    %6503 = vmatpush1.msra.mxu0 %v4970
    %6504 = vmatprep.subr.mxu0 %v4963
    %6505 = vmatpush1.msra.mxu0 %v4962
    %6506 = vmatprep.subr.mxu0 %v4955
    %6507 = vmatpush1.msra.mxu0 %v4954
    %6508 = vmatprep.subr.mxu0 %v4947
    %6509 = vmatpush1.msra.mxu0 %v4946
    %6510 = vmatprep.subr.mxu0 %v4939
    %6511 = vmatpush1.msra.mxu0 %v4938
    %6512 = vmatprep.subr.mxu0 %v5187
    %6513 = vmatpush2.msra.mxu0 %v5186
    %6514 = vmatprep.subr.mxu0 %v5179
    %6515 = vmatpush2.msra.mxu0 %v5178
    %6516 = vmatprep.subr.mxu0 %v5171
    %6517 = vmatpush2.msra.mxu0 %v5170
    %6518 = vmatprep.subr.mxu0 %v5163
    %6519 = vmatpush2.msra.mxu0 %v5162
    %6520 = vmatprep.subr.mxu0 %v5155
    %6521 = vmatpush2.msra.mxu0 %v5154
    %6522 = vmatprep.subr.mxu0 %v5147
    %6523 = vmatpush2.msra.mxu0 %v5146
    %6524 = vmatprep.subr.mxu0 %v5139
    %6525 = vmatpush2.msra.mxu0 %v5138
    %6526 = vmatprep.subr.mxu0 %v5131
    %6527 = vmatpush2.msra.mxu0 %v5130
    %6528 = vmatprep.subr.mxu0 %v5123
    %6529 = vmatpush2.msra.mxu0 %v5122
    %6530 = vmatprep.subr.mxu0 %v5115
    %6531 = vmatpush2.msra.mxu0 %v5114
    %6532 = vmatprep.subr.mxu0 %v5107
    %6533 = vmatpush2.msra.mxu0 %v5106
    %6534 = vmatprep.subr.mxu0 %v5099
    %6535 = vmatpush2.msra.mxu0 %v5098
    %6536 = vmatprep.subr.mxu0 %v5091
    %6537 = vmatpush2.msra.mxu0 %v5090
    %6538 = vmatprep.subr.mxu0 %v5083
    %6539 = vmatpush2.msra.mxu0 %v5082
    %6540 = vmatprep.subr.mxu0 %v5075
    %6541 = vmatpush2.msra.mxu0 %v5074
    %6542 = vmatprep.subr.mxu0 %v5067
    %6543 = vmatpush2.msra.mxu0 %v5066
    %6544 = vmatprep.mubr.f32.mxu0 %v3905
    %6545 = vmatmul.mubr.f32.gmra.mxu0 %v3904
    %v6546 = vpop.f32.mrf.mxu0
    %v6547 = vadd.f32 %v6476, %v6546
    %v6548 = vpop.f32.mrf.mxu0
    %v6549 = vadd.f32 %v6478, %v6548
    %6550 = vdwg.mxu0
    %6551 = vmatprep.subr.mxu0 %v5315
    %6552 = vmatpush1.msra.mxu0 %v5314
    %6553 = vmatprep.subr.mxu0 %v5307
    %6554 = vmatpush1.msra.mxu0 %v5306
    %6555 = vmatprep.subr.mxu0 %v5299
    %6556 = vmatpush1.msra.mxu0 %v5298
    %6557 = vmatprep.subr.mxu0 %v5291
    %6558 = vmatpush1.msra.mxu0 %v5290
    %6559 = vmatprep.subr.mxu0 %v5283
    %6560 = vmatpush1.msra.mxu0 %v5282
    %6561 = vmatprep.subr.mxu0 %v5275
    %6562 = vmatpush1.msra.mxu0 %v5274
    %6563 = vmatprep.subr.mxu0 %v5267
    %6564 = vmatpush1.msra.mxu0 %v5266
    %6565 = vmatprep.subr.mxu0 %v5259
    %6566 = vmatpush1.msra.mxu0 %v5258
    %6567 = vmatprep.subr.mxu0 %v5251
    %6568 = vmatpush1.msra.mxu0 %v5250
    %6569 = vmatprep.subr.mxu0 %v5243
    %6570 = vmatpush1.msra.mxu0 %v5242
    %6571 = vmatprep.subr.mxu0 %v5235
    %6572 = vmatpush1.msra.mxu0 %v5234
    %6573 = vmatprep.subr.mxu0 %v5227
    %6574 = vmatpush1.msra.mxu0 %v5226
    %6575 = vmatprep.subr.mxu0 %v5219
    %6576 = vmatpush1.msra.mxu0 %v5218
    %6577 = vmatprep.subr.mxu0 %v5211
    %6578 = vmatpush1.msra.mxu0 %v5210
    %6579 = vmatprep.subr.mxu0 %v5203
    %6580 = vmatpush1.msra.mxu0 %v5202
    %6581 = vmatprep.subr.mxu0 %v5195
    %6582 = vmatpush1.msra.mxu0 %v5194
    %6583 = vmatprep.subr.mxu0 %v5443
    %6584 = vmatpush2.msra.mxu0 %v5442
    %6585 = vmatprep.subr.mxu0 %v5435
    %6586 = vmatpush2.msra.mxu0 %v5434
    %6587 = vmatprep.subr.mxu0 %v5427
    %6588 = vmatpush2.msra.mxu0 %v5426
    %6589 = vmatprep.subr.mxu0 %v5419
    %6590 = vmatpush2.msra.mxu0 %v5418
    %6591 = vmatprep.subr.mxu0 %v5411
    %6592 = vmatpush2.msra.mxu0 %v5410
    %6593 = vmatprep.subr.mxu0 %v5403
    %6594 = vmatpush2.msra.mxu0 %v5402
    %6595 = vmatprep.subr.mxu0 %v5395
    %6596 = vmatpush2.msra.mxu0 %v5394
    %6597 = vmatprep.subr.mxu0 %v5387
    %6598 = vmatpush2.msra.mxu0 %v5386
    %6599 = vmatprep.subr.mxu0 %v5379
    %6600 = vmatpush2.msra.mxu0 %v5378
    %6601 = vmatprep.subr.mxu0 %v5371
    %6602 = vmatpush2.msra.mxu0 %v5370
    %6603 = vmatprep.subr.mxu0 %v5363
    %6604 = vmatpush2.msra.mxu0 %v5362
    %6605 = vmatprep.subr.mxu0 %v5355
    %6606 = vmatpush2.msra.mxu0 %v5354
    %6607 = vmatprep.subr.mxu0 %v5347
    %6608 = vmatpush2.msra.mxu0 %v5346
    %6609 = vmatprep.subr.mxu0 %v5339
    %6610 = vmatpush2.msra.mxu0 %v5338
    %6611 = vmatprep.subr.mxu0 %v5331
    %6612 = vmatpush2.msra.mxu0 %v5330
    %6613 = vmatprep.subr.mxu0 %v5323
    %6614 = vmatpush2.msra.mxu0 %v5322
    %6615 = vmatprep.mubr.f32.mxu0 %v3907
    %6616 = vmatmul.mubr.f32.gmra.mxu0 %v3906
    %v6617 = vpop.f32.mrf.mxu0
    %v6618 = vadd.f32 %v6547, %v6617
    %v6619 = vpop.f32.mrf.mxu0
    %v6620 = vadd.f32 %v6549, %v6619
    %6621 = vdwg.mxu0
    %v6622 = vmax.f32 %v5766, 0.0
    %v6623 = vmax.f32 %v5768, 0.0
    %v6624 = vmax.f32 %v6050, 0.0
    %v6625 = vmax.f32 %v6052, 0.0
    %v6626 = vmax.f32 %v6334, 0.0
    %v6627 = vmax.f32 %v6336, 0.0
    %v6628 = vmax.f32 %v6618, 0.0
    %v6629 = vmax.f32 %v6620, 0.0
    %v6630 = vld [vmem:[#allocation19] sm:$0xff]
    %v6631 = vld [vmem:[#allocation19 + $0x8] sm:$0xff]
    %v6632 = vld [vmem:[#allocation19 + $0x10] sm:$0xff]
    %v6633 = vld [vmem:[#allocation19 + $0x18] sm:$0xff]
    %v6634 = vld [vmem:[#allocation19 + $0x20] sm:$0xff]
    %v6635 = vld [vmem:[#allocation19 + $0x28] sm:$0xff]
    %v6636 = vld [vmem:[#allocation19 + $0x30] sm:$0xff]
    %v6637 = vld [vmem:[#allocation19 + $0x38] sm:$0xff]
    %v6638 = vld [vmem:[#allocation19 + $0x40] sm:$0xff]
    %v6639 = vld [vmem:[#allocation19 + $0x48] sm:$0xff]
    %v6640 = vld [vmem:[#allocation19 + $0x50] sm:$0xff]
    %v6641 = vld [vmem:[#allocation19 + $0x58] sm:$0xff]
    %v6642 = vld [vmem:[#allocation19 + $0x60] sm:$0xff]
    %v6643 = vld [vmem:[#allocation19 + $0x68] sm:$0xff]
    %v6644 = vld [vmem:[#allocation19 + $0x70] sm:$0xff]
    %v6645 = vld [vmem:[#allocation19 + $0x78] sm:$0xff]
    %v6646 = vld [vmem:[#allocation19 + $0x80] sm:$0xff]
    %v6647 = vld [vmem:[#allocation19 + $0x88] sm:$0xff]
    %v6648 = vld [vmem:[#allocation19 + $0x90] sm:$0xff]
    %v6649 = vld [vmem:[#allocation19 + $0x98] sm:$0xff]
    %v6650 = vld [vmem:[#allocation19 + $0xa0] sm:$0xff]
    %v6651 = vld [vmem:[#allocation19 + $0xa8] sm:$0xff]
    %v6652 = vld [vmem:[#allocation19 + $0xb0] sm:$0xff]
    %v6653 = vld [vmem:[#allocation19 + $0xb8] sm:$0xff]
    %v6654 = vld [vmem:[#allocation19 + $0xc0] sm:$0xff]
    %v6655 = vld [vmem:[#allocation19 + $0xc8] sm:$0xff]
    %v6656 = vld [vmem:[#allocation19 + $0xd0] sm:$0xff]
    %v6657 = vld [vmem:[#allocation19 + $0xd8] sm:$0xff]
    %v6658 = vld [vmem:[#allocation19 + $0xe0] sm:$0xff]
    %v6659 = vld [vmem:[#allocation19 + $0xe8] sm:$0xff]
    %v6660 = vld [vmem:[#allocation19 + $0xf0] sm:$0xff]
    %v6661 = vld [vmem:[#allocation19 + $0xf8] sm:$0xff]
    %v6662 = vld [vmem:[#allocation19 + $0x100] sm:$0xff]
    %v6663 = vld [vmem:[#allocation19 + $0x108] sm:$0xff]
    %v6664 = vld [vmem:[#allocation19 + $0x110] sm:$0xff]
    %v6665 = vld [vmem:[#allocation19 + $0x118] sm:$0xff]
    %v6666 = vld [vmem:[#allocation19 + $0x120] sm:$0xff]
    %v6667 = vld [vmem:[#allocation19 + $0x128] sm:$0xff]
    %v6668 = vld [vmem:[#allocation19 + $0x130] sm:$0xff]
    %v6669 = vld [vmem:[#allocation19 + $0x138] sm:$0xff]
    %v6670 = vld [vmem:[#allocation19 + $0x140] sm:$0xff]
    %v6671 = vld [vmem:[#allocation19 + $0x148] sm:$0xff]
    %v6672 = vld [vmem:[#allocation19 + $0x150] sm:$0xff]
    %v6673 = vld [vmem:[#allocation19 + $0x158] sm:$0xff]
    %v6674 = vld [vmem:[#allocation19 + $0x160] sm:$0xff]
    %v6675 = vld [vmem:[#allocation19 + $0x168] sm:$0xff]
    %v6676 = vld [vmem:[#allocation19 + $0x170] sm:$0xff]
    %v6677 = vld [vmem:[#allocation19 + $0x178] sm:$0xff]
    %v6678 = vld [vmem:[#allocation19 + $0x180] sm:$0xff]
    %v6679 = vld [vmem:[#allocation19 + $0x188] sm:$0xff]
    %v6680 = vld [vmem:[#allocation19 + $0x190] sm:$0xff]
    %v6681 = vld [vmem:[#allocation19 + $0x198] sm:$0xff]
    %v6682 = vld [vmem:[#allocation19 + $0x1a0] sm:$0xff]
    %v6683 = vld [vmem:[#allocation19 + $0x1a8] sm:$0xff]
    %v6684 = vld [vmem:[#allocation19 + $0x1b0] sm:$0xff]
    %v6685 = vld [vmem:[#allocation19 + $0x1b8] sm:$0xff]
    %v6686 = vld [vmem:[#allocation19 + $0x1c0] sm:$0xff]
    %v6687 = vld [vmem:[#allocation19 + $0x1c8] sm:$0xff]
    %v6688 = vld [vmem:[#allocation19 + $0x1d0] sm:$0xff]
    %v6689 = vld [vmem:[#allocation19 + $0x1d8] sm:$0xff]
    %v6690 = vld [vmem:[#allocation19 + $0x1e0] sm:$0xff]
    %v6691 = vld [vmem:[#allocation19 + $0x1e8] sm:$0xff]
    %v6692 = vld [vmem:[#allocation19 + $0x1f0] sm:$0xff]
    %v6693 = vld [vmem:[#allocation19 + $0x1f8] sm:$0xff]
    %v6694 = vld [vmem:[#allocation19 + $0x200] sm:$0xff]
    %v6695 = vld [vmem:[#allocation19 + $0x208] sm:$0xff]
    %v6696 = vld [vmem:[#allocation19 + $0x210] sm:$0xff]
    %v6697 = vld [vmem:[#allocation19 + $0x218] sm:$0xff]
    %v6698 = vld [vmem:[#allocation19 + $0x220] sm:$0xff]
    %v6699 = vld [vmem:[#allocation19 + $0x228] sm:$0xff]
    %v6700 = vld [vmem:[#allocation19 + $0x230] sm:$0xff]
    %v6701 = vld [vmem:[#allocation19 + $0x238] sm:$0xff]
    %v6702 = vld [vmem:[#allocation19 + $0x240] sm:$0xff]
    %v6703 = vld [vmem:[#allocation19 + $0x248] sm:$0xff]
    %v6704 = vld [vmem:[#allocation19 + $0x250] sm:$0xff]
    %v6705 = vld [vmem:[#allocation19 + $0x258] sm:$0xff]
    %v6706 = vld [vmem:[#allocation19 + $0x260] sm:$0xff]
    %v6707 = vld [vmem:[#allocation19 + $0x268] sm:$0xff]
    %v6708 = vld [vmem:[#allocation19 + $0x270] sm:$0xff]
    %v6709 = vld [vmem:[#allocation19 + $0x278] sm:$0xff]
    %v6710 = vld [vmem:[#allocation19 + $0x280] sm:$0xff]
    %v6711 = vld [vmem:[#allocation19 + $0x288] sm:$0xff]
    %v6712 = vld [vmem:[#allocation19 + $0x290] sm:$0xff]
    %v6713 = vld [vmem:[#allocation19 + $0x298] sm:$0xff]
    %v6714 = vld [vmem:[#allocation19 + $0x2a0] sm:$0xff]
    %v6715 = vld [vmem:[#allocation19 + $0x2a8] sm:$0xff]
    %v6716 = vld [vmem:[#allocation19 + $0x2b0] sm:$0xff]
    %v6717 = vld [vmem:[#allocation19 + $0x2b8] sm:$0xff]
    %v6718 = vld [vmem:[#allocation19 + $0x2c0] sm:$0xff]
    %v6719 = vld [vmem:[#allocation19 + $0x2c8] sm:$0xff]
    %v6720 = vld [vmem:[#allocation19 + $0x2d0] sm:$0xff]
    %v6721 = vld [vmem:[#allocation19 + $0x2d8] sm:$0xff]
    %v6722 = vld [vmem:[#allocation19 + $0x2e0] sm:$0xff]
    %v6723 = vld [vmem:[#allocation19 + $0x2e8] sm:$0xff]
    %v6724 = vld [vmem:[#allocation19 + $0x2f0] sm:$0xff]
    %v6725 = vld [vmem:[#allocation19 + $0x2f8] sm:$0xff]
    %v6726 = vld [vmem:[#allocation19 + $0x300] sm:$0xff]
    %v6727 = vld [vmem:[#allocation19 + $0x308] sm:$0xff]
    %v6728 = vld [vmem:[#allocation19 + $0x310] sm:$0xff]
    %v6729 = vld [vmem:[#allocation19 + $0x318] sm:$0xff]
    %v6730 = vld [vmem:[#allocation19 + $0x320] sm:$0xff]
    %v6731 = vld [vmem:[#allocation19 + $0x328] sm:$0xff]
    %v6732 = vld [vmem:[#allocation19 + $0x330] sm:$0xff]
    %v6733 = vld [vmem:[#allocation19 + $0x338] sm:$0xff]
    %v6734 = vld [vmem:[#allocation19 + $0x340] sm:$0xff]
    %v6735 = vld [vmem:[#allocation19 + $0x348] sm:$0xff]
    %v6736 = vld [vmem:[#allocation19 + $0x350] sm:$0xff]
    %v6737 = vld [vmem:[#allocation19 + $0x358] sm:$0xff]
    %v6738 = vld [vmem:[#allocation19 + $0x360] sm:$0xff]
    %v6739 = vld [vmem:[#allocation19 + $0x368] sm:$0xff]
    %v6740 = vld [vmem:[#allocation19 + $0x370] sm:$0xff]
    %v6741 = vld [vmem:[#allocation19 + $0x378] sm:$0xff]
    %v6742 = vld [vmem:[#allocation19 + $0x380] sm:$0xff]
    %v6743 = vld [vmem:[#allocation19 + $0x388] sm:$0xff]
    %v6744 = vld [vmem:[#allocation19 + $0x390] sm:$0xff]
    %v6745 = vld [vmem:[#allocation19 + $0x398] sm:$0xff]
    %v6746 = vld [vmem:[#allocation19 + $0x3a0] sm:$0xff]
    %v6747 = vld [vmem:[#allocation19 + $0x3a8] sm:$0xff]
    %v6748 = vld [vmem:[#allocation19 + $0x3b0] sm:$0xff]
    %v6749 = vld [vmem:[#allocation19 + $0x3b8] sm:$0xff]
    %v6750 = vld [vmem:[#allocation19 + $0x3c0] sm:$0xff]
    %v6751 = vld [vmem:[#allocation19 + $0x3c8] sm:$0xff]
    %v6752 = vld [vmem:[#allocation19 + $0x3d0] sm:$0xff]
    %v6753 = vld [vmem:[#allocation19 + $0x3d8] sm:$0xff]
    %v6754 = vld [vmem:[#allocation19 + $0x3e0] sm:$0xff]
    %v6755 = vld [vmem:[#allocation19 + $0x3e8] sm:$0xff]
    %v6756 = vld [vmem:[#allocation19 + $0x3f0] sm:$0xff]
    %v6757 = vld [vmem:[#allocation19 + $0x3f8] sm:$0xff]
    %v6758 = vunpack.c.l.bf16 %v6630
    %v6759 = vunpack.c.h.bf16 %v6630
    %v6760 = vunpack.c.l.bf16 %v6631
    %v6761 = vunpack.c.h.bf16 %v6631
    %v6762 = vunpack.c.l.bf16 %v6632
    %v6763 = vunpack.c.h.bf16 %v6632
    %v6764 = vunpack.c.l.bf16 %v6633
    %v6765 = vunpack.c.h.bf16 %v6633
    %v6766 = vunpack.c.l.bf16 %v6634
    %v6767 = vunpack.c.h.bf16 %v6634
    %v6768 = vunpack.c.l.bf16 %v6635
    %v6769 = vunpack.c.h.bf16 %v6635
    %v6770 = vunpack.c.l.bf16 %v6636
    %v6771 = vunpack.c.h.bf16 %v6636
    %v6772 = vunpack.c.l.bf16 %v6637
    %v6773 = vunpack.c.h.bf16 %v6637
    %v6774 = vunpack.c.l.bf16 %v6638
    %v6775 = vunpack.c.h.bf16 %v6638
    %v6776 = vunpack.c.l.bf16 %v6639
    %v6777 = vunpack.c.h.bf16 %v6639
    %v6778 = vunpack.c.l.bf16 %v6640
    %v6779 = vunpack.c.h.bf16 %v6640
    %v6780 = vunpack.c.l.bf16 %v6641
    %v6781 = vunpack.c.h.bf16 %v6641
    %v6782 = vunpack.c.l.bf16 %v6642
    %v6783 = vunpack.c.h.bf16 %v6642
    %v6784 = vunpack.c.l.bf16 %v6643
    %v6785 = vunpack.c.h.bf16 %v6643
    %v6786 = vunpack.c.l.bf16 %v6644
    %v6787 = vunpack.c.h.bf16 %v6644
    %v6788 = vunpack.c.l.bf16 %v6645
    %v6789 = vunpack.c.h.bf16 %v6645
    %v6790 = vunpack.c.l.bf16 %v6646
    %v6791 = vunpack.c.h.bf16 %v6646
    %v6792 = vunpack.c.l.bf16 %v6647
    %v6793 = vunpack.c.h.bf16 %v6647
    %v6794 = vunpack.c.l.bf16 %v6648
    %v6795 = vunpack.c.h.bf16 %v6648
    %v6796 = vunpack.c.l.bf16 %v6649
    %v6797 = vunpack.c.h.bf16 %v6649
    %v6798 = vunpack.c.l.bf16 %v6650
    %v6799 = vunpack.c.h.bf16 %v6650
    %v6800 = vunpack.c.l.bf16 %v6651
    %v6801 = vunpack.c.h.bf16 %v6651
    %v6802 = vunpack.c.l.bf16 %v6652
    %v6803 = vunpack.c.h.bf16 %v6652
    %v6804 = vunpack.c.l.bf16 %v6653
    %v6805 = vunpack.c.h.bf16 %v6653
    %v6806 = vunpack.c.l.bf16 %v6654
    %v6807 = vunpack.c.h.bf16 %v6654
    %v6808 = vunpack.c.l.bf16 %v6655
    %v6809 = vunpack.c.h.bf16 %v6655
    %v6810 = vunpack.c.l.bf16 %v6656
    %v6811 = vunpack.c.h.bf16 %v6656
    %v6812 = vunpack.c.l.bf16 %v6657
    %v6813 = vunpack.c.h.bf16 %v6657
    %v6814 = vunpack.c.l.bf16 %v6658
    %v6815 = vunpack.c.h.bf16 %v6658
    %v6816 = vunpack.c.l.bf16 %v6659
    %v6817 = vunpack.c.h.bf16 %v6659
    %v6818 = vunpack.c.l.bf16 %v6660
    %v6819 = vunpack.c.h.bf16 %v6660
    %v6820 = vunpack.c.l.bf16 %v6661
    %v6821 = vunpack.c.h.bf16 %v6661
    %v6822 = vunpack.c.l.bf16 %v6662
    %v6823 = vunpack.c.h.bf16 %v6662
    %v6824 = vunpack.c.l.bf16 %v6663
    %v6825 = vunpack.c.h.bf16 %v6663
    %v6826 = vunpack.c.l.bf16 %v6664
    %v6827 = vunpack.c.h.bf16 %v6664
    %v6828 = vunpack.c.l.bf16 %v6665
    %v6829 = vunpack.c.h.bf16 %v6665
    %v6830 = vunpack.c.l.bf16 %v6666
    %v6831 = vunpack.c.h.bf16 %v6666
    %v6832 = vunpack.c.l.bf16 %v6667
    %v6833 = vunpack.c.h.bf16 %v6667
    %v6834 = vunpack.c.l.bf16 %v6668
    %v6835 = vunpack.c.h.bf16 %v6668
    %v6836 = vunpack.c.l.bf16 %v6669
    %v6837 = vunpack.c.h.bf16 %v6669
    %v6838 = vunpack.c.l.bf16 %v6670
    %v6839 = vunpack.c.h.bf16 %v6670
    %v6840 = vunpack.c.l.bf16 %v6671
    %v6841 = vunpack.c.h.bf16 %v6671
    %v6842 = vunpack.c.l.bf16 %v6672
    %v6843 = vunpack.c.h.bf16 %v6672
    %v6844 = vunpack.c.l.bf16 %v6673
    %v6845 = vunpack.c.h.bf16 %v6673
    %v6846 = vunpack.c.l.bf16 %v6674
    %v6847 = vunpack.c.h.bf16 %v6674
    %v6848 = vunpack.c.l.bf16 %v6675
    %v6849 = vunpack.c.h.bf16 %v6675
    %v6850 = vunpack.c.l.bf16 %v6676
    %v6851 = vunpack.c.h.bf16 %v6676
    %v6852 = vunpack.c.l.bf16 %v6677
    %v6853 = vunpack.c.h.bf16 %v6677
    %v6854 = vunpack.c.l.bf16 %v6678
    %v6855 = vunpack.c.h.bf16 %v6678
    %v6856 = vunpack.c.l.bf16 %v6679
    %v6857 = vunpack.c.h.bf16 %v6679
    %v6858 = vunpack.c.l.bf16 %v6680
    %v6859 = vunpack.c.h.bf16 %v6680
    %v6860 = vunpack.c.l.bf16 %v6681
    %v6861 = vunpack.c.h.bf16 %v6681
    %v6862 = vunpack.c.l.bf16 %v6682
    %v6863 = vunpack.c.h.bf16 %v6682
    %v6864 = vunpack.c.l.bf16 %v6683
    %v6865 = vunpack.c.h.bf16 %v6683
    %v6866 = vunpack.c.l.bf16 %v6684
    %v6867 = vunpack.c.h.bf16 %v6684
    %v6868 = vunpack.c.l.bf16 %v6685
    %v6869 = vunpack.c.h.bf16 %v6685
    %v6870 = vunpack.c.l.bf16 %v6686
    %v6871 = vunpack.c.h.bf16 %v6686
    %v6872 = vunpack.c.l.bf16 %v6687
    %v6873 = vunpack.c.h.bf16 %v6687
    %v6874 = vunpack.c.l.bf16 %v6688
    %v6875 = vunpack.c.h.bf16 %v6688
    %v6876 = vunpack.c.l.bf16 %v6689
    %v6877 = vunpack.c.h.bf16 %v6689
    %v6878 = vunpack.c.l.bf16 %v6690
    %v6879 = vunpack.c.h.bf16 %v6690
    %v6880 = vunpack.c.l.bf16 %v6691
    %v6881 = vunpack.c.h.bf16 %v6691
    %v6882 = vunpack.c.l.bf16 %v6692
    %v6883 = vunpack.c.h.bf16 %v6692
    %v6884 = vunpack.c.l.bf16 %v6693
    %v6885 = vunpack.c.h.bf16 %v6693
    %v6886 = vunpack.c.l.bf16 %v6694
    %v6887 = vunpack.c.h.bf16 %v6694
    %v6888 = vunpack.c.l.bf16 %v6695
    %v6889 = vunpack.c.h.bf16 %v6695
    %v6890 = vunpack.c.l.bf16 %v6696
    %v6891 = vunpack.c.h.bf16 %v6696
    %v6892 = vunpack.c.l.bf16 %v6697
    %v6893 = vunpack.c.h.bf16 %v6697
    %v6894 = vunpack.c.l.bf16 %v6698
    %v6895 = vunpack.c.h.bf16 %v6698
    %v6896 = vunpack.c.l.bf16 %v6699
    %v6897 = vunpack.c.h.bf16 %v6699
    %v6898 = vunpack.c.l.bf16 %v6700
    %v6899 = vunpack.c.h.bf16 %v6700
    %v6900 = vunpack.c.l.bf16 %v6701
    %v6901 = vunpack.c.h.bf16 %v6701
    %v6902 = vunpack.c.l.bf16 %v6702
    %v6903 = vunpack.c.h.bf16 %v6702
    %v6904 = vunpack.c.l.bf16 %v6703
    %v6905 = vunpack.c.h.bf16 %v6703
    %v6906 = vunpack.c.l.bf16 %v6704
    %v6907 = vunpack.c.h.bf16 %v6704
    %v6908 = vunpack.c.l.bf16 %v6705
    %v6909 = vunpack.c.h.bf16 %v6705
    %v6910 = vunpack.c.l.bf16 %v6706
    %v6911 = vunpack.c.h.bf16 %v6706
    %v6912 = vunpack.c.l.bf16 %v6707
    %v6913 = vunpack.c.h.bf16 %v6707
    %v6914 = vunpack.c.l.bf16 %v6708
    %v6915 = vunpack.c.h.bf16 %v6708
    %v6916 = vunpack.c.l.bf16 %v6709
    %v6917 = vunpack.c.h.bf16 %v6709
    %v6918 = vunpack.c.l.bf16 %v6710
    %v6919 = vunpack.c.h.bf16 %v6710
    %v6920 = vunpack.c.l.bf16 %v6711
    %v6921 = vunpack.c.h.bf16 %v6711
    %v6922 = vunpack.c.l.bf16 %v6712
    %v6923 = vunpack.c.h.bf16 %v6712
    %v6924 = vunpack.c.l.bf16 %v6713
    %v6925 = vunpack.c.h.bf16 %v6713
    %v6926 = vunpack.c.l.bf16 %v6714
    %v6927 = vunpack.c.h.bf16 %v6714
    %v6928 = vunpack.c.l.bf16 %v6715
    %v6929 = vunpack.c.h.bf16 %v6715
    %v6930 = vunpack.c.l.bf16 %v6716
    %v6931 = vunpack.c.h.bf16 %v6716
    %v6932 = vunpack.c.l.bf16 %v6717
    %v6933 = vunpack.c.h.bf16 %v6717
    %v6934 = vunpack.c.l.bf16 %v6718
    %v6935 = vunpack.c.h.bf16 %v6718
    %v6936 = vunpack.c.l.bf16 %v6719
    %v6937 = vunpack.c.h.bf16 %v6719
    %v6938 = vunpack.c.l.bf16 %v6720
    %v6939 = vunpack.c.h.bf16 %v6720
    %v6940 = vunpack.c.l.bf16 %v6721
    %v6941 = vunpack.c.h.bf16 %v6721
    %v6942 = vunpack.c.l.bf16 %v6722
    %v6943 = vunpack.c.h.bf16 %v6722
    %v6944 = vunpack.c.l.bf16 %v6723
    %v6945 = vunpack.c.h.bf16 %v6723
    %v6946 = vunpack.c.l.bf16 %v6724
    %v6947 = vunpack.c.h.bf16 %v6724
    %v6948 = vunpack.c.l.bf16 %v6725
    %v6949 = vunpack.c.h.bf16 %v6725
    %v6950 = vunpack.c.l.bf16 %v6726
    %v6951 = vunpack.c.h.bf16 %v6726
    %v6952 = vunpack.c.l.bf16 %v6727
    %v6953 = vunpack.c.h.bf16 %v6727
    %v6954 = vunpack.c.l.bf16 %v6728
    %v6955 = vunpack.c.h.bf16 %v6728
    %v6956 = vunpack.c.l.bf16 %v6729
    %v6957 = vunpack.c.h.bf16 %v6729
    %v6958 = vunpack.c.l.bf16 %v6730
    %v6959 = vunpack.c.h.bf16 %v6730
    %v6960 = vunpack.c.l.bf16 %v6731
    %v6961 = vunpack.c.h.bf16 %v6731
    %v6962 = vunpack.c.l.bf16 %v6732
    %v6963 = vunpack.c.h.bf16 %v6732
    %v6964 = vunpack.c.l.bf16 %v6733
    %v6965 = vunpack.c.h.bf16 %v6733
    %v6966 = vunpack.c.l.bf16 %v6734
    %v6967 = vunpack.c.h.bf16 %v6734
    %v6968 = vunpack.c.l.bf16 %v6735
    %v6969 = vunpack.c.h.bf16 %v6735
    %v6970 = vunpack.c.l.bf16 %v6736
    %v6971 = vunpack.c.h.bf16 %v6736
    %v6972 = vunpack.c.l.bf16 %v6737
    %v6973 = vunpack.c.h.bf16 %v6737
    %v6974 = vunpack.c.l.bf16 %v6738
    %v6975 = vunpack.c.h.bf16 %v6738
    %v6976 = vunpack.c.l.bf16 %v6739
    %v6977 = vunpack.c.h.bf16 %v6739
    %v6978 = vunpack.c.l.bf16 %v6740
    %v6979 = vunpack.c.h.bf16 %v6740
    %v6980 = vunpack.c.l.bf16 %v6741
    %v6981 = vunpack.c.h.bf16 %v6741
    %v6982 = vunpack.c.l.bf16 %v6742
    %v6983 = vunpack.c.h.bf16 %v6742
    %v6984 = vunpack.c.l.bf16 %v6743
    %v6985 = vunpack.c.h.bf16 %v6743
    %v6986 = vunpack.c.l.bf16 %v6744
    %v6987 = vunpack.c.h.bf16 %v6744
    %v6988 = vunpack.c.l.bf16 %v6745
    %v6989 = vunpack.c.h.bf16 %v6745
    %v6990 = vunpack.c.l.bf16 %v6746
    %v6991 = vunpack.c.h.bf16 %v6746
    %v6992 = vunpack.c.l.bf16 %v6747
    %v6993 = vunpack.c.h.bf16 %v6747
    %v6994 = vunpack.c.l.bf16 %v6748
    %v6995 = vunpack.c.h.bf16 %v6748
    %v6996 = vunpack.c.l.bf16 %v6749
    %v6997 = vunpack.c.h.bf16 %v6749
    %v6998 = vunpack.c.l.bf16 %v6750
    %v6999 = vunpack.c.h.bf16 %v6750
    %v7000 = vunpack.c.l.bf16 %v6751
    %v7001 = vunpack.c.h.bf16 %v6751
    %v7002 = vunpack.c.l.bf16 %v6752
    %v7003 = vunpack.c.h.bf16 %v6752
    %v7004 = vunpack.c.l.bf16 %v6753
    %v7005 = vunpack.c.h.bf16 %v6753
    %v7006 = vunpack.c.l.bf16 %v6754
    %v7007 = vunpack.c.h.bf16 %v6754
    %v7008 = vunpack.c.l.bf16 %v6755
    %v7009 = vunpack.c.h.bf16 %v6755
    %v7010 = vunpack.c.l.bf16 %v6756
    %v7011 = vunpack.c.h.bf16 %v6756
    %v7012 = vunpack.c.l.bf16 %v6757
    %v7013 = vunpack.c.h.bf16 %v6757
    %v7014 = vld [vmem:[#allocation21] sm:$0x3]
    %v7016 = vlaneseq
    %v7017 = vshrl.u32 %v7016, 7
    %v7018 = vsub.s32 0, %v7017
    %v7019 = vrot.slane %v7014, %v7018
    %v7020 = vlaneseq
    %v7021 = vshrl.u32 %v7020, 7
    %v7022 = vsub.s32 1, %v7021
    %v7023 = vrot.slane %v7014, %v7022
    %7026 = vmatprep.subr.mxu0 %v6789
    %7027 = vmatpush1.msra.mxu0 %v6788
    %7028 = vmatprep.subr.mxu0 %v6787
    %7029 = vmatpush1.msra.mxu0 %v6786
    %7030 = vmatprep.subr.mxu0 %v6785
    %7031 = vmatpush1.msra.mxu0 %v6784
    %7032 = vmatprep.subr.mxu0 %v6783
    %7033 = vmatpush1.msra.mxu0 %v6782
    %7034 = vmatprep.subr.mxu0 %v6781
    %7035 = vmatpush1.msra.mxu0 %v6780
    %7036 = vmatprep.subr.mxu0 %v6779
    %7037 = vmatpush1.msra.mxu0 %v6778
    %7038 = vmatprep.subr.mxu0 %v6777
    %7039 = vmatpush1.msra.mxu0 %v6776
    %7040 = vmatprep.subr.mxu0 %v6775
    %7041 = vmatpush1.msra.mxu0 %v6774
    %7042 = vmatprep.subr.mxu0 %v6773
    %7043 = vmatpush1.msra.mxu0 %v6772
    %7044 = vmatprep.subr.mxu0 %v6771
    %7045 = vmatpush1.msra.mxu0 %v6770
    %7046 = vmatprep.subr.mxu0 %v6769
    %7047 = vmatpush1.msra.mxu0 %v6768
    %7048 = vmatprep.subr.mxu0 %v6767
    %7049 = vmatpush1.msra.mxu0 %v6766
    %7050 = vmatprep.subr.mxu0 %v6765
    %7051 = vmatpush1.msra.mxu0 %v6764
    %7052 = vmatprep.subr.mxu0 %v6763
    %7053 = vmatpush1.msra.mxu0 %v6762
    %7054 = vmatprep.subr.mxu0 %v6761
    %7055 = vmatpush1.msra.mxu0 %v6760
    %7056 = vmatprep.subr.mxu0 %v6759
    %7057 = vmatpush1.msra.mxu0 %v6758
    %7058 = vmatprep.subr.mxu0 %v6821
    %7059 = vmatpush2.msra.mxu0 %v6820
    %7060 = vmatprep.subr.mxu0 %v6819
    %7061 = vmatpush2.msra.mxu0 %v6818
    %7062 = vmatprep.subr.mxu0 %v6817
    %7063 = vmatpush2.msra.mxu0 %v6816
    %7064 = vmatprep.subr.mxu0 %v6815
    %7065 = vmatpush2.msra.mxu0 %v6814
    %7066 = vmatprep.subr.mxu0 %v6813
    %7067 = vmatpush2.msra.mxu0 %v6812
    %7068 = vmatprep.subr.mxu0 %v6811
    %7069 = vmatpush2.msra.mxu0 %v6810
    %7070 = vmatprep.subr.mxu0 %v6809
    %7071 = vmatpush2.msra.mxu0 %v6808
    %7072 = vmatprep.subr.mxu0 %v6807
    %7073 = vmatpush2.msra.mxu0 %v6806
    %7074 = vmatprep.subr.mxu0 %v6805
    %7075 = vmatpush2.msra.mxu0 %v6804
    %7076 = vmatprep.subr.mxu0 %v6803
    %7077 = vmatpush2.msra.mxu0 %v6802
    %7078 = vmatprep.subr.mxu0 %v6801
    %7079 = vmatpush2.msra.mxu0 %v6800
    %7080 = vmatprep.subr.mxu0 %v6799
    %7081 = vmatpush2.msra.mxu0 %v6798
    %7082 = vmatprep.subr.mxu0 %v6797
    %7083 = vmatpush2.msra.mxu0 %v6796
    %7084 = vmatprep.subr.mxu0 %v6795
    %7085 = vmatpush2.msra.mxu0 %v6794
    %7086 = vmatprep.subr.mxu0 %v6793
    %7087 = vmatpush2.msra.mxu0 %v6792
    %7088 = vmatprep.subr.mxu0 %v6791
    %7089 = vmatpush2.msra.mxu0 %v6790
    %7090 = vmatprep.mubr.f32.mxu0 %v6623
    %7091 = vmatmul.mubr.f32.gmra.mxu0 %v6622
    %v7092 = vpop.f32.mrf.mxu0
    %v7093 = vadd.f32 %v7019, %v7092
    %v7094 = vpop.f32.mrf.mxu0
    %v7095 = vadd.f32 %v7023, %v7094
    %7096 = vdwg.mxu0
    %7097 = vmatprep.subr.mxu0 %v6853
    %7098 = vmatpush1.msra.mxu0 %v6852
    %7099 = vmatprep.subr.mxu0 %v6851
    %7100 = vmatpush1.msra.mxu0 %v6850
    %7101 = vmatprep.subr.mxu0 %v6849
    %7102 = vmatpush1.msra.mxu0 %v6848
    %7103 = vmatprep.subr.mxu0 %v6847
    %7104 = vmatpush1.msra.mxu0 %v6846
    %7105 = vmatprep.subr.mxu0 %v6845
    %7106 = vmatpush1.msra.mxu0 %v6844
    %7107 = vmatprep.subr.mxu0 %v6843
    %7108 = vmatpush1.msra.mxu0 %v6842
    %7109 = vmatprep.subr.mxu0 %v6841
    %7110 = vmatpush1.msra.mxu0 %v6840
    %7111 = vmatprep.subr.mxu0 %v6839
    %7112 = vmatpush1.msra.mxu0 %v6838
    %7113 = vmatprep.subr.mxu0 %v6837
    %7114 = vmatpush1.msra.mxu0 %v6836
    %7115 = vmatprep.subr.mxu0 %v6835
    %7116 = vmatpush1.msra.mxu0 %v6834
    %7117 = vmatprep.subr.mxu0 %v6833
    %7118 = vmatpush1.msra.mxu0 %v6832
    %7119 = vmatprep.subr.mxu0 %v6831
    %7120 = vmatpush1.msra.mxu0 %v6830
    %7121 = vmatprep.subr.mxu0 %v6829
    %7122 = vmatpush1.msra.mxu0 %v6828
    %7123 = vmatprep.subr.mxu0 %v6827
    %7124 = vmatpush1.msra.mxu0 %v6826
    %7125 = vmatprep.subr.mxu0 %v6825
    %7126 = vmatpush1.msra.mxu0 %v6824
    %7127 = vmatprep.subr.mxu0 %v6823
    %7128 = vmatpush1.msra.mxu0 %v6822
    %7129 = vmatprep.subr.mxu0 %v6885
    %7130 = vmatpush2.msra.mxu0 %v6884
    %7131 = vmatprep.subr.mxu0 %v6883
    %7132 = vmatpush2.msra.mxu0 %v6882
    %7133 = vmatprep.subr.mxu0 %v6881
    %7134 = vmatpush2.msra.mxu0 %v6880
    %7135 = vmatprep.subr.mxu0 %v6879
    %7136 = vmatpush2.msra.mxu0 %v6878
    %7137 = vmatprep.subr.mxu0 %v6877
    %7138 = vmatpush2.msra.mxu0 %v6876
    %7139 = vmatprep.subr.mxu0 %v6875
    %7140 = vmatpush2.msra.mxu0 %v6874
    %7141 = vmatprep.subr.mxu0 %v6873
    %7142 = vmatpush2.msra.mxu0 %v6872
    %7143 = vmatprep.subr.mxu0 %v6871
    %7144 = vmatpush2.msra.mxu0 %v6870
    %7145 = vmatprep.subr.mxu0 %v6869
    %7146 = vmatpush2.msra.mxu0 %v6868
    %7147 = vmatprep.subr.mxu0 %v6867
    %7148 = vmatpush2.msra.mxu0 %v6866
    %7149 = vmatprep.subr.mxu0 %v6865
    %7150 = vmatpush2.msra.mxu0 %v6864
    %7151 = vmatprep.subr.mxu0 %v6863
    %7152 = vmatpush2.msra.mxu0 %v6862
    %7153 = vmatprep.subr.mxu0 %v6861
    %7154 = vmatpush2.msra.mxu0 %v6860
    %7155 = vmatprep.subr.mxu0 %v6859
    %7156 = vmatpush2.msra.mxu0 %v6858
    %7157 = vmatprep.subr.mxu0 %v6857
    %7158 = vmatpush2.msra.mxu0 %v6856
    %7159 = vmatprep.subr.mxu0 %v6855
    %7160 = vmatpush2.msra.mxu0 %v6854
    %7161 = vmatprep.mubr.f32.mxu0 %v6625
    %7162 = vmatmul.mubr.f32.gmra.mxu0 %v6624
    %v7163 = vpop.f32.mrf.mxu0
    %v7164 = vadd.f32 %v7093, %v7163
    %v7165 = vpop.f32.mrf.mxu0
    %v7166 = vadd.f32 %v7095, %v7165
    %7167 = vdwg.mxu0
    %7168 = vmatprep.subr.mxu0 %v6917
    %7169 = vmatpush1.msra.mxu0 %v6916
    %7170 = vmatprep.subr.mxu0 %v6915
    %7171 = vmatpush1.msra.mxu0 %v6914
    %7172 = vmatprep.subr.mxu0 %v6913
    %7173 = vmatpush1.msra.mxu0 %v6912
    %7174 = vmatprep.subr.mxu0 %v6911
    %7175 = vmatpush1.msra.mxu0 %v6910
    %7176 = vmatprep.subr.mxu0 %v6909
    %7177 = vmatpush1.msra.mxu0 %v6908
    %7178 = vmatprep.subr.mxu0 %v6907
    %7179 = vmatpush1.msra.mxu0 %v6906
    %7180 = vmatprep.subr.mxu0 %v6905
    %7181 = vmatpush1.msra.mxu0 %v6904
    %7182 = vmatprep.subr.mxu0 %v6903
    %7183 = vmatpush1.msra.mxu0 %v6902
    %7184 = vmatprep.subr.mxu0 %v6901
    %7185 = vmatpush1.msra.mxu0 %v6900
    %7186 = vmatprep.subr.mxu0 %v6899
    %7187 = vmatpush1.msra.mxu0 %v6898
    %7188 = vmatprep.subr.mxu0 %v6897
    %7189 = vmatpush1.msra.mxu0 %v6896
    %7190 = vmatprep.subr.mxu0 %v6895
    %7191 = vmatpush1.msra.mxu0 %v6894
    %7192 = vmatprep.subr.mxu0 %v6893
    %7193 = vmatpush1.msra.mxu0 %v6892
    %7194 = vmatprep.subr.mxu0 %v6891
    %7195 = vmatpush1.msra.mxu0 %v6890
    %7196 = vmatprep.subr.mxu0 %v6889
    %7197 = vmatpush1.msra.mxu0 %v6888
    %7198 = vmatprep.subr.mxu0 %v6887
    %7199 = vmatpush1.msra.mxu0 %v6886
    %7200 = vmatprep.subr.mxu0 %v6949
    %7201 = vmatpush2.msra.mxu0 %v6948
    %7202 = vmatprep.subr.mxu0 %v6947
    %7203 = vmatpush2.msra.mxu0 %v6946
    %7204 = vmatprep.subr.mxu0 %v6945
    %7205 = vmatpush2.msra.mxu0 %v6944
    %7206 = vmatprep.subr.mxu0 %v6943
    %7207 = vmatpush2.msra.mxu0 %v6942
    %7208 = vmatprep.subr.mxu0 %v6941
    %7209 = vmatpush2.msra.mxu0 %v6940
    %7210 = vmatprep.subr.mxu0 %v6939
    %7211 = vmatpush2.msra.mxu0 %v6938
    %7212 = vmatprep.subr.mxu0 %v6937
    %7213 = vmatpush2.msra.mxu0 %v6936
    %7214 = vmatprep.subr.mxu0 %v6935
    %7215 = vmatpush2.msra.mxu0 %v6934
    %7216 = vmatprep.subr.mxu0 %v6933
    %7217 = vmatpush2.msra.mxu0 %v6932
    %7218 = vmatprep.subr.mxu0 %v6931
    %7219 = vmatpush2.msra.mxu0 %v6930
    %7220 = vmatprep.subr.mxu0 %v6929
    %7221 = vmatpush2.msra.mxu0 %v6928
    %7222 = vmatprep.subr.mxu0 %v6927
    %7223 = vmatpush2.msra.mxu0 %v6926
    %7224 = vmatprep.subr.mxu0 %v6925
    %7225 = vmatpush2.msra.mxu0 %v6924
    %7226 = vmatprep.subr.mxu0 %v6923
    %7227 = vmatpush2.msra.mxu0 %v6922
    %7228 = vmatprep.subr.mxu0 %v6921
    %7229 = vmatpush2.msra.mxu0 %v6920
    %7230 = vmatprep.subr.mxu0 %v6919
    %7231 = vmatpush2.msra.mxu0 %v6918
    %7232 = vmatprep.mubr.f32.mxu0 %v6627
    %7233 = vmatmul.mubr.f32.gmra.mxu0 %v6626
    %v7234 = vpop.f32.mrf.mxu0
    %v7235 = vadd.f32 %v7164, %v7234
    %v7236 = vpop.f32.mrf.mxu0
    %v7237 = vadd.f32 %v7166, %v7236
    %7238 = vdwg.mxu0
    %7239 = vmatprep.subr.mxu0 %v6981
    %7240 = vmatpush1.msra.mxu0 %v6980
    %7241 = vmatprep.subr.mxu0 %v6979
    %7242 = vmatpush1.msra.mxu0 %v6978
    %7243 = vmatprep.subr.mxu0 %v6977
    %7244 = vmatpush1.msra.mxu0 %v6976
    %7245 = vmatprep.subr.mxu0 %v6975
    %7246 = vmatpush1.msra.mxu0 %v6974
    %7247 = vmatprep.subr.mxu0 %v6973
    %7248 = vmatpush1.msra.mxu0 %v6972
    %7249 = vmatprep.subr.mxu0 %v6971
    %7250 = vmatpush1.msra.mxu0 %v6970
    %7251 = vmatprep.subr.mxu0 %v6969
    %7252 = vmatpush1.msra.mxu0 %v6968
    %7253 = vmatprep.subr.mxu0 %v6967
    %7254 = vmatpush1.msra.mxu0 %v6966
    %7255 = vmatprep.subr.mxu0 %v6965
    %7256 = vmatpush1.msra.mxu0 %v6964
    %7257 = vmatprep.subr.mxu0 %v6963
    %7258 = vmatpush1.msra.mxu0 %v6962
    %7259 = vmatprep.subr.mxu0 %v6961
    %7260 = vmatpush1.msra.mxu0 %v6960
    %7261 = vmatprep.subr.mxu0 %v6959
    %7262 = vmatpush1.msra.mxu0 %v6958
    %7263 = vmatprep.subr.mxu0 %v6957
    %7264 = vmatpush1.msra.mxu0 %v6956
    %7265 = vmatprep.subr.mxu0 %v6955
    %7266 = vmatpush1.msra.mxu0 %v6954
    %7267 = vmatprep.subr.mxu0 %v6953
    %7268 = vmatpush1.msra.mxu0 %v6952
    %7269 = vmatprep.subr.mxu0 %v6951
    %7270 = vmatpush1.msra.mxu0 %v6950
    %7271 = vmatprep.subr.mxu0 %v7013
    %7272 = vmatpush2.msra.mxu0 %v7012
    %7273 = vmatprep.subr.mxu0 %v7011
    %7274 = vmatpush2.msra.mxu0 %v7010
    %7275 = vmatprep.subr.mxu0 %v7009
    %7276 = vmatpush2.msra.mxu0 %v7008
    %7277 = vmatprep.subr.mxu0 %v7007
    %7278 = vmatpush2.msra.mxu0 %v7006
    %7279 = vmatprep.subr.mxu0 %v7005
    %7280 = vmatpush2.msra.mxu0 %v7004
    %7281 = vmatprep.subr.mxu0 %v7003
    %7282 = vmatpush2.msra.mxu0 %v7002
    %7283 = vmatprep.subr.mxu0 %v7001
    %7284 = vmatpush2.msra.mxu0 %v7000
    %7285 = vmatprep.subr.mxu0 %v6999
    %7286 = vmatpush2.msra.mxu0 %v6998
    %7287 = vmatprep.subr.mxu0 %v6997
    %7288 = vmatpush2.msra.mxu0 %v6996
    %7289 = vmatprep.subr.mxu0 %v6995
    %7290 = vmatpush2.msra.mxu0 %v6994
    %7291 = vmatprep.subr.mxu0 %v6993
    %7292 = vmatpush2.msra.mxu0 %v6992
    %7293 = vmatprep.subr.mxu0 %v6991
    %7294 = vmatpush2.msra.mxu0 %v6990
    %7295 = vmatprep.subr.mxu0 %v6989
    %7296 = vmatpush2.msra.mxu0 %v6988
    %7297 = vmatprep.subr.mxu0 %v6987
    %7298 = vmatpush2.msra.mxu0 %v6986
    %7299 = vmatprep.subr.mxu0 %v6985
    %7300 = vmatpush2.msra.mxu0 %v6984
    %7301 = vmatprep.subr.mxu0 %v6983
    %7302 = vmatpush2.msra.mxu0 %v6982
    %7303 = vmatprep.mubr.f32.mxu0 %v6629
    %7304 = vmatmul.mubr.f32.gmra.mxu0 %v6628
    %v7305 = vpop.f32.mrf.mxu0
    %v7306 = vadd.f32 %v7235, %v7305
    %v7307 = vpop.f32.mrf.mxu0
    %v7308 = vadd.f32 %v7237, %v7307
    %7309 = vdwg.mxu0
    %v7310 = vmax.f32 %v7306, 0.0
    %v7311 = vmax.f32 %v7308, 0.0
    %v7312 = vld [vmem:[#allocation22] sm:$0xf]
    %v7313 = vld [vmem:[#allocation22 + $0x4] sm:$0xf]
    %v7314 = vld [vmem:[#allocation22 + $0x8] sm:$0xf]
    %v7315 = vld [vmem:[#allocation22 + $0xc] sm:$0xf]
    %v7316 = vld [vmem:[#allocation22 + $0x10] sm:$0xf]
    %v7317 = vld [vmem:[#allocation22 + $0x14] sm:$0xf]
    %v7318 = vld [vmem:[#allocation22 + $0x18] sm:$0xf]
    %v7319 = vld [vmem:[#allocation22 + $0x1c] sm:$0xf]
    %v7320 = vld [vmem:[#allocation22 + $0x20] sm:$0xf]
    %v7321 = vld [vmem:[#allocation22 + $0x24] sm:$0xf]
    %v7322 = vld [vmem:[#allocation22 + $0x28] sm:$0xf]
    %v7323 = vld [vmem:[#allocation22 + $0x2c] sm:$0xf]
    %v7324 = vld [vmem:[#allocation22 + $0x30] sm:$0xf]
    %v7325 = vld [vmem:[#allocation22 + $0x34] sm:$0xf]
    %v7326 = vld [vmem:[#allocation22 + $0x38] sm:$0xf]
    %v7327 = vld [vmem:[#allocation22 + $0x3c] sm:$0xf]
    %v7328 = vld [vmem:[#allocation22 + $0x40] sm:$0xf]
    %v7329 = vld [vmem:[#allocation22 + $0x44] sm:$0xf]
    %v7330 = vld [vmem:[#allocation22 + $0x48] sm:$0xf]
    %v7331 = vld [vmem:[#allocation22 + $0x4c] sm:$0xf]
    %v7332 = vld [vmem:[#allocation22 + $0x50] sm:$0xf]
    %v7333 = vld [vmem:[#allocation22 + $0x54] sm:$0xf]
    %v7334 = vld [vmem:[#allocation22 + $0x58] sm:$0xf]
    %v7335 = vld [vmem:[#allocation22 + $0x5c] sm:$0xf]
    %v7336 = vld [vmem:[#allocation22 + $0x60] sm:$0xf]
    %v7337 = vld [vmem:[#allocation22 + $0x64] sm:$0xf]
    %v7338 = vld [vmem:[#allocation22 + $0x68] sm:$0xf]
    %v7339 = vld [vmem:[#allocation22 + $0x6c] sm:$0xf]
    %v7340 = vld [vmem:[#allocation22 + $0x70] sm:$0xf]
    %v7341 = vld [vmem:[#allocation22 + $0x74] sm:$0xf]
    %v7342 = vld [vmem:[#allocation22 + $0x78] sm:$0xf]
    %v7343 = vld [vmem:[#allocation22 + $0x7c] sm:$0xf]
    %v7344 = vunpack.c.l.bf16 %v7312
    %v7345 = vunpack.c.l.bf16 %v7313
    %v7346 = vunpack.c.l.bf16 %v7314
    %v7347 = vunpack.c.l.bf16 %v7315
    %v7348 = vunpack.c.l.bf16 %v7316
    %v7349 = vunpack.c.l.bf16 %v7317
    %v7350 = vunpack.c.l.bf16 %v7318
    %v7351 = vunpack.c.l.bf16 %v7319
    %v7352 = vunpack.c.l.bf16 %v7320
    %v7353 = vunpack.c.l.bf16 %v7321
    %v7354 = vunpack.c.l.bf16 %v7322
    %v7355 = vunpack.c.l.bf16 %v7323
    %v7356 = vunpack.c.l.bf16 %v7324
    %v7357 = vunpack.c.l.bf16 %v7325
    %v7358 = vunpack.c.l.bf16 %v7326
    %v7359 = vunpack.c.l.bf16 %v7327
    %v7360 = vunpack.c.l.bf16 %v7328
    %v7361 = vunpack.c.l.bf16 %v7329
    %v7362 = vunpack.c.l.bf16 %v7330
    %v7363 = vunpack.c.l.bf16 %v7331
    %v7364 = vunpack.c.l.bf16 %v7332
    %v7365 = vunpack.c.l.bf16 %v7333
    %v7366 = vunpack.c.l.bf16 %v7334
    %v7367 = vunpack.c.l.bf16 %v7335
    %v7368 = vunpack.c.l.bf16 %v7336
    %v7369 = vunpack.c.l.bf16 %v7337
    %v7370 = vunpack.c.l.bf16 %v7338
    %v7371 = vunpack.c.l.bf16 %v7339
    %v7372 = vunpack.c.l.bf16 %v7340
    %v7373 = vunpack.c.l.bf16 %v7341
    %v7374 = vunpack.c.l.bf16 %v7342
    %v7375 = vunpack.c.l.bf16 %v7343
    %v7376 = vld [vmem:[#allocation24] sm:$0x1]
    %7377 = vmatprep.subr.mxu0 0.0
    %7378 = vmatpush1.msra.mxu0 %v7359
    %7379 = vmatprep.subr.mxu0 0.0
    %7380 = vmatpush1.msra.mxu0 %v7358
    %7381 = vmatprep.subr.mxu0 0.0
    %7382 = vmatpush1.msra.mxu0 %v7357
    %7383 = vmatprep.subr.mxu0 0.0
    %7384 = vmatpush1.msra.mxu0 %v7356
    %7385 = vmatprep.subr.mxu0 0.0
    %7386 = vmatpush1.msra.mxu0 %v7355
    %7387 = vmatprep.subr.mxu0 0.0
    %7388 = vmatpush1.msra.mxu0 %v7354
    %7389 = vmatprep.subr.mxu0 0.0
    %7390 = vmatpush1.msra.mxu0 %v7353
    %7391 = vmatprep.subr.mxu0 0.0
    %7392 = vmatpush1.msra.mxu0 %v7352
    %7393 = vmatprep.subr.mxu0 0.0
    %7394 = vmatpush1.msra.mxu0 %v7351
    %7395 = vmatprep.subr.mxu0 0.0
    %7396 = vmatpush1.msra.mxu0 %v7350
    %7397 = vmatprep.subr.mxu0 0.0
    %7398 = vmatpush1.msra.mxu0 %v7349
    %7399 = vmatprep.subr.mxu0 0.0
    %7400 = vmatpush1.msra.mxu0 %v7348
    %7401 = vmatprep.subr.mxu0 0.0
    %7402 = vmatpush1.msra.mxu0 %v7347
    %7403 = vmatprep.subr.mxu0 0.0
    %7404 = vmatpush1.msra.mxu0 %v7346
    %7405 = vmatprep.subr.mxu0 0.0
    %7406 = vmatpush1.msra.mxu0 %v7345
    %7407 = vmatprep.subr.mxu0 0.0
    %7408 = vmatpush1.msra.mxu0 %v7344
    %7409 = vmatprep.subr.mxu0 0.0
    %7410 = vmatpush2.msra.mxu0 %v7375
    %7411 = vmatprep.subr.mxu0 0.0
    %7412 = vmatpush2.msra.mxu0 %v7374
    %7413 = vmatprep.subr.mxu0 0.0
    %7414 = vmatpush2.msra.mxu0 %v7373
    %7415 = vmatprep.subr.mxu0 0.0
    %7416 = vmatpush2.msra.mxu0 %v7372
    %7417 = vmatprep.subr.mxu0 0.0
    %7418 = vmatpush2.msra.mxu0 %v7371
    %7419 = vmatprep.subr.mxu0 0.0
    %7420 = vmatpush2.msra.mxu0 %v7370
    %7421 = vmatprep.subr.mxu0 0.0
    %7422 = vmatpush2.msra.mxu0 %v7369
    %7423 = vmatprep.subr.mxu0 0.0
    %7424 = vmatpush2.msra.mxu0 %v7368
    %7425 = vmatprep.subr.mxu0 0.0
    %7426 = vmatpush2.msra.mxu0 %v7367
    %7427 = vmatprep.subr.mxu0 0.0
    %7428 = vmatpush2.msra.mxu0 %v7366
    %7429 = vmatprep.subr.mxu0 0.0
    %7430 = vmatpush2.msra.mxu0 %v7365
    %7431 = vmatprep.subr.mxu0 0.0
    %7432 = vmatpush2.msra.mxu0 %v7364
    %7433 = vmatprep.subr.mxu0 0.0
    %7434 = vmatpush2.msra.mxu0 %v7363
    %7435 = vmatprep.subr.mxu0 0.0
    %7436 = vmatpush2.msra.mxu0 %v7362
    %7437 = vmatprep.subr.mxu0 0.0
    %7438 = vmatpush2.msra.mxu0 %v7361
    %7439 = vmatprep.subr.mxu0 0.0
    %7440 = vmatpush2.msra.mxu0 %v7360
    %7441 = vmatprep.mubr.f32.mxu0 %v7311
    %7442 = vmatmul.mubr.f32.gmra.mxu0 %v7310
    %v7443 = vpop.f32.mrf.mxu0
    %v7444 = vadd.f32 %v7376, %v7443
    %v7445 = vpop.f32.mrf.mxu0
    %7446 = vdwg.mxu0
    %7447 = vst [vmem:[%s16] sm:$0x1] %v7444
    // Predicated region
    $region126: #{pose_refine_net.1} parent=1 // pred_check
      _
    $region127: #{pose_refine_net.1} parent=1 // pred_check_branch
      %7449 = sbr.rel (0) target = $region129
    $region128: #{pose_refine_net.1} parent=1 // pred_region
      _
    $region129: #{pose_refine_net.1} parent=1 // pred_fallthru
      _
    // Predicated region
    $region130: #{pose_refine_net.1} parent=1 // pred_check
      _
    $region131: #{pose_refine_net.1} parent=1 // pred_check_branch
      %7451 = sbr.rel (0) target = $region133
    $region132: #{pose_refine_net.1} parent=1 // pred_region
      _
    $region133: #{pose_refine_net.1} parent=1 // pred_fallthru
      _
    %7452 = vsyncpa [#allocation3], 1
    %7453 = vsyncpa [#allocation5], 1
    %7454 = vsyncpa [#allocation8], 1
    %7455 = vsyncpa [#allocation11], 1
    %7456 = vsyncpa [#allocation14], 1
    %7457 = vsyncpa [#allocation17], 1
    %7458 = vsyncpa [#allocation20], 1
    %7459 = vsyncpa [#allocation23], 1

</llo_original>
